<compile_context>
chip_gen: v6e
topology: v6e:2x2x1
jax: 0.10.0
libtpu: 0.0.40
codegen_flags: <defaults>
</compile_context>

<pallas_src>
import math
import functools

import jax
import jax.numpy as jnp
from jax.experimental import pallas as pl
from jax.experimental.pallas import tpu as pltpu


IN_FEATURES = 2
OUT_FEATURES = 1
HIDDEN = 256
NUM_HIDDEN_LAYERS = 3   # number of hidden->hidden layers (5 linear layers total)
OMEGA = 30.0            # SIREN sine frequency
DEFAULT_TILE_M = 2048   # rows per grid step (sweepable; keep a multiple of 128)


def _round_up(x, m):
    return ((x + m - 1) // m) * m


def _cdiv(a, b):
    return -(-a // b)


# ---------------------------------------------------------------------------
# Fast sine: one-step Cody-Waite range reduction + odd degree-9 polynomial.
# Valid for the |x| <= ~60 arguments this network produces; error vs sin is at
# the ~1e-6 level on the reduced interval.  Used identically in the kernel and
# in the mimic reference so the numerical comparison stays tight.
# ---------------------------------------------------------------------------
_INV_TWO_PI = 0.15915494309189535      # 1 / (2*pi)
_TWO_PI_HI = 6.28125                   # exact in 8 mantissa bits
_TWO_PI_LO = 1.9353071795864769e-3     # 2*pi - _TWO_PI_HI

_S3 = -1.66666672e-1
_S5 = 8.33338592e-3
_S7 = -1.98559923e-4
_S9 = 2.86567956e-6


def _fast_sin(x):
    n = jnp.floor(x * _INV_TWO_PI + 0.5)
    r = x - n * _TWO_PI_HI - n * _TWO_PI_LO      # r in [-pi, pi]
    r2 = r * r
    p = _S9
    p = p * r2 + _S7
    p = p * r2 + _S5
    p = p * r2 + _S3
    return r + r * r2 * p


def inr_mlp_kernel(x_ref,
                   w0_ref, b0_ref,
                   w1_ref, b1_ref,
                   w2_ref, b2_ref,
                   w3_ref, b3_ref,
                   w4_ref, b4_ref,
                   out_ref):
    """Whole SIREN-style MLP on one tile of rows.

    x_ref:  (tile_m, IN_FEATURES)   f32
    w0_ref: (IN_FEATURES, HIDDEN)   f32, pre-scaled by OMEGA
    w1..w3: (HIDDEN, HIDDEN)        bf16 (or f32 if precise), pre-scaled by OMEGA
    w4_ref: (HIDDEN, 1)             bf16 (or f32) output weight column
    bK_ref: (1, fan_out)            f32 (b0..b3 pre-scaled by OMEGA)
    out_ref:(tile_m, OUT_FEATURES)  f32
    """
    x = x_ref[...]                                       # (tile_m, 2) f32

    # Layer 0 on the MXU (K=2 is degenerate but the MXU has large slack).
    h = jnp.dot(x, w0_ref[...], preferred_element_type=jnp.float32) + b0_ref[...]
    s = _fast_sin(h)                                     # freq already folded in

    # Hidden layers: operands cast to the weight dtype (bf16 by default),
    # f32 accumulation on the MXU, f32 bias + sine epilogue on the VPU.
    for w_ref, b_ref in ((w1_ref, b1_ref), (w2_ref, b2_ref), (w3_ref, b3_ref)):
        h = jnp.dot(s.astype(w_ref.dtype), w_ref[...],
                    preferred_element_type=jnp.float32) + b_ref[...]
        s = _fast_sin(h)

    # Output layer also on the MXU (frees a full-width VALU multiply and an
    # XLU lane reduction; the N=1 matmul rides on MXU slack).
    y = jnp.dot(s.astype(w4_ref.dtype), w4_ref[...],
                preferred_element_type=jnp.float32) + b4_ref[...]
    out_ref[...] = y.astype(out_ref.dtype)


def init_inr_params(key, in_features=IN_FEATURES, hidden=HIDDEN,
                    out_features=OUT_FEATURES, num_hidden_layers=NUM_HIDDEN_LAYERS):
    """Deterministic SIREN-style init mirroring the PyTorch module.

    first_layer_sine_init: W ~ U(-1/fan_in, 1/fan_in)
    sine_init:             W ~ U(-sqrt(6/fan_in)/30, sqrt(6/fan_in)/30)
    bias (nn.Linear default): b ~ U(-1/sqrt(fan_in), 1/sqrt(fan_in))
    Weights returned already transposed: shape (fan_in, fan_out).
    """
    dims = [in_features] + [hidden] * (num_hidden_layers + 1) + [out_features]
    params = []
    for layer_idx in range(len(dims) - 1):
        fan_in, fan_out = dims[layer_idx], dims[layer_idx + 1]
        key, kw, kb = jax.random.split(key, 3)
        if layer_idx == 0:
            bound_w = 1.0 / fan_in
        else:
            bound_w = math.sqrt(6.0 / fan_in) / 30.0
        w_t = jax.random.uniform(kw, (fan_in, fan_out), jnp.float32,
                                 minval=-bound_w, maxval=bound_w)
        bound_b = 1.0 / math.sqrt(fan_in)
        b = jax.random.uniform(kb, (1, fan_out), jnp.float32,
                               minval=-bound_b, maxval=bound_b)
        params.append((w_t, b))
    return params


def _replicated_spec(shape):
    """Whole-array block, same block every grid step (weights/biases)."""
    nd = len(shape)
    return pl.BlockSpec(shape, lambda i: (0,) * nd)


def _choose_tiling(M, tile_m):
    """Pick (row_tile, padded_M).

    Tiles are multiples of 128.  Prefer an EVEN number of grid steps so the
    v7x megacore split of the 'parallel' axis is load-balanced, and balance
    rows across steps instead of padding a whole extra tile.
    """
    m128 = _round_up(M, 128)
    max_tile = max(128, _round_up(min(tile_m, m128), 128))
    steps = _cdiv(m128, max_tile)
    if steps == 1 and m128 >= 256:
        steps = 2                       # give both v7x TensorCores work
    if steps > 1 and steps % 2 == 1:
        steps += 1                      # even step count -> balanced megacore
    tile = _round_up(_cdiv(m128, steps), 128)
    return tile, steps * tile


@functools.partial(jax.jit, static_argnames=("tile_m", "precise"))
def inr_forward(coords, params, tile_m=DEFAULT_TILE_M, precise=False):
    """coords: [B, N, in_features] float32 -> {'model_in', 'model_out'}.

    precise=True keeps the hidden weights / matmuls in f32 (MXU has slack, so
    this stays mostly hidden under the sine-bound VALU path) if bf16 parity
    with the PyTorch f32 semantics is not good enough.
    """
    B, N, C = coords.shape
    assert C == IN_FEATURES
    M = B * N
    x = coords.reshape(M, C).astype(jnp.float32)

    tile, m_pad = _choose_tiling(M, tile_m)
    if m_pad != M:
        x = jnp.pad(x, ((0, m_pad - M), (0, 0)))

    (w0, b0), (w1, b1), (w2, b2), (w3, b3), (w4, b4) = params
    hidden_dtype = jnp.float32 if precise else jnp.bfloat16

    # Fold the sine frequency into layers 0..3 (sin(30*(xW+b)) == sin(x(30W)+30b)).
    W0 = (w0 * OMEGA).astype(jnp.float32)          # (2, H)
    B0 = (b0 * OMEGA).astype(jnp.float32)          # (1, H)
    W1 = (w1 * OMEGA).astype(hidden_dtype)         # (H, H)
    B1 = (b1 * OMEGA).astype(jnp.float32)
    W2 = (w2 * OMEGA).astype(hidden_dtype)
    B2 = (b2 * OMEGA).astype(jnp.float32)
    W3 = (w3 * OMEGA).astype(hidden_dtype)
    B3 = (b3 * OMEGA).astype(jnp.float32)
    W4 = w4.astype(hidden_dtype)                   # (H, 1) output column
    B4 = b4.astype(jnp.float32)                    # (1, 1)

    weight_args = [W0, B0, W1, B1, W2, B2, W3, B3, W4, B4]

    in_specs = [pl.BlockSpec((tile, C), lambda i: (i, 0))]
    for arr in weight_args:
        in_specs.append(_replicated_spec(arr.shape))

    out = pl.pallas_call(
        inr_mlp_kernel,
        out_shape=jax.ShapeDtypeStruct((m_pad, OUT_FEATURES), jnp.float32),
        grid_spec=pltpu.PrefetchScalarGridSpec(
            num_scalar_prefetch=0,
            grid=(m_pad // tile,),
            in_specs=in_specs,
            out_specs=pl.BlockSpec((tile, OUT_FEATURES), lambda i: (i, 0)),
        ),
        compiler_params=pltpu.CompilerParams(
            dimension_semantics=("parallel",),
            vmem_limit_bytes=32 * 1024 * 1024),
    )(x, *weight_args)

    out = out[:M].reshape(B, N, OUT_FEATURES)
    # TODO(synk): output stays (M, 1) (masked stores); a lane-dense relayout is
    # skipped since the kernel is compute-bound on the sine/matmul path.
    # TODO(synk): 'model_in' is just the coords array (no autograd graph like
    # the PyTorch requires_grad_ bookkeeping); 'lc'/'lg' modes not implemented.
    return {"model_in": coords, "model_out": out}


def inr_forward_ref(coords, params, mimic_kernel=False):
    """Pure-JAX reference.

    mimic_kernel=False: exact PyTorch FCBlock semantics (all f32, true sin).
    mimic_kernel=True:  replicates the kernel's folding, bf16 matmul operands
                        with f32 accumulation, and the same fast sine, for a
                        tight numerical comparison.
    """
    x = coords.astype(jnp.float32).reshape(-1, coords.shape[-1])
    (w0, b0), (w1, b1), (w2, b2), (w3, b3), (w4, b4) = params
    if mimic_kernel:
        hd = jnp.bfloat16
        h = jnp.matmul(x, w0 * OMEGA) + (b0 * OMEGA)[0]
        s = _fast_sin(h)
        for (w, b) in ((w1, b1), (w2, b2), (w3, b3)):
            h = jnp.dot(s.astype(hd), (w * OMEGA).astype(hd),
                        preferred_element_type=jnp.float32) + (b * OMEGA)[0]
            s = _fast_sin(h)
        y = jnp.dot(s.astype(hd), w4.astype(hd),
                    preferred_element_type=jnp.float32) + b4[0]
    else:
        h = x
        for (w, b) in ((w0, b0), (w1, b1), (w2, b2), (w3, b3)):
            h = jnp.sin(OMEGA * (jnp.matmul(h, w) + b[0]))
        y = jnp.matmul(h, w4) + b4[0]
    return y.reshape(*coords.shape[:-1], -1)


if __name__ == "__main__":
    key = jax.random.PRNGKey(0)
    kp, kc = jax.random.split(key)

    params = init_inr_params(kp)

    # Small coords consistent with an INR: batch=2, 256 points, 2-D coords.
    B, N = 2, 256
    coords = jax.random.uniform(kc, (B, N, IN_FEATURES), jnp.float32,
                                minval=-1.0, maxval=1.0)

    result = inr_forward(coords, params)
    out = jax.block_until_ready(result["model_out"])
    assert out.shape == (B, N, OUT_FEATURES)
    assert result["model_in"].shape == coords.shape

    # Tight check against a reference that applies the same quantization and
    # the same fast sine (differences: MXU vs XLA accumulation order only).
    ref_mimic = inr_forward_ref(coords, params, mimic_kernel=True)
    err_mimic = float(jnp.max(jnp.abs(out - ref_mimic)))
    assert jnp.allclose(out, ref_mimic, atol=2e-3, rtol=2e-3), \
        f"kernel vs mimic reference max err {err_mimic}"

    # Looser check against the full-f32 PyTorch-semantics reference
    # (bf16 hidden matmuls introduce ~1e-3..1e-2 level differences).
    ref_f32 = inr_forward_ref(coords, params, mimic_kernel=False)
    err_f32 = float(jnp.max(jnp.abs(out - ref_f32)))
    assert jnp.allclose(out, ref_f32, atol=2e-2, rtol=2e-2), \
        f"kernel vs f32 reference max err {err_f32}"

    print("KERNEL_OK")
</pallas_src>

<mosaic_0001>
module attributes {stable_mosaic.version = 11 : i64} {
  func.func @inr_mlp_kernel(%arg0: i32, %arg1: memref<256x2xf32, #tpu.memory_space<vmem>>, %arg2: memref<2x256xf32, #tpu.memory_space<vmem>>, %arg3: memref<1x256xf32, #tpu.memory_space<vmem>>, %arg4: memref<256x256xbf16, #tpu.memory_space<vmem>>, %arg5: memref<1x256xf32, #tpu.memory_space<vmem>>, %arg6: memref<256x256xbf16, #tpu.memory_space<vmem>>, %arg7: memref<1x256xf32, #tpu.memory_space<vmem>>, %arg8: memref<256x256xbf16, #tpu.memory_space<vmem>>, %arg9: memref<1x256xf32, #tpu.memory_space<vmem>>, %arg10: memref<256x1xbf16, #tpu.memory_space<vmem>>, %arg11: memref<1x1xf32, #tpu.memory_space<vmem>>, %arg12: memref<256x1xf32, #tpu.memory_space<vmem>>) attributes {dimension_semantics = [#tpu.dimension_semantics<parallel>], iteration_bounds = array<i64: 2>, scalar_prefetch = 0 : i64, scratch_operands = 0 : i64, tpu.core_type = #tpu.core_type<tc>, window_params = [{transform_indices = @transform_0, window_bounds = array<i64: 256, 2>}, {pipeline_mode = #tpu.pipeline_mode<synchronous>, transform_indices = @transform_1, window_bounds = array<i64: 2, 256>}, {pipeline_mode = #tpu.pipeline_mode<synchronous>, transform_indices = @transform_2, window_bounds = array<i64: 1, 256>}, {pipeline_mode = #tpu.pipeline_mode<synchronous>, transform_indices = @transform_3, window_bounds = array<i64: 256, 256>}, {pipeline_mode = #tpu.pipeline_mode<synchronous>, transform_indices = @transform_4, window_bounds = array<i64: 1, 256>}, {pipeline_mode = #tpu.pipeline_mode<synchronous>, transform_indices = @transform_5, window_bounds = array<i64: 256, 256>}, {pipeline_mode = #tpu.pipeline_mode<synchronous>, transform_indices = @transform_6, window_bounds = array<i64: 1, 256>}, {pipeline_mode = #tpu.pipeline_mode<synchronous>, transform_indices = @transform_7, window_bounds = array<i64: 256, 256>}, {pipeline_mode = #tpu.pipeline_mode<synchronous>, transform_indices = @transform_8, window_bounds = array<i64: 1, 256>}, {pipeline_mode = #tpu.pipeline_mode<synchronous>, transform_indices = @transform_9, window_bounds = array<i64: 256, 1>}, {pipeline_mode = #tpu.pipeline_mode<synchronous>, transform_indices = @transform_10, window_bounds = array<i64: 1, 1>}, {transform_indices = @transform_11, window_bounds = array<i64: 256, 1>}]} {
    %c0 = arith.constant 0 : index
    %c0_0 = arith.constant 0 : index
    %0 = vector.load %arg1[%c0, %c0_0] : memref<256x2xf32, #tpu.memory_space<vmem>>, vector<256x2xf32>
    %c0_1 = arith.constant 0 : index
    %c0_2 = arith.constant 0 : index
    %1 = vector.load %arg2[%c0_1, %c0_2] : memref<2x256xf32, #tpu.memory_space<vmem>>, vector<2x256xf32>
    %cst = arith.constant dense<0.000000e+00> : vector<256x256xf32>
    %2 = tpu.matmul %0, %1, %cst {dimension_numbers = #tpu.dot_dimension_numbers<[1], [0], [0], [1], [0, 0, 1, 1], [], []>} : vector<256x2xf32>, vector<2x256xf32>, vector<256x256xf32> -> vector<256x256xf32>
    %c0_3 = arith.constant 0 : index
    %c0_4 = arith.constant 0 : index
    %3 = vector.load %arg3[%c0_3, %c0_4] : memref<1x256xf32, #tpu.memory_space<vmem>>, vector<1x256xf32>
    %4 = vector.broadcast %3 : vector<1x256xf32> to vector<256x256xf32>
    %5 = arith.addf %2, %4 : vector<256x256xf32>
    %cst_5 = arith.constant 0.159154937 : f32
    %6 = vector.broadcast %cst_5 : f32 to vector<256x256xf32>
    %7 = arith.mulf %5, %6 : vector<256x256xf32>
    %cst_6 = arith.constant 5.000000e-01 : f32
    %8 = vector.broadcast %cst_6 : f32 to vector<256x256xf32>
    %9 = arith.addf %7, %8 : vector<256x256xf32>
    %10 = math.floor %9 : vector<256x256xf32>
    %cst_7 = arith.constant 6.281250e+00 : f32
    %11 = vector.broadcast %cst_7 : f32 to vector<256x256xf32>
    %12 = arith.mulf %10, %11 : vector<256x256xf32>
    %13 = arith.subf %5, %12 : vector<256x256xf32>
    %cst_8 = arith.constant 0.00193530717 : f32
    %14 = vector.broadcast %cst_8 : f32 to vector<256x256xf32>
    %15 = arith.mulf %10, %14 : vector<256x256xf32>
    %16 = arith.subf %13, %15 : vector<256x256xf32>
    %17 = arith.mulf %16, %16 : vector<256x256xf32>
    %cst_9 = arith.constant 2.86567956E-6 : f32
    %18 = vector.broadcast %cst_9 : f32 to vector<256x256xf32>
    %19 = arith.mulf %18, %17 : vector<256x256xf32>
    %cst_10 = arith.constant -1.98559923E-4 : f32
    %20 = vector.broadcast %cst_10 : f32 to vector<256x256xf32>
    %21 = arith.addf %19, %20 : vector<256x256xf32>
    %22 = arith.mulf %21, %17 : vector<256x256xf32>
    %cst_11 = arith.constant 0.00833338592 : f32
    %23 = vector.broadcast %cst_11 : f32 to vector<256x256xf32>
    %24 = arith.addf %22, %23 : vector<256x256xf32>
    %25 = arith.mulf %24, %17 : vector<256x256xf32>
    %cst_12 = arith.constant -0.166666672 : f32
    %26 = vector.broadcast %cst_12 : f32 to vector<256x256xf32>
    %27 = arith.addf %25, %26 : vector<256x256xf32>
    %28 = arith.mulf %16, %17 : vector<256x256xf32>
    %29 = arith.mulf %28, %27 : vector<256x256xf32>
    %30 = arith.addf %16, %29 : vector<256x256xf32>
    %31 = arith.truncf %30 : vector<256x256xf32> to vector<256x256xbf16>
    %c0_13 = arith.constant 0 : index
    %c0_14 = arith.constant 0 : index
    %32 = vector.load %arg4[%c0_13, %c0_14] : memref<256x256xbf16, #tpu.memory_space<vmem>>, vector<256x256xbf16>
    %cst_15 = arith.constant dense<0.000000e+00> : vector<256x256xf32>
    %33 = tpu.matmul %31, %32, %cst_15 {dimension_numbers = #tpu.dot_dimension_numbers<[1], [0], [0], [1], [0, 0, 1, 1], [], []>} : vector<256x256xbf16>, vector<256x256xbf16>, vector<256x256xf32> -> vector<256x256xf32>
    %c0_16 = arith.constant 0 : index
    %c0_17 = arith.constant 0 : index
    %34 = vector.load %arg5[%c0_16, %c0_17] : memref<1x256xf32, #tpu.memory_space<vmem>>, vector<1x256xf32>
    %35 = vector.broadcast %34 : vector<1x256xf32> to vector<256x256xf32>
    %36 = arith.addf %33, %35 : vector<256x256xf32>
    %cst_18 = arith.constant 0.159154937 : f32
    %37 = vector.broadcast %cst_18 : f32 to vector<256x256xf32>
    %38 = arith.mulf %36, %37 : vector<256x256xf32>
    %cst_19 = arith.constant 5.000000e-01 : f32
    %39 = vector.broadcast %cst_19 : f32 to vector<256x256xf32>
    %40 = arith.addf %38, %39 : vector<256x256xf32>
    %41 = math.floor %40 : vector<256x256xf32>
    %cst_20 = arith.constant 6.281250e+00 : f32
    %42 = vector.broadcast %cst_20 : f32 to vector<256x256xf32>
    %43 = arith.mulf %41, %42 : vector<256x256xf32>
    %44 = arith.subf %36, %43 : vector<256x256xf32>
    %cst_21 = arith.constant 0.00193530717 : f32
    %45 = vector.broadcast %cst_21 : f32 to vector<256x256xf32>
    %46 = arith.mulf %41, %45 : vector<256x256xf32>
    %47 = arith.subf %44, %46 : vector<256x256xf32>
    %48 = arith.mulf %47, %47 : vector<256x256xf32>
    %cst_22 = arith.constant 2.86567956E-6 : f32
    %49 = vector.broadcast %cst_22 : f32 to vector<256x256xf32>
    %50 = arith.mulf %49, %48 : vector<256x256xf32>
    %cst_23 = arith.constant -1.98559923E-4 : f32
    %51 = vector.broadcast %cst_23 : f32 to vector<256x256xf32>
    %52 = arith.addf %50, %51 : vector<256x256xf32>
    %53 = arith.mulf %52, %48 : vector<256x256xf32>
    %cst_24 = arith.constant 0.00833338592 : f32
    %54 = vector.broadcast %cst_24 : f32 to vector<256x256xf32>
    %55 = arith.addf %53, %54 : vector<256x256xf32>
    %56 = arith.mulf %55, %48 : vector<256x256xf32>
    %cst_25 = arith.constant -0.166666672 : f32
    %57 = vector.broadcast %cst_25 : f32 to vector<256x256xf32>
    %58 = arith.addf %56, %57 : vector<256x256xf32>
    %59 = arith.mulf %47, %48 : vector<256x256xf32>
    %60 = arith.mulf %59, %58 : vector<256x256xf32>
    %61 = arith.addf %47, %60 : vector<256x256xf32>
    %62 = arith.truncf %61 : vector<256x256xf32> to vector<256x256xbf16>
    %c0_26 = arith.constant 0 : index
    %c0_27 = arith.constant 0 : index
    %63 = vector.load %arg6[%c0_26, %c0_27] : memref<256x256xbf16, #tpu.memory_space<vmem>>, vector<256x256xbf16>
    %cst_28 = arith.constant dense<0.000000e+00> : vector<256x256xf32>
    %64 = tpu.matmul %62, %63, %cst_28 {dimension_numbers = #tpu.dot_dimension_numbers<[1], [0], [0], [1], [0, 0, 1, 1], [], []>} : vector<256x256xbf16>, vector<256x256xbf16>, vector<256x256xf32> -> vector<256x256xf32>
    %c0_29 = arith.constant 0 : index
    %c0_30 = arith.constant 0 : index
    %65 = vector.load %arg7[%c0_29, %c0_30] : memref<1x256xf32, #tpu.memory_space<vmem>>, vector<1x256xf32>
    %66 = vector.broadcast %65 : vector<1x256xf32> to vector<256x256xf32>
    %67 = arith.addf %64, %66 : vector<256x256xf32>
    %cst_31 = arith.constant 0.159154937 : f32
    %68 = vector.broadcast %cst_31 : f32 to vector<256x256xf32>
    %69 = arith.mulf %67, %68 : vector<256x256xf32>
    %cst_32 = arith.constant 5.000000e-01 : f32
    %70 = vector.broadcast %cst_32 : f32 to vector<256x256xf32>
    %71 = arith.addf %69, %70 : vector<256x256xf32>
    %72 = math.floor %71 : vector<256x256xf32>
    %cst_33 = arith.constant 6.281250e+00 : f32
    %73 = vector.broadcast %cst_33 : f32 to vector<256x256xf32>
    %74 = arith.mulf %72, %73 : vector<256x256xf32>
    %75 = arith.subf %67, %74 : vector<256x256xf32>
    %cst_34 = arith.constant 0.00193530717 : f32
    %76 = vector.broadcast %cst_34 : f32 to vector<256x256xf32>
    %77 = arith.mulf %72, %76 : vector<256x256xf32>
    %78 = arith.subf %75, %77 : vector<256x256xf32>
    %79 = arith.mulf %78, %78 : vector<256x256xf32>
    %cst_35 = arith.constant 2.86567956E-6 : f32
    %80 = vector.broadcast %cst_35 : f32 to vector<256x256xf32>
    %81 = arith.mulf %80, %79 : vector<256x256xf32>
    %cst_36 = arith.constant -1.98559923E-4 : f32
    %82 = vector.broadcast %cst_36 : f32 to vector<256x256xf32>
    %83 = arith.addf %81, %82 : vector<256x256xf32>
    %84 = arith.mulf %83, %79 : vector<256x256xf32>
    %cst_37 = arith.constant 0.00833338592 : f32
    %85 = vector.broadcast %cst_37 : f32 to vector<256x256xf32>
    %86 = arith.addf %84, %85 : vector<256x256xf32>
    %87 = arith.mulf %86, %79 : vector<256x256xf32>
    %cst_38 = arith.constant -0.166666672 : f32
    %88 = vector.broadcast %cst_38 : f32 to vector<256x256xf32>
    %89 = arith.addf %87, %88 : vector<256x256xf32>
    %90 = arith.mulf %78, %79 : vector<256x256xf32>
    %91 = arith.mulf %90, %89 : vector<256x256xf32>
    %92 = arith.addf %78, %91 : vector<256x256xf32>
    %93 = arith.truncf %92 : vector<256x256xf32> to vector<256x256xbf16>
    %c0_39 = arith.constant 0 : index
    %c0_40 = arith.constant 0 : index
    %94 = vector.load %arg8[%c0_39, %c0_40] : memref<256x256xbf16, #tpu.memory_space<vmem>>, vector<256x256xbf16>
    %cst_41 = arith.constant dense<0.000000e+00> : vector<256x256xf32>
    %95 = tpu.matmul %93, %94, %cst_41 {dimension_numbers = #tpu.dot_dimension_numbers<[1], [0], [0], [1], [0, 0, 1, 1], [], []>} : vector<256x256xbf16>, vector<256x256xbf16>, vector<256x256xf32> -> vector<256x256xf32>
    %c0_42 = arith.constant 0 : index
    %c0_43 = arith.constant 0 : index
    %96 = vector.load %arg9[%c0_42, %c0_43] : memref<1x256xf32, #tpu.memory_space<vmem>>, vector<1x256xf32>
    %97 = vector.broadcast %96 : vector<1x256xf32> to vector<256x256xf32>
    %98 = arith.addf %95, %97 : vector<256x256xf32>
    %cst_44 = arith.constant 0.159154937 : f32
    %99 = vector.broadcast %cst_44 : f32 to vector<256x256xf32>
    %100 = arith.mulf %98, %99 : vector<256x256xf32>
    %cst_45 = arith.constant 5.000000e-01 : f32
    %101 = vector.broadcast %cst_45 : f32 to vector<256x256xf32>
    %102 = arith.addf %100, %101 : vector<256x256xf32>
    %103 = math.floor %102 : vector<256x256xf32>
    %cst_46 = arith.constant 6.281250e+00 : f32
    %104 = vector.broadcast %cst_46 : f32 to vector<256x256xf32>
    %105 = arith.mulf %103, %104 : vector<256x256xf32>
    %106 = arith.subf %98, %105 : vector<256x256xf32>
    %cst_47 = arith.constant 0.00193530717 : f32
    %107 = vector.broadcast %cst_47 : f32 to vector<256x256xf32>
    %108 = arith.mulf %103, %107 : vector<256x256xf32>
    %109 = arith.subf %106, %108 : vector<256x256xf32>
    %110 = arith.mulf %109, %109 : vector<256x256xf32>
    %cst_48 = arith.constant 2.86567956E-6 : f32
    %111 = vector.broadcast %cst_48 : f32 to vector<256x256xf32>
    %112 = arith.mulf %111, %110 : vector<256x256xf32>
    %cst_49 = arith.constant -1.98559923E-4 : f32
    %113 = vector.broadcast %cst_49 : f32 to vector<256x256xf32>
    %114 = arith.addf %112, %113 : vector<256x256xf32>
    %115 = arith.mulf %114, %110 : vector<256x256xf32>
    %cst_50 = arith.constant 0.00833338592 : f32
    %116 = vector.broadcast %cst_50 : f32 to vector<256x256xf32>
    %117 = arith.addf %115, %116 : vector<256x256xf32>
    %118 = arith.mulf %117, %110 : vector<256x256xf32>
    %cst_51 = arith.constant -0.166666672 : f32
    %119 = vector.broadcast %cst_51 : f32 to vector<256x256xf32>
    %120 = arith.addf %118, %119 : vector<256x256xf32>
    %121 = arith.mulf %109, %110 : vector<256x256xf32>
    %122 = arith.mulf %121, %120 : vector<256x256xf32>
    %123 = arith.addf %109, %122 : vector<256x256xf32>
    %124 = arith.truncf %123 : vector<256x256xf32> to vector<256x256xbf16>
    %c0_52 = arith.constant 0 : index
    %c0_53 = arith.constant 0 : index
    %125 = vector.load %arg10[%c0_52, %c0_53] : memref<256x1xbf16, #tpu.memory_space<vmem>>, vector<256x1xbf16>
    %cst_54 = arith.constant dense<0.000000e+00> : vector<256x1xf32>
    %126 = tpu.matmul %124, %125, %cst_54 {dimension_numbers = #tpu.dot_dimension_numbers<[1], [0], [0], [1], [0, 0, 1, 1], [], []>} : vector<256x256xbf16>, vector<256x1xbf16>, vector<256x1xf32> -> vector<256x1xf32>
    %c0_55 = arith.constant 0 : index
    %c0_56 = arith.constant 0 : index
    %127 = vector.load %arg11[%c0_55, %c0_56] : memref<1x1xf32, #tpu.memory_space<vmem>>, vector<1x1xf32>
    %128 = vector.broadcast %127 : vector<1x1xf32> to vector<256x1xf32>
    %129 = arith.addf %126, %128 : vector<256x1xf32>
    %c0_57 = arith.constant 0 : index
    %c0_58 = arith.constant 0 : index
    %130 = vector.load %arg12[%c0_57, %c0_58] : memref<256x1xf32, #tpu.memory_space<vmem>>, vector<256x1xf32>
    tpu.vector_store %arg12[%c0_57, %c0_58], %129 {strides = array<i32>} : memref<256x1xf32, #tpu.memory_space<vmem>>, vector<256x1xf32>,
    return
  }
  func.func @transform_0(%arg0: i32) -> (i32, i32) {
    %c0_i32 = arith.constant 0 : i32
    %c0_i32_0 = arith.constant 0 : i32
    return %arg0, %c0_i32 : i32, i32
  }
  func.func @transform_1(%arg0: i32) -> (i32, i32) {
    %c0_i32 = arith.constant 0 : i32
    %c0_i32_0 = arith.constant 0 : i32
    %c0_i32_1 = arith.constant 0 : i32
    return %c0_i32, %c0_i32_0 : i32, i32
  }
  func.func @transform_2(%arg0: i32) -> (i32, i32) {
    %c0_i32 = arith.constant 0 : i32
    %c0_i32_0 = arith.constant 0 : i32
    %c0_i32_1 = arith.constant 0 : i32
    return %c0_i32, %c0_i32_0 : i32, i32
  }
  func.func @transform_3(%arg0: i32) -> (i32, i32) {
    %c0_i32 = arith.constant 0 : i32
    %c0_i32_0 = arith.constant 0 : i32
    %c0_i32_1 = arith.constant 0 : i32
    return %c0_i32, %c0_i32_0 : i32, i32
  }
  func.func @transform_4(%arg0: i32) -> (i32, i32) {
    %c0_i32 = arith.constant 0 : i32
    %c0_i32_0 = arith.constant 0 : i32
    %c0_i32_1 = arith.constant 0 : i32
    return %c0_i32, %c0_i32_0 : i32, i32
  }
  func.func @transform_5(%arg0: i32) -> (i32, i32) {
    %c0_i32 = arith.constant 0 : i32
    %c0_i32_0 = arith.constant 0 : i32
    %c0_i32_1 = arith.constant 0 : i32
    return %c0_i32, %c0_i32_0 : i32, i32
  }
  func.func @transform_6(%arg0: i32) -> (i32, i32) {
    %c0_i32 = arith.constant 0 : i32
    %c0_i32_0 = arith.constant 0 : i32
    %c0_i32_1 = arith.constant 0 : i32
    return %c0_i32, %c0_i32_0 : i32, i32
  }
  func.func @transform_7(%arg0: i32) -> (i32, i32) {
    %c0_i32 = arith.constant 0 : i32
    %c0_i32_0 = arith.constant 0 : i32
    %c0_i32_1 = arith.constant 0 : i32
    return %c0_i32, %c0_i32_0 : i32, i32
  }
  func.func @transform_8(%arg0: i32) -> (i32, i32) {
    %c0_i32 = arith.constant 0 : i32
    %c0_i32_0 = arith.constant 0 : i32
    %c0_i32_1 = arith.constant 0 : i32
    return %c0_i32, %c0_i32_0 : i32, i32
  }
  func.func @transform_9(%arg0: i32) -> (i32, i32) {
    %c0_i32 = arith.constant 0 : i32
    %c0_i32_0 = arith.constant 0 : i32
    %c0_i32_1 = arith.constant 0 : i32
    return %c0_i32, %c0_i32_0 : i32, i32
  }
  func.func @transform_10(%arg0: i32) -> (i32, i32) {
    %c0_i32 = arith.constant 0 : i32
    %c0_i32_0 = arith.constant 0 : i32
    %c0_i32_1 = arith.constant 0 : i32
    return %c0_i32, %c0_i32_0 : i32, i32
  }
  func.func @transform_11(%arg0: i32) -> (i32, i32) {
    %c0_i32 = arith.constant 0 : i32
    %c0_i32_0 = arith.constant 0 : i32
    return %arg0, %c0_i32 : i32, i32
  }
}

</mosaic_0001>

<llo_original>
// kernel: inr_forward.1
$region0: #{inr_forward.1}
  #allocation0 [shape = 'u32[]', space=smem, size = 0x4, offset = 0x4, fixed_abs, tag = 'smem constant byte address 0x4 - core index']
  #allocation1 [shape = 'u32[144,128]{1,0:T(1,128)}', space=vmem, size = 0x12000, scoped, tag = 'internal scratch']
  #allocation2 [shape = 'f32[1,1]{1,0:T(1,128)S(1)}', space=vmem, size = 0x200, scoped, tag = 'scoped memory for inr_forward.1']
  %s0 = inlined_call_operand.vmem [shape: f32[512,2], index: 0, kind: input, shape index: {}]
  %s1 = inlined_call_operand.vmem [shape: f32[2,256], index: 1, kind: input, shape index: {}]
  %s2 = inlined_call_operand.vmem [shape: f32[1,256], index: 2, kind: input, shape index: {}]
  %s3 = inlined_call_operand.vmem [shape: bf16[256,256], index: 3, kind: input, shape index: {}]
  %s4 = inlined_call_operand.vmem [shape: f32[1,256], index: 4, kind: input, shape index: {}]
  %s5 = inlined_call_operand.vmem [shape: bf16[256,256], index: 5, kind: input, shape index: {}]
  %s6 = inlined_call_operand.vmem [shape: f32[1,256], index: 6, kind: input, shape index: {}]
  %s7 = inlined_call_operand.vmem [shape: bf16[256,256], index: 7, kind: input, shape index: {}]
  %s8 = inlined_call_operand.vmem [shape: f32[1,256], index: 8, kind: input, shape index: {}]
  %s9 = inlined_call_operand.vmem [shape: bf16[256,1], index: 9, kind: input, shape index: {}]
  %s10 = inlined_call_operand.<no memory space> [shape: f32[1,1], index: 10, kind: input, shape index: {}]
  %s11 = inlined_call_operand.vmem [shape: f32[512,1], index: 11, kind: output, shape index: {}]
  %s12 = sld [smem:[#allocation0]]
  $region77: #{inr_forward.1} parent=0
    _
  %s14 = ssub.s32 1, %s12
  %s15 = scalar_select 0, %s14, %s12
  %v16 = vstv %s10
  %17 = vst [vmem:[#allocation2] sm:$0x1] %v16
  loop: start=0, step=1, limit=4
  $region2: #{inr_forward.1} parent=0 // loop_pre_header
    _
  $region3: #{inr_forward.1} parent=0 // loop_header
    %s19 = sphi 0, %s23
    %p20 = scmp.ge.s32.totalorder %s19, 4
    %s29 = sphi 0, %s31
    %s32 = sphi 0, %s29
    %s33 = sphi 0, %s32
    %s49 = sphi 0, %s33
    %s53 = sphi 0, %s53
    %s55 = sphi 0, %s53
    %s56 = sphi 0, %s55
    %s70 = sphi 0, %s56
    %s74 = sphi 0, %s74
    %s76 = sphi 0, %s74
    %s77 = sphi 0, %s76
    %s91 = sphi 0, %s77
    %s95 = sphi 0, %s95
    %s97 = sphi 0, %s95
    %s98 = sphi 0, %s97
    %s112 = sphi 0, %s98
    %s116 = sphi 0, %s116
    %s118 = sphi 0, %s116
    %s119 = sphi 0, %s118
    %s133 = sphi 0, %s119
    %s137 = sphi 0, %s137
    %s139 = sphi 0, %s137
    %s140 = sphi 0, %s139
    %s154 = sphi 0, %s140
    %s158 = sphi 0, %s158
    %s160 = sphi 0, %s158
    %s161 = sphi 0, %s160
    %s175 = sphi 0, %s161
    %s179 = sphi 0, %s179
    %s181 = sphi 0, %s179
    %s182 = sphi 0, %s181
    %s196 = sphi 0, %s182
    %s200 = sphi 0, %s200
    %s202 = sphi 0, %s200
    %s203 = sphi 0, %s202
    %s217 = sphi 0, %s203
    %s221 = sphi 0, %s221
    %s223 = sphi 0, %s221
    %s224 = sphi 0, %s223
    %s238 = sphi 0, %s224
    %s242 = sphi 0, %s242
    %s244 = sphi 0, %s242
    %s245 = sphi 0, %s244
    %s259 = sphi 0, %s245
    %s265 = sphi 0, %s267
    %s268 = sphi 0, %s265
    %s269 = sphi 0, %s268
    %s285 = sphi 0, %s269
  $region4: #{inr_forward.1} parent=0 // loop_header_branch
    %22 = sbr.rel (%p20) target = $region8
  $region5: #{inr_forward.1} parent=0 // loop_body
    %s24 = ssub.s32 %s19, 1
    %s25 = ssub.s32 %s19, 2
    %s26 = sadd.s32 %s19, 1
    %s27 = ssub.s32 %s19, %s26
    %p28 = scmp.eq.s32.totalorder %s27, 0
    %s30 = sadd.s32 %s29, 1
    %s31 = scalar_select %p28, %s29, %s30
    %p34 = pneg %p28
    %p35 = scmp.eq.s32.totalorder %s19, 1
    %p36 = por %p34, %p35
    %p37 = scmp.ne.s32.totalorder %s29, %s32
    %p38 = scmp.eq.s32.totalorder %s19, 0
    %p39 = por %p37, %p38
    %p40 = scmp.ne.s32.totalorder %s29, %s32
    %p41 = scmp.eq.s32.totalorder %s24, 1
    %p42 = por %p40, %p41
    %p43 = scmp.ne.s32.totalorder %s32, %s33
    %p44 = scmp.eq.s32.totalorder %s24, 0
    %p45 = por %p43, %p44
    %p46 = scmp.ne.s32.totalorder %s32, %s33
    %p47 = scmp.eq.s32.totalorder %s25, 1
    %p48 = por %p46, %p47
    %p50 = scmp.ne.s32.totalorder %s33, %s49
    %p51 = scmp.eq.s32.totalorder %s25, 0
    %p52 = por %p50, %p51
    %s54 = sadd.s32 %s53, 1
    %p57 = scmp.eq.s32.totalorder %s19, 1
    %p58 = scmp.ne.s32.totalorder %s53, %s55
    %p59 = scmp.eq.s32.totalorder %s19, 0
    %p60 = por %p58, %p59
    %p61 = scmp.ne.s32.totalorder %s53, %s55
    %p62 = scmp.eq.s32.totalorder %s24, 1
    %p63 = por %p61, %p62
    %p64 = scmp.ne.s32.totalorder %s55, %s56
    %p65 = scmp.eq.s32.totalorder %s24, 0
    %p66 = por %p64, %p65
    %p67 = scmp.ne.s32.totalorder %s55, %s56
    %p68 = scmp.eq.s32.totalorder %s25, 1
    %p69 = por %p67, %p68
    %p71 = scmp.ne.s32.totalorder %s56, %s70
    %p72 = scmp.eq.s32.totalorder %s25, 0
    %p73 = por %p71, %p72
    %s75 = sadd.s32 %s74, 1
    %p78 = scmp.eq.s32.totalorder %s19, 1
    %p79 = scmp.ne.s32.totalorder %s74, %s76
    %p80 = scmp.eq.s32.totalorder %s19, 0
    %p81 = por %p79, %p80
    %p82 = scmp.ne.s32.totalorder %s74, %s76
    %p83 = scmp.eq.s32.totalorder %s24, 1
    %p84 = por %p82, %p83
    %p85 = scmp.ne.s32.totalorder %s76, %s77
    %p86 = scmp.eq.s32.totalorder %s24, 0
    %p87 = por %p85, %p86
    %p88 = scmp.ne.s32.totalorder %s76, %s77
    %p89 = scmp.eq.s32.totalorder %s25, 1
    %p90 = por %p88, %p89
    %p92 = scmp.ne.s32.totalorder %s77, %s91
    %p93 = scmp.eq.s32.totalorder %s25, 0
    %p94 = por %p92, %p93
    %s96 = sadd.s32 %s95, 1
    %p99 = scmp.eq.s32.totalorder %s19, 1
    %p100 = scmp.ne.s32.totalorder %s95, %s97
    %p101 = scmp.eq.s32.totalorder %s19, 0
    %p102 = por %p100, %p101
    %p103 = scmp.ne.s32.totalorder %s95, %s97
    %p104 = scmp.eq.s32.totalorder %s24, 1
    %p105 = por %p103, %p104
    %p106 = scmp.ne.s32.totalorder %s97, %s98
    %p107 = scmp.eq.s32.totalorder %s24, 0
    %p108 = por %p106, %p107
    %p109 = scmp.ne.s32.totalorder %s97, %s98
    %p110 = scmp.eq.s32.totalorder %s25, 1
    %p111 = por %p109, %p110
    %p113 = scmp.ne.s32.totalorder %s98, %s112
    %p114 = scmp.eq.s32.totalorder %s25, 0
    %p115 = por %p113, %p114
    %s117 = sadd.s32 %s116, 1
    %p120 = scmp.eq.s32.totalorder %s19, 1
    %p121 = scmp.ne.s32.totalorder %s116, %s118
    %p122 = scmp.eq.s32.totalorder %s19, 0
    %p123 = por %p121, %p122
    %p124 = scmp.ne.s32.totalorder %s116, %s118
    %p125 = scmp.eq.s32.totalorder %s24, 1
    %p126 = por %p124, %p125
    %p127 = scmp.ne.s32.totalorder %s118, %s119
    %p128 = scmp.eq.s32.totalorder %s24, 0
    %p129 = por %p127, %p128
    %p130 = scmp.ne.s32.totalorder %s118, %s119
    %p131 = scmp.eq.s32.totalorder %s25, 1
    %p132 = por %p130, %p131
    %p134 = scmp.ne.s32.totalorder %s119, %s133
    %p135 = scmp.eq.s32.totalorder %s25, 0
    %p136 = por %p134, %p135
    %s138 = sadd.s32 %s137, 1
    %p141 = scmp.eq.s32.totalorder %s19, 1
    %p142 = scmp.ne.s32.totalorder %s137, %s139
    %p143 = scmp.eq.s32.totalorder %s19, 0
    %p144 = por %p142, %p143
    %p145 = scmp.ne.s32.totalorder %s137, %s139
    %p146 = scmp.eq.s32.totalorder %s24, 1
    %p147 = por %p145, %p146
    %p148 = scmp.ne.s32.totalorder %s139, %s140
    %p149 = scmp.eq.s32.totalorder %s24, 0
    %p150 = por %p148, %p149
    %p151 = scmp.ne.s32.totalorder %s139, %s140
    %p152 = scmp.eq.s32.totalorder %s25, 1
    %p153 = por %p151, %p152
    %p155 = scmp.ne.s32.totalorder %s140, %s154
    %p156 = scmp.eq.s32.totalorder %s25, 0
    %p157 = por %p155, %p156
    %s159 = sadd.s32 %s158, 1
    %p162 = scmp.eq.s32.totalorder %s19, 1
    %p163 = scmp.ne.s32.totalorder %s158, %s160
    %p164 = scmp.eq.s32.totalorder %s19, 0
    %p165 = por %p163, %p164
    %p166 = scmp.ne.s32.totalorder %s158, %s160
    %p167 = scmp.eq.s32.totalorder %s24, 1
    %p168 = por %p166, %p167
    %p169 = scmp.ne.s32.totalorder %s160, %s161
    %p170 = scmp.eq.s32.totalorder %s24, 0
    %p171 = por %p169, %p170
    %p172 = scmp.ne.s32.totalorder %s160, %s161
    %p173 = scmp.eq.s32.totalorder %s25, 1
    %p174 = por %p172, %p173
    %p176 = scmp.ne.s32.totalorder %s161, %s175
    %p177 = scmp.eq.s32.totalorder %s25, 0
    %p178 = por %p176, %p177
    %s180 = sadd.s32 %s179, 1
    %p183 = scmp.eq.s32.totalorder %s19, 1
    %p184 = scmp.ne.s32.totalorder %s179, %s181
    %p185 = scmp.eq.s32.totalorder %s19, 0
    %p186 = por %p184, %p185
    %p187 = scmp.ne.s32.totalorder %s179, %s181
    %p188 = scmp.eq.s32.totalorder %s24, 1
    %p189 = por %p187, %p188
    %p190 = scmp.ne.s32.totalorder %s181, %s182
    %p191 = scmp.eq.s32.totalorder %s24, 0
    %p192 = por %p190, %p191
    %p193 = scmp.ne.s32.totalorder %s181, %s182
    %p194 = scmp.eq.s32.totalorder %s25, 1
    %p195 = por %p193, %p194
    %p197 = scmp.ne.s32.totalorder %s182, %s196
    %p198 = scmp.eq.s32.totalorder %s25, 0
    %p199 = por %p197, %p198
    %s201 = sadd.s32 %s200, 1
    %p204 = scmp.eq.s32.totalorder %s19, 1
    %p205 = scmp.ne.s32.totalorder %s200, %s202
    %p206 = scmp.eq.s32.totalorder %s19, 0
    %p207 = por %p205, %p206
    %p208 = scmp.ne.s32.totalorder %s200, %s202
    %p209 = scmp.eq.s32.totalorder %s24, 1
    %p210 = por %p208, %p209
    %p211 = scmp.ne.s32.totalorder %s202, %s203
    %p212 = scmp.eq.s32.totalorder %s24, 0
    %p213 = por %p211, %p212
    %p214 = scmp.ne.s32.totalorder %s202, %s203
    %p215 = scmp.eq.s32.totalorder %s25, 1
    %p216 = por %p214, %p215
    %p218 = scmp.ne.s32.totalorder %s203, %s217
    %p219 = scmp.eq.s32.totalorder %s25, 0
    %p220 = por %p218, %p219
    %s222 = sadd.s32 %s221, 1
    %p225 = scmp.eq.s32.totalorder %s19, 1
    %p226 = scmp.ne.s32.totalorder %s221, %s223
    %p227 = scmp.eq.s32.totalorder %s19, 0
    %p228 = por %p226, %p227
    %p229 = scmp.ne.s32.totalorder %s221, %s223
    %p230 = scmp.eq.s32.totalorder %s24, 1
    %p231 = por %p229, %p230
    %p232 = scmp.ne.s32.totalorder %s223, %s224
    %p233 = scmp.eq.s32.totalorder %s24, 0
    %p234 = por %p232, %p233
    %p235 = scmp.ne.s32.totalorder %s223, %s224
    %p236 = scmp.eq.s32.totalorder %s25, 1
    %p237 = por %p235, %p236
    %p239 = scmp.ne.s32.totalorder %s224, %s238
    %p240 = scmp.eq.s32.totalorder %s25, 0
    %p241 = por %p239, %p240
    %s243 = sadd.s32 %s242, 1
    %p246 = scmp.eq.s32.totalorder %s19, 1
    %p247 = scmp.ne.s32.totalorder %s242, %s244
    %p248 = scmp.eq.s32.totalorder %s19, 0
    %p249 = por %p247, %p248
    %p250 = scmp.ne.s32.totalorder %s242, %s244
    %p251 = scmp.eq.s32.totalorder %s24, 1
    %p252 = por %p250, %p251
    %p253 = scmp.ne.s32.totalorder %s244, %s245
    %p254 = scmp.eq.s32.totalorder %s24, 0
    %p255 = por %p253, %p254
    %p256 = scmp.ne.s32.totalorder %s244, %s245
    %p257 = scmp.eq.s32.totalorder %s25, 1
    %p258 = por %p256, %p257
    %p260 = scmp.ne.s32.totalorder %s245, %s259
    %p261 = scmp.eq.s32.totalorder %s25, 0
    %p262 = por %p260, %p261
    %s263 = ssub.s32 %s19, %s26
    %p264 = scmp.eq.s32.totalorder %s263, 0
    %s266 = sadd.s32 %s265, 1
    %s267 = scalar_select %p264, %s265, %s266
    %p270 = pneg %p264
    %p271 = scmp.eq.s32.totalorder %s19, 1
    %p272 = por %p270, %p271
    %p273 = scmp.ne.s32.totalorder %s265, %s268
    %p274 = scmp.eq.s32.totalorder %s19, 0
    %p275 = por %p273, %p274
    %p276 = scmp.ne.s32.totalorder %s265, %s268
    %p277 = scmp.eq.s32.totalorder %s24, 1
    %p278 = por %p276, %p277
    %p279 = scmp.ne.s32.totalorder %s268, %s269
    %p280 = scmp.eq.s32.totalorder %s24, 0
    %p281 = por %p279, %p280
    %p282 = scmp.ne.s32.totalorder %s268, %s269
    %p283 = scmp.eq.s32.totalorder %s25, 1
    %p284 = por %p282, %p283
    %p286 = scmp.ne.s32.totalorder %s269, %s285
    %p287 = scmp.eq.s32.totalorder %s25, 0
    %p288 = por %p286, %p287
    %p289 = scmp.le.s32.totalorder 1, %s19
    %p290 = scmp.lt.s32.totalorder %s19, 3
    %p291 = pnand %p289, %p290
    %p292 = pneg %p291
    // Predicated region
    $region9: #{inr_forward.1} parent=5 // pred_check
      _
    $region10: #{inr_forward.1} parent=5 // pred_check_branch
      %294 = sbr.rel (%p291) target = $region12
    $region11: #{inr_forward.1} parent=5 // pred_region
      %s295 = ssub.s32 %s19, 1
      // Predicated region
      $region13: #{inr_forward.1} parent=11 // pred_check
        %p296 = pneg %p66
      $region14: #{inr_forward.1} parent=11 // pred_check_branch
        %298 = sbr.rel (%p296) target = $region16
      $region15: #{inr_forward.1} parent=11 // pred_region
        _
      $region16: #{inr_forward.1} parent=11 // pred_fallthru
        _
      // Predicated region
      $region17: #{inr_forward.1} parent=11 // pred_check
        %p299 = pneg %p87
      $region18: #{inr_forward.1} parent=11 // pred_check_branch
        %301 = sbr.rel (%p299) target = $region20
      $region19: #{inr_forward.1} parent=11 // pred_region
        _
      $region20: #{inr_forward.1} parent=11 // pred_fallthru
        _
      // Predicated region
      $region21: #{inr_forward.1} parent=11 // pred_check
        %p302 = pneg %p108
      $region22: #{inr_forward.1} parent=11 // pred_check_branch
        %304 = sbr.rel (%p302) target = $region24
      $region23: #{inr_forward.1} parent=11 // pred_region
        _
      $region24: #{inr_forward.1} parent=11 // pred_fallthru
        _
      // Predicated region
      $region25: #{inr_forward.1} parent=11 // pred_check
        %p305 = pneg %p129
      $region26: #{inr_forward.1} parent=11 // pred_check_branch
        %307 = sbr.rel (%p305) target = $region28
      $region27: #{inr_forward.1} parent=11 // pred_region
        _
      $region28: #{inr_forward.1} parent=11 // pred_fallthru
        _
      // Predicated region
      $region29: #{inr_forward.1} parent=11 // pred_check
        %p308 = pneg %p150
      $region30: #{inr_forward.1} parent=11 // pred_check_branch
        %310 = sbr.rel (%p308) target = $region32
      $region31: #{inr_forward.1} parent=11 // pred_region
        _
      $region32: #{inr_forward.1} parent=11 // pred_fallthru
        _
      // Predicated region
      $region33: #{inr_forward.1} parent=11 // pred_check
        %p311 = pneg %p171
      $region34: #{inr_forward.1} parent=11 // pred_check_branch
        %313 = sbr.rel (%p311) target = $region36
      $region35: #{inr_forward.1} parent=11 // pred_region
        _
      $region36: #{inr_forward.1} parent=11 // pred_fallthru
        _
      // Predicated region
      $region37: #{inr_forward.1} parent=11 // pred_check
        %p314 = pneg %p192
      $region38: #{inr_forward.1} parent=11 // pred_check_branch
        %316 = sbr.rel (%p314) target = $region40
      $region39: #{inr_forward.1} parent=11 // pred_region
        _
      $region40: #{inr_forward.1} parent=11 // pred_fallthru
        _
      // Predicated region
      $region41: #{inr_forward.1} parent=11 // pred_check
        %p317 = pneg %p213
      $region42: #{inr_forward.1} parent=11 // pred_check_branch
        %319 = sbr.rel (%p317) target = $region44
      $region43: #{inr_forward.1} parent=11 // pred_region
        _
      $region44: #{inr_forward.1} parent=11 // pred_fallthru
        _
      // Predicated region
      $region45: #{inr_forward.1} parent=11 // pred_check
        %p320 = pneg %p234
      $region46: #{inr_forward.1} parent=11 // pred_check_branch
        %322 = sbr.rel (%p320) target = $region48
      $region47: #{inr_forward.1} parent=11 // pred_region
        _
      $region48: #{inr_forward.1} parent=11 // pred_fallthru
        _
      // Predicated region
      $region49: #{inr_forward.1} parent=11 // pred_check
        %p323 = pneg %p255
      $region50: #{inr_forward.1} parent=11 // pred_check_branch
        %325 = sbr.rel (%p323) target = $region52
      $region51: #{inr_forward.1} parent=11 // pred_region
        _
      $region52: #{inr_forward.1} parent=11 // pred_fallthru
        _
    $region12: #{inr_forward.1} parent=5 // pred_fallthru
      _
    %p326 = scmp.lt.s32.totalorder %s19, 2
    // Predicated region
    $region53: #{inr_forward.1} parent=5 // pred_check
      %p327 = pneg %p326
    $region54: #{inr_forward.1} parent=5 // pred_check_branch
      %329 = sbr.rel (%p327) target = $region56
    $region55: #{inr_forward.1} parent=5 // pred_region
      // Predicated region
      $region57: #{inr_forward.1} parent=55 // pred_check
        %p330 = pneg %p39
      $region58: #{inr_forward.1} parent=55 // pred_check_branch
        %332 = sbr.rel (%p330) target = $region60
      $region59: #{inr_forward.1} parent=55 // pred_region
        %s333 = smul.u32 32, %s19
        %p334 = scmp.lt.s32.totalorder %s333, 63
        %s335 = scalar_select %p334, %s333, 63
        %s336 = smul.addr %s335, 8
        %s337 = scalar_lea.vmem %s0, %s336
        %s338 = smul.u32 32, %s19
      $region60: #{inr_forward.1} parent=55 // pred_fallthru
        _
    $region56: #{inr_forward.1} parent=5 // pred_fallthru
      _
    %p339 = scmp.le.s32.totalorder 1, %s19
    %p340 = scmp.lt.s32.totalorder %s19, 3
    %p341 = pnand %p339, %p340
    %p342 = pneg %p341
    // Predicated region
    $region61: #{inr_forward.1} parent=5 // pred_check
      _
    $region62: #{inr_forward.1} parent=5 // pred_check_branch
      %344 = sbr.rel (%p341) target = $region64
    $region63: #{inr_forward.1} parent=5 // pred_region
      %s345 = ssub.s32 %s19, 1
      %s346 = smul.u32 32, %s24
      %p347 = scmp.lt.s32.totalorder %s346, 63
      %s348 = scalar_select %p347, %s346, 63
      %s349 = smul.addr %s348, 8
      %s350 = scalar_lea.vmem %s0, %s349
      %p351 = pneg %p45
      %p352 = pneg %p42
      %p353 = pneg %p66
      %p354 = pneg %p63
      %p355 = pneg %p87
      %p356 = pneg %p84
      %p357 = pneg %p108
      %p358 = pneg %p105
      %p359 = pneg %p129
      %p360 = pneg %p126
      %p361 = pneg %p150
      %p362 = pneg %p147
      %p363 = pneg %p171
      %p364 = pneg %p168
      %p365 = pneg %p192
      %p366 = pneg %p189
      %p367 = pneg %p213
      %p368 = pneg %p210
      %p369 = pneg %p234
      %p370 = pneg %p231
      %p371 = pneg %p255
      %p372 = pneg %p252
      %p373 = pneg %p281
      %p374 = pneg %p278
      %s375 = smul.u32 32, %s24
      %p376 = scmp.lt.s32.totalorder %s375, 63
      %s377 = scalar_select %p376, %s375, 63
      %s378 = smul.addr %s377, 8
      %s379 = scalar_lea.vmem %s11, %s378
      %s380 = smul.u32 32, %s24
      %p381 = scmp.lt.s32.totalorder %s380, 63
      %s382 = scalar_select %p381, %s380, 63
      %s383 = smul.addr %s382, 8
      %s384 = scalar_lea.vmem %s0, %s383
      %s385 = smul.u32 32, %s24
      %s386 = smul.u32 32, %s24
      %p387 = scmp.lt.s32.totalorder %s386, 63
      %s388 = scalar_select %p387, %s386, 63
      %s389 = smul.addr %s388, 8
      %s390 = scalar_lea.vmem %s11, %s389
      %s391 = smul.u32 32, %s24
      %v393 = vld [vmem:[%s384] sm:$0xff]
      %v394 = vld [vmem:[%s384 + $0x8] sm:$0xff]
      %v395 = vld [vmem:[%s384 + $0x10] sm:$0xff]
      %v396 = vld [vmem:[%s384 + $0x18] sm:$0xff]
      %v397 = vld [vmem:[%s384 + $0x20] sm:$0xff]
      %v398 = vld [vmem:[%s384 + $0x28] sm:$0xff]
      %v399 = vld [vmem:[%s384 + $0x30] sm:$0xff]
      %v400 = vld [vmem:[%s384 + $0x38] sm:$0xff]
      %v401 = vld [vmem:[%s384 + $0x40] sm:$0xff]
      %v402 = vld [vmem:[%s384 + $0x48] sm:$0xff]
      %v403 = vld [vmem:[%s384 + $0x50] sm:$0xff]
      %v404 = vld [vmem:[%s384 + $0x58] sm:$0xff]
      %v405 = vld [vmem:[%s384 + $0x60] sm:$0xff]
      %v406 = vld [vmem:[%s384 + $0x68] sm:$0xff]
      %v407 = vld [vmem:[%s384 + $0x70] sm:$0xff]
      %v408 = vld [vmem:[%s384 + $0x78] sm:$0xff]
      %v409 = vld [vmem:[%s384 + $0x80] sm:$0xff]
      %v410 = vld [vmem:[%s384 + $0x88] sm:$0xff]
      %v411 = vld [vmem:[%s384 + $0x90] sm:$0xff]
      %v412 = vld [vmem:[%s384 + $0x98] sm:$0xff]
      %v413 = vld [vmem:[%s384 + $0xa0] sm:$0xff]
      %v414 = vld [vmem:[%s384 + $0xa8] sm:$0xff]
      %v415 = vld [vmem:[%s384 + $0xb0] sm:$0xff]
      %v416 = vld [vmem:[%s384 + $0xb8] sm:$0xff]
      %v417 = vld [vmem:[%s384 + $0xc0] sm:$0xff]
      %v418 = vld [vmem:[%s384 + $0xc8] sm:$0xff]
      %v419 = vld [vmem:[%s384 + $0xd0] sm:$0xff]
      %v420 = vld [vmem:[%s384 + $0xd8] sm:$0xff]
      %v421 = vld [vmem:[%s384 + $0xe0] sm:$0xff]
      %v422 = vld [vmem:[%s384 + $0xe8] sm:$0xff]
      %v423 = vld [vmem:[%s384 + $0xf0] sm:$0xff]
      %v424 = vld [vmem:[%s384 + $0xf8] sm:$0xff]
      %v425 = vld [vmem:[%s1] sm:$0xf]
      %v426 = vld [vmem:[%s2] sm:$0x3]
      %v428 = vlaneseq
      %v429 = vshrl.u32 %v428, 7
      %v430 = vsub.s32 0, %v429
      %v431 = vrot.slane %v426, %v430
      %v432 = vlaneseq
      %v433 = vshrl.u32 %v432, 7
      %v434 = vsub.s32 1, %v433
      %v435 = vrot.slane %v426, %v434
      %v440 = vunpack.c.l.s4 1983009808
      %v441 = vunpack.c.0.s8 %v440
      %v442 = vlaneseq
      %v443 = vshrl.u32 %v442, 7
      %v444 = vsub.s32 %v441, %v443
      %v445 = vrot.slane %v425, %v444
      %v446 = vcombine.high %v445, %v445
      %vm447 = vcmask 15360
      %v449 = vsel %vm447, %v393, 0
      %v452 = vsel %vm447, %v394, 0
      %v455 = vsel %vm447, %v395, 0
      %v458 = vsel %vm447, %v396, 0
      %v461 = vsel %vm447, %v397, 0
      %v464 = vsel %vm447, %v398, 0
      %v467 = vsel %vm447, %v399, 0
      %v470 = vsel %vm447, %v400, 0
      %v473 = vsel %vm447, %v401, 0
      %v476 = vsel %vm447, %v402, 0
      %v479 = vsel %vm447, %v403, 0
      %v482 = vsel %vm447, %v404, 0
      %v485 = vsel %vm447, %v405, 0
      %v488 = vsel %vm447, %v406, 0
      %v491 = vsel %vm447, %v407, 0
      %v494 = vsel %vm447, %v408, 0
      %v497 = vsel %vm447, %v409, 0
      %v500 = vsel %vm447, %v410, 0
      %v503 = vsel %vm447, %v411, 0
      %v506 = vsel %vm447, %v412, 0
      %v509 = vsel %vm447, %v413, 0
      %v512 = vsel %vm447, %v414, 0
      %v515 = vsel %vm447, %v415, 0
      %v518 = vsel %vm447, %v416, 0
      %v521 = vsel %vm447, %v417, 0
      %v524 = vsel %vm447, %v418, 0
      %v527 = vsel %vm447, %v419, 0
      %v530 = vsel %vm447, %v420, 0
      %v533 = vsel %vm447, %v421, 0
      %v536 = vsel %vm447, %v422, 0
      %v539 = vsel %vm447, %v423, 0
      %v542 = vsel %vm447, %v424, 0
      %vm544 = vcmask 1041408
      %v545 = vsel %vm544, %v445, 0
      %v547 = vsel %vm544, %v446, 0
      %549 = vmatprep.subr.mxu0 0.0
      %550 = vmatpush1.msra.mxu0 0.0
      %551 = vmatprep.subr.mxu0 0.0
      %552 = vmatpush1.msra.mxu0 0.0
      %553 = vmatprep.subr.mxu0 0.0
      %554 = vmatpush1.msra.mxu0 0.0
      %555 = vmatprep.subr.mxu0 0.0
      %556 = vmatpush1.msra.mxu0 0.0
      %557 = vmatprep.subr.mxu0 0.0
      %558 = vmatpush1.msra.mxu0 0.0
      %559 = vmatprep.subr.mxu0 0.0
      %560 = vmatpush1.msra.mxu0 0.0
      %561 = vmatprep.subr.mxu0 0.0
      %562 = vmatpush1.msra.mxu0 0.0
      %563 = vmatprep.subr.mxu0 0.0
      %564 = vmatpush1.msra.mxu0 0.0
      %565 = vmatprep.subr.mxu0 0.0
      %566 = vmatpush1.msra.mxu0 0.0
      %567 = vmatprep.subr.mxu0 0.0
      %568 = vmatpush1.msra.mxu0 0.0
      %569 = vmatprep.subr.mxu0 0.0
      %570 = vmatpush1.msra.mxu0 0.0
      %571 = vmatprep.subr.mxu0 0.0
      %572 = vmatpush1.msra.mxu0 0.0
      %573 = vmatprep.subr.mxu0 0.0
      %574 = vmatpush1.msra.mxu0 0.0
      %575 = vmatprep.subr.mxu0 0.0
      %576 = vmatpush1.msra.mxu0 0.0
      %577 = vmatprep.subr.mxu0 0.0
      %578 = vmatpush1.msra.mxu0 0.0
      %579 = vmatprep.subr.mxu0 %v547
      %580 = vmatpush1.msra.mxu0 %v545
      %581 = vmatprep.subr.mxu0 0.0
      %582 = vmatpush2.msra.mxu0 0.0
      %583 = vmatprep.subr.mxu0 0.0
      %584 = vmatpush2.msra.mxu0 0.0
      %585 = vmatprep.subr.mxu0 0.0
      %586 = vmatpush2.msra.mxu0 0.0
      %587 = vmatprep.subr.mxu0 0.0
      %588 = vmatpush2.msra.mxu0 0.0
      %589 = vmatprep.subr.mxu0 0.0
      %590 = vmatpush2.msra.mxu0 0.0
      %591 = vmatprep.subr.mxu0 0.0
      %592 = vmatpush2.msra.mxu0 0.0
      %593 = vmatprep.subr.mxu0 0.0
      %594 = vmatpush2.msra.mxu0 0.0
      %595 = vmatprep.subr.mxu0 0.0
      %596 = vmatpush2.msra.mxu0 0.0
      %597 = vmatprep.subr.mxu0 0.0
      %598 = vmatpush2.msra.mxu0 0.0
      %599 = vmatprep.subr.mxu0 0.0
      %600 = vmatpush2.msra.mxu0 0.0
      %601 = vmatprep.subr.mxu0 0.0
      %602 = vmatpush2.msra.mxu0 0.0
      %603 = vmatprep.subr.mxu0 0.0
      %604 = vmatpush2.msra.mxu0 0.0
      %605 = vmatprep.subr.mxu0 0.0
      %606 = vmatpush2.msra.mxu0 0.0
      %607 = vmatprep.subr.mxu0 0.0
      %608 = vmatpush2.msra.mxu0 0.0
      %609 = vmatprep.subr.mxu0 0.0
      %610 = vmatpush2.msra.mxu0 0.0
      %611 = vmatprep.subr.mxu0 0.0
      %612 = vmatpush2.msra.mxu0 0.0
      %613 = vmatprep.mubr.f32.mxu0 0.0
      %614 = vmatmul.mubr.f32.gmra.mxu0 %v449
      %v615 = vpop.f32.mrf.mxu0
      %v616 = vadd.f32 %v431, %v615
      %v617 = vpop.f32.mrf.mxu0
      %v618 = vadd.f32 %v435, %v617
      %619 = vmatprep.mubr.f32.mxu0 0.0
      %620 = vmatmul.mubr.f32.gmra.mxu0 %v452
      %v621 = vpop.f32.mrf.mxu0
      %v622 = vadd.f32 %v431, %v621
      %v623 = vpop.f32.mrf.mxu0
      %v624 = vadd.f32 %v435, %v623
      %625 = vmatprep.mubr.f32.mxu0 0.0
      %626 = vmatmul.mubr.f32.gmra.mxu0 %v455
      %v627 = vpop.f32.mrf.mxu0
      %v628 = vadd.f32 %v431, %v627
      %v629 = vpop.f32.mrf.mxu0
      %v630 = vadd.f32 %v435, %v629
      %631 = vmatprep.mubr.f32.mxu0 0.0
      %632 = vmatmul.mubr.f32.gmra.mxu0 %v458
      %v633 = vpop.f32.mrf.mxu0
      %v634 = vadd.f32 %v431, %v633
      %v635 = vpop.f32.mrf.mxu0
      %v636 = vadd.f32 %v435, %v635
      %637 = vmatprep.mubr.f32.mxu0 0.0
      %638 = vmatmul.mubr.f32.gmra.mxu0 %v461
      %v639 = vpop.f32.mrf.mxu0
      %v640 = vadd.f32 %v431, %v639
      %v641 = vpop.f32.mrf.mxu0
      %v642 = vadd.f32 %v435, %v641
      %643 = vmatprep.mubr.f32.mxu0 0.0
      %644 = vmatmul.mubr.f32.gmra.mxu0 %v464
      %v645 = vpop.f32.mrf.mxu0
      %v646 = vadd.f32 %v431, %v645
      %v647 = vpop.f32.mrf.mxu0
      %v648 = vadd.f32 %v435, %v647
      %649 = vmatprep.mubr.f32.mxu0 0.0
      %650 = vmatmul.mubr.f32.gmra.mxu0 %v467
      %v651 = vpop.f32.mrf.mxu0
      %v652 = vadd.f32 %v431, %v651
      %v653 = vpop.f32.mrf.mxu0
      %v654 = vadd.f32 %v435, %v653
      %655 = vmatprep.mubr.f32.mxu0 0.0
      %656 = vmatmul.mubr.f32.gmra.mxu0 %v470
      %v657 = vpop.f32.mrf.mxu0
      %v658 = vadd.f32 %v431, %v657
      %v659 = vpop.f32.mrf.mxu0
      %v660 = vadd.f32 %v435, %v659
      %661 = vmatprep.mubr.f32.mxu0 0.0
      %662 = vmatmul.mubr.f32.gmra.mxu0 %v473
      %v663 = vpop.f32.mrf.mxu0
      %v664 = vadd.f32 %v431, %v663
      %v665 = vpop.f32.mrf.mxu0
      %v666 = vadd.f32 %v435, %v665
      %667 = vmatprep.mubr.f32.mxu0 0.0
      %668 = vmatmul.mubr.f32.gmra.mxu0 %v476
      %v669 = vpop.f32.mrf.mxu0
      %v670 = vadd.f32 %v431, %v669
      %v671 = vpop.f32.mrf.mxu0
      %v672 = vadd.f32 %v435, %v671
      %673 = vmatprep.mubr.f32.mxu0 0.0
      %674 = vmatmul.mubr.f32.gmra.mxu0 %v479
      %v675 = vpop.f32.mrf.mxu0
      %v676 = vadd.f32 %v431, %v675
      %v677 = vpop.f32.mrf.mxu0
      %v678 = vadd.f32 %v435, %v677
      %679 = vmatprep.mubr.f32.mxu0 0.0
      %680 = vmatmul.mubr.f32.gmra.mxu0 %v482
      %v681 = vpop.f32.mrf.mxu0
      %v682 = vadd.f32 %v431, %v681
      %v683 = vpop.f32.mrf.mxu0
      %v684 = vadd.f32 %v435, %v683
      %685 = vmatprep.mubr.f32.mxu0 0.0
      %686 = vmatmul.mubr.f32.gmra.mxu0 %v485
      %v687 = vpop.f32.mrf.mxu0
      %v688 = vadd.f32 %v431, %v687
      %v689 = vpop.f32.mrf.mxu0
      %v690 = vadd.f32 %v435, %v689
      %691 = vmatprep.mubr.f32.mxu0 0.0
      %692 = vmatmul.mubr.f32.gmra.mxu0 %v488
      %v693 = vpop.f32.mrf.mxu0
      %v694 = vadd.f32 %v431, %v693
      %v695 = vpop.f32.mrf.mxu0
      %v696 = vadd.f32 %v435, %v695
      %697 = vmatprep.mubr.f32.mxu0 0.0
      %698 = vmatmul.mubr.f32.gmra.mxu0 %v491
      %v699 = vpop.f32.mrf.mxu0
      %v700 = vadd.f32 %v431, %v699
      %v701 = vpop.f32.mrf.mxu0
      %v702 = vadd.f32 %v435, %v701
      %703 = vmatprep.mubr.f32.mxu0 0.0
      %704 = vmatmul.mubr.f32.gmra.mxu0 %v494
      %v705 = vpop.f32.mrf.mxu0
      %v706 = vadd.f32 %v431, %v705
      %v707 = vpop.f32.mrf.mxu0
      %v708 = vadd.f32 %v435, %v707
      %709 = vmatprep.mubr.f32.mxu0 0.0
      %710 = vmatmul.mubr.f32.gmra.mxu0 %v497
      %v711 = vpop.f32.mrf.mxu0
      %v712 = vadd.f32 %v431, %v711
      %v713 = vpop.f32.mrf.mxu0
      %v714 = vadd.f32 %v435, %v713
      %715 = vmatprep.mubr.f32.mxu0 0.0
      %716 = vmatmul.mubr.f32.gmra.mxu0 %v500
      %v717 = vpop.f32.mrf.mxu0
      %v718 = vadd.f32 %v431, %v717
      %v719 = vpop.f32.mrf.mxu0
      %v720 = vadd.f32 %v435, %v719
      %721 = vmatprep.mubr.f32.mxu0 0.0
      %722 = vmatmul.mubr.f32.gmra.mxu0 %v503
      %v723 = vpop.f32.mrf.mxu0
      %v724 = vadd.f32 %v431, %v723
      %v725 = vpop.f32.mrf.mxu0
      %v726 = vadd.f32 %v435, %v725
      %727 = vmatprep.mubr.f32.mxu0 0.0
      %728 = vmatmul.mubr.f32.gmra.mxu0 %v506
      %v729 = vpop.f32.mrf.mxu0
      %v730 = vadd.f32 %v431, %v729
      %v731 = vpop.f32.mrf.mxu0
      %v732 = vadd.f32 %v435, %v731
      %733 = vmatprep.mubr.f32.mxu0 0.0
      %734 = vmatmul.mubr.f32.gmra.mxu0 %v509
      %v735 = vpop.f32.mrf.mxu0
      %v736 = vadd.f32 %v431, %v735
      %v737 = vpop.f32.mrf.mxu0
      %v738 = vadd.f32 %v435, %v737
      %739 = vmatprep.mubr.f32.mxu0 0.0
      %740 = vmatmul.mubr.f32.gmra.mxu0 %v512
      %v741 = vpop.f32.mrf.mxu0
      %v742 = vadd.f32 %v431, %v741
      %v743 = vpop.f32.mrf.mxu0
      %v744 = vadd.f32 %v435, %v743
      %745 = vmatprep.mubr.f32.mxu0 0.0
      %746 = vmatmul.mubr.f32.gmra.mxu0 %v515
      %v747 = vpop.f32.mrf.mxu0
      %v748 = vadd.f32 %v431, %v747
      %v749 = vpop.f32.mrf.mxu0
      %v750 = vadd.f32 %v435, %v749
      %751 = vmatprep.mubr.f32.mxu0 0.0
      %752 = vmatmul.mubr.f32.gmra.mxu0 %v518
      %v753 = vpop.f32.mrf.mxu0
      %v754 = vadd.f32 %v431, %v753
      %v755 = vpop.f32.mrf.mxu0
      %v756 = vadd.f32 %v435, %v755
      %757 = vmatprep.mubr.f32.mxu0 0.0
      %758 = vmatmul.mubr.f32.gmra.mxu0 %v521
      %v759 = vpop.f32.mrf.mxu0
      %v760 = vadd.f32 %v431, %v759
      %v761 = vpop.f32.mrf.mxu0
      %v762 = vadd.f32 %v435, %v761
      %763 = vmatprep.mubr.f32.mxu0 0.0
      %764 = vmatmul.mubr.f32.gmra.mxu0 %v524
      %v765 = vpop.f32.mrf.mxu0
      %v766 = vadd.f32 %v431, %v765
      %v767 = vpop.f32.mrf.mxu0
      %v768 = vadd.f32 %v435, %v767
      %769 = vmatprep.mubr.f32.mxu0 0.0
      %770 = vmatmul.mubr.f32.gmra.mxu0 %v527
      %v771 = vpop.f32.mrf.mxu0
      %v772 = vadd.f32 %v431, %v771
      %v773 = vpop.f32.mrf.mxu0
      %v774 = vadd.f32 %v435, %v773
      %775 = vmatprep.mubr.f32.mxu0 0.0
      %776 = vmatmul.mubr.f32.gmra.mxu0 %v530
      %v777 = vpop.f32.mrf.mxu0
      %v778 = vadd.f32 %v431, %v777
      %v779 = vpop.f32.mrf.mxu0
      %v780 = vadd.f32 %v435, %v779
      %781 = vmatprep.mubr.f32.mxu0 0.0
      %782 = vmatmul.mubr.f32.gmra.mxu0 %v533
      %v783 = vpop.f32.mrf.mxu0
      %v784 = vadd.f32 %v431, %v783
      %v785 = vpop.f32.mrf.mxu0
      %v786 = vadd.f32 %v435, %v785
      %787 = vmatprep.mubr.f32.mxu0 0.0
      %788 = vmatmul.mubr.f32.gmra.mxu0 %v536
      %v789 = vpop.f32.mrf.mxu0
      %v790 = vadd.f32 %v431, %v789
      %v791 = vpop.f32.mrf.mxu0
      %v792 = vadd.f32 %v435, %v791
      %793 = vmatprep.mubr.f32.mxu0 0.0
      %794 = vmatmul.mubr.f32.gmra.mxu0 %v539
      %v795 = vpop.f32.mrf.mxu0
      %v796 = vadd.f32 %v431, %v795
      %v797 = vpop.f32.mrf.mxu0
      %v798 = vadd.f32 %v435, %v797
      %799 = vmatprep.mubr.f32.mxu0 0.0
      %800 = vmatmul.mubr.f32.gmra.mxu0 %v542
      %v801 = vpop.f32.mrf.mxu0
      %v802 = vadd.f32 %v431, %v801
      %v803 = vpop.f32.mrf.mxu0
      %v804 = vadd.f32 %v435, %v803
      %805 = vdwg.mxu0
      %v806 = vmul.f32 %v616, 0.15915494
      %v807 = vmul.f32 %v618, 0.15915494
      %v808 = vmul.f32 %v622, 0.15915494
      %v809 = vmul.f32 %v624, 0.15915494
      %v810 = vmul.f32 %v628, 0.15915494
      %v811 = vmul.f32 %v630, 0.15915494
      %v812 = vmul.f32 %v634, 0.15915494
      %v813 = vmul.f32 %v636, 0.15915494
      %v814 = vmul.f32 %v640, 0.15915494
      %v815 = vmul.f32 %v642, 0.15915494
      %v816 = vmul.f32 %v646, 0.15915494
      %v817 = vmul.f32 %v648, 0.15915494
      %v818 = vmul.f32 %v652, 0.15915494
      %v819 = vmul.f32 %v654, 0.15915494
      %v820 = vmul.f32 %v658, 0.15915494
      %v821 = vmul.f32 %v660, 0.15915494
      %v822 = vmul.f32 %v664, 0.15915494
      %v823 = vmul.f32 %v666, 0.15915494
      %v824 = vmul.f32 %v670, 0.15915494
      %v825 = vmul.f32 %v672, 0.15915494
      %v826 = vmul.f32 %v676, 0.15915494
      %v827 = vmul.f32 %v678, 0.15915494
      %v828 = vmul.f32 %v682, 0.15915494
      %v829 = vmul.f32 %v684, 0.15915494
      %v830 = vmul.f32 %v688, 0.15915494
      %v831 = vmul.f32 %v690, 0.15915494
      %v832 = vmul.f32 %v694, 0.15915494
      %v833 = vmul.f32 %v696, 0.15915494
      %v834 = vmul.f32 %v700, 0.15915494
      %v835 = vmul.f32 %v702, 0.15915494
      %v836 = vmul.f32 %v706, 0.15915494
      %v837 = vmul.f32 %v708, 0.15915494
      %v838 = vmul.f32 %v712, 0.15915494
      %v839 = vmul.f32 %v714, 0.15915494
      %v840 = vmul.f32 %v718, 0.15915494
      %v841 = vmul.f32 %v720, 0.15915494
      %v842 = vmul.f32 %v724, 0.15915494
      %v843 = vmul.f32 %v726, 0.15915494
      %v844 = vmul.f32 %v730, 0.15915494
      %v845 = vmul.f32 %v732, 0.15915494
      %v846 = vmul.f32 %v736, 0.15915494
      %v847 = vmul.f32 %v738, 0.15915494
      %v848 = vmul.f32 %v742, 0.15915494
      %v849 = vmul.f32 %v744, 0.15915494
      %v850 = vmul.f32 %v748, 0.15915494
      %v851 = vmul.f32 %v750, 0.15915494
      %v852 = vmul.f32 %v754, 0.15915494
      %v853 = vmul.f32 %v756, 0.15915494
      %v854 = vmul.f32 %v760, 0.15915494
      %v855 = vmul.f32 %v762, 0.15915494
      %v856 = vmul.f32 %v766, 0.15915494
      %v857 = vmul.f32 %v768, 0.15915494
      %v858 = vmul.f32 %v772, 0.15915494
      %v859 = vmul.f32 %v774, 0.15915494
      %v860 = vmul.f32 %v778, 0.15915494
      %v861 = vmul.f32 %v780, 0.15915494
      %v862 = vmul.f32 %v784, 0.15915494
      %v863 = vmul.f32 %v786, 0.15915494
      %v864 = vmul.f32 %v790, 0.15915494
      %v865 = vmul.f32 %v792, 0.15915494
      %v866 = vmul.f32 %v796, 0.15915494
      %v867 = vmul.f32 %v798, 0.15915494
      %v868 = vmul.f32 %v802, 0.15915494
      %v869 = vmul.f32 %v804, 0.15915494
      %v870 = vadd.f32 %v806, 0.5
      %v871 = vadd.f32 %v807, 0.5
      %v872 = vadd.f32 %v808, 0.5
      %v873 = vadd.f32 %v809, 0.5
      %v874 = vadd.f32 %v810, 0.5
      %v875 = vadd.f32 %v811, 0.5
      %v876 = vadd.f32 %v812, 0.5
      %v877 = vadd.f32 %v813, 0.5
      %v878 = vadd.f32 %v814, 0.5
      %v879 = vadd.f32 %v815, 0.5
      %v880 = vadd.f32 %v816, 0.5
      %v881 = vadd.f32 %v817, 0.5
      %v882 = vadd.f32 %v818, 0.5
      %v883 = vadd.f32 %v819, 0.5
      %v884 = vadd.f32 %v820, 0.5
      %v885 = vadd.f32 %v821, 0.5
      %v886 = vadd.f32 %v822, 0.5
      %v887 = vadd.f32 %v823, 0.5
      %v888 = vadd.f32 %v824, 0.5
      %v889 = vadd.f32 %v825, 0.5
      %v890 = vadd.f32 %v826, 0.5
      %v891 = vadd.f32 %v827, 0.5
      %v892 = vadd.f32 %v828, 0.5
      %v893 = vadd.f32 %v829, 0.5
      %v894 = vadd.f32 %v830, 0.5
      %v895 = vadd.f32 %v831, 0.5
      %v896 = vadd.f32 %v832, 0.5
      %v897 = vadd.f32 %v833, 0.5
      %v898 = vadd.f32 %v834, 0.5
      %v899 = vadd.f32 %v835, 0.5
      %v900 = vadd.f32 %v836, 0.5
      %v901 = vadd.f32 %v837, 0.5
      %v902 = vadd.f32 %v838, 0.5
      %v903 = vadd.f32 %v839, 0.5
      %v904 = vadd.f32 %v840, 0.5
      %v905 = vadd.f32 %v841, 0.5
      %v906 = vadd.f32 %v842, 0.5
      %v907 = vadd.f32 %v843, 0.5
      %v908 = vadd.f32 %v844, 0.5
      %v909 = vadd.f32 %v845, 0.5
      %v910 = vadd.f32 %v846, 0.5
      %v911 = vadd.f32 %v847, 0.5
      %v912 = vadd.f32 %v848, 0.5
      %v913 = vadd.f32 %v849, 0.5
      %v914 = vadd.f32 %v850, 0.5
      %v915 = vadd.f32 %v851, 0.5
      %v916 = vadd.f32 %v852, 0.5
      %v917 = vadd.f32 %v853, 0.5
      %v918 = vadd.f32 %v854, 0.5
      %v919 = vadd.f32 %v855, 0.5
      %v920 = vadd.f32 %v856, 0.5
      %v921 = vadd.f32 %v857, 0.5
      %v922 = vadd.f32 %v858, 0.5
      %v923 = vadd.f32 %v859, 0.5
      %v924 = vadd.f32 %v860, 0.5
      %v925 = vadd.f32 %v861, 0.5
      %v926 = vadd.f32 %v862, 0.5
      %v927 = vadd.f32 %v863, 0.5
      %v928 = vadd.f32 %v864, 0.5
      %v929 = vadd.f32 %v865, 0.5
      %v930 = vadd.f32 %v866, 0.5
      %v931 = vadd.f32 %v867, 0.5
      %v932 = vadd.f32 %v868, 0.5
      %v933 = vadd.f32 %v869, 0.5
      %v934 = vfloor.f32 %v870
      %v935 = vfloor.f32 %v871
      %v936 = vfloor.f32 %v872
      %v937 = vfloor.f32 %v873
      %v938 = vfloor.f32 %v874
      %v939 = vfloor.f32 %v875
      %v940 = vfloor.f32 %v876
      %v941 = vfloor.f32 %v877
      %v942 = vfloor.f32 %v878
      %v943 = vfloor.f32 %v879
      %v944 = vfloor.f32 %v880
      %v945 = vfloor.f32 %v881
      %v946 = vfloor.f32 %v882
      %v947 = vfloor.f32 %v883
      %v948 = vfloor.f32 %v884
      %v949 = vfloor.f32 %v885
      %v950 = vfloor.f32 %v886
      %v951 = vfloor.f32 %v887
      %v952 = vfloor.f32 %v888
      %v953 = vfloor.f32 %v889
      %v954 = vfloor.f32 %v890
      %v955 = vfloor.f32 %v891
      %v956 = vfloor.f32 %v892
      %v957 = vfloor.f32 %v893
      %v958 = vfloor.f32 %v894
      %v959 = vfloor.f32 %v895
      %v960 = vfloor.f32 %v896
      %v961 = vfloor.f32 %v897
      %v962 = vfloor.f32 %v898
      %v963 = vfloor.f32 %v899
      %v964 = vfloor.f32 %v900
      %v965 = vfloor.f32 %v901
      %v966 = vfloor.f32 %v902
      %v967 = vfloor.f32 %v903
      %v968 = vfloor.f32 %v904
      %v969 = vfloor.f32 %v905
      %v970 = vfloor.f32 %v906
      %v971 = vfloor.f32 %v907
      %v972 = vfloor.f32 %v908
      %v973 = vfloor.f32 %v909
      %v974 = vfloor.f32 %v910
      %v975 = vfloor.f32 %v911
      %v976 = vfloor.f32 %v912
      %v977 = vfloor.f32 %v913
      %v978 = vfloor.f32 %v914
      %v979 = vfloor.f32 %v915
      %v980 = vfloor.f32 %v916
      %v981 = vfloor.f32 %v917
      %v982 = vfloor.f32 %v918
      %v983 = vfloor.f32 %v919
      %v984 = vfloor.f32 %v920
      %v985 = vfloor.f32 %v921
      %v986 = vfloor.f32 %v922
      %v987 = vfloor.f32 %v923
      %v988 = vfloor.f32 %v924
      %v989 = vfloor.f32 %v925
      %v990 = vfloor.f32 %v926
      %v991 = vfloor.f32 %v927
      %v992 = vfloor.f32 %v928
      %v993 = vfloor.f32 %v929
      %v994 = vfloor.f32 %v930
      %v995 = vfloor.f32 %v931
      %v996 = vfloor.f32 %v932
      %v997 = vfloor.f32 %v933
      %v998 = vmul.f32 %v934, 6.28125
      %v999 = vmul.f32 %v935, 6.28125
      %v1000 = vmul.f32 %v936, 6.28125
      %v1001 = vmul.f32 %v937, 6.28125
      %v1002 = vmul.f32 %v938, 6.28125
      %v1003 = vmul.f32 %v939, 6.28125
      %v1004 = vmul.f32 %v940, 6.28125
      %v1005 = vmul.f32 %v941, 6.28125
      %v1006 = vmul.f32 %v942, 6.28125
      %v1007 = vmul.f32 %v943, 6.28125
      %v1008 = vmul.f32 %v944, 6.28125
      %v1009 = vmul.f32 %v945, 6.28125
      %v1010 = vmul.f32 %v946, 6.28125
      %v1011 = vmul.f32 %v947, 6.28125
      %v1012 = vmul.f32 %v948, 6.28125
      %v1013 = vmul.f32 %v949, 6.28125
      %v1014 = vmul.f32 %v950, 6.28125
      %v1015 = vmul.f32 %v951, 6.28125
      %v1016 = vmul.f32 %v952, 6.28125
      %v1017 = vmul.f32 %v953, 6.28125
      %v1018 = vmul.f32 %v954, 6.28125
      %v1019 = vmul.f32 %v955, 6.28125
      %v1020 = vmul.f32 %v956, 6.28125
      %v1021 = vmul.f32 %v957, 6.28125
      %v1022 = vmul.f32 %v958, 6.28125
      %v1023 = vmul.f32 %v959, 6.28125
      %v1024 = vmul.f32 %v960, 6.28125
      %v1025 = vmul.f32 %v961, 6.28125
      %v1026 = vmul.f32 %v962, 6.28125
      %v1027 = vmul.f32 %v963, 6.28125
      %v1028 = vmul.f32 %v964, 6.28125
      %v1029 = vmul.f32 %v965, 6.28125
      %v1030 = vmul.f32 %v966, 6.28125
      %v1031 = vmul.f32 %v967, 6.28125
      %v1032 = vmul.f32 %v968, 6.28125
      %v1033 = vmul.f32 %v969, 6.28125
      %v1034 = vmul.f32 %v970, 6.28125
      %v1035 = vmul.f32 %v971, 6.28125
      %v1036 = vmul.f32 %v972, 6.28125
      %v1037 = vmul.f32 %v973, 6.28125
      %v1038 = vmul.f32 %v974, 6.28125
      %v1039 = vmul.f32 %v975, 6.28125
      %v1040 = vmul.f32 %v976, 6.28125
      %v1041 = vmul.f32 %v977, 6.28125
      %v1042 = vmul.f32 %v978, 6.28125
      %v1043 = vmul.f32 %v979, 6.28125
      %v1044 = vmul.f32 %v980, 6.28125
      %v1045 = vmul.f32 %v981, 6.28125
      %v1046 = vmul.f32 %v982, 6.28125
      %v1047 = vmul.f32 %v983, 6.28125
      %v1048 = vmul.f32 %v984, 6.28125
      %v1049 = vmul.f32 %v985, 6.28125
      %v1050 = vmul.f32 %v986, 6.28125
      %v1051 = vmul.f32 %v987, 6.28125
      %v1052 = vmul.f32 %v988, 6.28125
      %v1053 = vmul.f32 %v989, 6.28125
      %v1054 = vmul.f32 %v990, 6.28125
      %v1055 = vmul.f32 %v991, 6.28125
      %v1056 = vmul.f32 %v992, 6.28125
      %v1057 = vmul.f32 %v993, 6.28125
      %v1058 = vmul.f32 %v994, 6.28125
      %v1059 = vmul.f32 %v995, 6.28125
      %v1060 = vmul.f32 %v996, 6.28125
      %v1061 = vmul.f32 %v997, 6.28125
      %v1062 = vsub.f32 %v616, %v998
      %v1063 = vsub.f32 %v618, %v999
      %v1064 = vsub.f32 %v622, %v1000
      %v1065 = vsub.f32 %v624, %v1001
      %v1066 = vsub.f32 %v628, %v1002
      %v1067 = vsub.f32 %v630, %v1003
      %v1068 = vsub.f32 %v634, %v1004
      %v1069 = vsub.f32 %v636, %v1005
      %v1070 = vsub.f32 %v640, %v1006
      %v1071 = vsub.f32 %v642, %v1007
      %v1072 = vsub.f32 %v646, %v1008
      %v1073 = vsub.f32 %v648, %v1009
      %v1074 = vsub.f32 %v652, %v1010
      %v1075 = vsub.f32 %v654, %v1011
      %v1076 = vsub.f32 %v658, %v1012
      %v1077 = vsub.f32 %v660, %v1013
      %v1078 = vsub.f32 %v664, %v1014
      %v1079 = vsub.f32 %v666, %v1015
      %v1080 = vsub.f32 %v670, %v1016
      %v1081 = vsub.f32 %v672, %v1017
      %v1082 = vsub.f32 %v676, %v1018
      %v1083 = vsub.f32 %v678, %v1019
      %v1084 = vsub.f32 %v682, %v1020
      %v1085 = vsub.f32 %v684, %v1021
      %v1086 = vsub.f32 %v688, %v1022
      %v1087 = vsub.f32 %v690, %v1023
      %v1088 = vsub.f32 %v694, %v1024
      %v1089 = vsub.f32 %v696, %v1025
      %v1090 = vsub.f32 %v700, %v1026
      %v1091 = vsub.f32 %v702, %v1027
      %v1092 = vsub.f32 %v706, %v1028
      %v1093 = vsub.f32 %v708, %v1029
      %v1094 = vsub.f32 %v712, %v1030
      %v1095 = vsub.f32 %v714, %v1031
      %v1096 = vsub.f32 %v718, %v1032
      %v1097 = vsub.f32 %v720, %v1033
      %v1098 = vsub.f32 %v724, %v1034
      %v1099 = vsub.f32 %v726, %v1035
      %v1100 = vsub.f32 %v730, %v1036
      %v1101 = vsub.f32 %v732, %v1037
      %v1102 = vsub.f32 %v736, %v1038
      %v1103 = vsub.f32 %v738, %v1039
      %v1104 = vsub.f32 %v742, %v1040
      %v1105 = vsub.f32 %v744, %v1041
      %v1106 = vsub.f32 %v748, %v1042
      %v1107 = vsub.f32 %v750, %v1043
      %v1108 = vsub.f32 %v754, %v1044
      %v1109 = vsub.f32 %v756, %v1045
      %v1110 = vsub.f32 %v760, %v1046
      %v1111 = vsub.f32 %v762, %v1047
      %v1112 = vsub.f32 %v766, %v1048
      %v1113 = vsub.f32 %v768, %v1049
      %v1114 = vsub.f32 %v772, %v1050
      %v1115 = vsub.f32 %v774, %v1051
      %v1116 = vsub.f32 %v778, %v1052
      %v1117 = vsub.f32 %v780, %v1053
      %v1118 = vsub.f32 %v784, %v1054
      %v1119 = vsub.f32 %v786, %v1055
      %v1120 = vsub.f32 %v790, %v1056
      %v1121 = vsub.f32 %v792, %v1057
      %v1122 = vsub.f32 %v796, %v1058
      %v1123 = vsub.f32 %v798, %v1059
      %v1124 = vsub.f32 %v802, %v1060
      %v1125 = vsub.f32 %v804, %v1061
      %v1126 = vmul.f32 %v934, 0.0019353072
      %v1127 = vmul.f32 %v935, 0.0019353072
      %v1128 = vmul.f32 %v936, 0.0019353072
      %v1129 = vmul.f32 %v937, 0.0019353072
      %v1130 = vmul.f32 %v938, 0.0019353072
      %v1131 = vmul.f32 %v939, 0.0019353072
      %v1132 = vmul.f32 %v940, 0.0019353072
      %v1133 = vmul.f32 %v941, 0.0019353072
      %v1134 = vmul.f32 %v942, 0.0019353072
      %v1135 = vmul.f32 %v943, 0.0019353072
      %v1136 = vmul.f32 %v944, 0.0019353072
      %v1137 = vmul.f32 %v945, 0.0019353072
      %v1138 = vmul.f32 %v946, 0.0019353072
      %v1139 = vmul.f32 %v947, 0.0019353072
      %v1140 = vmul.f32 %v948, 0.0019353072
      %v1141 = vmul.f32 %v949, 0.0019353072
      %v1142 = vmul.f32 %v950, 0.0019353072
      %v1143 = vmul.f32 %v951, 0.0019353072
      %v1144 = vmul.f32 %v952, 0.0019353072
      %v1145 = vmul.f32 %v953, 0.0019353072
      %v1146 = vmul.f32 %v954, 0.0019353072
      %v1147 = vmul.f32 %v955, 0.0019353072
      %v1148 = vmul.f32 %v956, 0.0019353072
      %v1149 = vmul.f32 %v957, 0.0019353072
      %v1150 = vmul.f32 %v958, 0.0019353072
      %v1151 = vmul.f32 %v959, 0.0019353072
      %v1152 = vmul.f32 %v960, 0.0019353072
      %v1153 = vmul.f32 %v961, 0.0019353072
      %v1154 = vmul.f32 %v962, 0.0019353072
      %v1155 = vmul.f32 %v963, 0.0019353072
      %v1156 = vmul.f32 %v964, 0.0019353072
      %v1157 = vmul.f32 %v965, 0.0019353072
      %v1158 = vmul.f32 %v966, 0.0019353072
      %v1159 = vmul.f32 %v967, 0.0019353072
      %v1160 = vmul.f32 %v968, 0.0019353072
      %v1161 = vmul.f32 %v969, 0.0019353072
      %v1162 = vmul.f32 %v970, 0.0019353072
      %v1163 = vmul.f32 %v971, 0.0019353072
      %v1164 = vmul.f32 %v972, 0.0019353072
      %v1165 = vmul.f32 %v973, 0.0019353072
      %v1166 = vmul.f32 %v974, 0.0019353072
      %v1167 = vmul.f32 %v975, 0.0019353072
      %v1168 = vmul.f32 %v976, 0.0019353072
      %v1169 = vmul.f32 %v977, 0.0019353072
      %v1170 = vmul.f32 %v978, 0.0019353072
      %v1171 = vmul.f32 %v979, 0.0019353072
      %v1172 = vmul.f32 %v980, 0.0019353072
      %v1173 = vmul.f32 %v981, 0.0019353072
      %v1174 = vmul.f32 %v982, 0.0019353072
      %v1175 = vmul.f32 %v983, 0.0019353072
      %v1176 = vmul.f32 %v984, 0.0019353072
      %v1177 = vmul.f32 %v985, 0.0019353072
      %v1178 = vmul.f32 %v986, 0.0019353072
      %v1179 = vmul.f32 %v987, 0.0019353072
      %v1180 = vmul.f32 %v988, 0.0019353072
      %v1181 = vmul.f32 %v989, 0.0019353072
      %v1182 = vmul.f32 %v990, 0.0019353072
      %v1183 = vmul.f32 %v991, 0.0019353072
      %v1184 = vmul.f32 %v992, 0.0019353072
      %v1185 = vmul.f32 %v993, 0.0019353072
      %v1186 = vmul.f32 %v994, 0.0019353072
      %v1187 = vmul.f32 %v995, 0.0019353072
      %v1188 = vmul.f32 %v996, 0.0019353072
      %v1189 = vmul.f32 %v997, 0.0019353072
      %v1190 = vsub.f32 %v1062, %v1126
      %v1191 = vsub.f32 %v1063, %v1127
      %v1192 = vsub.f32 %v1064, %v1128
      %v1193 = vsub.f32 %v1065, %v1129
      %v1194 = vsub.f32 %v1066, %v1130
      %v1195 = vsub.f32 %v1067, %v1131
      %v1196 = vsub.f32 %v1068, %v1132
      %v1197 = vsub.f32 %v1069, %v1133
      %v1198 = vsub.f32 %v1070, %v1134
      %v1199 = vsub.f32 %v1071, %v1135
      %v1200 = vsub.f32 %v1072, %v1136
      %v1201 = vsub.f32 %v1073, %v1137
      %v1202 = vsub.f32 %v1074, %v1138
      %v1203 = vsub.f32 %v1075, %v1139
      %v1204 = vsub.f32 %v1076, %v1140
      %v1205 = vsub.f32 %v1077, %v1141
      %v1206 = vsub.f32 %v1078, %v1142
      %v1207 = vsub.f32 %v1079, %v1143
      %v1208 = vsub.f32 %v1080, %v1144
      %v1209 = vsub.f32 %v1081, %v1145
      %v1210 = vsub.f32 %v1082, %v1146
      %v1211 = vsub.f32 %v1083, %v1147
      %v1212 = vsub.f32 %v1084, %v1148
      %v1213 = vsub.f32 %v1085, %v1149
      %v1214 = vsub.f32 %v1086, %v1150
      %v1215 = vsub.f32 %v1087, %v1151
      %v1216 = vsub.f32 %v1088, %v1152
      %v1217 = vsub.f32 %v1089, %v1153
      %v1218 = vsub.f32 %v1090, %v1154
      %v1219 = vsub.f32 %v1091, %v1155
      %v1220 = vsub.f32 %v1092, %v1156
      %v1221 = vsub.f32 %v1093, %v1157
      %v1222 = vsub.f32 %v1094, %v1158
      %v1223 = vsub.f32 %v1095, %v1159
      %v1224 = vsub.f32 %v1096, %v1160
      %v1225 = vsub.f32 %v1097, %v1161
      %v1226 = vsub.f32 %v1098, %v1162
      %v1227 = vsub.f32 %v1099, %v1163
      %v1228 = vsub.f32 %v1100, %v1164
      %v1229 = vsub.f32 %v1101, %v1165
      %v1230 = vsub.f32 %v1102, %v1166
      %v1231 = vsub.f32 %v1103, %v1167
      %v1232 = vsub.f32 %v1104, %v1168
      %v1233 = vsub.f32 %v1105, %v1169
      %v1234 = vsub.f32 %v1106, %v1170
      %v1235 = vsub.f32 %v1107, %v1171
      %v1236 = vsub.f32 %v1108, %v1172
      %v1237 = vsub.f32 %v1109, %v1173
      %v1238 = vsub.f32 %v1110, %v1174
      %v1239 = vsub.f32 %v1111, %v1175
      %v1240 = vsub.f32 %v1112, %v1176
      %v1241 = vsub.f32 %v1113, %v1177
      %v1242 = vsub.f32 %v1114, %v1178
      %v1243 = vsub.f32 %v1115, %v1179
      %v1244 = vsub.f32 %v1116, %v1180
      %v1245 = vsub.f32 %v1117, %v1181
      %v1246 = vsub.f32 %v1118, %v1182
      %v1247 = vsub.f32 %v1119, %v1183
      %v1248 = vsub.f32 %v1120, %v1184
      %v1249 = vsub.f32 %v1121, %v1185
      %v1250 = vsub.f32 %v1122, %v1186
      %v1251 = vsub.f32 %v1123, %v1187
      %v1252 = vsub.f32 %v1124, %v1188
      %v1253 = vsub.f32 %v1125, %v1189
      %v1254 = vmul.f32 %v1190, %v1190
      %v1255 = vmul.f32 %v1191, %v1191
      %v1256 = vmul.f32 %v1192, %v1192
      %v1257 = vmul.f32 %v1193, %v1193
      %v1258 = vmul.f32 %v1194, %v1194
      %v1259 = vmul.f32 %v1195, %v1195
      %v1260 = vmul.f32 %v1196, %v1196
      %v1261 = vmul.f32 %v1197, %v1197
      %v1262 = vmul.f32 %v1198, %v1198
      %v1263 = vmul.f32 %v1199, %v1199
      %v1264 = vmul.f32 %v1200, %v1200
      %v1265 = vmul.f32 %v1201, %v1201
      %v1266 = vmul.f32 %v1202, %v1202
      %v1267 = vmul.f32 %v1203, %v1203
      %v1268 = vmul.f32 %v1204, %v1204
      %v1269 = vmul.f32 %v1205, %v1205
      %v1270 = vmul.f32 %v1206, %v1206
      %v1271 = vmul.f32 %v1207, %v1207
      %v1272 = vmul.f32 %v1208, %v1208
      %v1273 = vmul.f32 %v1209, %v1209
      %v1274 = vmul.f32 %v1210, %v1210
      %v1275 = vmul.f32 %v1211, %v1211
      %v1276 = vmul.f32 %v1212, %v1212
      %v1277 = vmul.f32 %v1213, %v1213
      %v1278 = vmul.f32 %v1214, %v1214
      %v1279 = vmul.f32 %v1215, %v1215
      %v1280 = vmul.f32 %v1216, %v1216
      %v1281 = vmul.f32 %v1217, %v1217
      %v1282 = vmul.f32 %v1218, %v1218
      %v1283 = vmul.f32 %v1219, %v1219
      %v1284 = vmul.f32 %v1220, %v1220
      %v1285 = vmul.f32 %v1221, %v1221
      %v1286 = vmul.f32 %v1222, %v1222
      %v1287 = vmul.f32 %v1223, %v1223
      %v1288 = vmul.f32 %v1224, %v1224
      %v1289 = vmul.f32 %v1225, %v1225
      %v1290 = vmul.f32 %v1226, %v1226
      %v1291 = vmul.f32 %v1227, %v1227
      %v1292 = vmul.f32 %v1228, %v1228
      %v1293 = vmul.f32 %v1229, %v1229
      %v1294 = vmul.f32 %v1230, %v1230
      %v1295 = vmul.f32 %v1231, %v1231
      %v1296 = vmul.f32 %v1232, %v1232
      %v1297 = vmul.f32 %v1233, %v1233
      %v1298 = vmul.f32 %v1234, %v1234
      %v1299 = vmul.f32 %v1235, %v1235
      %v1300 = vmul.f32 %v1236, %v1236
      %v1301 = vmul.f32 %v1237, %v1237
      %v1302 = vmul.f32 %v1238, %v1238
      %v1303 = vmul.f32 %v1239, %v1239
      %v1304 = vmul.f32 %v1240, %v1240
      %v1305 = vmul.f32 %v1241, %v1241
      %v1306 = vmul.f32 %v1242, %v1242
      %v1307 = vmul.f32 %v1243, %v1243
      %v1308 = vmul.f32 %v1244, %v1244
      %v1309 = vmul.f32 %v1245, %v1245
      %v1310 = vmul.f32 %v1246, %v1246
      %v1311 = vmul.f32 %v1247, %v1247
      %v1312 = vmul.f32 %v1248, %v1248
      %v1313 = vmul.f32 %v1249, %v1249
      %v1314 = vmul.f32 %v1250, %v1250
      %v1315 = vmul.f32 %v1251, %v1251
      %v1316 = vmul.f32 %v1252, %v1252
      %v1317 = vmul.f32 %v1253, %v1253
      %v1318 = vmul.f32 %v1254, 2.8656796e-06
      %v1319 = vmul.f32 %v1255, 2.8656796e-06
      %v1320 = vmul.f32 %v1256, 2.8656796e-06
      %v1321 = vmul.f32 %v1257, 2.8656796e-06
      %v1322 = vmul.f32 %v1258, 2.8656796e-06
      %v1323 = vmul.f32 %v1259, 2.8656796e-06
      %v1324 = vmul.f32 %v1260, 2.8656796e-06
      %v1325 = vmul.f32 %v1261, 2.8656796e-06
      %v1326 = vmul.f32 %v1262, 2.8656796e-06
      %v1327 = vmul.f32 %v1263, 2.8656796e-06
      %v1328 = vmul.f32 %v1264, 2.8656796e-06
      %v1329 = vmul.f32 %v1265, 2.8656796e-06
      %v1330 = vmul.f32 %v1266, 2.8656796e-06
      %v1331 = vmul.f32 %v1267, 2.8656796e-06
      %v1332 = vmul.f32 %v1268, 2.8656796e-06
      %v1333 = vmul.f32 %v1269, 2.8656796e-06
      %v1334 = vmul.f32 %v1270, 2.8656796e-06
      %v1335 = vmul.f32 %v1271, 2.8656796e-06
      %v1336 = vmul.f32 %v1272, 2.8656796e-06
      %v1337 = vmul.f32 %v1273, 2.8656796e-06
      %v1338 = vmul.f32 %v1274, 2.8656796e-06
      %v1339 = vmul.f32 %v1275, 2.8656796e-06
      %v1340 = vmul.f32 %v1276, 2.8656796e-06
      %v1341 = vmul.f32 %v1277, 2.8656796e-06
      %v1342 = vmul.f32 %v1278, 2.8656796e-06
      %v1343 = vmul.f32 %v1279, 2.8656796e-06
      %v1344 = vmul.f32 %v1280, 2.8656796e-06
      %v1345 = vmul.f32 %v1281, 2.8656796e-06
      %v1346 = vmul.f32 %v1282, 2.8656796e-06
      %v1347 = vmul.f32 %v1283, 2.8656796e-06
      %v1348 = vmul.f32 %v1284, 2.8656796e-06
      %v1349 = vmul.f32 %v1285, 2.8656796e-06
      %v1350 = vmul.f32 %v1286, 2.8656796e-06
      %v1351 = vmul.f32 %v1287, 2.8656796e-06
      %v1352 = vmul.f32 %v1288, 2.8656796e-06
      %v1353 = vmul.f32 %v1289, 2.8656796e-06
      %v1354 = vmul.f32 %v1290, 2.8656796e-06
      %v1355 = vmul.f32 %v1291, 2.8656796e-06
      %v1356 = vmul.f32 %v1292, 2.8656796e-06
      %v1357 = vmul.f32 %v1293, 2.8656796e-06
      %v1358 = vmul.f32 %v1294, 2.8656796e-06
      %v1359 = vmul.f32 %v1295, 2.8656796e-06
      %v1360 = vmul.f32 %v1296, 2.8656796e-06
      %v1361 = vmul.f32 %v1297, 2.8656796e-06
      %v1362 = vmul.f32 %v1298, 2.8656796e-06
      %v1363 = vmul.f32 %v1299, 2.8656796e-06
      %v1364 = vmul.f32 %v1300, 2.8656796e-06
      %v1365 = vmul.f32 %v1301, 2.8656796e-06
      %v1366 = vmul.f32 %v1302, 2.8656796e-06
      %v1367 = vmul.f32 %v1303, 2.8656796e-06
      %v1368 = vmul.f32 %v1304, 2.8656796e-06
      %v1369 = vmul.f32 %v1305, 2.8656796e-06
      %v1370 = vmul.f32 %v1306, 2.8656796e-06
      %v1371 = vmul.f32 %v1307, 2.8656796e-06
      %v1372 = vmul.f32 %v1308, 2.8656796e-06
      %v1373 = vmul.f32 %v1309, 2.8656796e-06
      %v1374 = vmul.f32 %v1310, 2.8656796e-06
      %v1375 = vmul.f32 %v1311, 2.8656796e-06
      %v1376 = vmul.f32 %v1312, 2.8656796e-06
      %v1377 = vmul.f32 %v1313, 2.8656796e-06
      %v1378 = vmul.f32 %v1314, 2.8656796e-06
      %v1379 = vmul.f32 %v1315, 2.8656796e-06
      %v1380 = vmul.f32 %v1316, 2.8656796e-06
      %v1381 = vmul.f32 %v1317, 2.8656796e-06
      %v1382 = vadd.f32 %v1318, -0.00019855992
      %v1383 = vadd.f32 %v1319, -0.00019855992
      %v1384 = vadd.f32 %v1320, -0.00019855992
      %v1385 = vadd.f32 %v1321, -0.00019855992
      %v1386 = vadd.f32 %v1322, -0.00019855992
      %v1387 = vadd.f32 %v1323, -0.00019855992
      %v1388 = vadd.f32 %v1324, -0.00019855992
      %v1389 = vadd.f32 %v1325, -0.00019855992
      %v1390 = vadd.f32 %v1326, -0.00019855992
      %v1391 = vadd.f32 %v1327, -0.00019855992
      %v1392 = vadd.f32 %v1328, -0.00019855992
      %v1393 = vadd.f32 %v1329, -0.00019855992
      %v1394 = vadd.f32 %v1330, -0.00019855992
      %v1395 = vadd.f32 %v1331, -0.00019855992
      %v1396 = vadd.f32 %v1332, -0.00019855992
      %v1397 = vadd.f32 %v1333, -0.00019855992
      %v1398 = vadd.f32 %v1334, -0.00019855992
      %v1399 = vadd.f32 %v1335, -0.00019855992
      %v1400 = vadd.f32 %v1336, -0.00019855992
      %v1401 = vadd.f32 %v1337, -0.00019855992
      %v1402 = vadd.f32 %v1338, -0.00019855992
      %v1403 = vadd.f32 %v1339, -0.00019855992
      %v1404 = vadd.f32 %v1340, -0.00019855992
      %v1405 = vadd.f32 %v1341, -0.00019855992
      %v1406 = vadd.f32 %v1342, -0.00019855992
      %v1407 = vadd.f32 %v1343, -0.00019855992
      %v1408 = vadd.f32 %v1344, -0.00019855992
      %v1409 = vadd.f32 %v1345, -0.00019855992
      %v1410 = vadd.f32 %v1346, -0.00019855992
      %v1411 = vadd.f32 %v1347, -0.00019855992
      %v1412 = vadd.f32 %v1348, -0.00019855992
      %v1413 = vadd.f32 %v1349, -0.00019855992
      %v1414 = vadd.f32 %v1350, -0.00019855992
      %v1415 = vadd.f32 %v1351, -0.00019855992
      %v1416 = vadd.f32 %v1352, -0.00019855992
      %v1417 = vadd.f32 %v1353, -0.00019855992
      %v1418 = vadd.f32 %v1354, -0.00019855992
      %v1419 = vadd.f32 %v1355, -0.00019855992
      %v1420 = vadd.f32 %v1356, -0.00019855992
      %v1421 = vadd.f32 %v1357, -0.00019855992
      %v1422 = vadd.f32 %v1358, -0.00019855992
      %v1423 = vadd.f32 %v1359, -0.00019855992
      %v1424 = vadd.f32 %v1360, -0.00019855992
      %v1425 = vadd.f32 %v1361, -0.00019855992
      %v1426 = vadd.f32 %v1362, -0.00019855992
      %v1427 = vadd.f32 %v1363, -0.00019855992
      %v1428 = vadd.f32 %v1364, -0.00019855992
      %v1429 = vadd.f32 %v1365, -0.00019855992
      %v1430 = vadd.f32 %v1366, -0.00019855992
      %v1431 = vadd.f32 %v1367, -0.00019855992
      %v1432 = vadd.f32 %v1368, -0.00019855992
      %v1433 = vadd.f32 %v1369, -0.00019855992
      %v1434 = vadd.f32 %v1370, -0.00019855992
      %v1435 = vadd.f32 %v1371, -0.00019855992
      %v1436 = vadd.f32 %v1372, -0.00019855992
      %v1437 = vadd.f32 %v1373, -0.00019855992
      %v1438 = vadd.f32 %v1374, -0.00019855992
      %v1439 = vadd.f32 %v1375, -0.00019855992
      %v1440 = vadd.f32 %v1376, -0.00019855992
      %v1441 = vadd.f32 %v1377, -0.00019855992
      %v1442 = vadd.f32 %v1378, -0.00019855992
      %v1443 = vadd.f32 %v1379, -0.00019855992
      %v1444 = vadd.f32 %v1380, -0.00019855992
      %v1445 = vadd.f32 %v1381, -0.00019855992
      %v1446 = vmul.f32 %v1382, %v1254
      %v1447 = vmul.f32 %v1383, %v1255
      %v1448 = vmul.f32 %v1384, %v1256
      %v1449 = vmul.f32 %v1385, %v1257
      %v1450 = vmul.f32 %v1386, %v1258
      %v1451 = vmul.f32 %v1387, %v1259
      %v1452 = vmul.f32 %v1388, %v1260
      %v1453 = vmul.f32 %v1389, %v1261
      %v1454 = vmul.f32 %v1390, %v1262
      %v1455 = vmul.f32 %v1391, %v1263
      %v1456 = vmul.f32 %v1392, %v1264
      %v1457 = vmul.f32 %v1393, %v1265
      %v1458 = vmul.f32 %v1394, %v1266
      %v1459 = vmul.f32 %v1395, %v1267
      %v1460 = vmul.f32 %v1396, %v1268
      %v1461 = vmul.f32 %v1397, %v1269
      %v1462 = vmul.f32 %v1398, %v1270
      %v1463 = vmul.f32 %v1399, %v1271
      %v1464 = vmul.f32 %v1400, %v1272
      %v1465 = vmul.f32 %v1401, %v1273
      %v1466 = vmul.f32 %v1402, %v1274
      %v1467 = vmul.f32 %v1403, %v1275
      %v1468 = vmul.f32 %v1404, %v1276
      %v1469 = vmul.f32 %v1405, %v1277
      %v1470 = vmul.f32 %v1406, %v1278
      %v1471 = vmul.f32 %v1407, %v1279
      %v1472 = vmul.f32 %v1408, %v1280
      %v1473 = vmul.f32 %v1409, %v1281
      %v1474 = vmul.f32 %v1410, %v1282
      %v1475 = vmul.f32 %v1411, %v1283
      %v1476 = vmul.f32 %v1412, %v1284
      %v1477 = vmul.f32 %v1413, %v1285
      %v1478 = vmul.f32 %v1414, %v1286
      %v1479 = vmul.f32 %v1415, %v1287
      %v1480 = vmul.f32 %v1416, %v1288
      %v1481 = vmul.f32 %v1417, %v1289
      %v1482 = vmul.f32 %v1418, %v1290
      %v1483 = vmul.f32 %v1419, %v1291
      %v1484 = vmul.f32 %v1420, %v1292
      %v1485 = vmul.f32 %v1421, %v1293
      %v1486 = vmul.f32 %v1422, %v1294
      %v1487 = vmul.f32 %v1423, %v1295
      %v1488 = vmul.f32 %v1424, %v1296
      %v1489 = vmul.f32 %v1425, %v1297
      %v1490 = vmul.f32 %v1426, %v1298
      %v1491 = vmul.f32 %v1427, %v1299
      %v1492 = vmul.f32 %v1428, %v1300
      %v1493 = vmul.f32 %v1429, %v1301
      %v1494 = vmul.f32 %v1430, %v1302
      %v1495 = vmul.f32 %v1431, %v1303
      %v1496 = vmul.f32 %v1432, %v1304
      %v1497 = vmul.f32 %v1433, %v1305
      %v1498 = vmul.f32 %v1434, %v1306
      %v1499 = vmul.f32 %v1435, %v1307
      %v1500 = vmul.f32 %v1436, %v1308
      %v1501 = vmul.f32 %v1437, %v1309
      %v1502 = vmul.f32 %v1438, %v1310
      %v1503 = vmul.f32 %v1439, %v1311
      %v1504 = vmul.f32 %v1440, %v1312
      %v1505 = vmul.f32 %v1441, %v1313
      %v1506 = vmul.f32 %v1442, %v1314
      %v1507 = vmul.f32 %v1443, %v1315
      %v1508 = vmul.f32 %v1444, %v1316
      %v1509 = vmul.f32 %v1445, %v1317
      %v1510 = vadd.f32 %v1446, 0.008333386
      %v1511 = vadd.f32 %v1447, 0.008333386
      %v1512 = vadd.f32 %v1448, 0.008333386
      %v1513 = vadd.f32 %v1449, 0.008333386
      %v1514 = vadd.f32 %v1450, 0.008333386
      %v1515 = vadd.f32 %v1451, 0.008333386
      %v1516 = vadd.f32 %v1452, 0.008333386
      %v1517 = vadd.f32 %v1453, 0.008333386
      %v1518 = vadd.f32 %v1454, 0.008333386
      %v1519 = vadd.f32 %v1455, 0.008333386
      %v1520 = vadd.f32 %v1456, 0.008333386
      %v1521 = vadd.f32 %v1457, 0.008333386
      %v1522 = vadd.f32 %v1458, 0.008333386
      %v1523 = vadd.f32 %v1459, 0.008333386
      %v1524 = vadd.f32 %v1460, 0.008333386
      %v1525 = vadd.f32 %v1461, 0.008333386
      %v1526 = vadd.f32 %v1462, 0.008333386
      %v1527 = vadd.f32 %v1463, 0.008333386
      %v1528 = vadd.f32 %v1464, 0.008333386
      %v1529 = vadd.f32 %v1465, 0.008333386
      %v1530 = vadd.f32 %v1466, 0.008333386
      %v1531 = vadd.f32 %v1467, 0.008333386
      %v1532 = vadd.f32 %v1468, 0.008333386
      %v1533 = vadd.f32 %v1469, 0.008333386
      %v1534 = vadd.f32 %v1470, 0.008333386
      %v1535 = vadd.f32 %v1471, 0.008333386
      %v1536 = vadd.f32 %v1472, 0.008333386
      %v1537 = vadd.f32 %v1473, 0.008333386
      %v1538 = vadd.f32 %v1474, 0.008333386
      %v1539 = vadd.f32 %v1475, 0.008333386
      %v1540 = vadd.f32 %v1476, 0.008333386
      %v1541 = vadd.f32 %v1477, 0.008333386
      %v1542 = vadd.f32 %v1478, 0.008333386
      %v1543 = vadd.f32 %v1479, 0.008333386
      %v1544 = vadd.f32 %v1480, 0.008333386
      %v1545 = vadd.f32 %v1481, 0.008333386
      %v1546 = vadd.f32 %v1482, 0.008333386
      %v1547 = vadd.f32 %v1483, 0.008333386
      %v1548 = vadd.f32 %v1484, 0.008333386
      %v1549 = vadd.f32 %v1485, 0.008333386
      %v1550 = vadd.f32 %v1486, 0.008333386
      %v1551 = vadd.f32 %v1487, 0.008333386
      %v1552 = vadd.f32 %v1488, 0.008333386
      %v1553 = vadd.f32 %v1489, 0.008333386
      %v1554 = vadd.f32 %v1490, 0.008333386
      %v1555 = vadd.f32 %v1491, 0.008333386
      %v1556 = vadd.f32 %v1492, 0.008333386
      %v1557 = vadd.f32 %v1493, 0.008333386
      %v1558 = vadd.f32 %v1494, 0.008333386
      %v1559 = vadd.f32 %v1495, 0.008333386
      %v1560 = vadd.f32 %v1496, 0.008333386
      %v1561 = vadd.f32 %v1497, 0.008333386
      %v1562 = vadd.f32 %v1498, 0.008333386
      %v1563 = vadd.f32 %v1499, 0.008333386
      %v1564 = vadd.f32 %v1500, 0.008333386
      %v1565 = vadd.f32 %v1501, 0.008333386
      %v1566 = vadd.f32 %v1502, 0.008333386
      %v1567 = vadd.f32 %v1503, 0.008333386
      %v1568 = vadd.f32 %v1504, 0.008333386
      %v1569 = vadd.f32 %v1505, 0.008333386
      %v1570 = vadd.f32 %v1506, 0.008333386
      %v1571 = vadd.f32 %v1507, 0.008333386
      %v1572 = vadd.f32 %v1508, 0.008333386
      %v1573 = vadd.f32 %v1509, 0.008333386
      %v1574 = vmul.f32 %v1510, %v1254
      %v1575 = vmul.f32 %v1511, %v1255
      %v1576 = vmul.f32 %v1512, %v1256
      %v1577 = vmul.f32 %v1513, %v1257
      %v1578 = vmul.f32 %v1514, %v1258
      %v1579 = vmul.f32 %v1515, %v1259
      %v1580 = vmul.f32 %v1516, %v1260
      %v1581 = vmul.f32 %v1517, %v1261
      %v1582 = vmul.f32 %v1518, %v1262
      %v1583 = vmul.f32 %v1519, %v1263
      %v1584 = vmul.f32 %v1520, %v1264
      %v1585 = vmul.f32 %v1521, %v1265
      %v1586 = vmul.f32 %v1522, %v1266
      %v1587 = vmul.f32 %v1523, %v1267
      %v1588 = vmul.f32 %v1524, %v1268
      %v1589 = vmul.f32 %v1525, %v1269
      %v1590 = vmul.f32 %v1526, %v1270
      %v1591 = vmul.f32 %v1527, %v1271
      %v1592 = vmul.f32 %v1528, %v1272
      %v1593 = vmul.f32 %v1529, %v1273
      %v1594 = vmul.f32 %v1530, %v1274
      %v1595 = vmul.f32 %v1531, %v1275
      %v1596 = vmul.f32 %v1532, %v1276
      %v1597 = vmul.f32 %v1533, %v1277
      %v1598 = vmul.f32 %v1534, %v1278
      %v1599 = vmul.f32 %v1535, %v1279
      %v1600 = vmul.f32 %v1536, %v1280
      %v1601 = vmul.f32 %v1537, %v1281
      %v1602 = vmul.f32 %v1538, %v1282
      %v1603 = vmul.f32 %v1539, %v1283
      %v1604 = vmul.f32 %v1540, %v1284
      %v1605 = vmul.f32 %v1541, %v1285
      %v1606 = vmul.f32 %v1542, %v1286
      %v1607 = vmul.f32 %v1543, %v1287
      %v1608 = vmul.f32 %v1544, %v1288
      %v1609 = vmul.f32 %v1545, %v1289
      %v1610 = vmul.f32 %v1546, %v1290
      %v1611 = vmul.f32 %v1547, %v1291
      %v1612 = vmul.f32 %v1548, %v1292
      %v1613 = vmul.f32 %v1549, %v1293
      %v1614 = vmul.f32 %v1550, %v1294
      %v1615 = vmul.f32 %v1551, %v1295
      %v1616 = vmul.f32 %v1552, %v1296
      %v1617 = vmul.f32 %v1553, %v1297
      %v1618 = vmul.f32 %v1554, %v1298
      %v1619 = vmul.f32 %v1555, %v1299
      %v1620 = vmul.f32 %v1556, %v1300
      %v1621 = vmul.f32 %v1557, %v1301
      %v1622 = vmul.f32 %v1558, %v1302
      %v1623 = vmul.f32 %v1559, %v1303
      %v1624 = vmul.f32 %v1560, %v1304
      %v1625 = vmul.f32 %v1561, %v1305
      %v1626 = vmul.f32 %v1562, %v1306
      %v1627 = vmul.f32 %v1563, %v1307
      %v1628 = vmul.f32 %v1564, %v1308
      %v1629 = vmul.f32 %v1565, %v1309
      %v1630 = vmul.f32 %v1566, %v1310
      %v1631 = vmul.f32 %v1567, %v1311
      %v1632 = vmul.f32 %v1568, %v1312
      %v1633 = vmul.f32 %v1569, %v1313
      %v1634 = vmul.f32 %v1570, %v1314
      %v1635 = vmul.f32 %v1571, %v1315
      %v1636 = vmul.f32 %v1572, %v1316
      %v1637 = vmul.f32 %v1573, %v1317
      %v1638 = vadd.f32 %v1574, -0.16666667
      %v1639 = vadd.f32 %v1575, -0.16666667
      %v1640 = vadd.f32 %v1576, -0.16666667
      %v1641 = vadd.f32 %v1577, -0.16666667
      %v1642 = vadd.f32 %v1578, -0.16666667
      %v1643 = vadd.f32 %v1579, -0.16666667
      %v1644 = vadd.f32 %v1580, -0.16666667
      %v1645 = vadd.f32 %v1581, -0.16666667
      %v1646 = vadd.f32 %v1582, -0.16666667
      %v1647 = vadd.f32 %v1583, -0.16666667
      %v1648 = vadd.f32 %v1584, -0.16666667
      %v1649 = vadd.f32 %v1585, -0.16666667
      %v1650 = vadd.f32 %v1586, -0.16666667
      %v1651 = vadd.f32 %v1587, -0.16666667
      %v1652 = vadd.f32 %v1588, -0.16666667
      %v1653 = vadd.f32 %v1589, -0.16666667
      %v1654 = vadd.f32 %v1590, -0.16666667
      %v1655 = vadd.f32 %v1591, -0.16666667
      %v1656 = vadd.f32 %v1592, -0.16666667
      %v1657 = vadd.f32 %v1593, -0.16666667
      %v1658 = vadd.f32 %v1594, -0.16666667
      %v1659 = vadd.f32 %v1595, -0.16666667
      %v1660 = vadd.f32 %v1596, -0.16666667
      %v1661 = vadd.f32 %v1597, -0.16666667
      %v1662 = vadd.f32 %v1598, -0.16666667
      %v1663 = vadd.f32 %v1599, -0.16666667
      %v1664 = vadd.f32 %v1600, -0.16666667
      %v1665 = vadd.f32 %v1601, -0.16666667
      %v1666 = vadd.f32 %v1602, -0.16666667
      %v1667 = vadd.f32 %v1603, -0.16666667
      %v1668 = vadd.f32 %v1604, -0.16666667
      %v1669 = vadd.f32 %v1605, -0.16666667
      %v1670 = vadd.f32 %v1606, -0.16666667
      %v1671 = vadd.f32 %v1607, -0.16666667
      %v1672 = vadd.f32 %v1608, -0.16666667
      %v1673 = vadd.f32 %v1609, -0.16666667
      %v1674 = vadd.f32 %v1610, -0.16666667
      %v1675 = vadd.f32 %v1611, -0.16666667
      %v1676 = vadd.f32 %v1612, -0.16666667
      %v1677 = vadd.f32 %v1613, -0.16666667
      %v1678 = vadd.f32 %v1614, -0.16666667
      %v1679 = vadd.f32 %v1615, -0.16666667
      %v1680 = vadd.f32 %v1616, -0.16666667
      %v1681 = vadd.f32 %v1617, -0.16666667
      %v1682 = vadd.f32 %v1618, -0.16666667
      %v1683 = vadd.f32 %v1619, -0.16666667
      %v1684 = vadd.f32 %v1620, -0.16666667
      %v1685 = vadd.f32 %v1621, -0.16666667
      %v1686 = vadd.f32 %v1622, -0.16666667
      %v1687 = vadd.f32 %v1623, -0.16666667
      %v1688 = vadd.f32 %v1624, -0.16666667
      %v1689 = vadd.f32 %v1625, -0.16666667
      %v1690 = vadd.f32 %v1626, -0.16666667
      %v1691 = vadd.f32 %v1627, -0.16666667
      %v1692 = vadd.f32 %v1628, -0.16666667
      %v1693 = vadd.f32 %v1629, -0.16666667
      %v1694 = vadd.f32 %v1630, -0.16666667
      %v1695 = vadd.f32 %v1631, -0.16666667
      %v1696 = vadd.f32 %v1632, -0.16666667
      %v1697 = vadd.f32 %v1633, -0.16666667
      %v1698 = vadd.f32 %v1634, -0.16666667
      %v1699 = vadd.f32 %v1635, -0.16666667
      %v1700 = vadd.f32 %v1636, -0.16666667
      %v1701 = vadd.f32 %v1637, -0.16666667
      %v1702 = vmul.f32 %v1190, %v1254
      %v1703 = vmul.f32 %v1191, %v1255
      %v1704 = vmul.f32 %v1192, %v1256
      %v1705 = vmul.f32 %v1193, %v1257
      %v1706 = vmul.f32 %v1194, %v1258
      %v1707 = vmul.f32 %v1195, %v1259
      %v1708 = vmul.f32 %v1196, %v1260
      %v1709 = vmul.f32 %v1197, %v1261
      %v1710 = vmul.f32 %v1198, %v1262
      %v1711 = vmul.f32 %v1199, %v1263
      %v1712 = vmul.f32 %v1200, %v1264
      %v1713 = vmul.f32 %v1201, %v1265
      %v1714 = vmul.f32 %v1202, %v1266
      %v1715 = vmul.f32 %v1203, %v1267
      %v1716 = vmul.f32 %v1204, %v1268
      %v1717 = vmul.f32 %v1205, %v1269
      %v1718 = vmul.f32 %v1206, %v1270
      %v1719 = vmul.f32 %v1207, %v1271
      %v1720 = vmul.f32 %v1208, %v1272
      %v1721 = vmul.f32 %v1209, %v1273
      %v1722 = vmul.f32 %v1210, %v1274
      %v1723 = vmul.f32 %v1211, %v1275
      %v1724 = vmul.f32 %v1212, %v1276
      %v1725 = vmul.f32 %v1213, %v1277
      %v1726 = vmul.f32 %v1214, %v1278
      %v1727 = vmul.f32 %v1215, %v1279
      %v1728 = vmul.f32 %v1216, %v1280
      %v1729 = vmul.f32 %v1217, %v1281
      %v1730 = vmul.f32 %v1218, %v1282
      %v1731 = vmul.f32 %v1219, %v1283
      %v1732 = vmul.f32 %v1220, %v1284
      %v1733 = vmul.f32 %v1221, %v1285
      %v1734 = vmul.f32 %v1222, %v1286
      %v1735 = vmul.f32 %v1223, %v1287
      %v1736 = vmul.f32 %v1224, %v1288
      %v1737 = vmul.f32 %v1225, %v1289
      %v1738 = vmul.f32 %v1226, %v1290
      %v1739 = vmul.f32 %v1227, %v1291
      %v1740 = vmul.f32 %v1228, %v1292
      %v1741 = vmul.f32 %v1229, %v1293
      %v1742 = vmul.f32 %v1230, %v1294
      %v1743 = vmul.f32 %v1231, %v1295
      %v1744 = vmul.f32 %v1232, %v1296
      %v1745 = vmul.f32 %v1233, %v1297
      %v1746 = vmul.f32 %v1234, %v1298
      %v1747 = vmul.f32 %v1235, %v1299
      %v1748 = vmul.f32 %v1236, %v1300
      %v1749 = vmul.f32 %v1237, %v1301
      %v1750 = vmul.f32 %v1238, %v1302
      %v1751 = vmul.f32 %v1239, %v1303
      %v1752 = vmul.f32 %v1240, %v1304
      %v1753 = vmul.f32 %v1241, %v1305
      %v1754 = vmul.f32 %v1242, %v1306
      %v1755 = vmul.f32 %v1243, %v1307
      %v1756 = vmul.f32 %v1244, %v1308
      %v1757 = vmul.f32 %v1245, %v1309
      %v1758 = vmul.f32 %v1246, %v1310
      %v1759 = vmul.f32 %v1247, %v1311
      %v1760 = vmul.f32 %v1248, %v1312
      %v1761 = vmul.f32 %v1249, %v1313
      %v1762 = vmul.f32 %v1250, %v1314
      %v1763 = vmul.f32 %v1251, %v1315
      %v1764 = vmul.f32 %v1252, %v1316
      %v1765 = vmul.f32 %v1253, %v1317
      %v1766 = vmul.f32 %v1702, %v1638
      %v1767 = vmul.f32 %v1703, %v1639
      %v1768 = vmul.f32 %v1704, %v1640
      %v1769 = vmul.f32 %v1705, %v1641
      %v1770 = vmul.f32 %v1706, %v1642
      %v1771 = vmul.f32 %v1707, %v1643
      %v1772 = vmul.f32 %v1708, %v1644
      %v1773 = vmul.f32 %v1709, %v1645
      %v1774 = vmul.f32 %v1710, %v1646
      %v1775 = vmul.f32 %v1711, %v1647
      %v1776 = vmul.f32 %v1712, %v1648
      %v1777 = vmul.f32 %v1713, %v1649
      %v1778 = vmul.f32 %v1714, %v1650
      %v1779 = vmul.f32 %v1715, %v1651
      %v1780 = vmul.f32 %v1716, %v1652
      %v1781 = vmul.f32 %v1717, %v1653
      %v1782 = vmul.f32 %v1718, %v1654
      %v1783 = vmul.f32 %v1719, %v1655
      %v1784 = vmul.f32 %v1720, %v1656
      %v1785 = vmul.f32 %v1721, %v1657
      %v1786 = vmul.f32 %v1722, %v1658
      %v1787 = vmul.f32 %v1723, %v1659
      %v1788 = vmul.f32 %v1724, %v1660
      %v1789 = vmul.f32 %v1725, %v1661
      %v1790 = vmul.f32 %v1726, %v1662
      %v1791 = vmul.f32 %v1727, %v1663
      %v1792 = vmul.f32 %v1728, %v1664
      %v1793 = vmul.f32 %v1729, %v1665
      %v1794 = vmul.f32 %v1730, %v1666
      %v1795 = vmul.f32 %v1731, %v1667
      %v1796 = vmul.f32 %v1732, %v1668
      %v1797 = vmul.f32 %v1733, %v1669
      %v1798 = vmul.f32 %v1734, %v1670
      %v1799 = vmul.f32 %v1735, %v1671
      %v1800 = vmul.f32 %v1736, %v1672
      %v1801 = vmul.f32 %v1737, %v1673
      %v1802 = vmul.f32 %v1738, %v1674
      %v1803 = vmul.f32 %v1739, %v1675
      %v1804 = vmul.f32 %v1740, %v1676
      %v1805 = vmul.f32 %v1741, %v1677
      %v1806 = vmul.f32 %v1742, %v1678
      %v1807 = vmul.f32 %v1743, %v1679
      %v1808 = vmul.f32 %v1744, %v1680
      %v1809 = vmul.f32 %v1745, %v1681
      %v1810 = vmul.f32 %v1746, %v1682
      %v1811 = vmul.f32 %v1747, %v1683
      %v1812 = vmul.f32 %v1748, %v1684
      %v1813 = vmul.f32 %v1749, %v1685
      %v1814 = vmul.f32 %v1750, %v1686
      %v1815 = vmul.f32 %v1751, %v1687
      %v1816 = vmul.f32 %v1752, %v1688
      %v1817 = vmul.f32 %v1753, %v1689
      %v1818 = vmul.f32 %v1754, %v1690
      %v1819 = vmul.f32 %v1755, %v1691
      %v1820 = vmul.f32 %v1756, %v1692
      %v1821 = vmul.f32 %v1757, %v1693
      %v1822 = vmul.f32 %v1758, %v1694
      %v1823 = vmul.f32 %v1759, %v1695
      %v1824 = vmul.f32 %v1760, %v1696
      %v1825 = vmul.f32 %v1761, %v1697
      %v1826 = vmul.f32 %v1762, %v1698
      %v1827 = vmul.f32 %v1763, %v1699
      %v1828 = vmul.f32 %v1764, %v1700
      %v1829 = vmul.f32 %v1765, %v1701
      %v1830 = vadd.f32 %v1190, %v1766
      %v1831 = vadd.f32 %v1191, %v1767
      %v1832 = vadd.f32 %v1192, %v1768
      %v1833 = vadd.f32 %v1193, %v1769
      %v1834 = vadd.f32 %v1194, %v1770
      %v1835 = vadd.f32 %v1195, %v1771
      %v1836 = vadd.f32 %v1196, %v1772
      %v1837 = vadd.f32 %v1197, %v1773
      %v1838 = vadd.f32 %v1198, %v1774
      %v1839 = vadd.f32 %v1199, %v1775
      %v1840 = vadd.f32 %v1200, %v1776
      %v1841 = vadd.f32 %v1201, %v1777
      %v1842 = vadd.f32 %v1202, %v1778
      %v1843 = vadd.f32 %v1203, %v1779
      %v1844 = vadd.f32 %v1204, %v1780
      %v1845 = vadd.f32 %v1205, %v1781
      %v1846 = vadd.f32 %v1206, %v1782
      %v1847 = vadd.f32 %v1207, %v1783
      %v1848 = vadd.f32 %v1208, %v1784
      %v1849 = vadd.f32 %v1209, %v1785
      %v1850 = vadd.f32 %v1210, %v1786
      %v1851 = vadd.f32 %v1211, %v1787
      %v1852 = vadd.f32 %v1212, %v1788
      %v1853 = vadd.f32 %v1213, %v1789
      %v1854 = vadd.f32 %v1214, %v1790
      %v1855 = vadd.f32 %v1215, %v1791
      %v1856 = vadd.f32 %v1216, %v1792
      %v1857 = vadd.f32 %v1217, %v1793
      %v1858 = vadd.f32 %v1218, %v1794
      %v1859 = vadd.f32 %v1219, %v1795
      %v1860 = vadd.f32 %v1220, %v1796
      %v1861 = vadd.f32 %v1221, %v1797
      %v1862 = vadd.f32 %v1222, %v1798
      %v1863 = vadd.f32 %v1223, %v1799
      %v1864 = vadd.f32 %v1224, %v1800
      %v1865 = vadd.f32 %v1225, %v1801
      %v1866 = vadd.f32 %v1226, %v1802
      %v1867 = vadd.f32 %v1227, %v1803
      %v1868 = vadd.f32 %v1228, %v1804
      %v1869 = vadd.f32 %v1229, %v1805
      %v1870 = vadd.f32 %v1230, %v1806
      %v1871 = vadd.f32 %v1231, %v1807
      %v1872 = vadd.f32 %v1232, %v1808
      %v1873 = vadd.f32 %v1233, %v1809
      %v1874 = vadd.f32 %v1234, %v1810
      %v1875 = vadd.f32 %v1235, %v1811
      %v1876 = vadd.f32 %v1236, %v1812
      %v1877 = vadd.f32 %v1237, %v1813
      %v1878 = vadd.f32 %v1238, %v1814
      %v1879 = vadd.f32 %v1239, %v1815
      %v1880 = vadd.f32 %v1240, %v1816
      %v1881 = vadd.f32 %v1241, %v1817
      %v1882 = vadd.f32 %v1242, %v1818
      %v1883 = vadd.f32 %v1243, %v1819
      %v1884 = vadd.f32 %v1244, %v1820
      %v1885 = vadd.f32 %v1245, %v1821
      %v1886 = vadd.f32 %v1246, %v1822
      %v1887 = vadd.f32 %v1247, %v1823
      %v1888 = vadd.f32 %v1248, %v1824
      %v1889 = vadd.f32 %v1249, %v1825
      %v1890 = vadd.f32 %v1250, %v1826
      %v1891 = vadd.f32 %v1251, %v1827
      %v1892 = vadd.f32 %v1252, %v1828
      %v1893 = vadd.f32 %v1253, %v1829
      %v1894 = vpack.c.bf16 %v1832, %v1830
      %v1895 = vpack.c.bf16 %v1833, %v1831
      %v1896 = vpack.c.bf16 %v1836, %v1834
      %v1897 = vpack.c.bf16 %v1837, %v1835
      %v1898 = vpack.c.bf16 %v1840, %v1838
      %v1899 = vpack.c.bf16 %v1841, %v1839
      %v1900 = vpack.c.bf16 %v1844, %v1842
      %v1901 = vpack.c.bf16 %v1845, %v1843
      %v1902 = vpack.c.bf16 %v1848, %v1846
      %v1903 = vpack.c.bf16 %v1849, %v1847
      %v1904 = vpack.c.bf16 %v1852, %v1850
      %v1905 = vpack.c.bf16 %v1853, %v1851
      %v1906 = vpack.c.bf16 %v1856, %v1854
      %v1907 = vpack.c.bf16 %v1857, %v1855
      %v1908 = vpack.c.bf16 %v1860, %v1858
      %v1909 = vpack.c.bf16 %v1861, %v1859
      %v1910 = vpack.c.bf16 %v1864, %v1862
      %v1911 = vpack.c.bf16 %v1865, %v1863
      %v1912 = vpack.c.bf16 %v1868, %v1866
      %v1913 = vpack.c.bf16 %v1869, %v1867
      %v1914 = vpack.c.bf16 %v1872, %v1870
      %v1915 = vpack.c.bf16 %v1873, %v1871
      %v1916 = vpack.c.bf16 %v1876, %v1874
      %v1917 = vpack.c.bf16 %v1877, %v1875
      %v1918 = vpack.c.bf16 %v1880, %v1878
      %v1919 = vpack.c.bf16 %v1881, %v1879
      %v1920 = vpack.c.bf16 %v1884, %v1882
      %v1921 = vpack.c.bf16 %v1885, %v1883
      %v1922 = vpack.c.bf16 %v1888, %v1886
      %v1923 = vpack.c.bf16 %v1889, %v1887
      %v1924 = vpack.c.bf16 %v1892, %v1890
      %v1925 = vpack.c.bf16 %v1893, %v1891
      %v1926 = vld [vmem:[%s3] sm:$0xff]
      %v1927 = vld [vmem:[%s3 + $0x8] sm:$0xff]
      %v1928 = vld [vmem:[%s3 + $0x10] sm:$0xff]
      %v1929 = vld [vmem:[%s3 + $0x18] sm:$0xff]
      %v1930 = vld [vmem:[%s3 + $0x20] sm:$0xff]
      %v1931 = vld [vmem:[%s3 + $0x28] sm:$0xff]
      %v1932 = vld [vmem:[%s3 + $0x30] sm:$0xff]
      %v1933 = vld [vmem:[%s3 + $0x38] sm:$0xff]
      %v1934 = vld [vmem:[%s3 + $0x40] sm:$0xff]
      %v1935 = vld [vmem:[%s3 + $0x48] sm:$0xff]
      %v1936 = vld [vmem:[%s3 + $0x50] sm:$0xff]
      %v1937 = vld [vmem:[%s3 + $0x58] sm:$0xff]
      %v1938 = vld [vmem:[%s3 + $0x60] sm:$0xff]
      %v1939 = vld [vmem:[%s3 + $0x68] sm:$0xff]
      %v1940 = vld [vmem:[%s3 + $0x70] sm:$0xff]
      %v1941 = vld [vmem:[%s3 + $0x78] sm:$0xff]
      %v1942 = vld [vmem:[%s3 + $0x80] sm:$0xff]
      %v1943 = vld [vmem:[%s3 + $0x88] sm:$0xff]
      %v1944 = vld [vmem:[%s3 + $0x90] sm:$0xff]
      %v1945 = vld [vmem:[%s3 + $0x98] sm:$0xff]
      %v1946 = vld [vmem:[%s3 + $0xa0] sm:$0xff]
      %v1947 = vld [vmem:[%s3 + $0xa8] sm:$0xff]
      %v1948 = vld [vmem:[%s3 + $0xb0] sm:$0xff]
      %v1949 = vld [vmem:[%s3 + $0xb8] sm:$0xff]
      %v1950 = vld [vmem:[%s3 + $0xc0] sm:$0xff]
      %v1951 = vld [vmem:[%s3 + $0xc8] sm:$0xff]
      %v1952 = vld [vmem:[%s3 + $0xd0] sm:$0xff]
      %v1953 = vld [vmem:[%s3 + $0xd8] sm:$0xff]
      %v1954 = vld [vmem:[%s3 + $0xe0] sm:$0xff]
      %v1955 = vld [vmem:[%s3 + $0xe8] sm:$0xff]
      %v1956 = vld [vmem:[%s3 + $0xf0] sm:$0xff]
      %v1957 = vld [vmem:[%s3 + $0xf8] sm:$0xff]
      %v1958 = vld [vmem:[%s4] sm:$0x3]
      %v1960 = vlaneseq
      %v1961 = vshrl.u32 %v1960, 7
      %v1962 = vsub.s32 0, %v1961
      %v1963 = vrot.slane %v1958, %v1962
      %v1964 = vlaneseq
      %v1965 = vshrl.u32 %v1964, 7
      %v1966 = vsub.s32 1, %v1965
      %v1967 = vrot.slane %v1958, %v1966
      %v2002 = vunpack.c.l.b16 %v1926
      %v2003 = vunpack.c.h.b16 %v1926
      %v2004 = vunpack.c.l.b16 %v1927
      %v2005 = vunpack.c.h.b16 %v1927
      %v2006 = vunpack.c.l.b16 %v1928
      %v2007 = vunpack.c.h.b16 %v1928
      %v2008 = vunpack.c.l.b16 %v1929
      %v2009 = vunpack.c.h.b16 %v1929
      %v2010 = vunpack.c.l.b16 %v1930
      %v2011 = vunpack.c.h.b16 %v1930
      %v2012 = vunpack.c.l.b16 %v1931
      %v2013 = vunpack.c.h.b16 %v1931
      %v2014 = vunpack.c.l.b16 %v1932
      %v2015 = vunpack.c.h.b16 %v1932
      %v2016 = vunpack.c.l.b16 %v1933
      %v2017 = vunpack.c.h.b16 %v1933
      %v2018 = vunpack.c.l.b16 %v1934
      %v2019 = vunpack.c.h.b16 %v1934
      %v2020 = vunpack.c.l.b16 %v1935
      %v2021 = vunpack.c.h.b16 %v1935
      %v2022 = vunpack.c.l.b16 %v1936
      %v2023 = vunpack.c.h.b16 %v1936
      %v2024 = vunpack.c.l.b16 %v1937
      %v2025 = vunpack.c.h.b16 %v1937
      %v2026 = vunpack.c.l.b16 %v1938
      %v2027 = vunpack.c.h.b16 %v1938
      %v2028 = vunpack.c.l.b16 %v1939
      %v2029 = vunpack.c.h.b16 %v1939
      %v2030 = vunpack.c.l.b16 %v1940
      %v2031 = vunpack.c.h.b16 %v1940
      %v2032 = vunpack.c.l.b16 %v1941
      %v2033 = vunpack.c.h.b16 %v1941
      %v2034 = vunpack.c.l.b16 %v1942
      %v2035 = vunpack.c.h.b16 %v1942
      %v2036 = vunpack.c.l.b16 %v1943
      %v2037 = vunpack.c.h.b16 %v1943
      %v2038 = vunpack.c.l.b16 %v1944
      %v2039 = vunpack.c.h.b16 %v1944
      %v2040 = vunpack.c.l.b16 %v1945
      %v2041 = vunpack.c.h.b16 %v1945
      %v2042 = vunpack.c.l.b16 %v1946
      %v2043 = vunpack.c.h.b16 %v1946
      %v2044 = vunpack.c.l.b16 %v1947
      %v2045 = vunpack.c.h.b16 %v1947
      %v2046 = vunpack.c.l.b16 %v1948
      %v2047 = vunpack.c.h.b16 %v1948
      %v2048 = vunpack.c.l.b16 %v1949
      %v2049 = vunpack.c.h.b16 %v1949
      %v2050 = vunpack.c.l.b16 %v1950
      %v2051 = vunpack.c.h.b16 %v1950
      %v2052 = vunpack.c.l.b16 %v1951
      %v2053 = vunpack.c.h.b16 %v1951
      %v2054 = vunpack.c.l.b16 %v1952
      %v2055 = vunpack.c.h.b16 %v1952
      %v2056 = vunpack.c.l.b16 %v1953
      %v2057 = vunpack.c.h.b16 %v1953
      %v2058 = vunpack.c.l.b16 %v1954
      %v2059 = vunpack.c.h.b16 %v1954
      %v2060 = vunpack.c.l.b16 %v1955
      %v2061 = vunpack.c.h.b16 %v1955
      %v2062 = vunpack.c.l.b16 %v1956
      %v2063 = vunpack.c.h.b16 %v1956
      %v2064 = vunpack.c.l.b16 %v1957
      %v2065 = vunpack.c.h.b16 %v1957
      %v2066 = vpack.c.b16 %v2004, %v2002
      %v2067 = vpack.c.b16 %v2005, %v2003
      %v2068 = vpack.c.b16 %v2008, %v2006
      %v2069 = vpack.c.b16 %v2009, %v2007
      %v2070 = vpack.c.b16 %v2012, %v2010
      %v2071 = vpack.c.b16 %v2013, %v2011
      %v2072 = vpack.c.b16 %v2016, %v2014
      %v2073 = vpack.c.b16 %v2017, %v2015
      %v2074 = vpack.c.b16 %v2020, %v2018
      %v2075 = vpack.c.b16 %v2021, %v2019
      %v2076 = vpack.c.b16 %v2024, %v2022
      %v2077 = vpack.c.b16 %v2025, %v2023
      %v2078 = vpack.c.b16 %v2028, %v2026
      %v2079 = vpack.c.b16 %v2029, %v2027
      %v2080 = vpack.c.b16 %v2032, %v2030
      %v2081 = vpack.c.b16 %v2033, %v2031
      %v2082 = vpack.c.b16 %v2036, %v2034
      %v2083 = vpack.c.b16 %v2037, %v2035
      %v2084 = vpack.c.b16 %v2040, %v2038
      %v2085 = vpack.c.b16 %v2041, %v2039
      %v2086 = vpack.c.b16 %v2044, %v2042
      %v2087 = vpack.c.b16 %v2045, %v2043
      %v2088 = vpack.c.b16 %v2048, %v2046
      %v2089 = vpack.c.b16 %v2049, %v2047
      %v2090 = vpack.c.b16 %v2052, %v2050
      %v2091 = vpack.c.b16 %v2053, %v2051
      %v2092 = vpack.c.b16 %v2056, %v2054
      %v2093 = vpack.c.b16 %v2057, %v2055
      %v2094 = vpack.c.b16 %v2060, %v2058
      %v2095 = vpack.c.b16 %v2061, %v2059
      %v2096 = vpack.c.b16 %v2064, %v2062
      %v2097 = vpack.c.b16 %v2065, %v2063
      %2130 = vmatprep.subr.bf16.mxu0 %v2081
      %2131 = vmatpush1.bf16.msra.mxu0 %v2080
      %2132 = vmatprep.subr.bf16.mxu0 %v2079
      %2133 = vmatpush1.bf16.msra.mxu0 %v2078
      %2134 = vmatprep.subr.bf16.mxu0 %v2077
      %2135 = vmatpush1.bf16.msra.mxu0 %v2076
      %2136 = vmatprep.subr.bf16.mxu0 %v2075
      %2137 = vmatpush1.bf16.msra.mxu0 %v2074
      %2138 = vmatprep.subr.bf16.mxu0 %v2073
      %2139 = vmatpush1.bf16.msra.mxu0 %v2072
      %2140 = vmatprep.subr.bf16.mxu0 %v2071
      %2141 = vmatpush1.bf16.msra.mxu0 %v2070
      %2142 = vmatprep.subr.bf16.mxu0 %v2069
      %2143 = vmatpush1.bf16.msra.mxu0 %v2068
      %2144 = vmatprep.subr.bf16.mxu0 %v2067
      %2145 = vmatpush1.bf16.msra.mxu0 %v2066
      %2146 = vmatprep.subr.bf16.mxu0 %v2097
      %2147 = vmatpush2.bf16.msra.mxu0 %v2096
      %2148 = vmatprep.subr.bf16.mxu0 %v2095
      %2149 = vmatpush2.bf16.msra.mxu0 %v2094
      %2150 = vmatprep.subr.bf16.mxu0 %v2093
      %2151 = vmatpush2.bf16.msra.mxu0 %v2092
      %2152 = vmatprep.subr.bf16.mxu0 %v2091
      %2153 = vmatpush2.bf16.msra.mxu0 %v2090
      %2154 = vmatprep.subr.bf16.mxu0 %v2089
      %2155 = vmatpush2.bf16.msra.mxu0 %v2088
      %2156 = vmatprep.subr.bf16.mxu0 %v2087
      %2157 = vmatpush2.bf16.msra.mxu0 %v2086
      %2158 = vmatprep.subr.bf16.mxu0 %v2085
      %2159 = vmatpush2.bf16.msra.mxu0 %v2084
      %2160 = vmatprep.subr.bf16.mxu0 %v2083
      %2161 = vmatpush2.bf16.msra.mxu0 %v2082
      %2162 = vmatprep.mubr.bf16.mxu0 %v1895
      %2163 = vmatmul.mubr.bf16.gmra.mxu0 %v1894
      %v2164 = vpop.f32.mrf.mxu0
      %v2165 = vadd.f32 %v1963, %v2164
      %v2166 = vpop.f32.mrf.mxu0
      %v2167 = vadd.f32 %v1967, %v2166
      %v2168 = vpop.f32.mrf.mxu0
      %v2169 = vadd.f32 %v1963, %v2168
      %v2170 = vpop.f32.mrf.mxu0
      %v2171 = vadd.f32 %v1967, %v2170
      %2172 = vmatprep.mubr.bf16.mxu0 %v1897
      %2173 = vmatmul.mubr.bf16.gmra.mxu0 %v1896
      %v2174 = vpop.f32.mrf.mxu0
      %v2175 = vadd.f32 %v1963, %v2174
      %v2176 = vpop.f32.mrf.mxu0
      %v2177 = vadd.f32 %v1967, %v2176
      %v2178 = vpop.f32.mrf.mxu0
      %v2179 = vadd.f32 %v1963, %v2178
      %v2180 = vpop.f32.mrf.mxu0
      %v2181 = vadd.f32 %v1967, %v2180
      %2182 = vmatprep.mubr.bf16.mxu0 %v1899
      %2183 = vmatmul.mubr.bf16.gmra.mxu0 %v1898
      %v2184 = vpop.f32.mrf.mxu0
      %v2185 = vadd.f32 %v1963, %v2184
      %v2186 = vpop.f32.mrf.mxu0
      %v2187 = vadd.f32 %v1967, %v2186
      %v2188 = vpop.f32.mrf.mxu0
      %v2189 = vadd.f32 %v1963, %v2188
      %v2190 = vpop.f32.mrf.mxu0
      %v2191 = vadd.f32 %v1967, %v2190
      %2192 = vmatprep.mubr.bf16.mxu0 %v1901
      %2193 = vmatmul.mubr.bf16.gmra.mxu0 %v1900
      %v2194 = vpop.f32.mrf.mxu0
      %v2195 = vadd.f32 %v1963, %v2194
      %v2196 = vpop.f32.mrf.mxu0
      %v2197 = vadd.f32 %v1967, %v2196
      %v2198 = vpop.f32.mrf.mxu0
      %v2199 = vadd.f32 %v1963, %v2198
      %v2200 = vpop.f32.mrf.mxu0
      %v2201 = vadd.f32 %v1967, %v2200
      %2202 = vmatprep.mubr.bf16.mxu0 %v1903
      %2203 = vmatmul.mubr.bf16.gmra.mxu0 %v1902
      %v2204 = vpop.f32.mrf.mxu0
      %v2205 = vadd.f32 %v1963, %v2204
      %v2206 = vpop.f32.mrf.mxu0
      %v2207 = vadd.f32 %v1967, %v2206
      %v2208 = vpop.f32.mrf.mxu0
      %v2209 = vadd.f32 %v1963, %v2208
      %v2210 = vpop.f32.mrf.mxu0
      %v2211 = vadd.f32 %v1967, %v2210
      %2212 = vmatprep.mubr.bf16.mxu0 %v1905
      %2213 = vmatmul.mubr.bf16.gmra.mxu0 %v1904
      %v2214 = vpop.f32.mrf.mxu0
      %v2215 = vadd.f32 %v1963, %v2214
      %v2216 = vpop.f32.mrf.mxu0
      %v2217 = vadd.f32 %v1967, %v2216
      %v2218 = vpop.f32.mrf.mxu0
      %v2219 = vadd.f32 %v1963, %v2218
      %v2220 = vpop.f32.mrf.mxu0
      %v2221 = vadd.f32 %v1967, %v2220
      %2222 = vmatprep.mubr.bf16.mxu0 %v1907
      %2223 = vmatmul.mubr.bf16.gmra.mxu0 %v1906
      %v2224 = vpop.f32.mrf.mxu0
      %v2225 = vadd.f32 %v1963, %v2224
      %v2226 = vpop.f32.mrf.mxu0
      %v2227 = vadd.f32 %v1967, %v2226
      %v2228 = vpop.f32.mrf.mxu0
      %v2229 = vadd.f32 %v1963, %v2228
      %v2230 = vpop.f32.mrf.mxu0
      %v2231 = vadd.f32 %v1967, %v2230
      %2232 = vmatprep.mubr.bf16.mxu0 %v1909
      %2233 = vmatmul.mubr.bf16.gmra.mxu0 %v1908
      %v2234 = vpop.f32.mrf.mxu0
      %v2235 = vadd.f32 %v1963, %v2234
      %v2236 = vpop.f32.mrf.mxu0
      %v2237 = vadd.f32 %v1967, %v2236
      %v2238 = vpop.f32.mrf.mxu0
      %v2239 = vadd.f32 %v1963, %v2238
      %v2240 = vpop.f32.mrf.mxu0
      %v2241 = vadd.f32 %v1967, %v2240
      %2242 = vmatprep.mubr.bf16.mxu0 %v1911
      %2243 = vmatmul.mubr.bf16.gmra.mxu0 %v1910
      %v2244 = vpop.f32.mrf.mxu0
      %v2245 = vadd.f32 %v1963, %v2244
      %v2246 = vpop.f32.mrf.mxu0
      %v2247 = vadd.f32 %v1967, %v2246
      %v2248 = vpop.f32.mrf.mxu0
      %v2249 = vadd.f32 %v1963, %v2248
      %v2250 = vpop.f32.mrf.mxu0
      %v2251 = vadd.f32 %v1967, %v2250
      %2252 = vmatprep.mubr.bf16.mxu0 %v1913
      %2253 = vmatmul.mubr.bf16.gmra.mxu0 %v1912
      %v2254 = vpop.f32.mrf.mxu0
      %v2255 = vadd.f32 %v1963, %v2254
      %v2256 = vpop.f32.mrf.mxu0
      %v2257 = vadd.f32 %v1967, %v2256
      %v2258 = vpop.f32.mrf.mxu0
      %v2259 = vadd.f32 %v1963, %v2258
      %v2260 = vpop.f32.mrf.mxu0
      %v2261 = vadd.f32 %v1967, %v2260
      %2262 = vmatprep.mubr.bf16.mxu0 %v1915
      %2263 = vmatmul.mubr.bf16.gmra.mxu0 %v1914
      %v2264 = vpop.f32.mrf.mxu0
      %v2265 = vadd.f32 %v1963, %v2264
      %v2266 = vpop.f32.mrf.mxu0
      %v2267 = vadd.f32 %v1967, %v2266
      %v2268 = vpop.f32.mrf.mxu0
      %v2269 = vadd.f32 %v1963, %v2268
      %v2270 = vpop.f32.mrf.mxu0
      %v2271 = vadd.f32 %v1967, %v2270
      %2272 = vmatprep.mubr.bf16.mxu0 %v1917
      %2273 = vmatmul.mubr.bf16.gmra.mxu0 %v1916
      %v2274 = vpop.f32.mrf.mxu0
      %v2275 = vadd.f32 %v1963, %v2274
      %v2276 = vpop.f32.mrf.mxu0
      %v2277 = vadd.f32 %v1967, %v2276
      %v2278 = vpop.f32.mrf.mxu0
      %v2279 = vadd.f32 %v1963, %v2278
      %v2280 = vpop.f32.mrf.mxu0
      %v2281 = vadd.f32 %v1967, %v2280
      %2282 = vmatprep.mubr.bf16.mxu0 %v1919
      %2283 = vmatmul.mubr.bf16.gmra.mxu0 %v1918
      %v2284 = vpop.f32.mrf.mxu0
      %v2285 = vadd.f32 %v1963, %v2284
      %v2286 = vpop.f32.mrf.mxu0
      %v2287 = vadd.f32 %v1967, %v2286
      %v2288 = vpop.f32.mrf.mxu0
      %v2289 = vadd.f32 %v1963, %v2288
      %v2290 = vpop.f32.mrf.mxu0
      %v2291 = vadd.f32 %v1967, %v2290
      %2292 = vmatprep.mubr.bf16.mxu0 %v1921
      %2293 = vmatmul.mubr.bf16.gmra.mxu0 %v1920
      %v2294 = vpop.f32.mrf.mxu0
      %v2295 = vadd.f32 %v1963, %v2294
      %v2296 = vpop.f32.mrf.mxu0
      %v2297 = vadd.f32 %v1967, %v2296
      %v2298 = vpop.f32.mrf.mxu0
      %v2299 = vadd.f32 %v1963, %v2298
      %v2300 = vpop.f32.mrf.mxu0
      %v2301 = vadd.f32 %v1967, %v2300
      %2302 = vmatprep.mubr.bf16.mxu0 %v1923
      %2303 = vmatmul.mubr.bf16.gmra.mxu0 %v1922
      %v2304 = vpop.f32.mrf.mxu0
      %v2305 = vadd.f32 %v1963, %v2304
      %v2306 = vpop.f32.mrf.mxu0
      %v2307 = vadd.f32 %v1967, %v2306
      %v2308 = vpop.f32.mrf.mxu0
      %v2309 = vadd.f32 %v1963, %v2308
      %v2310 = vpop.f32.mrf.mxu0
      %v2311 = vadd.f32 %v1967, %v2310
      %2312 = vmatprep.mubr.bf16.mxu0 %v1925
      %2313 = vmatmul.mubr.bf16.gmra.mxu0 %v1924
      %v2314 = vpop.f32.mrf.mxu0
      %v2315 = vadd.f32 %v1963, %v2314
      %v2316 = vpop.f32.mrf.mxu0
      %v2317 = vadd.f32 %v1967, %v2316
      %v2318 = vpop.f32.mrf.mxu0
      %v2319 = vadd.f32 %v1963, %v2318
      %v2320 = vpop.f32.mrf.mxu0
      %v2321 = vadd.f32 %v1967, %v2320
      %2322 = vdwg.mxu0
      %v2323 = vmul.f32 %v2165, 0.15915494
      %v2324 = vmul.f32 %v2167, 0.15915494
      %v2325 = vmul.f32 %v2169, 0.15915494
      %v2326 = vmul.f32 %v2171, 0.15915494
      %v2327 = vmul.f32 %v2175, 0.15915494
      %v2328 = vmul.f32 %v2177, 0.15915494
      %v2329 = vmul.f32 %v2179, 0.15915494
      %v2330 = vmul.f32 %v2181, 0.15915494
      %v2331 = vmul.f32 %v2185, 0.15915494
      %v2332 = vmul.f32 %v2187, 0.15915494
      %v2333 = vmul.f32 %v2189, 0.15915494
      %v2334 = vmul.f32 %v2191, 0.15915494
      %v2335 = vmul.f32 %v2195, 0.15915494
      %v2336 = vmul.f32 %v2197, 0.15915494
      %v2337 = vmul.f32 %v2199, 0.15915494
      %v2338 = vmul.f32 %v2201, 0.15915494
      %v2339 = vmul.f32 %v2205, 0.15915494
      %v2340 = vmul.f32 %v2207, 0.15915494
      %v2341 = vmul.f32 %v2209, 0.15915494
      %v2342 = vmul.f32 %v2211, 0.15915494
      %v2343 = vmul.f32 %v2215, 0.15915494
      %v2344 = vmul.f32 %v2217, 0.15915494
      %v2345 = vmul.f32 %v2219, 0.15915494
      %v2346 = vmul.f32 %v2221, 0.15915494
      %v2347 = vmul.f32 %v2225, 0.15915494
      %v2348 = vmul.f32 %v2227, 0.15915494
      %v2349 = vmul.f32 %v2229, 0.15915494
      %v2350 = vmul.f32 %v2231, 0.15915494
      %v2351 = vmul.f32 %v2235, 0.15915494
      %v2352 = vmul.f32 %v2237, 0.15915494
      %v2353 = vmul.f32 %v2239, 0.15915494
      %v2354 = vmul.f32 %v2241, 0.15915494
      %v2355 = vmul.f32 %v2245, 0.15915494
      %v2356 = vmul.f32 %v2247, 0.15915494
      %v2357 = vmul.f32 %v2249, 0.15915494
      %v2358 = vmul.f32 %v2251, 0.15915494
      %v2359 = vmul.f32 %v2255, 0.15915494
      %v2360 = vmul.f32 %v2257, 0.15915494
      %v2361 = vmul.f32 %v2259, 0.15915494
      %v2362 = vmul.f32 %v2261, 0.15915494
      %v2363 = vmul.f32 %v2265, 0.15915494
      %v2364 = vmul.f32 %v2267, 0.15915494
      %v2365 = vmul.f32 %v2269, 0.15915494
      %v2366 = vmul.f32 %v2271, 0.15915494
      %v2367 = vmul.f32 %v2275, 0.15915494
      %v2368 = vmul.f32 %v2277, 0.15915494
      %v2369 = vmul.f32 %v2279, 0.15915494
      %v2370 = vmul.f32 %v2281, 0.15915494
      %v2371 = vmul.f32 %v2285, 0.15915494
      %v2372 = vmul.f32 %v2287, 0.15915494
      %v2373 = vmul.f32 %v2289, 0.15915494
      %v2374 = vmul.f32 %v2291, 0.15915494
      %v2375 = vmul.f32 %v2295, 0.15915494
      %v2376 = vmul.f32 %v2297, 0.15915494
      %v2377 = vmul.f32 %v2299, 0.15915494
      %v2378 = vmul.f32 %v2301, 0.15915494
      %v2379 = vmul.f32 %v2305, 0.15915494
      %v2380 = vmul.f32 %v2307, 0.15915494
      %v2381 = vmul.f32 %v2309, 0.15915494
      %v2382 = vmul.f32 %v2311, 0.15915494
      %v2383 = vmul.f32 %v2315, 0.15915494
      %v2384 = vmul.f32 %v2317, 0.15915494
      %v2385 = vmul.f32 %v2319, 0.15915494
      %v2386 = vmul.f32 %v2321, 0.15915494
      %v2387 = vadd.f32 %v2323, 0.5
      %v2388 = vadd.f32 %v2324, 0.5
      %v2389 = vadd.f32 %v2325, 0.5
      %v2390 = vadd.f32 %v2326, 0.5
      %v2391 = vadd.f32 %v2327, 0.5
      %v2392 = vadd.f32 %v2328, 0.5
      %v2393 = vadd.f32 %v2329, 0.5
      %v2394 = vadd.f32 %v2330, 0.5
      %v2395 = vadd.f32 %v2331, 0.5
      %v2396 = vadd.f32 %v2332, 0.5
      %v2397 = vadd.f32 %v2333, 0.5
      %v2398 = vadd.f32 %v2334, 0.5
      %v2399 = vadd.f32 %v2335, 0.5
      %v2400 = vadd.f32 %v2336, 0.5
      %v2401 = vadd.f32 %v2337, 0.5
      %v2402 = vadd.f32 %v2338, 0.5
      %v2403 = vadd.f32 %v2339, 0.5
      %v2404 = vadd.f32 %v2340, 0.5
      %v2405 = vadd.f32 %v2341, 0.5
      %v2406 = vadd.f32 %v2342, 0.5
      %v2407 = vadd.f32 %v2343, 0.5
      %v2408 = vadd.f32 %v2344, 0.5
      %v2409 = vadd.f32 %v2345, 0.5
      %v2410 = vadd.f32 %v2346, 0.5
      %v2411 = vadd.f32 %v2347, 0.5
      %v2412 = vadd.f32 %v2348, 0.5
      %v2413 = vadd.f32 %v2349, 0.5
      %v2414 = vadd.f32 %v2350, 0.5
      %v2415 = vadd.f32 %v2351, 0.5
      %v2416 = vadd.f32 %v2352, 0.5
      %v2417 = vadd.f32 %v2353, 0.5
      %v2418 = vadd.f32 %v2354, 0.5
      %v2419 = vadd.f32 %v2355, 0.5
      %v2420 = vadd.f32 %v2356, 0.5
      %v2421 = vadd.f32 %v2357, 0.5
      %v2422 = vadd.f32 %v2358, 0.5
      %v2423 = vadd.f32 %v2359, 0.5
      %v2424 = vadd.f32 %v2360, 0.5
      %v2425 = vadd.f32 %v2361, 0.5
      %v2426 = vadd.f32 %v2362, 0.5
      %v2427 = vadd.f32 %v2363, 0.5
      %v2428 = vadd.f32 %v2364, 0.5
      %v2429 = vadd.f32 %v2365, 0.5
      %v2430 = vadd.f32 %v2366, 0.5
      %v2431 = vadd.f32 %v2367, 0.5
      %v2432 = vadd.f32 %v2368, 0.5
      %v2433 = vadd.f32 %v2369, 0.5
      %v2434 = vadd.f32 %v2370, 0.5
      %v2435 = vadd.f32 %v2371, 0.5
      %v2436 = vadd.f32 %v2372, 0.5
      %v2437 = vadd.f32 %v2373, 0.5
      %v2438 = vadd.f32 %v2374, 0.5
      %v2439 = vadd.f32 %v2375, 0.5
      %v2440 = vadd.f32 %v2376, 0.5
      %v2441 = vadd.f32 %v2377, 0.5
      %v2442 = vadd.f32 %v2378, 0.5
      %v2443 = vadd.f32 %v2379, 0.5
      %v2444 = vadd.f32 %v2380, 0.5
      %v2445 = vadd.f32 %v2381, 0.5
      %v2446 = vadd.f32 %v2382, 0.5
      %v2447 = vadd.f32 %v2383, 0.5
      %v2448 = vadd.f32 %v2384, 0.5
      %v2449 = vadd.f32 %v2385, 0.5
      %v2450 = vadd.f32 %v2386, 0.5
      %v2451 = vfloor.f32 %v2387
      %v2452 = vfloor.f32 %v2388
      %v2453 = vfloor.f32 %v2389
      %v2454 = vfloor.f32 %v2390
      %v2455 = vfloor.f32 %v2391
      %v2456 = vfloor.f32 %v2392
      %v2457 = vfloor.f32 %v2393
      %v2458 = vfloor.f32 %v2394
      %v2459 = vfloor.f32 %v2395
      %v2460 = vfloor.f32 %v2396
      %v2461 = vfloor.f32 %v2397
      %v2462 = vfloor.f32 %v2398
      %v2463 = vfloor.f32 %v2399
      %v2464 = vfloor.f32 %v2400
      %v2465 = vfloor.f32 %v2401
      %v2466 = vfloor.f32 %v2402
      %v2467 = vfloor.f32 %v2403
      %v2468 = vfloor.f32 %v2404
      %v2469 = vfloor.f32 %v2405
      %v2470 = vfloor.f32 %v2406
      %v2471 = vfloor.f32 %v2407
      %v2472 = vfloor.f32 %v2408
      %v2473 = vfloor.f32 %v2409
      %v2474 = vfloor.f32 %v2410
      %v2475 = vfloor.f32 %v2411
      %v2476 = vfloor.f32 %v2412
      %v2477 = vfloor.f32 %v2413
      %v2478 = vfloor.f32 %v2414
      %v2479 = vfloor.f32 %v2415
      %v2480 = vfloor.f32 %v2416
      %v2481 = vfloor.f32 %v2417
      %v2482 = vfloor.f32 %v2418
      %v2483 = vfloor.f32 %v2419
      %v2484 = vfloor.f32 %v2420
      %v2485 = vfloor.f32 %v2421
      %v2486 = vfloor.f32 %v2422
      %v2487 = vfloor.f32 %v2423
      %v2488 = vfloor.f32 %v2424
      %v2489 = vfloor.f32 %v2425
      %v2490 = vfloor.f32 %v2426
      %v2491 = vfloor.f32 %v2427
      %v2492 = vfloor.f32 %v2428
      %v2493 = vfloor.f32 %v2429
      %v2494 = vfloor.f32 %v2430
      %v2495 = vfloor.f32 %v2431
      %v2496 = vfloor.f32 %v2432
      %v2497 = vfloor.f32 %v2433
      %v2498 = vfloor.f32 %v2434
      %v2499 = vfloor.f32 %v2435
      %v2500 = vfloor.f32 %v2436
      %v2501 = vfloor.f32 %v2437
      %v2502 = vfloor.f32 %v2438
      %v2503 = vfloor.f32 %v2439
      %v2504 = vfloor.f32 %v2440
      %v2505 = vfloor.f32 %v2441
      %v2506 = vfloor.f32 %v2442
      %v2507 = vfloor.f32 %v2443
      %v2508 = vfloor.f32 %v2444
      %v2509 = vfloor.f32 %v2445
      %v2510 = vfloor.f32 %v2446
      %v2511 = vfloor.f32 %v2447
      %v2512 = vfloor.f32 %v2448
      %v2513 = vfloor.f32 %v2449
      %v2514 = vfloor.f32 %v2450
      %v2515 = vmul.f32 %v2451, 6.28125
      %v2516 = vmul.f32 %v2452, 6.28125
      %v2517 = vmul.f32 %v2453, 6.28125
      %v2518 = vmul.f32 %v2454, 6.28125
      %v2519 = vmul.f32 %v2455, 6.28125
      %v2520 = vmul.f32 %v2456, 6.28125
      %v2521 = vmul.f32 %v2457, 6.28125
      %v2522 = vmul.f32 %v2458, 6.28125
      %v2523 = vmul.f32 %v2459, 6.28125
      %v2524 = vmul.f32 %v2460, 6.28125
      %v2525 = vmul.f32 %v2461, 6.28125
      %v2526 = vmul.f32 %v2462, 6.28125
      %v2527 = vmul.f32 %v2463, 6.28125
      %v2528 = vmul.f32 %v2464, 6.28125
      %v2529 = vmul.f32 %v2465, 6.28125
      %v2530 = vmul.f32 %v2466, 6.28125
      %v2531 = vmul.f32 %v2467, 6.28125
      %v2532 = vmul.f32 %v2468, 6.28125
      %v2533 = vmul.f32 %v2469, 6.28125
      %v2534 = vmul.f32 %v2470, 6.28125
      %v2535 = vmul.f32 %v2471, 6.28125
      %v2536 = vmul.f32 %v2472, 6.28125
      %v2537 = vmul.f32 %v2473, 6.28125
      %v2538 = vmul.f32 %v2474, 6.28125
      %v2539 = vmul.f32 %v2475, 6.28125
      %v2540 = vmul.f32 %v2476, 6.28125
      %v2541 = vmul.f32 %v2477, 6.28125
      %v2542 = vmul.f32 %v2478, 6.28125
      %v2543 = vmul.f32 %v2479, 6.28125
      %v2544 = vmul.f32 %v2480, 6.28125
      %v2545 = vmul.f32 %v2481, 6.28125
      %v2546 = vmul.f32 %v2482, 6.28125
      %v2547 = vmul.f32 %v2483, 6.28125
      %v2548 = vmul.f32 %v2484, 6.28125
      %v2549 = vmul.f32 %v2485, 6.28125
      %v2550 = vmul.f32 %v2486, 6.28125
      %v2551 = vmul.f32 %v2487, 6.28125
      %v2552 = vmul.f32 %v2488, 6.28125
      %v2553 = vmul.f32 %v2489, 6.28125
      %v2554 = vmul.f32 %v2490, 6.28125
      %v2555 = vmul.f32 %v2491, 6.28125
      %v2556 = vmul.f32 %v2492, 6.28125
      %v2557 = vmul.f32 %v2493, 6.28125
      %v2558 = vmul.f32 %v2494, 6.28125
      %v2559 = vmul.f32 %v2495, 6.28125
      %v2560 = vmul.f32 %v2496, 6.28125
      %v2561 = vmul.f32 %v2497, 6.28125
      %v2562 = vmul.f32 %v2498, 6.28125
      %v2563 = vmul.f32 %v2499, 6.28125
      %v2564 = vmul.f32 %v2500, 6.28125
      %v2565 = vmul.f32 %v2501, 6.28125
      %v2566 = vmul.f32 %v2502, 6.28125
      %v2567 = vmul.f32 %v2503, 6.28125
      %v2568 = vmul.f32 %v2504, 6.28125
      %v2569 = vmul.f32 %v2505, 6.28125
      %v2570 = vmul.f32 %v2506, 6.28125
      %v2571 = vmul.f32 %v2507, 6.28125
      %v2572 = vmul.f32 %v2508, 6.28125
      %v2573 = vmul.f32 %v2509, 6.28125
      %v2574 = vmul.f32 %v2510, 6.28125
      %v2575 = vmul.f32 %v2511, 6.28125
      %v2576 = vmul.f32 %v2512, 6.28125
      %v2577 = vmul.f32 %v2513, 6.28125
      %v2578 = vmul.f32 %v2514, 6.28125
      %v2579 = vsub.f32 %v2165, %v2515
      %v2580 = vsub.f32 %v2167, %v2516
      %v2581 = vsub.f32 %v2169, %v2517
      %v2582 = vsub.f32 %v2171, %v2518
      %v2583 = vsub.f32 %v2175, %v2519
      %v2584 = vsub.f32 %v2177, %v2520
      %v2585 = vsub.f32 %v2179, %v2521
      %v2586 = vsub.f32 %v2181, %v2522
      %v2587 = vsub.f32 %v2185, %v2523
      %v2588 = vsub.f32 %v2187, %v2524
      %v2589 = vsub.f32 %v2189, %v2525
      %v2590 = vsub.f32 %v2191, %v2526
      %v2591 = vsub.f32 %v2195, %v2527
      %v2592 = vsub.f32 %v2197, %v2528
      %v2593 = vsub.f32 %v2199, %v2529
      %v2594 = vsub.f32 %v2201, %v2530
      %v2595 = vsub.f32 %v2205, %v2531
      %v2596 = vsub.f32 %v2207, %v2532
      %v2597 = vsub.f32 %v2209, %v2533
      %v2598 = vsub.f32 %v2211, %v2534
      %v2599 = vsub.f32 %v2215, %v2535
      %v2600 = vsub.f32 %v2217, %v2536
      %v2601 = vsub.f32 %v2219, %v2537
      %v2602 = vsub.f32 %v2221, %v2538
      %v2603 = vsub.f32 %v2225, %v2539
      %v2604 = vsub.f32 %v2227, %v2540
      %v2605 = vsub.f32 %v2229, %v2541
      %v2606 = vsub.f32 %v2231, %v2542
      %v2607 = vsub.f32 %v2235, %v2543
      %v2608 = vsub.f32 %v2237, %v2544
      %v2609 = vsub.f32 %v2239, %v2545
      %v2610 = vsub.f32 %v2241, %v2546
      %v2611 = vsub.f32 %v2245, %v2547
      %v2612 = vsub.f32 %v2247, %v2548
      %v2613 = vsub.f32 %v2249, %v2549
      %v2614 = vsub.f32 %v2251, %v2550
      %v2615 = vsub.f32 %v2255, %v2551
      %v2616 = vsub.f32 %v2257, %v2552
      %v2617 = vsub.f32 %v2259, %v2553
      %v2618 = vsub.f32 %v2261, %v2554
      %v2619 = vsub.f32 %v2265, %v2555
      %v2620 = vsub.f32 %v2267, %v2556
      %v2621 = vsub.f32 %v2269, %v2557
      %v2622 = vsub.f32 %v2271, %v2558
      %v2623 = vsub.f32 %v2275, %v2559
      %v2624 = vsub.f32 %v2277, %v2560
      %v2625 = vsub.f32 %v2279, %v2561
      %v2626 = vsub.f32 %v2281, %v2562
      %v2627 = vsub.f32 %v2285, %v2563
      %v2628 = vsub.f32 %v2287, %v2564
      %v2629 = vsub.f32 %v2289, %v2565
      %v2630 = vsub.f32 %v2291, %v2566
      %v2631 = vsub.f32 %v2295, %v2567
      %v2632 = vsub.f32 %v2297, %v2568
      %v2633 = vsub.f32 %v2299, %v2569
      %v2634 = vsub.f32 %v2301, %v2570
      %v2635 = vsub.f32 %v2305, %v2571
      %v2636 = vsub.f32 %v2307, %v2572
      %v2637 = vsub.f32 %v2309, %v2573
      %v2638 = vsub.f32 %v2311, %v2574
      %v2639 = vsub.f32 %v2315, %v2575
      %v2640 = vsub.f32 %v2317, %v2576
      %v2641 = vsub.f32 %v2319, %v2577
      %v2642 = vsub.f32 %v2321, %v2578
      %v2643 = vmul.f32 %v2451, 0.0019353072
      %v2644 = vmul.f32 %v2452, 0.0019353072
      %v2645 = vmul.f32 %v2453, 0.0019353072
      %v2646 = vmul.f32 %v2454, 0.0019353072
      %v2647 = vmul.f32 %v2455, 0.0019353072
      %v2648 = vmul.f32 %v2456, 0.0019353072
      %v2649 = vmul.f32 %v2457, 0.0019353072
      %v2650 = vmul.f32 %v2458, 0.0019353072
      %v2651 = vmul.f32 %v2459, 0.0019353072
      %v2652 = vmul.f32 %v2460, 0.0019353072
      %v2653 = vmul.f32 %v2461, 0.0019353072
      %v2654 = vmul.f32 %v2462, 0.0019353072
      %v2655 = vmul.f32 %v2463, 0.0019353072
      %v2656 = vmul.f32 %v2464, 0.0019353072
      %v2657 = vmul.f32 %v2465, 0.0019353072
      %v2658 = vmul.f32 %v2466, 0.0019353072
      %v2659 = vmul.f32 %v2467, 0.0019353072
      %v2660 = vmul.f32 %v2468, 0.0019353072
      %v2661 = vmul.f32 %v2469, 0.0019353072
      %v2662 = vmul.f32 %v2470, 0.0019353072
      %v2663 = vmul.f32 %v2471, 0.0019353072
      %v2664 = vmul.f32 %v2472, 0.0019353072
      %v2665 = vmul.f32 %v2473, 0.0019353072
      %v2666 = vmul.f32 %v2474, 0.0019353072
      %v2667 = vmul.f32 %v2475, 0.0019353072
      %v2668 = vmul.f32 %v2476, 0.0019353072
      %v2669 = vmul.f32 %v2477, 0.0019353072
      %v2670 = vmul.f32 %v2478, 0.0019353072
      %v2671 = vmul.f32 %v2479, 0.0019353072
      %v2672 = vmul.f32 %v2480, 0.0019353072
      %v2673 = vmul.f32 %v2481, 0.0019353072
      %v2674 = vmul.f32 %v2482, 0.0019353072
      %v2675 = vmul.f32 %v2483, 0.0019353072
      %v2676 = vmul.f32 %v2484, 0.0019353072
      %v2677 = vmul.f32 %v2485, 0.0019353072
      %v2678 = vmul.f32 %v2486, 0.0019353072
      %v2679 = vmul.f32 %v2487, 0.0019353072
      %v2680 = vmul.f32 %v2488, 0.0019353072
      %v2681 = vmul.f32 %v2489, 0.0019353072
      %v2682 = vmul.f32 %v2490, 0.0019353072
      %v2683 = vmul.f32 %v2491, 0.0019353072
      %v2684 = vmul.f32 %v2492, 0.0019353072
      %v2685 = vmul.f32 %v2493, 0.0019353072
      %v2686 = vmul.f32 %v2494, 0.0019353072
      %v2687 = vmul.f32 %v2495, 0.0019353072
      %v2688 = vmul.f32 %v2496, 0.0019353072
      %v2689 = vmul.f32 %v2497, 0.0019353072
      %v2690 = vmul.f32 %v2498, 0.0019353072
      %v2691 = vmul.f32 %v2499, 0.0019353072
      %v2692 = vmul.f32 %v2500, 0.0019353072
      %v2693 = vmul.f32 %v2501, 0.0019353072
      %v2694 = vmul.f32 %v2502, 0.0019353072
      %v2695 = vmul.f32 %v2503, 0.0019353072
      %v2696 = vmul.f32 %v2504, 0.0019353072
      %v2697 = vmul.f32 %v2505, 0.0019353072
      %v2698 = vmul.f32 %v2506, 0.0019353072
      %v2699 = vmul.f32 %v2507, 0.0019353072
      %v2700 = vmul.f32 %v2508, 0.0019353072
      %v2701 = vmul.f32 %v2509, 0.0019353072
      %v2702 = vmul.f32 %v2510, 0.0019353072
      %v2703 = vmul.f32 %v2511, 0.0019353072
      %v2704 = vmul.f32 %v2512, 0.0019353072
      %v2705 = vmul.f32 %v2513, 0.0019353072
      %v2706 = vmul.f32 %v2514, 0.0019353072
      %v2707 = vsub.f32 %v2579, %v2643
      %v2708 = vsub.f32 %v2580, %v2644
      %v2709 = vsub.f32 %v2581, %v2645
      %v2710 = vsub.f32 %v2582, %v2646
      %v2711 = vsub.f32 %v2583, %v2647
      %v2712 = vsub.f32 %v2584, %v2648
      %v2713 = vsub.f32 %v2585, %v2649
      %v2714 = vsub.f32 %v2586, %v2650
      %v2715 = vsub.f32 %v2587, %v2651
      %v2716 = vsub.f32 %v2588, %v2652
      %v2717 = vsub.f32 %v2589, %v2653
      %v2718 = vsub.f32 %v2590, %v2654
      %v2719 = vsub.f32 %v2591, %v2655
      %v2720 = vsub.f32 %v2592, %v2656
      %v2721 = vsub.f32 %v2593, %v2657
      %v2722 = vsub.f32 %v2594, %v2658
      %v2723 = vsub.f32 %v2595, %v2659
      %v2724 = vsub.f32 %v2596, %v2660
      %v2725 = vsub.f32 %v2597, %v2661
      %v2726 = vsub.f32 %v2598, %v2662
      %v2727 = vsub.f32 %v2599, %v2663
      %v2728 = vsub.f32 %v2600, %v2664
      %v2729 = vsub.f32 %v2601, %v2665
      %v2730 = vsub.f32 %v2602, %v2666
      %v2731 = vsub.f32 %v2603, %v2667
      %v2732 = vsub.f32 %v2604, %v2668
      %v2733 = vsub.f32 %v2605, %v2669
      %v2734 = vsub.f32 %v2606, %v2670
      %v2735 = vsub.f32 %v2607, %v2671
      %v2736 = vsub.f32 %v2608, %v2672
      %v2737 = vsub.f32 %v2609, %v2673
      %v2738 = vsub.f32 %v2610, %v2674
      %v2739 = vsub.f32 %v2611, %v2675
      %v2740 = vsub.f32 %v2612, %v2676
      %v2741 = vsub.f32 %v2613, %v2677
      %v2742 = vsub.f32 %v2614, %v2678
      %v2743 = vsub.f32 %v2615, %v2679
      %v2744 = vsub.f32 %v2616, %v2680
      %v2745 = vsub.f32 %v2617, %v2681
      %v2746 = vsub.f32 %v2618, %v2682
      %v2747 = vsub.f32 %v2619, %v2683
      %v2748 = vsub.f32 %v2620, %v2684
      %v2749 = vsub.f32 %v2621, %v2685
      %v2750 = vsub.f32 %v2622, %v2686
      %v2751 = vsub.f32 %v2623, %v2687
      %v2752 = vsub.f32 %v2624, %v2688
      %v2753 = vsub.f32 %v2625, %v2689
      %v2754 = vsub.f32 %v2626, %v2690
      %v2755 = vsub.f32 %v2627, %v2691
      %v2756 = vsub.f32 %v2628, %v2692
      %v2757 = vsub.f32 %v2629, %v2693
      %v2758 = vsub.f32 %v2630, %v2694
      %v2759 = vsub.f32 %v2631, %v2695
      %v2760 = vsub.f32 %v2632, %v2696
      %v2761 = vsub.f32 %v2633, %v2697
      %v2762 = vsub.f32 %v2634, %v2698
      %v2763 = vsub.f32 %v2635, %v2699
      %v2764 = vsub.f32 %v2636, %v2700
      %v2765 = vsub.f32 %v2637, %v2701
      %v2766 = vsub.f32 %v2638, %v2702
      %v2767 = vsub.f32 %v2639, %v2703
      %v2768 = vsub.f32 %v2640, %v2704
      %v2769 = vsub.f32 %v2641, %v2705
      %v2770 = vsub.f32 %v2642, %v2706
      %v2771 = vmul.f32 %v2707, %v2707
      %v2772 = vmul.f32 %v2708, %v2708
      %v2773 = vmul.f32 %v2709, %v2709
      %v2774 = vmul.f32 %v2710, %v2710
      %v2775 = vmul.f32 %v2711, %v2711
      %v2776 = vmul.f32 %v2712, %v2712
      %v2777 = vmul.f32 %v2713, %v2713
      %v2778 = vmul.f32 %v2714, %v2714
      %v2779 = vmul.f32 %v2715, %v2715
      %v2780 = vmul.f32 %v2716, %v2716
      %v2781 = vmul.f32 %v2717, %v2717
      %v2782 = vmul.f32 %v2718, %v2718
      %v2783 = vmul.f32 %v2719, %v2719
      %v2784 = vmul.f32 %v2720, %v2720
      %v2785 = vmul.f32 %v2721, %v2721
      %v2786 = vmul.f32 %v2722, %v2722
      %v2787 = vmul.f32 %v2723, %v2723
      %v2788 = vmul.f32 %v2724, %v2724
      %v2789 = vmul.f32 %v2725, %v2725
      %v2790 = vmul.f32 %v2726, %v2726
      %v2791 = vmul.f32 %v2727, %v2727
      %v2792 = vmul.f32 %v2728, %v2728
      %v2793 = vmul.f32 %v2729, %v2729
      %v2794 = vmul.f32 %v2730, %v2730
      %v2795 = vmul.f32 %v2731, %v2731
      %v2796 = vmul.f32 %v2732, %v2732
      %v2797 = vmul.f32 %v2733, %v2733
      %v2798 = vmul.f32 %v2734, %v2734
      %v2799 = vmul.f32 %v2735, %v2735
      %v2800 = vmul.f32 %v2736, %v2736
      %v2801 = vmul.f32 %v2737, %v2737
      %v2802 = vmul.f32 %v2738, %v2738
      %v2803 = vmul.f32 %v2739, %v2739
      %v2804 = vmul.f32 %v2740, %v2740
      %v2805 = vmul.f32 %v2741, %v2741
      %v2806 = vmul.f32 %v2742, %v2742
      %v2807 = vmul.f32 %v2743, %v2743
      %v2808 = vmul.f32 %v2744, %v2744
      %v2809 = vmul.f32 %v2745, %v2745
      %v2810 = vmul.f32 %v2746, %v2746
      %v2811 = vmul.f32 %v2747, %v2747
      %v2812 = vmul.f32 %v2748, %v2748
      %v2813 = vmul.f32 %v2749, %v2749
      %v2814 = vmul.f32 %v2750, %v2750
      %v2815 = vmul.f32 %v2751, %v2751
      %v2816 = vmul.f32 %v2752, %v2752
      %v2817 = vmul.f32 %v2753, %v2753
      %v2818 = vmul.f32 %v2754, %v2754
      %v2819 = vmul.f32 %v2755, %v2755
      %v2820 = vmul.f32 %v2756, %v2756
      %v2821 = vmul.f32 %v2757, %v2757
      %v2822 = vmul.f32 %v2758, %v2758
      %v2823 = vmul.f32 %v2759, %v2759
      %v2824 = vmul.f32 %v2760, %v2760
      %v2825 = vmul.f32 %v2761, %v2761
      %v2826 = vmul.f32 %v2762, %v2762
      %v2827 = vmul.f32 %v2763, %v2763
      %v2828 = vmul.f32 %v2764, %v2764
      %v2829 = vmul.f32 %v2765, %v2765
      %v2830 = vmul.f32 %v2766, %v2766
      %v2831 = vmul.f32 %v2767, %v2767
      %v2832 = vmul.f32 %v2768, %v2768
      %v2833 = vmul.f32 %v2769, %v2769
      %v2834 = vmul.f32 %v2770, %v2770
      %v2835 = vmul.f32 %v2771, 2.8656796e-06
      %v2836 = vmul.f32 %v2772, 2.8656796e-06
      %v2837 = vmul.f32 %v2773, 2.8656796e-06
      %v2838 = vmul.f32 %v2774, 2.8656796e-06
      %v2839 = vmul.f32 %v2775, 2.8656796e-06
      %v2840 = vmul.f32 %v2776, 2.8656796e-06
      %v2841 = vmul.f32 %v2777, 2.8656796e-06
      %v2842 = vmul.f32 %v2778, 2.8656796e-06
      %v2843 = vmul.f32 %v2779, 2.8656796e-06
      %v2844 = vmul.f32 %v2780, 2.8656796e-06
      %v2845 = vmul.f32 %v2781, 2.8656796e-06
      %v2846 = vmul.f32 %v2782, 2.8656796e-06
      %v2847 = vmul.f32 %v2783, 2.8656796e-06
      %v2848 = vmul.f32 %v2784, 2.8656796e-06
      %v2849 = vmul.f32 %v2785, 2.8656796e-06
      %v2850 = vmul.f32 %v2786, 2.8656796e-06
      %v2851 = vmul.f32 %v2787, 2.8656796e-06
      %v2852 = vmul.f32 %v2788, 2.8656796e-06
      %v2853 = vmul.f32 %v2789, 2.8656796e-06
      %v2854 = vmul.f32 %v2790, 2.8656796e-06
      %v2855 = vmul.f32 %v2791, 2.8656796e-06
      %v2856 = vmul.f32 %v2792, 2.8656796e-06
      %v2857 = vmul.f32 %v2793, 2.8656796e-06
      %v2858 = vmul.f32 %v2794, 2.8656796e-06
      %v2859 = vmul.f32 %v2795, 2.8656796e-06
      %v2860 = vmul.f32 %v2796, 2.8656796e-06
      %v2861 = vmul.f32 %v2797, 2.8656796e-06
      %v2862 = vmul.f32 %v2798, 2.8656796e-06
      %v2863 = vmul.f32 %v2799, 2.8656796e-06
      %v2864 = vmul.f32 %v2800, 2.8656796e-06
      %v2865 = vmul.f32 %v2801, 2.8656796e-06
      %v2866 = vmul.f32 %v2802, 2.8656796e-06
      %v2867 = vmul.f32 %v2803, 2.8656796e-06
      %v2868 = vmul.f32 %v2804, 2.8656796e-06
      %v2869 = vmul.f32 %v2805, 2.8656796e-06
      %v2870 = vmul.f32 %v2806, 2.8656796e-06
      %v2871 = vmul.f32 %v2807, 2.8656796e-06
      %v2872 = vmul.f32 %v2808, 2.8656796e-06
      %v2873 = vmul.f32 %v2809, 2.8656796e-06
      %v2874 = vmul.f32 %v2810, 2.8656796e-06
      %v2875 = vmul.f32 %v2811, 2.8656796e-06
      %v2876 = vmul.f32 %v2812, 2.8656796e-06
      %v2877 = vmul.f32 %v2813, 2.8656796e-06
      %v2878 = vmul.f32 %v2814, 2.8656796e-06
      %v2879 = vmul.f32 %v2815, 2.8656796e-06
      %v2880 = vmul.f32 %v2816, 2.8656796e-06
      %v2881 = vmul.f32 %v2817, 2.8656796e-06
      %v2882 = vmul.f32 %v2818, 2.8656796e-06
      %v2883 = vmul.f32 %v2819, 2.8656796e-06
      %v2884 = vmul.f32 %v2820, 2.8656796e-06
      %v2885 = vmul.f32 %v2821, 2.8656796e-06
      %v2886 = vmul.f32 %v2822, 2.8656796e-06
      %v2887 = vmul.f32 %v2823, 2.8656796e-06
      %v2888 = vmul.f32 %v2824, 2.8656796e-06
      %v2889 = vmul.f32 %v2825, 2.8656796e-06
      %v2890 = vmul.f32 %v2826, 2.8656796e-06
      %v2891 = vmul.f32 %v2827, 2.8656796e-06
      %v2892 = vmul.f32 %v2828, 2.8656796e-06
      %v2893 = vmul.f32 %v2829, 2.8656796e-06
      %v2894 = vmul.f32 %v2830, 2.8656796e-06
      %v2895 = vmul.f32 %v2831, 2.8656796e-06
      %v2896 = vmul.f32 %v2832, 2.8656796e-06
      %v2897 = vmul.f32 %v2833, 2.8656796e-06
      %v2898 = vmul.f32 %v2834, 2.8656796e-06
      %v2899 = vadd.f32 %v2835, -0.00019855992
      %v2900 = vadd.f32 %v2836, -0.00019855992
      %v2901 = vadd.f32 %v2837, -0.00019855992
      %v2902 = vadd.f32 %v2838, -0.00019855992
      %v2903 = vadd.f32 %v2839, -0.00019855992
      %v2904 = vadd.f32 %v2840, -0.00019855992
      %v2905 = vadd.f32 %v2841, -0.00019855992
      %v2906 = vadd.f32 %v2842, -0.00019855992
      %v2907 = vadd.f32 %v2843, -0.00019855992
      %v2908 = vadd.f32 %v2844, -0.00019855992
      %v2909 = vadd.f32 %v2845, -0.00019855992
      %v2910 = vadd.f32 %v2846, -0.00019855992
      %v2911 = vadd.f32 %v2847, -0.00019855992
      %v2912 = vadd.f32 %v2848, -0.00019855992
      %v2913 = vadd.f32 %v2849, -0.00019855992
      %v2914 = vadd.f32 %v2850, -0.00019855992
      %v2915 = vadd.f32 %v2851, -0.00019855992
      %v2916 = vadd.f32 %v2852, -0.00019855992
      %v2917 = vadd.f32 %v2853, -0.00019855992
      %v2918 = vadd.f32 %v2854, -0.00019855992
      %v2919 = vadd.f32 %v2855, -0.00019855992
      %v2920 = vadd.f32 %v2856, -0.00019855992
      %v2921 = vadd.f32 %v2857, -0.00019855992
      %v2922 = vadd.f32 %v2858, -0.00019855992
      %v2923 = vadd.f32 %v2859, -0.00019855992
      %v2924 = vadd.f32 %v2860, -0.00019855992
      %v2925 = vadd.f32 %v2861, -0.00019855992
      %v2926 = vadd.f32 %v2862, -0.00019855992
      %v2927 = vadd.f32 %v2863, -0.00019855992
      %v2928 = vadd.f32 %v2864, -0.00019855992
      %v2929 = vadd.f32 %v2865, -0.00019855992
      %v2930 = vadd.f32 %v2866, -0.00019855992
      %v2931 = vadd.f32 %v2867, -0.00019855992
      %v2932 = vadd.f32 %v2868, -0.00019855992
      %v2933 = vadd.f32 %v2869, -0.00019855992
      %v2934 = vadd.f32 %v2870, -0.00019855992
      %v2935 = vadd.f32 %v2871, -0.00019855992
      %v2936 = vadd.f32 %v2872, -0.00019855992
      %v2937 = vadd.f32 %v2873, -0.00019855992
      %v2938 = vadd.f32 %v2874, -0.00019855992
      %v2939 = vadd.f32 %v2875, -0.00019855992
      %v2940 = vadd.f32 %v2876, -0.00019855992
      %v2941 = vadd.f32 %v2877, -0.00019855992
      %v2942 = vadd.f32 %v2878, -0.00019855992
      %v2943 = vadd.f32 %v2879, -0.00019855992
      %v2944 = vadd.f32 %v2880, -0.00019855992
      %v2945 = vadd.f32 %v2881, -0.00019855992
      %v2946 = vadd.f32 %v2882, -0.00019855992
      %v2947 = vadd.f32 %v2883, -0.00019855992
      %v2948 = vadd.f32 %v2884, -0.00019855992
      %v2949 = vadd.f32 %v2885, -0.00019855992
      %v2950 = vadd.f32 %v2886, -0.00019855992
      %v2951 = vadd.f32 %v2887, -0.00019855992
      %v2952 = vadd.f32 %v2888, -0.00019855992
      %v2953 = vadd.f32 %v2889, -0.00019855992
      %v2954 = vadd.f32 %v2890, -0.00019855992
      %v2955 = vadd.f32 %v2891, -0.00019855992
      %v2956 = vadd.f32 %v2892, -0.00019855992
      %v2957 = vadd.f32 %v2893, -0.00019855992
      %v2958 = vadd.f32 %v2894, -0.00019855992
      %v2959 = vadd.f32 %v2895, -0.00019855992
      %v2960 = vadd.f32 %v2896, -0.00019855992
      %v2961 = vadd.f32 %v2897, -0.00019855992
      %v2962 = vadd.f32 %v2898, -0.00019855992
      %v2963 = vmul.f32 %v2899, %v2771
      %v2964 = vmul.f32 %v2900, %v2772
      %v2965 = vmul.f32 %v2901, %v2773
      %v2966 = vmul.f32 %v2902, %v2774
      %v2967 = vmul.f32 %v2903, %v2775
      %v2968 = vmul.f32 %v2904, %v2776
      %v2969 = vmul.f32 %v2905, %v2777
      %v2970 = vmul.f32 %v2906, %v2778
      %v2971 = vmul.f32 %v2907, %v2779
      %v2972 = vmul.f32 %v2908, %v2780
      %v2973 = vmul.f32 %v2909, %v2781
      %v2974 = vmul.f32 %v2910, %v2782
      %v2975 = vmul.f32 %v2911, %v2783
      %v2976 = vmul.f32 %v2912, %v2784
      %v2977 = vmul.f32 %v2913, %v2785
      %v2978 = vmul.f32 %v2914, %v2786
      %v2979 = vmul.f32 %v2915, %v2787
      %v2980 = vmul.f32 %v2916, %v2788
      %v2981 = vmul.f32 %v2917, %v2789
      %v2982 = vmul.f32 %v2918, %v2790
      %v2983 = vmul.f32 %v2919, %v2791
      %v2984 = vmul.f32 %v2920, %v2792
      %v2985 = vmul.f32 %v2921, %v2793
      %v2986 = vmul.f32 %v2922, %v2794
      %v2987 = vmul.f32 %v2923, %v2795
      %v2988 = vmul.f32 %v2924, %v2796
      %v2989 = vmul.f32 %v2925, %v2797
      %v2990 = vmul.f32 %v2926, %v2798
      %v2991 = vmul.f32 %v2927, %v2799
      %v2992 = vmul.f32 %v2928, %v2800
      %v2993 = vmul.f32 %v2929, %v2801
      %v2994 = vmul.f32 %v2930, %v2802
      %v2995 = vmul.f32 %v2931, %v2803
      %v2996 = vmul.f32 %v2932, %v2804
      %v2997 = vmul.f32 %v2933, %v2805
      %v2998 = vmul.f32 %v2934, %v2806
      %v2999 = vmul.f32 %v2935, %v2807
      %v3000 = vmul.f32 %v2936, %v2808
      %v3001 = vmul.f32 %v2937, %v2809
      %v3002 = vmul.f32 %v2938, %v2810
      %v3003 = vmul.f32 %v2939, %v2811
      %v3004 = vmul.f32 %v2940, %v2812
      %v3005 = vmul.f32 %v2941, %v2813
      %v3006 = vmul.f32 %v2942, %v2814
      %v3007 = vmul.f32 %v2943, %v2815
      %v3008 = vmul.f32 %v2944, %v2816
      %v3009 = vmul.f32 %v2945, %v2817
      %v3010 = vmul.f32 %v2946, %v2818
      %v3011 = vmul.f32 %v2947, %v2819
      %v3012 = vmul.f32 %v2948, %v2820
      %v3013 = vmul.f32 %v2949, %v2821
      %v3014 = vmul.f32 %v2950, %v2822
      %v3015 = vmul.f32 %v2951, %v2823
      %v3016 = vmul.f32 %v2952, %v2824
      %v3017 = vmul.f32 %v2953, %v2825
      %v3018 = vmul.f32 %v2954, %v2826
      %v3019 = vmul.f32 %v2955, %v2827
      %v3020 = vmul.f32 %v2956, %v2828
      %v3021 = vmul.f32 %v2957, %v2829
      %v3022 = vmul.f32 %v2958, %v2830
      %v3023 = vmul.f32 %v2959, %v2831
      %v3024 = vmul.f32 %v2960, %v2832
      %v3025 = vmul.f32 %v2961, %v2833
      %v3026 = vmul.f32 %v2962, %v2834
      %v3027 = vadd.f32 %v2963, 0.008333386
      %v3028 = vadd.f32 %v2964, 0.008333386
      %v3029 = vadd.f32 %v2965, 0.008333386
      %v3030 = vadd.f32 %v2966, 0.008333386
      %v3031 = vadd.f32 %v2967, 0.008333386
      %v3032 = vadd.f32 %v2968, 0.008333386
      %v3033 = vadd.f32 %v2969, 0.008333386
      %v3034 = vadd.f32 %v2970, 0.008333386
      %v3035 = vadd.f32 %v2971, 0.008333386
      %v3036 = vadd.f32 %v2972, 0.008333386
      %v3037 = vadd.f32 %v2973, 0.008333386
      %v3038 = vadd.f32 %v2974, 0.008333386
      %v3039 = vadd.f32 %v2975, 0.008333386
      %v3040 = vadd.f32 %v2976, 0.008333386
      %v3041 = vadd.f32 %v2977, 0.008333386
      %v3042 = vadd.f32 %v2978, 0.008333386
      %v3043 = vadd.f32 %v2979, 0.008333386
      %v3044 = vadd.f32 %v2980, 0.008333386
      %v3045 = vadd.f32 %v2981, 0.008333386
      %v3046 = vadd.f32 %v2982, 0.008333386
      %v3047 = vadd.f32 %v2983, 0.008333386
      %v3048 = vadd.f32 %v2984, 0.008333386
      %v3049 = vadd.f32 %v2985, 0.008333386
      %v3050 = vadd.f32 %v2986, 0.008333386
      %v3051 = vadd.f32 %v2987, 0.008333386
      %v3052 = vadd.f32 %v2988, 0.008333386
      %v3053 = vadd.f32 %v2989, 0.008333386
      %v3054 = vadd.f32 %v2990, 0.008333386
      %v3055 = vadd.f32 %v2991, 0.008333386
      %v3056 = vadd.f32 %v2992, 0.008333386
      %v3057 = vadd.f32 %v2993, 0.008333386
      %v3058 = vadd.f32 %v2994, 0.008333386
      %v3059 = vadd.f32 %v2995, 0.008333386
      %v3060 = vadd.f32 %v2996, 0.008333386
      %v3061 = vadd.f32 %v2997, 0.008333386
      %v3062 = vadd.f32 %v2998, 0.008333386
      %v3063 = vadd.f32 %v2999, 0.008333386
      %v3064 = vadd.f32 %v3000, 0.008333386
      %v3065 = vadd.f32 %v3001, 0.008333386
      %v3066 = vadd.f32 %v3002, 0.008333386
      %v3067 = vadd.f32 %v3003, 0.008333386
      %v3068 = vadd.f32 %v3004, 0.008333386
      %v3069 = vadd.f32 %v3005, 0.008333386
      %v3070 = vadd.f32 %v3006, 0.008333386
      %v3071 = vadd.f32 %v3007, 0.008333386
      %v3072 = vadd.f32 %v3008, 0.008333386
      %v3073 = vadd.f32 %v3009, 0.008333386
      %v3074 = vadd.f32 %v3010, 0.008333386
      %v3075 = vadd.f32 %v3011, 0.008333386
      %v3076 = vadd.f32 %v3012, 0.008333386
      %v3077 = vadd.f32 %v3013, 0.008333386
      %v3078 = vadd.f32 %v3014, 0.008333386
      %v3079 = vadd.f32 %v3015, 0.008333386
      %v3080 = vadd.f32 %v3016, 0.008333386
      %v3081 = vadd.f32 %v3017, 0.008333386
      %v3082 = vadd.f32 %v3018, 0.008333386
      %v3083 = vadd.f32 %v3019, 0.008333386
      %v3084 = vadd.f32 %v3020, 0.008333386
      %v3085 = vadd.f32 %v3021, 0.008333386
      %v3086 = vadd.f32 %v3022, 0.008333386
      %v3087 = vadd.f32 %v3023, 0.008333386
      %v3088 = vadd.f32 %v3024, 0.008333386
      %v3089 = vadd.f32 %v3025, 0.008333386
      %v3090 = vadd.f32 %v3026, 0.008333386
      %v3091 = vmul.f32 %v3027, %v2771
      %v3092 = vmul.f32 %v3028, %v2772
      %v3093 = vmul.f32 %v3029, %v2773
      %v3094 = vmul.f32 %v3030, %v2774
      %v3095 = vmul.f32 %v3031, %v2775
      %v3096 = vmul.f32 %v3032, %v2776
      %v3097 = vmul.f32 %v3033, %v2777
      %v3098 = vmul.f32 %v3034, %v2778
      %v3099 = vmul.f32 %v3035, %v2779
      %v3100 = vmul.f32 %v3036, %v2780
      %v3101 = vmul.f32 %v3037, %v2781
      %v3102 = vmul.f32 %v3038, %v2782
      %v3103 = vmul.f32 %v3039, %v2783
      %v3104 = vmul.f32 %v3040, %v2784
      %v3105 = vmul.f32 %v3041, %v2785
      %v3106 = vmul.f32 %v3042, %v2786
      %v3107 = vmul.f32 %v3043, %v2787
      %v3108 = vmul.f32 %v3044, %v2788
      %v3109 = vmul.f32 %v3045, %v2789
      %v3110 = vmul.f32 %v3046, %v2790
      %v3111 = vmul.f32 %v3047, %v2791
      %v3112 = vmul.f32 %v3048, %v2792
      %v3113 = vmul.f32 %v3049, %v2793
      %v3114 = vmul.f32 %v3050, %v2794
      %v3115 = vmul.f32 %v3051, %v2795
      %v3116 = vmul.f32 %v3052, %v2796
      %v3117 = vmul.f32 %v3053, %v2797
      %v3118 = vmul.f32 %v3054, %v2798
      %v3119 = vmul.f32 %v3055, %v2799
      %v3120 = vmul.f32 %v3056, %v2800
      %v3121 = vmul.f32 %v3057, %v2801
      %v3122 = vmul.f32 %v3058, %v2802
      %v3123 = vmul.f32 %v3059, %v2803
      %v3124 = vmul.f32 %v3060, %v2804
      %v3125 = vmul.f32 %v3061, %v2805
      %v3126 = vmul.f32 %v3062, %v2806
      %v3127 = vmul.f32 %v3063, %v2807
      %v3128 = vmul.f32 %v3064, %v2808
      %v3129 = vmul.f32 %v3065, %v2809
      %v3130 = vmul.f32 %v3066, %v2810
      %v3131 = vmul.f32 %v3067, %v2811
      %v3132 = vmul.f32 %v3068, %v2812
      %v3133 = vmul.f32 %v3069, %v2813
      %v3134 = vmul.f32 %v3070, %v2814
      %v3135 = vmul.f32 %v3071, %v2815
      %v3136 = vmul.f32 %v3072, %v2816
      %v3137 = vmul.f32 %v3073, %v2817
      %v3138 = vmul.f32 %v3074, %v2818
      %v3139 = vmul.f32 %v3075, %v2819
      %v3140 = vmul.f32 %v3076, %v2820
      %v3141 = vmul.f32 %v3077, %v2821
      %v3142 = vmul.f32 %v3078, %v2822
      %v3143 = vmul.f32 %v3079, %v2823
      %v3144 = vmul.f32 %v3080, %v2824
      %v3145 = vmul.f32 %v3081, %v2825
      %v3146 = vmul.f32 %v3082, %v2826
      %v3147 = vmul.f32 %v3083, %v2827
      %v3148 = vmul.f32 %v3084, %v2828
      %v3149 = vmul.f32 %v3085, %v2829
      %v3150 = vmul.f32 %v3086, %v2830
      %v3151 = vmul.f32 %v3087, %v2831
      %v3152 = vmul.f32 %v3088, %v2832
      %v3153 = vmul.f32 %v3089, %v2833
      %v3154 = vmul.f32 %v3090, %v2834
      %v3155 = vadd.f32 %v3091, -0.16666667
      %v3156 = vadd.f32 %v3092, -0.16666667
      %v3157 = vadd.f32 %v3093, -0.16666667
      %v3158 = vadd.f32 %v3094, -0.16666667
      %v3159 = vadd.f32 %v3095, -0.16666667
      %v3160 = vadd.f32 %v3096, -0.16666667
      %v3161 = vadd.f32 %v3097, -0.16666667
      %v3162 = vadd.f32 %v3098, -0.16666667
      %v3163 = vadd.f32 %v3099, -0.16666667
      %v3164 = vadd.f32 %v3100, -0.16666667
      %v3165 = vadd.f32 %v3101, -0.16666667
      %v3166 = vadd.f32 %v3102, -0.16666667
      %v3167 = vadd.f32 %v3103, -0.16666667
      %v3168 = vadd.f32 %v3104, -0.16666667
      %v3169 = vadd.f32 %v3105, -0.16666667
      %v3170 = vadd.f32 %v3106, -0.16666667
      %v3171 = vadd.f32 %v3107, -0.16666667
      %v3172 = vadd.f32 %v3108, -0.16666667
      %v3173 = vadd.f32 %v3109, -0.16666667
      %v3174 = vadd.f32 %v3110, -0.16666667
      %v3175 = vadd.f32 %v3111, -0.16666667
      %v3176 = vadd.f32 %v3112, -0.16666667
      %v3177 = vadd.f32 %v3113, -0.16666667
      %v3178 = vadd.f32 %v3114, -0.16666667
      %v3179 = vadd.f32 %v3115, -0.16666667
      %v3180 = vadd.f32 %v3116, -0.16666667
      %v3181 = vadd.f32 %v3117, -0.16666667
      %v3182 = vadd.f32 %v3118, -0.16666667
      %v3183 = vadd.f32 %v3119, -0.16666667
      %v3184 = vadd.f32 %v3120, -0.16666667
      %v3185 = vadd.f32 %v3121, -0.16666667
      %v3186 = vadd.f32 %v3122, -0.16666667
      %v3187 = vadd.f32 %v3123, -0.16666667
      %v3188 = vadd.f32 %v3124, -0.16666667
      %v3189 = vadd.f32 %v3125, -0.16666667
      %v3190 = vadd.f32 %v3126, -0.16666667
      %v3191 = vadd.f32 %v3127, -0.16666667
      %v3192 = vadd.f32 %v3128, -0.16666667
      %v3193 = vadd.f32 %v3129, -0.16666667
      %v3194 = vadd.f32 %v3130, -0.16666667
      %v3195 = vadd.f32 %v3131, -0.16666667
      %v3196 = vadd.f32 %v3132, -0.16666667
      %v3197 = vadd.f32 %v3133, -0.16666667
      %v3198 = vadd.f32 %v3134, -0.16666667
      %v3199 = vadd.f32 %v3135, -0.16666667
      %v3200 = vadd.f32 %v3136, -0.16666667
      %v3201 = vadd.f32 %v3137, -0.16666667
      %v3202 = vadd.f32 %v3138, -0.16666667
      %v3203 = vadd.f32 %v3139, -0.16666667
      %v3204 = vadd.f32 %v3140, -0.16666667
      %v3205 = vadd.f32 %v3141, -0.16666667
      %v3206 = vadd.f32 %v3142, -0.16666667
      %v3207 = vadd.f32 %v3143, -0.16666667
      %v3208 = vadd.f32 %v3144, -0.16666667
      %v3209 = vadd.f32 %v3145, -0.16666667
      %v3210 = vadd.f32 %v3146, -0.16666667
      %v3211 = vadd.f32 %v3147, -0.16666667
      %v3212 = vadd.f32 %v3148, -0.16666667
      %v3213 = vadd.f32 %v3149, -0.16666667
      %v3214 = vadd.f32 %v3150, -0.16666667
      %v3215 = vadd.f32 %v3151, -0.16666667
      %v3216 = vadd.f32 %v3152, -0.16666667
      %v3217 = vadd.f32 %v3153, -0.16666667
      %v3218 = vadd.f32 %v3154, -0.16666667
      %v3219 = vmul.f32 %v2707, %v2771
      %v3220 = vmul.f32 %v2708, %v2772
      %v3221 = vmul.f32 %v2709, %v2773
      %v3222 = vmul.f32 %v2710, %v2774
      %v3223 = vmul.f32 %v2711, %v2775
      %v3224 = vmul.f32 %v2712, %v2776
      %v3225 = vmul.f32 %v2713, %v2777
      %v3226 = vmul.f32 %v2714, %v2778
      %v3227 = vmul.f32 %v2715, %v2779
      %v3228 = vmul.f32 %v2716, %v2780
      %v3229 = vmul.f32 %v2717, %v2781
      %v3230 = vmul.f32 %v2718, %v2782
      %v3231 = vmul.f32 %v2719, %v2783
      %v3232 = vmul.f32 %v2720, %v2784
      %v3233 = vmul.f32 %v2721, %v2785
      %v3234 = vmul.f32 %v2722, %v2786
      %v3235 = vmul.f32 %v2723, %v2787
      %v3236 = vmul.f32 %v2724, %v2788
      %v3237 = vmul.f32 %v2725, %v2789
      %v3238 = vmul.f32 %v2726, %v2790
      %v3239 = vmul.f32 %v2727, %v2791
      %v3240 = vmul.f32 %v2728, %v2792
      %v3241 = vmul.f32 %v2729, %v2793
      %v3242 = vmul.f32 %v2730, %v2794
      %v3243 = vmul.f32 %v2731, %v2795
      %v3244 = vmul.f32 %v2732, %v2796
      %v3245 = vmul.f32 %v2733, %v2797
      %v3246 = vmul.f32 %v2734, %v2798
      %v3247 = vmul.f32 %v2735, %v2799
      %v3248 = vmul.f32 %v2736, %v2800
      %v3249 = vmul.f32 %v2737, %v2801
      %v3250 = vmul.f32 %v2738, %v2802
      %v3251 = vmul.f32 %v2739, %v2803
      %v3252 = vmul.f32 %v2740, %v2804
      %v3253 = vmul.f32 %v2741, %v2805
      %v3254 = vmul.f32 %v2742, %v2806
      %v3255 = vmul.f32 %v2743, %v2807
      %v3256 = vmul.f32 %v2744, %v2808
      %v3257 = vmul.f32 %v2745, %v2809
      %v3258 = vmul.f32 %v2746, %v2810
      %v3259 = vmul.f32 %v2747, %v2811
      %v3260 = vmul.f32 %v2748, %v2812
      %v3261 = vmul.f32 %v2749, %v2813
      %v3262 = vmul.f32 %v2750, %v2814
      %v3263 = vmul.f32 %v2751, %v2815
      %v3264 = vmul.f32 %v2752, %v2816
      %v3265 = vmul.f32 %v2753, %v2817
      %v3266 = vmul.f32 %v2754, %v2818
      %v3267 = vmul.f32 %v2755, %v2819
      %v3268 = vmul.f32 %v2756, %v2820
      %v3269 = vmul.f32 %v2757, %v2821
      %v3270 = vmul.f32 %v2758, %v2822
      %v3271 = vmul.f32 %v2759, %v2823
      %v3272 = vmul.f32 %v2760, %v2824
      %v3273 = vmul.f32 %v2761, %v2825
      %v3274 = vmul.f32 %v2762, %v2826
      %v3275 = vmul.f32 %v2763, %v2827
      %v3276 = vmul.f32 %v2764, %v2828
      %v3277 = vmul.f32 %v2765, %v2829
      %v3278 = vmul.f32 %v2766, %v2830
      %v3279 = vmul.f32 %v2767, %v2831
      %v3280 = vmul.f32 %v2768, %v2832
      %v3281 = vmul.f32 %v2769, %v2833
      %v3282 = vmul.f32 %v2770, %v2834
      %v3283 = vmul.f32 %v3219, %v3155
      %v3284 = vmul.f32 %v3220, %v3156
      %v3285 = vmul.f32 %v3221, %v3157
      %v3286 = vmul.f32 %v3222, %v3158
      %v3287 = vmul.f32 %v3223, %v3159
      %v3288 = vmul.f32 %v3224, %v3160
      %v3289 = vmul.f32 %v3225, %v3161
      %v3290 = vmul.f32 %v3226, %v3162
      %v3291 = vmul.f32 %v3227, %v3163
      %v3292 = vmul.f32 %v3228, %v3164
      %v3293 = vmul.f32 %v3229, %v3165
      %v3294 = vmul.f32 %v3230, %v3166
      %v3295 = vmul.f32 %v3231, %v3167
      %v3296 = vmul.f32 %v3232, %v3168
      %v3297 = vmul.f32 %v3233, %v3169
      %v3298 = vmul.f32 %v3234, %v3170
      %v3299 = vmul.f32 %v3235, %v3171
      %v3300 = vmul.f32 %v3236, %v3172
      %v3301 = vmul.f32 %v3237, %v3173
      %v3302 = vmul.f32 %v3238, %v3174
      %v3303 = vmul.f32 %v3239, %v3175
      %v3304 = vmul.f32 %v3240, %v3176
      %v3305 = vmul.f32 %v3241, %v3177
      %v3306 = vmul.f32 %v3242, %v3178
      %v3307 = vmul.f32 %v3243, %v3179
      %v3308 = vmul.f32 %v3244, %v3180
      %v3309 = vmul.f32 %v3245, %v3181
      %v3310 = vmul.f32 %v3246, %v3182
      %v3311 = vmul.f32 %v3247, %v3183
      %v3312 = vmul.f32 %v3248, %v3184
      %v3313 = vmul.f32 %v3249, %v3185
      %v3314 = vmul.f32 %v3250, %v3186
      %v3315 = vmul.f32 %v3251, %v3187
      %v3316 = vmul.f32 %v3252, %v3188
      %v3317 = vmul.f32 %v3253, %v3189
      %v3318 = vmul.f32 %v3254, %v3190
      %v3319 = vmul.f32 %v3255, %v3191
      %v3320 = vmul.f32 %v3256, %v3192
      %v3321 = vmul.f32 %v3257, %v3193
      %v3322 = vmul.f32 %v3258, %v3194
      %v3323 = vmul.f32 %v3259, %v3195
      %v3324 = vmul.f32 %v3260, %v3196
      %v3325 = vmul.f32 %v3261, %v3197
      %v3326 = vmul.f32 %v3262, %v3198
      %v3327 = vmul.f32 %v3263, %v3199
      %v3328 = vmul.f32 %v3264, %v3200
      %v3329 = vmul.f32 %v3265, %v3201
      %v3330 = vmul.f32 %v3266, %v3202
      %v3331 = vmul.f32 %v3267, %v3203
      %v3332 = vmul.f32 %v3268, %v3204
      %v3333 = vmul.f32 %v3269, %v3205
      %v3334 = vmul.f32 %v3270, %v3206
      %v3335 = vmul.f32 %v3271, %v3207
      %v3336 = vmul.f32 %v3272, %v3208
      %v3337 = vmul.f32 %v3273, %v3209
      %v3338 = vmul.f32 %v3274, %v3210
      %v3339 = vmul.f32 %v3275, %v3211
      %v3340 = vmul.f32 %v3276, %v3212
      %v3341 = vmul.f32 %v3277, %v3213
      %v3342 = vmul.f32 %v3278, %v3214
      %v3343 = vmul.f32 %v3279, %v3215
      %v3344 = vmul.f32 %v3280, %v3216
      %v3345 = vmul.f32 %v3281, %v3217
      %v3346 = vmul.f32 %v3282, %v3218
      %v3347 = vadd.f32 %v2707, %v3283
      %v3348 = vadd.f32 %v2708, %v3284
      %v3349 = vadd.f32 %v2709, %v3285
      %v3350 = vadd.f32 %v2710, %v3286
      %v3351 = vadd.f32 %v2711, %v3287
      %v3352 = vadd.f32 %v2712, %v3288
      %v3353 = vadd.f32 %v2713, %v3289
      %v3354 = vadd.f32 %v2714, %v3290
      %v3355 = vadd.f32 %v2715, %v3291
      %v3356 = vadd.f32 %v2716, %v3292
      %v3357 = vadd.f32 %v2717, %v3293
      %v3358 = vadd.f32 %v2718, %v3294
      %v3359 = vadd.f32 %v2719, %v3295
      %v3360 = vadd.f32 %v2720, %v3296
      %v3361 = vadd.f32 %v2721, %v3297
      %v3362 = vadd.f32 %v2722, %v3298
      %v3363 = vadd.f32 %v2723, %v3299
      %v3364 = vadd.f32 %v2724, %v3300
      %v3365 = vadd.f32 %v2725, %v3301
      %v3366 = vadd.f32 %v2726, %v3302
      %v3367 = vadd.f32 %v2727, %v3303
      %v3368 = vadd.f32 %v2728, %v3304
      %v3369 = vadd.f32 %v2729, %v3305
      %v3370 = vadd.f32 %v2730, %v3306
      %v3371 = vadd.f32 %v2731, %v3307
      %v3372 = vadd.f32 %v2732, %v3308
      %v3373 = vadd.f32 %v2733, %v3309
      %v3374 = vadd.f32 %v2734, %v3310
      %v3375 = vadd.f32 %v2735, %v3311
      %v3376 = vadd.f32 %v2736, %v3312
      %v3377 = vadd.f32 %v2737, %v3313
      %v3378 = vadd.f32 %v2738, %v3314
      %v3379 = vadd.f32 %v2739, %v3315
      %v3380 = vadd.f32 %v2740, %v3316
      %v3381 = vadd.f32 %v2741, %v3317
      %v3382 = vadd.f32 %v2742, %v3318
      %v3383 = vadd.f32 %v2743, %v3319
      %v3384 = vadd.f32 %v2744, %v3320
      %v3385 = vadd.f32 %v2745, %v3321
      %v3386 = vadd.f32 %v2746, %v3322
      %v3387 = vadd.f32 %v2747, %v3323
      %v3388 = vadd.f32 %v2748, %v3324
      %v3389 = vadd.f32 %v2749, %v3325
      %v3390 = vadd.f32 %v2750, %v3326
      %v3391 = vadd.f32 %v2751, %v3327
      %v3392 = vadd.f32 %v2752, %v3328
      %v3393 = vadd.f32 %v2753, %v3329
      %v3394 = vadd.f32 %v2754, %v3330
      %v3395 = vadd.f32 %v2755, %v3331
      %v3396 = vadd.f32 %v2756, %v3332
      %v3397 = vadd.f32 %v2757, %v3333
      %v3398 = vadd.f32 %v2758, %v3334
      %v3399 = vadd.f32 %v2759, %v3335
      %v3400 = vadd.f32 %v2760, %v3336
      %v3401 = vadd.f32 %v2761, %v3337
      %v3402 = vadd.f32 %v2762, %v3338
      %v3403 = vadd.f32 %v2763, %v3339
      %v3404 = vadd.f32 %v2764, %v3340
      %v3405 = vadd.f32 %v2765, %v3341
      %v3406 = vadd.f32 %v2766, %v3342
      %v3407 = vadd.f32 %v2767, %v3343
      %v3408 = vadd.f32 %v2768, %v3344
      %v3409 = vadd.f32 %v2769, %v3345
      %v3410 = vadd.f32 %v2770, %v3346
      %v3411 = vpack.c.bf16 %v3349, %v3347
      %v3412 = vpack.c.bf16 %v3350, %v3348
      %v3413 = vpack.c.bf16 %v3353, %v3351
      %v3414 = vpack.c.bf16 %v3354, %v3352
      %v3415 = vpack.c.bf16 %v3357, %v3355
      %v3416 = vpack.c.bf16 %v3358, %v3356
      %v3417 = vpack.c.bf16 %v3361, %v3359
      %v3418 = vpack.c.bf16 %v3362, %v3360
      %v3419 = vpack.c.bf16 %v3365, %v3363
      %v3420 = vpack.c.bf16 %v3366, %v3364
      %v3421 = vpack.c.bf16 %v3369, %v3367
      %v3422 = vpack.c.bf16 %v3370, %v3368
      %v3423 = vpack.c.bf16 %v3373, %v3371
      %v3424 = vpack.c.bf16 %v3374, %v3372
      %v3425 = vpack.c.bf16 %v3377, %v3375
      %v3426 = vpack.c.bf16 %v3378, %v3376
      %v3427 = vpack.c.bf16 %v3381, %v3379
      %v3428 = vpack.c.bf16 %v3382, %v3380
      %v3429 = vpack.c.bf16 %v3385, %v3383
      %v3430 = vpack.c.bf16 %v3386, %v3384
      %v3431 = vpack.c.bf16 %v3389, %v3387
      %v3432 = vpack.c.bf16 %v3390, %v3388
      %v3433 = vpack.c.bf16 %v3393, %v3391
      %v3434 = vpack.c.bf16 %v3394, %v3392
      %v3435 = vpack.c.bf16 %v3397, %v3395
      %v3436 = vpack.c.bf16 %v3398, %v3396
      %v3437 = vpack.c.bf16 %v3401, %v3399
      %v3438 = vpack.c.bf16 %v3402, %v3400
      %v3439 = vpack.c.bf16 %v3405, %v3403
      %v3440 = vpack.c.bf16 %v3406, %v3404
      %v3441 = vpack.c.bf16 %v3409, %v3407
      %v3442 = vpack.c.bf16 %v3410, %v3408
      %v3443 = vld [vmem:[%s5] sm:$0xff]
      %v3444 = vld [vmem:[%s5 + $0x8] sm:$0xff]
      %v3445 = vld [vmem:[%s5 + $0x10] sm:$0xff]
      %v3446 = vld [vmem:[%s5 + $0x18] sm:$0xff]
      %v3447 = vld [vmem:[%s5 + $0x20] sm:$0xff]
      %v3448 = vld [vmem:[%s5 + $0x28] sm:$0xff]
      %v3449 = vld [vmem:[%s5 + $0x30] sm:$0xff]
      %v3450 = vld [vmem:[%s5 + $0x38] sm:$0xff]
      %v3451 = vld [vmem:[%s5 + $0x40] sm:$0xff]
      %v3452 = vld [vmem:[%s5 + $0x48] sm:$0xff]
      %v3453 = vld [vmem:[%s5 + $0x50] sm:$0xff]
      %v3454 = vld [vmem:[%s5 + $0x58] sm:$0xff]
      %v3455 = vld [vmem:[%s5 + $0x60] sm:$0xff]
      %v3456 = vld [vmem:[%s5 + $0x68] sm:$0xff]
      %v3457 = vld [vmem:[%s5 + $0x70] sm:$0xff]
      %v3458 = vld [vmem:[%s5 + $0x78] sm:$0xff]
      %v3459 = vld [vmem:[%s5 + $0x80] sm:$0xff]
      %v3460 = vld [vmem:[%s5 + $0x88] sm:$0xff]
      %v3461 = vld [vmem:[%s5 + $0x90] sm:$0xff]
      %v3462 = vld [vmem:[%s5 + $0x98] sm:$0xff]
      %v3463 = vld [vmem:[%s5 + $0xa0] sm:$0xff]
      %v3464 = vld [vmem:[%s5 + $0xa8] sm:$0xff]
      %v3465 = vld [vmem:[%s5 + $0xb0] sm:$0xff]
      %v3466 = vld [vmem:[%s5 + $0xb8] sm:$0xff]
      %v3467 = vld [vmem:[%s5 + $0xc0] sm:$0xff]
      %v3468 = vld [vmem:[%s5 + $0xc8] sm:$0xff]
      %v3469 = vld [vmem:[%s5 + $0xd0] sm:$0xff]
      %v3470 = vld [vmem:[%s5 + $0xd8] sm:$0xff]
      %v3471 = vld [vmem:[%s5 + $0xe0] sm:$0xff]
      %v3472 = vld [vmem:[%s5 + $0xe8] sm:$0xff]
      %v3473 = vld [vmem:[%s5 + $0xf0] sm:$0xff]
      %v3474 = vld [vmem:[%s5 + $0xf8] sm:$0xff]
      %v3475 = vld [vmem:[%s6] sm:$0x3]
      %v3477 = vlaneseq
      %v3478 = vshrl.u32 %v3477, 7
      %v3479 = vsub.s32 0, %v3478
      %v3480 = vrot.slane %v3475, %v3479
      %v3481 = vlaneseq
      %v3482 = vshrl.u32 %v3481, 7
      %v3483 = vsub.s32 1, %v3482
      %v3484 = vrot.slane %v3475, %v3483
      %v3519 = vunpack.c.l.b16 %v3443
      %v3520 = vunpack.c.h.b16 %v3443
      %v3521 = vunpack.c.l.b16 %v3444
      %v3522 = vunpack.c.h.b16 %v3444
      %v3523 = vunpack.c.l.b16 %v3445
      %v3524 = vunpack.c.h.b16 %v3445
      %v3525 = vunpack.c.l.b16 %v3446
      %v3526 = vunpack.c.h.b16 %v3446
      %v3527 = vunpack.c.l.b16 %v3447
      %v3528 = vunpack.c.h.b16 %v3447
      %v3529 = vunpack.c.l.b16 %v3448
      %v3530 = vunpack.c.h.b16 %v3448
      %v3531 = vunpack.c.l.b16 %v3449
      %v3532 = vunpack.c.h.b16 %v3449
      %v3533 = vunpack.c.l.b16 %v3450
      %v3534 = vunpack.c.h.b16 %v3450
      %v3535 = vunpack.c.l.b16 %v3451
      %v3536 = vunpack.c.h.b16 %v3451
      %v3537 = vunpack.c.l.b16 %v3452
      %v3538 = vunpack.c.h.b16 %v3452
      %v3539 = vunpack.c.l.b16 %v3453
      %v3540 = vunpack.c.h.b16 %v3453
      %v3541 = vunpack.c.l.b16 %v3454
      %v3542 = vunpack.c.h.b16 %v3454
      %v3543 = vunpack.c.l.b16 %v3455
      %v3544 = vunpack.c.h.b16 %v3455
      %v3545 = vunpack.c.l.b16 %v3456
      %v3546 = vunpack.c.h.b16 %v3456
      %v3547 = vunpack.c.l.b16 %v3457
      %v3548 = vunpack.c.h.b16 %v3457
      %v3549 = vunpack.c.l.b16 %v3458
      %v3550 = vunpack.c.h.b16 %v3458
      %v3551 = vunpack.c.l.b16 %v3459
      %v3552 = vunpack.c.h.b16 %v3459
      %v3553 = vunpack.c.l.b16 %v3460
      %v3554 = vunpack.c.h.b16 %v3460
      %v3555 = vunpack.c.l.b16 %v3461
      %v3556 = vunpack.c.h.b16 %v3461
      %v3557 = vunpack.c.l.b16 %v3462
      %v3558 = vunpack.c.h.b16 %v3462
      %v3559 = vunpack.c.l.b16 %v3463
      %v3560 = vunpack.c.h.b16 %v3463
      %v3561 = vunpack.c.l.b16 %v3464
      %v3562 = vunpack.c.h.b16 %v3464
      %v3563 = vunpack.c.l.b16 %v3465
      %v3564 = vunpack.c.h.b16 %v3465
      %v3565 = vunpack.c.l.b16 %v3466
      %v3566 = vunpack.c.h.b16 %v3466
      %v3567 = vunpack.c.l.b16 %v3467
      %v3568 = vunpack.c.h.b16 %v3467
      %v3569 = vunpack.c.l.b16 %v3468
      %v3570 = vunpack.c.h.b16 %v3468
      %v3571 = vunpack.c.l.b16 %v3469
      %v3572 = vunpack.c.h.b16 %v3469
      %v3573 = vunpack.c.l.b16 %v3470
      %v3574 = vunpack.c.h.b16 %v3470
      %v3575 = vunpack.c.l.b16 %v3471
      %v3576 = vunpack.c.h.b16 %v3471
      %v3577 = vunpack.c.l.b16 %v3472
      %v3578 = vunpack.c.h.b16 %v3472
      %v3579 = vunpack.c.l.b16 %v3473
      %v3580 = vunpack.c.h.b16 %v3473
      %v3581 = vunpack.c.l.b16 %v3474
      %v3582 = vunpack.c.h.b16 %v3474
      %v3583 = vpack.c.b16 %v3521, %v3519
      %v3584 = vpack.c.b16 %v3522, %v3520
      %v3585 = vpack.c.b16 %v3525, %v3523
      %v3586 = vpack.c.b16 %v3526, %v3524
      %v3587 = vpack.c.b16 %v3529, %v3527
      %v3588 = vpack.c.b16 %v3530, %v3528
      %v3589 = vpack.c.b16 %v3533, %v3531
      %v3590 = vpack.c.b16 %v3534, %v3532
      %v3591 = vpack.c.b16 %v3537, %v3535
      %v3592 = vpack.c.b16 %v3538, %v3536
      %v3593 = vpack.c.b16 %v3541, %v3539
      %v3594 = vpack.c.b16 %v3542, %v3540
      %v3595 = vpack.c.b16 %v3545, %v3543
      %v3596 = vpack.c.b16 %v3546, %v3544
      %v3597 = vpack.c.b16 %v3549, %v3547
      %v3598 = vpack.c.b16 %v3550, %v3548
      %v3599 = vpack.c.b16 %v3553, %v3551
      %v3600 = vpack.c.b16 %v3554, %v3552
      %v3601 = vpack.c.b16 %v3557, %v3555
      %v3602 = vpack.c.b16 %v3558, %v3556
      %v3603 = vpack.c.b16 %v3561, %v3559
      %v3604 = vpack.c.b16 %v3562, %v3560
      %v3605 = vpack.c.b16 %v3565, %v3563
      %v3606 = vpack.c.b16 %v3566, %v3564
      %v3607 = vpack.c.b16 %v3569, %v3567
      %v3608 = vpack.c.b16 %v3570, %v3568
      %v3609 = vpack.c.b16 %v3573, %v3571
      %v3610 = vpack.c.b16 %v3574, %v3572
      %v3611 = vpack.c.b16 %v3577, %v3575
      %v3612 = vpack.c.b16 %v3578, %v3576
      %v3613 = vpack.c.b16 %v3581, %v3579
      %v3614 = vpack.c.b16 %v3582, %v3580
      %3647 = vmatprep.subr.bf16.mxu0 %v3598
      %3648 = vmatpush1.bf16.msra.mxu0 %v3597
      %3649 = vmatprep.subr.bf16.mxu0 %v3596
      %3650 = vmatpush1.bf16.msra.mxu0 %v3595
      %3651 = vmatprep.subr.bf16.mxu0 %v3594
      %3652 = vmatpush1.bf16.msra.mxu0 %v3593
      %3653 = vmatprep.subr.bf16.mxu0 %v3592
      %3654 = vmatpush1.bf16.msra.mxu0 %v3591
      %3655 = vmatprep.subr.bf16.mxu0 %v3590
      %3656 = vmatpush1.bf16.msra.mxu0 %v3589
      %3657 = vmatprep.subr.bf16.mxu0 %v3588
      %3658 = vmatpush1.bf16.msra.mxu0 %v3587
      %3659 = vmatprep.subr.bf16.mxu0 %v3586
      %3660 = vmatpush1.bf16.msra.mxu0 %v3585
      %3661 = vmatprep.subr.bf16.mxu0 %v3584
      %3662 = vmatpush1.bf16.msra.mxu0 %v3583
      %3663 = vmatprep.subr.bf16.mxu0 %v3614
      %3664 = vmatpush2.bf16.msra.mxu0 %v3613
      %3665 = vmatprep.subr.bf16.mxu0 %v3612
      %3666 = vmatpush2.bf16.msra.mxu0 %v3611
      %3667 = vmatprep.subr.bf16.mxu0 %v3610
      %3668 = vmatpush2.bf16.msra.mxu0 %v3609
      %3669 = vmatprep.subr.bf16.mxu0 %v3608
      %3670 = vmatpush2.bf16.msra.mxu0 %v3607
      %3671 = vmatprep.subr.bf16.mxu0 %v3606
      %3672 = vmatpush2.bf16.msra.mxu0 %v3605
      %3673 = vmatprep.subr.bf16.mxu0 %v3604
      %3674 = vmatpush2.bf16.msra.mxu0 %v3603
      %3675 = vmatprep.subr.bf16.mxu0 %v3602
      %3676 = vmatpush2.bf16.msra.mxu0 %v3601
      %3677 = vmatprep.subr.bf16.mxu0 %v3600
      %3678 = vmatpush2.bf16.msra.mxu0 %v3599
      %3679 = vmatprep.mubr.bf16.mxu0 %v3412
      %3680 = vmatmul.mubr.bf16.gmra.mxu0 %v3411
      %v3681 = vpop.f32.mrf.mxu0
      %v3682 = vadd.f32 %v3480, %v3681
      %v3683 = vpop.f32.mrf.mxu0
      %v3684 = vadd.f32 %v3484, %v3683
      %v3685 = vpop.f32.mrf.mxu0
      %v3686 = vadd.f32 %v3480, %v3685
      %v3687 = vpop.f32.mrf.mxu0
      %v3688 = vadd.f32 %v3484, %v3687
      %3689 = vmatprep.mubr.bf16.mxu0 %v3414
      %3690 = vmatmul.mubr.bf16.gmra.mxu0 %v3413
      %v3691 = vpop.f32.mrf.mxu0
      %v3692 = vadd.f32 %v3480, %v3691
      %v3693 = vpop.f32.mrf.mxu0
      %v3694 = vadd.f32 %v3484, %v3693
      %v3695 = vpop.f32.mrf.mxu0
      %v3696 = vadd.f32 %v3480, %v3695
      %v3697 = vpop.f32.mrf.mxu0
      %v3698 = vadd.f32 %v3484, %v3697
      %3699 = vmatprep.mubr.bf16.mxu0 %v3416
      %3700 = vmatmul.mubr.bf16.gmra.mxu0 %v3415
      %v3701 = vpop.f32.mrf.mxu0
      %v3702 = vadd.f32 %v3480, %v3701
      %v3703 = vpop.f32.mrf.mxu0
      %v3704 = vadd.f32 %v3484, %v3703
      %v3705 = vpop.f32.mrf.mxu0
      %v3706 = vadd.f32 %v3480, %v3705
      %v3707 = vpop.f32.mrf.mxu0
      %v3708 = vadd.f32 %v3484, %v3707
      %3709 = vmatprep.mubr.bf16.mxu0 %v3418
      %3710 = vmatmul.mubr.bf16.gmra.mxu0 %v3417
      %v3711 = vpop.f32.mrf.mxu0
      %v3712 = vadd.f32 %v3480, %v3711
      %v3713 = vpop.f32.mrf.mxu0
      %v3714 = vadd.f32 %v3484, %v3713
      %v3715 = vpop.f32.mrf.mxu0
      %v3716 = vadd.f32 %v3480, %v3715
      %v3717 = vpop.f32.mrf.mxu0
      %v3718 = vadd.f32 %v3484, %v3717
      %3719 = vmatprep.mubr.bf16.mxu0 %v3420
      %3720 = vmatmul.mubr.bf16.gmra.mxu0 %v3419
      %v3721 = vpop.f32.mrf.mxu0
      %v3722 = vadd.f32 %v3480, %v3721
      %v3723 = vpop.f32.mrf.mxu0
      %v3724 = vadd.f32 %v3484, %v3723
      %v3725 = vpop.f32.mrf.mxu0
      %v3726 = vadd.f32 %v3480, %v3725
      %v3727 = vpop.f32.mrf.mxu0
      %v3728 = vadd.f32 %v3484, %v3727
      %3729 = vmatprep.mubr.bf16.mxu0 %v3422
      %3730 = vmatmul.mubr.bf16.gmra.mxu0 %v3421
      %v3731 = vpop.f32.mrf.mxu0
      %v3732 = vadd.f32 %v3480, %v3731
      %v3733 = vpop.f32.mrf.mxu0
      %v3734 = vadd.f32 %v3484, %v3733
      %v3735 = vpop.f32.mrf.mxu0
      %v3736 = vadd.f32 %v3480, %v3735
      %v3737 = vpop.f32.mrf.mxu0
      %v3738 = vadd.f32 %v3484, %v3737
      %3739 = vmatprep.mubr.bf16.mxu0 %v3424
      %3740 = vmatmul.mubr.bf16.gmra.mxu0 %v3423
      %v3741 = vpop.f32.mrf.mxu0
      %v3742 = vadd.f32 %v3480, %v3741
      %v3743 = vpop.f32.mrf.mxu0
      %v3744 = vadd.f32 %v3484, %v3743
      %v3745 = vpop.f32.mrf.mxu0
      %v3746 = vadd.f32 %v3480, %v3745
      %v3747 = vpop.f32.mrf.mxu0
      %v3748 = vadd.f32 %v3484, %v3747
      %3749 = vmatprep.mubr.bf16.mxu0 %v3426
      %3750 = vmatmul.mubr.bf16.gmra.mxu0 %v3425
      %v3751 = vpop.f32.mrf.mxu0
      %v3752 = vadd.f32 %v3480, %v3751
      %v3753 = vpop.f32.mrf.mxu0
      %v3754 = vadd.f32 %v3484, %v3753
      %v3755 = vpop.f32.mrf.mxu0
      %v3756 = vadd.f32 %v3480, %v3755
      %v3757 = vpop.f32.mrf.mxu0
      %v3758 = vadd.f32 %v3484, %v3757
      %3759 = vmatprep.mubr.bf16.mxu0 %v3428
      %3760 = vmatmul.mubr.bf16.gmra.mxu0 %v3427
      %v3761 = vpop.f32.mrf.mxu0
      %v3762 = vadd.f32 %v3480, %v3761
      %v3763 = vpop.f32.mrf.mxu0
      %v3764 = vadd.f32 %v3484, %v3763
      %v3765 = vpop.f32.mrf.mxu0
      %v3766 = vadd.f32 %v3480, %v3765
      %v3767 = vpop.f32.mrf.mxu0
      %v3768 = vadd.f32 %v3484, %v3767
      %3769 = vmatprep.mubr.bf16.mxu0 %v3430
      %3770 = vmatmul.mubr.bf16.gmra.mxu0 %v3429
      %v3771 = vpop.f32.mrf.mxu0
      %v3772 = vadd.f32 %v3480, %v3771
      %v3773 = vpop.f32.mrf.mxu0
      %v3774 = vadd.f32 %v3484, %v3773
      %v3775 = vpop.f32.mrf.mxu0
      %v3776 = vadd.f32 %v3480, %v3775
      %v3777 = vpop.f32.mrf.mxu0
      %v3778 = vadd.f32 %v3484, %v3777
      %3779 = vmatprep.mubr.bf16.mxu0 %v3432
      %3780 = vmatmul.mubr.bf16.gmra.mxu0 %v3431
      %v3781 = vpop.f32.mrf.mxu0
      %v3782 = vadd.f32 %v3480, %v3781
      %v3783 = vpop.f32.mrf.mxu0
      %v3784 = vadd.f32 %v3484, %v3783
      %v3785 = vpop.f32.mrf.mxu0
      %v3786 = vadd.f32 %v3480, %v3785
      %v3787 = vpop.f32.mrf.mxu0
      %v3788 = vadd.f32 %v3484, %v3787
      %3789 = vmatprep.mubr.bf16.mxu0 %v3434
      %3790 = vmatmul.mubr.bf16.gmra.mxu0 %v3433
      %v3791 = vpop.f32.mrf.mxu0
      %v3792 = vadd.f32 %v3480, %v3791
      %v3793 = vpop.f32.mrf.mxu0
      %v3794 = vadd.f32 %v3484, %v3793
      %v3795 = vpop.f32.mrf.mxu0
      %v3796 = vadd.f32 %v3480, %v3795
      %v3797 = vpop.f32.mrf.mxu0
      %v3798 = vadd.f32 %v3484, %v3797
      %3799 = vmatprep.mubr.bf16.mxu0 %v3436
      %3800 = vmatmul.mubr.bf16.gmra.mxu0 %v3435
      %v3801 = vpop.f32.mrf.mxu0
      %v3802 = vadd.f32 %v3480, %v3801
      %v3803 = vpop.f32.mrf.mxu0
      %v3804 = vadd.f32 %v3484, %v3803
      %v3805 = vpop.f32.mrf.mxu0
      %v3806 = vadd.f32 %v3480, %v3805
      %v3807 = vpop.f32.mrf.mxu0
      %v3808 = vadd.f32 %v3484, %v3807
      %3809 = vmatprep.mubr.bf16.mxu0 %v3438
      %3810 = vmatmul.mubr.bf16.gmra.mxu0 %v3437
      %v3811 = vpop.f32.mrf.mxu0
      %v3812 = vadd.f32 %v3480, %v3811
      %v3813 = vpop.f32.mrf.mxu0
      %v3814 = vadd.f32 %v3484, %v3813
      %v3815 = vpop.f32.mrf.mxu0
      %v3816 = vadd.f32 %v3480, %v3815
      %v3817 = vpop.f32.mrf.mxu0
      %v3818 = vadd.f32 %v3484, %v3817
      %3819 = vmatprep.mubr.bf16.mxu0 %v3440
      %3820 = vmatmul.mubr.bf16.gmra.mxu0 %v3439
      %v3821 = vpop.f32.mrf.mxu0
      %v3822 = vadd.f32 %v3480, %v3821
      %v3823 = vpop.f32.mrf.mxu0
      %v3824 = vadd.f32 %v3484, %v3823
      %v3825 = vpop.f32.mrf.mxu0
      %v3826 = vadd.f32 %v3480, %v3825
      %v3827 = vpop.f32.mrf.mxu0
      %v3828 = vadd.f32 %v3484, %v3827
      %3829 = vmatprep.mubr.bf16.mxu0 %v3442
      %3830 = vmatmul.mubr.bf16.gmra.mxu0 %v3441
      %v3831 = vpop.f32.mrf.mxu0
      %v3832 = vadd.f32 %v3480, %v3831
      %v3833 = vpop.f32.mrf.mxu0
      %v3834 = vadd.f32 %v3484, %v3833
      %v3835 = vpop.f32.mrf.mxu0
      %v3836 = vadd.f32 %v3480, %v3835
      %v3837 = vpop.f32.mrf.mxu0
      %v3838 = vadd.f32 %v3484, %v3837
      %3839 = vdwg.mxu0
      %v3840 = vmul.f32 %v3682, 0.15915494
      %v3841 = vmul.f32 %v3684, 0.15915494
      %v3842 = vmul.f32 %v3686, 0.15915494
      %v3843 = vmul.f32 %v3688, 0.15915494
      %v3844 = vmul.f32 %v3692, 0.15915494
      %v3845 = vmul.f32 %v3694, 0.15915494
      %v3846 = vmul.f32 %v3696, 0.15915494
      %v3847 = vmul.f32 %v3698, 0.15915494
      %v3848 = vmul.f32 %v3702, 0.15915494
      %v3849 = vmul.f32 %v3704, 0.15915494
      %v3850 = vmul.f32 %v3706, 0.15915494
      %v3851 = vmul.f32 %v3708, 0.15915494
      %v3852 = vmul.f32 %v3712, 0.15915494
      %v3853 = vmul.f32 %v3714, 0.15915494
      %v3854 = vmul.f32 %v3716, 0.15915494
      %v3855 = vmul.f32 %v3718, 0.15915494
      %v3856 = vmul.f32 %v3722, 0.15915494
      %v3857 = vmul.f32 %v3724, 0.15915494
      %v3858 = vmul.f32 %v3726, 0.15915494
      %v3859 = vmul.f32 %v3728, 0.15915494
      %v3860 = vmul.f32 %v3732, 0.15915494
      %v3861 = vmul.f32 %v3734, 0.15915494
      %v3862 = vmul.f32 %v3736, 0.15915494
      %v3863 = vmul.f32 %v3738, 0.15915494
      %v3864 = vmul.f32 %v3742, 0.15915494
      %v3865 = vmul.f32 %v3744, 0.15915494
      %v3866 = vmul.f32 %v3746, 0.15915494
      %v3867 = vmul.f32 %v3748, 0.15915494
      %v3868 = vmul.f32 %v3752, 0.15915494
      %v3869 = vmul.f32 %v3754, 0.15915494
      %v3870 = vmul.f32 %v3756, 0.15915494
      %v3871 = vmul.f32 %v3758, 0.15915494
      %v3872 = vmul.f32 %v3762, 0.15915494
      %v3873 = vmul.f32 %v3764, 0.15915494
      %v3874 = vmul.f32 %v3766, 0.15915494
      %v3875 = vmul.f32 %v3768, 0.15915494
      %v3876 = vmul.f32 %v3772, 0.15915494
      %v3877 = vmul.f32 %v3774, 0.15915494
      %v3878 = vmul.f32 %v3776, 0.15915494
      %v3879 = vmul.f32 %v3778, 0.15915494
      %v3880 = vmul.f32 %v3782, 0.15915494
      %v3881 = vmul.f32 %v3784, 0.15915494
      %v3882 = vmul.f32 %v3786, 0.15915494
      %v3883 = vmul.f32 %v3788, 0.15915494
      %v3884 = vmul.f32 %v3792, 0.15915494
      %v3885 = vmul.f32 %v3794, 0.15915494
      %v3886 = vmul.f32 %v3796, 0.15915494
      %v3887 = vmul.f32 %v3798, 0.15915494
      %v3888 = vmul.f32 %v3802, 0.15915494
      %v3889 = vmul.f32 %v3804, 0.15915494
      %v3890 = vmul.f32 %v3806, 0.15915494
      %v3891 = vmul.f32 %v3808, 0.15915494
      %v3892 = vmul.f32 %v3812, 0.15915494
      %v3893 = vmul.f32 %v3814, 0.15915494
      %v3894 = vmul.f32 %v3816, 0.15915494
      %v3895 = vmul.f32 %v3818, 0.15915494
      %v3896 = vmul.f32 %v3822, 0.15915494
      %v3897 = vmul.f32 %v3824, 0.15915494
      %v3898 = vmul.f32 %v3826, 0.15915494
      %v3899 = vmul.f32 %v3828, 0.15915494
      %v3900 = vmul.f32 %v3832, 0.15915494
      %v3901 = vmul.f32 %v3834, 0.15915494
      %v3902 = vmul.f32 %v3836, 0.15915494
      %v3903 = vmul.f32 %v3838, 0.15915494
      %v3904 = vadd.f32 %v3840, 0.5
      %v3905 = vadd.f32 %v3841, 0.5
      %v3906 = vadd.f32 %v3842, 0.5
      %v3907 = vadd.f32 %v3843, 0.5
      %v3908 = vadd.f32 %v3844, 0.5
      %v3909 = vadd.f32 %v3845, 0.5
      %v3910 = vadd.f32 %v3846, 0.5
      %v3911 = vadd.f32 %v3847, 0.5
      %v3912 = vadd.f32 %v3848, 0.5
      %v3913 = vadd.f32 %v3849, 0.5
      %v3914 = vadd.f32 %v3850, 0.5
      %v3915 = vadd.f32 %v3851, 0.5
      %v3916 = vadd.f32 %v3852, 0.5
      %v3917 = vadd.f32 %v3853, 0.5
      %v3918 = vadd.f32 %v3854, 0.5
      %v3919 = vadd.f32 %v3855, 0.5
      %v3920 = vadd.f32 %v3856, 0.5
      %v3921 = vadd.f32 %v3857, 0.5
      %v3922 = vadd.f32 %v3858, 0.5
      %v3923 = vadd.f32 %v3859, 0.5
      %v3924 = vadd.f32 %v3860, 0.5
      %v3925 = vadd.f32 %v3861, 0.5
      %v3926 = vadd.f32 %v3862, 0.5
      %v3927 = vadd.f32 %v3863, 0.5
      %v3928 = vadd.f32 %v3864, 0.5
      %v3929 = vadd.f32 %v3865, 0.5
      %v3930 = vadd.f32 %v3866, 0.5
      %v3931 = vadd.f32 %v3867, 0.5
      %v3932 = vadd.f32 %v3868, 0.5
      %v3933 = vadd.f32 %v3869, 0.5
      %v3934 = vadd.f32 %v3870, 0.5
      %v3935 = vadd.f32 %v3871, 0.5
      %v3936 = vadd.f32 %v3872, 0.5
      %v3937 = vadd.f32 %v3873, 0.5
      %v3938 = vadd.f32 %v3874, 0.5
      %v3939 = vadd.f32 %v3875, 0.5
      %v3940 = vadd.f32 %v3876, 0.5
      %v3941 = vadd.f32 %v3877, 0.5
      %v3942 = vadd.f32 %v3878, 0.5
      %v3943 = vadd.f32 %v3879, 0.5
      %v3944 = vadd.f32 %v3880, 0.5
      %v3945 = vadd.f32 %v3881, 0.5
      %v3946 = vadd.f32 %v3882, 0.5
      %v3947 = vadd.f32 %v3883, 0.5
      %v3948 = vadd.f32 %v3884, 0.5
      %v3949 = vadd.f32 %v3885, 0.5
      %v3950 = vadd.f32 %v3886, 0.5
      %v3951 = vadd.f32 %v3887, 0.5
      %v3952 = vadd.f32 %v3888, 0.5
      %v3953 = vadd.f32 %v3889, 0.5
      %v3954 = vadd.f32 %v3890, 0.5
      %v3955 = vadd.f32 %v3891, 0.5
      %v3956 = vadd.f32 %v3892, 0.5
      %v3957 = vadd.f32 %v3893, 0.5
      %v3958 = vadd.f32 %v3894, 0.5
      %v3959 = vadd.f32 %v3895, 0.5
      %v3960 = vadd.f32 %v3896, 0.5
      %v3961 = vadd.f32 %v3897, 0.5
      %v3962 = vadd.f32 %v3898, 0.5
      %v3963 = vadd.f32 %v3899, 0.5
      %v3964 = vadd.f32 %v3900, 0.5
      %v3965 = vadd.f32 %v3901, 0.5
      %v3966 = vadd.f32 %v3902, 0.5
      %v3967 = vadd.f32 %v3903, 0.5
      %v3968 = vfloor.f32 %v3904
      %v3969 = vfloor.f32 %v3905
      %v3970 = vfloor.f32 %v3906
      %v3971 = vfloor.f32 %v3907
      %v3972 = vfloor.f32 %v3908
      %v3973 = vfloor.f32 %v3909
      %v3974 = vfloor.f32 %v3910
      %v3975 = vfloor.f32 %v3911
      %v3976 = vfloor.f32 %v3912
      %v3977 = vfloor.f32 %v3913
      %v3978 = vfloor.f32 %v3914
      %v3979 = vfloor.f32 %v3915
      %v3980 = vfloor.f32 %v3916
      %v3981 = vfloor.f32 %v3917
      %v3982 = vfloor.f32 %v3918
      %v3983 = vfloor.f32 %v3919
      %v3984 = vfloor.f32 %v3920
      %v3985 = vfloor.f32 %v3921
      %v3986 = vfloor.f32 %v3922
      %v3987 = vfloor.f32 %v3923
      %v3988 = vfloor.f32 %v3924
      %v3989 = vfloor.f32 %v3925
      %v3990 = vfloor.f32 %v3926
      %v3991 = vfloor.f32 %v3927
      %v3992 = vfloor.f32 %v3928
      %v3993 = vfloor.f32 %v3929
      %v3994 = vfloor.f32 %v3930
      %v3995 = vfloor.f32 %v3931
      %v3996 = vfloor.f32 %v3932
      %v3997 = vfloor.f32 %v3933
      %v3998 = vfloor.f32 %v3934
      %v3999 = vfloor.f32 %v3935
      %v4000 = vfloor.f32 %v3936
      %v4001 = vfloor.f32 %v3937
      %v4002 = vfloor.f32 %v3938
      %v4003 = vfloor.f32 %v3939
      %v4004 = vfloor.f32 %v3940
      %v4005 = vfloor.f32 %v3941
      %v4006 = vfloor.f32 %v3942
      %v4007 = vfloor.f32 %v3943
      %v4008 = vfloor.f32 %v3944
      %v4009 = vfloor.f32 %v3945
      %v4010 = vfloor.f32 %v3946
      %v4011 = vfloor.f32 %v3947
      %v4012 = vfloor.f32 %v3948
      %v4013 = vfloor.f32 %v3949
      %v4014 = vfloor.f32 %v3950
      %v4015 = vfloor.f32 %v3951
      %v4016 = vfloor.f32 %v3952
      %v4017 = vfloor.f32 %v3953
      %v4018 = vfloor.f32 %v3954
      %v4019 = vfloor.f32 %v3955
      %v4020 = vfloor.f32 %v3956
      %v4021 = vfloor.f32 %v3957
      %v4022 = vfloor.f32 %v3958
      %v4023 = vfloor.f32 %v3959
      %v4024 = vfloor.f32 %v3960
      %v4025 = vfloor.f32 %v3961
      %v4026 = vfloor.f32 %v3962
      %v4027 = vfloor.f32 %v3963
      %v4028 = vfloor.f32 %v3964
      %v4029 = vfloor.f32 %v3965
      %v4030 = vfloor.f32 %v3966
      %v4031 = vfloor.f32 %v3967
      %v4032 = vmul.f32 %v3968, 6.28125
      %v4033 = vmul.f32 %v3969, 6.28125
      %v4034 = vmul.f32 %v3970, 6.28125
      %v4035 = vmul.f32 %v3971, 6.28125
      %v4036 = vmul.f32 %v3972, 6.28125
      %v4037 = vmul.f32 %v3973, 6.28125
      %v4038 = vmul.f32 %v3974, 6.28125
      %v4039 = vmul.f32 %v3975, 6.28125
      %v4040 = vmul.f32 %v3976, 6.28125
      %v4041 = vmul.f32 %v3977, 6.28125
      %v4042 = vmul.f32 %v3978, 6.28125
      %v4043 = vmul.f32 %v3979, 6.28125
      %v4044 = vmul.f32 %v3980, 6.28125
      %v4045 = vmul.f32 %v3981, 6.28125
      %v4046 = vmul.f32 %v3982, 6.28125
      %v4047 = vmul.f32 %v3983, 6.28125
      %v4048 = vmul.f32 %v3984, 6.28125
      %v4049 = vmul.f32 %v3985, 6.28125
      %v4050 = vmul.f32 %v3986, 6.28125
      %v4051 = vmul.f32 %v3987, 6.28125
      %v4052 = vmul.f32 %v3988, 6.28125
      %v4053 = vmul.f32 %v3989, 6.28125
      %v4054 = vmul.f32 %v3990, 6.28125
      %v4055 = vmul.f32 %v3991, 6.28125
      %v4056 = vmul.f32 %v3992, 6.28125
      %v4057 = vmul.f32 %v3993, 6.28125
      %v4058 = vmul.f32 %v3994, 6.28125
      %v4059 = vmul.f32 %v3995, 6.28125
      %v4060 = vmul.f32 %v3996, 6.28125
      %v4061 = vmul.f32 %v3997, 6.28125
      %v4062 = vmul.f32 %v3998, 6.28125
      %v4063 = vmul.f32 %v3999, 6.28125
      %v4064 = vmul.f32 %v4000, 6.28125
      %v4065 = vmul.f32 %v4001, 6.28125
      %v4066 = vmul.f32 %v4002, 6.28125
      %v4067 = vmul.f32 %v4003, 6.28125
      %v4068 = vmul.f32 %v4004, 6.28125
      %v4069 = vmul.f32 %v4005, 6.28125
      %v4070 = vmul.f32 %v4006, 6.28125
      %v4071 = vmul.f32 %v4007, 6.28125
      %v4072 = vmul.f32 %v4008, 6.28125
      %v4073 = vmul.f32 %v4009, 6.28125
      %v4074 = vmul.f32 %v4010, 6.28125
      %v4075 = vmul.f32 %v4011, 6.28125
      %v4076 = vmul.f32 %v4012, 6.28125
      %v4077 = vmul.f32 %v4013, 6.28125
      %v4078 = vmul.f32 %v4014, 6.28125
      %v4079 = vmul.f32 %v4015, 6.28125
      %v4080 = vmul.f32 %v4016, 6.28125
      %v4081 = vmul.f32 %v4017, 6.28125
      %v4082 = vmul.f32 %v4018, 6.28125
      %v4083 = vmul.f32 %v4019, 6.28125
      %v4084 = vmul.f32 %v4020, 6.28125
      %v4085 = vmul.f32 %v4021, 6.28125
      %v4086 = vmul.f32 %v4022, 6.28125
      %v4087 = vmul.f32 %v4023, 6.28125
      %v4088 = vmul.f32 %v4024, 6.28125
      %v4089 = vmul.f32 %v4025, 6.28125
      %v4090 = vmul.f32 %v4026, 6.28125
      %v4091 = vmul.f32 %v4027, 6.28125
      %v4092 = vmul.f32 %v4028, 6.28125
      %v4093 = vmul.f32 %v4029, 6.28125
      %v4094 = vmul.f32 %v4030, 6.28125
      %v4095 = vmul.f32 %v4031, 6.28125
      %v4096 = vsub.f32 %v3682, %v4032
      %v4097 = vsub.f32 %v3684, %v4033
      %v4098 = vsub.f32 %v3686, %v4034
      %v4099 = vsub.f32 %v3688, %v4035
      %v4100 = vsub.f32 %v3692, %v4036
      %v4101 = vsub.f32 %v3694, %v4037
      %v4102 = vsub.f32 %v3696, %v4038
      %v4103 = vsub.f32 %v3698, %v4039
      %v4104 = vsub.f32 %v3702, %v4040
      %v4105 = vsub.f32 %v3704, %v4041
      %v4106 = vsub.f32 %v3706, %v4042
      %v4107 = vsub.f32 %v3708, %v4043
      %v4108 = vsub.f32 %v3712, %v4044
      %v4109 = vsub.f32 %v3714, %v4045
      %v4110 = vsub.f32 %v3716, %v4046
      %v4111 = vsub.f32 %v3718, %v4047
      %v4112 = vsub.f32 %v3722, %v4048
      %v4113 = vsub.f32 %v3724, %v4049
      %v4114 = vsub.f32 %v3726, %v4050
      %v4115 = vsub.f32 %v3728, %v4051
      %v4116 = vsub.f32 %v3732, %v4052
      %v4117 = vsub.f32 %v3734, %v4053
      %v4118 = vsub.f32 %v3736, %v4054
      %v4119 = vsub.f32 %v3738, %v4055
      %v4120 = vsub.f32 %v3742, %v4056
      %v4121 = vsub.f32 %v3744, %v4057
      %v4122 = vsub.f32 %v3746, %v4058
      %v4123 = vsub.f32 %v3748, %v4059
      %v4124 = vsub.f32 %v3752, %v4060
      %v4125 = vsub.f32 %v3754, %v4061
      %v4126 = vsub.f32 %v3756, %v4062
      %v4127 = vsub.f32 %v3758, %v4063
      %v4128 = vsub.f32 %v3762, %v4064
      %v4129 = vsub.f32 %v3764, %v4065
      %v4130 = vsub.f32 %v3766, %v4066
      %v4131 = vsub.f32 %v3768, %v4067
      %v4132 = vsub.f32 %v3772, %v4068
      %v4133 = vsub.f32 %v3774, %v4069
      %v4134 = vsub.f32 %v3776, %v4070
      %v4135 = vsub.f32 %v3778, %v4071
      %v4136 = vsub.f32 %v3782, %v4072
      %v4137 = vsub.f32 %v3784, %v4073
      %v4138 = vsub.f32 %v3786, %v4074
      %v4139 = vsub.f32 %v3788, %v4075
      %v4140 = vsub.f32 %v3792, %v4076
      %v4141 = vsub.f32 %v3794, %v4077
      %v4142 = vsub.f32 %v3796, %v4078
      %v4143 = vsub.f32 %v3798, %v4079
      %v4144 = vsub.f32 %v3802, %v4080
      %v4145 = vsub.f32 %v3804, %v4081
      %v4146 = vsub.f32 %v3806, %v4082
      %v4147 = vsub.f32 %v3808, %v4083
      %v4148 = vsub.f32 %v3812, %v4084
      %v4149 = vsub.f32 %v3814, %v4085
      %v4150 = vsub.f32 %v3816, %v4086
      %v4151 = vsub.f32 %v3818, %v4087
      %v4152 = vsub.f32 %v3822, %v4088
      %v4153 = vsub.f32 %v3824, %v4089
      %v4154 = vsub.f32 %v3826, %v4090
      %v4155 = vsub.f32 %v3828, %v4091
      %v4156 = vsub.f32 %v3832, %v4092
      %v4157 = vsub.f32 %v3834, %v4093
      %v4158 = vsub.f32 %v3836, %v4094
      %v4159 = vsub.f32 %v3838, %v4095
      %v4160 = vmul.f32 %v3968, 0.0019353072
      %v4161 = vmul.f32 %v3969, 0.0019353072
      %v4162 = vmul.f32 %v3970, 0.0019353072
      %v4163 = vmul.f32 %v3971, 0.0019353072
      %v4164 = vmul.f32 %v3972, 0.0019353072
      %v4165 = vmul.f32 %v3973, 0.0019353072
      %v4166 = vmul.f32 %v3974, 0.0019353072
      %v4167 = vmul.f32 %v3975, 0.0019353072
      %v4168 = vmul.f32 %v3976, 0.0019353072
      %v4169 = vmul.f32 %v3977, 0.0019353072
      %v4170 = vmul.f32 %v3978, 0.0019353072
      %v4171 = vmul.f32 %v3979, 0.0019353072
      %v4172 = vmul.f32 %v3980, 0.0019353072
      %v4173 = vmul.f32 %v3981, 0.0019353072
      %v4174 = vmul.f32 %v3982, 0.0019353072
      %v4175 = vmul.f32 %v3983, 0.0019353072
      %v4176 = vmul.f32 %v3984, 0.0019353072
      %v4177 = vmul.f32 %v3985, 0.0019353072
      %v4178 = vmul.f32 %v3986, 0.0019353072
      %v4179 = vmul.f32 %v3987, 0.0019353072
      %v4180 = vmul.f32 %v3988, 0.0019353072
      %v4181 = vmul.f32 %v3989, 0.0019353072
      %v4182 = vmul.f32 %v3990, 0.0019353072
      %v4183 = vmul.f32 %v3991, 0.0019353072
      %v4184 = vmul.f32 %v3992, 0.0019353072
      %v4185 = vmul.f32 %v3993, 0.0019353072
      %v4186 = vmul.f32 %v3994, 0.0019353072
      %v4187 = vmul.f32 %v3995, 0.0019353072
      %v4188 = vmul.f32 %v3996, 0.0019353072
      %v4189 = vmul.f32 %v3997, 0.0019353072
      %v4190 = vmul.f32 %v3998, 0.0019353072
      %v4191 = vmul.f32 %v3999, 0.0019353072
      %v4192 = vmul.f32 %v4000, 0.0019353072
      %v4193 = vmul.f32 %v4001, 0.0019353072
      %v4194 = vmul.f32 %v4002, 0.0019353072
      %v4195 = vmul.f32 %v4003, 0.0019353072
      %v4196 = vmul.f32 %v4004, 0.0019353072
      %v4197 = vmul.f32 %v4005, 0.0019353072
      %v4198 = vmul.f32 %v4006, 0.0019353072
      %v4199 = vmul.f32 %v4007, 0.0019353072
      %v4200 = vmul.f32 %v4008, 0.0019353072
      %v4201 = vmul.f32 %v4009, 0.0019353072
      %v4202 = vmul.f32 %v4010, 0.0019353072
      %v4203 = vmul.f32 %v4011, 0.0019353072
      %v4204 = vmul.f32 %v4012, 0.0019353072
      %v4205 = vmul.f32 %v4013, 0.0019353072
      %v4206 = vmul.f32 %v4014, 0.0019353072
      %v4207 = vmul.f32 %v4015, 0.0019353072
      %v4208 = vmul.f32 %v4016, 0.0019353072
      %v4209 = vmul.f32 %v4017, 0.0019353072
      %v4210 = vmul.f32 %v4018, 0.0019353072
      %v4211 = vmul.f32 %v4019, 0.0019353072
      %v4212 = vmul.f32 %v4020, 0.0019353072
      %v4213 = vmul.f32 %v4021, 0.0019353072
      %v4214 = vmul.f32 %v4022, 0.0019353072
      %v4215 = vmul.f32 %v4023, 0.0019353072
      %v4216 = vmul.f32 %v4024, 0.0019353072
      %v4217 = vmul.f32 %v4025, 0.0019353072
      %v4218 = vmul.f32 %v4026, 0.0019353072
      %v4219 = vmul.f32 %v4027, 0.0019353072
      %v4220 = vmul.f32 %v4028, 0.0019353072
      %v4221 = vmul.f32 %v4029, 0.0019353072
      %v4222 = vmul.f32 %v4030, 0.0019353072
      %v4223 = vmul.f32 %v4031, 0.0019353072
      %v4224 = vsub.f32 %v4096, %v4160
      %v4225 = vsub.f32 %v4097, %v4161
      %v4226 = vsub.f32 %v4098, %v4162
      %v4227 = vsub.f32 %v4099, %v4163
      %v4228 = vsub.f32 %v4100, %v4164
      %v4229 = vsub.f32 %v4101, %v4165
      %v4230 = vsub.f32 %v4102, %v4166
      %v4231 = vsub.f32 %v4103, %v4167
      %v4232 = vsub.f32 %v4104, %v4168
      %v4233 = vsub.f32 %v4105, %v4169
      %v4234 = vsub.f32 %v4106, %v4170
      %v4235 = vsub.f32 %v4107, %v4171
      %v4236 = vsub.f32 %v4108, %v4172
      %v4237 = vsub.f32 %v4109, %v4173
      %v4238 = vsub.f32 %v4110, %v4174
      %v4239 = vsub.f32 %v4111, %v4175
      %v4240 = vsub.f32 %v4112, %v4176
      %v4241 = vsub.f32 %v4113, %v4177
      %v4242 = vsub.f32 %v4114, %v4178
      %v4243 = vsub.f32 %v4115, %v4179
      %v4244 = vsub.f32 %v4116, %v4180
      %v4245 = vsub.f32 %v4117, %v4181
      %v4246 = vsub.f32 %v4118, %v4182
      %v4247 = vsub.f32 %v4119, %v4183
      %v4248 = vsub.f32 %v4120, %v4184
      %v4249 = vsub.f32 %v4121, %v4185
      %v4250 = vsub.f32 %v4122, %v4186
      %v4251 = vsub.f32 %v4123, %v4187
      %v4252 = vsub.f32 %v4124, %v4188
      %v4253 = vsub.f32 %v4125, %v4189
      %v4254 = vsub.f32 %v4126, %v4190
      %v4255 = vsub.f32 %v4127, %v4191
      %v4256 = vsub.f32 %v4128, %v4192
      %v4257 = vsub.f32 %v4129, %v4193
      %v4258 = vsub.f32 %v4130, %v4194
      %v4259 = vsub.f32 %v4131, %v4195
      %v4260 = vsub.f32 %v4132, %v4196
      %v4261 = vsub.f32 %v4133, %v4197
      %v4262 = vsub.f32 %v4134, %v4198
      %v4263 = vsub.f32 %v4135, %v4199
      %v4264 = vsub.f32 %v4136, %v4200
      %v4265 = vsub.f32 %v4137, %v4201
      %v4266 = vsub.f32 %v4138, %v4202
      %v4267 = vsub.f32 %v4139, %v4203
      %v4268 = vsub.f32 %v4140, %v4204
      %v4269 = vsub.f32 %v4141, %v4205
      %v4270 = vsub.f32 %v4142, %v4206
      %v4271 = vsub.f32 %v4143, %v4207
      %v4272 = vsub.f32 %v4144, %v4208
      %v4273 = vsub.f32 %v4145, %v4209
      %v4274 = vsub.f32 %v4146, %v4210
      %v4275 = vsub.f32 %v4147, %v4211
      %v4276 = vsub.f32 %v4148, %v4212
      %v4277 = vsub.f32 %v4149, %v4213
      %v4278 = vsub.f32 %v4150, %v4214
      %v4279 = vsub.f32 %v4151, %v4215
      %v4280 = vsub.f32 %v4152, %v4216
      %v4281 = vsub.f32 %v4153, %v4217
      %v4282 = vsub.f32 %v4154, %v4218
      %v4283 = vsub.f32 %v4155, %v4219
      %v4284 = vsub.f32 %v4156, %v4220
      %v4285 = vsub.f32 %v4157, %v4221
      %v4286 = vsub.f32 %v4158, %v4222
      %v4287 = vsub.f32 %v4159, %v4223
      %v4288 = vmul.f32 %v4224, %v4224
      %v4289 = vmul.f32 %v4225, %v4225
      %v4290 = vmul.f32 %v4226, %v4226
      %v4291 = vmul.f32 %v4227, %v4227
      %v4292 = vmul.f32 %v4228, %v4228
      %v4293 = vmul.f32 %v4229, %v4229
      %v4294 = vmul.f32 %v4230, %v4230
      %v4295 = vmul.f32 %v4231, %v4231
      %v4296 = vmul.f32 %v4232, %v4232
      %v4297 = vmul.f32 %v4233, %v4233
      %v4298 = vmul.f32 %v4234, %v4234
      %v4299 = vmul.f32 %v4235, %v4235
      %v4300 = vmul.f32 %v4236, %v4236
      %v4301 = vmul.f32 %v4237, %v4237
      %v4302 = vmul.f32 %v4238, %v4238
      %v4303 = vmul.f32 %v4239, %v4239
      %v4304 = vmul.f32 %v4240, %v4240
      %v4305 = vmul.f32 %v4241, %v4241
      %v4306 = vmul.f32 %v4242, %v4242
      %v4307 = vmul.f32 %v4243, %v4243
      %v4308 = vmul.f32 %v4244, %v4244
      %v4309 = vmul.f32 %v4245, %v4245
      %v4310 = vmul.f32 %v4246, %v4246
      %v4311 = vmul.f32 %v4247, %v4247
      %v4312 = vmul.f32 %v4248, %v4248
      %v4313 = vmul.f32 %v4249, %v4249
      %v4314 = vmul.f32 %v4250, %v4250
      %v4315 = vmul.f32 %v4251, %v4251
      %v4316 = vmul.f32 %v4252, %v4252
      %v4317 = vmul.f32 %v4253, %v4253
      %v4318 = vmul.f32 %v4254, %v4254
      %v4319 = vmul.f32 %v4255, %v4255
      %v4320 = vmul.f32 %v4256, %v4256
      %v4321 = vmul.f32 %v4257, %v4257
      %v4322 = vmul.f32 %v4258, %v4258
      %v4323 = vmul.f32 %v4259, %v4259
      %v4324 = vmul.f32 %v4260, %v4260
      %v4325 = vmul.f32 %v4261, %v4261
      %v4326 = vmul.f32 %v4262, %v4262
      %v4327 = vmul.f32 %v4263, %v4263
      %v4328 = vmul.f32 %v4264, %v4264
      %v4329 = vmul.f32 %v4265, %v4265
      %v4330 = vmul.f32 %v4266, %v4266
      %v4331 = vmul.f32 %v4267, %v4267
      %v4332 = vmul.f32 %v4268, %v4268
      %v4333 = vmul.f32 %v4269, %v4269
      %v4334 = vmul.f32 %v4270, %v4270
      %v4335 = vmul.f32 %v4271, %v4271
      %v4336 = vmul.f32 %v4272, %v4272
      %v4337 = vmul.f32 %v4273, %v4273
      %v4338 = vmul.f32 %v4274, %v4274
      %v4339 = vmul.f32 %v4275, %v4275
      %v4340 = vmul.f32 %v4276, %v4276
      %v4341 = vmul.f32 %v4277, %v4277
      %v4342 = vmul.f32 %v4278, %v4278
      %v4343 = vmul.f32 %v4279, %v4279
      %v4344 = vmul.f32 %v4280, %v4280
      %v4345 = vmul.f32 %v4281, %v4281
      %v4346 = vmul.f32 %v4282, %v4282
      %v4347 = vmul.f32 %v4283, %v4283
      %v4348 = vmul.f32 %v4284, %v4284
      %v4349 = vmul.f32 %v4285, %v4285
      %v4350 = vmul.f32 %v4286, %v4286
      %v4351 = vmul.f32 %v4287, %v4287
      %v4352 = vmul.f32 %v4288, 2.8656796e-06
      %v4353 = vmul.f32 %v4289, 2.8656796e-06
      %v4354 = vmul.f32 %v4290, 2.8656796e-06
      %v4355 = vmul.f32 %v4291, 2.8656796e-06
      %v4356 = vmul.f32 %v4292, 2.8656796e-06
      %v4357 = vmul.f32 %v4293, 2.8656796e-06
      %v4358 = vmul.f32 %v4294, 2.8656796e-06
      %v4359 = vmul.f32 %v4295, 2.8656796e-06
      %v4360 = vmul.f32 %v4296, 2.8656796e-06
      %v4361 = vmul.f32 %v4297, 2.8656796e-06
      %v4362 = vmul.f32 %v4298, 2.8656796e-06
      %v4363 = vmul.f32 %v4299, 2.8656796e-06
      %v4364 = vmul.f32 %v4300, 2.8656796e-06
      %v4365 = vmul.f32 %v4301, 2.8656796e-06
      %v4366 = vmul.f32 %v4302, 2.8656796e-06
      %v4367 = vmul.f32 %v4303, 2.8656796e-06
      %v4368 = vmul.f32 %v4304, 2.8656796e-06
      %v4369 = vmul.f32 %v4305, 2.8656796e-06
      %v4370 = vmul.f32 %v4306, 2.8656796e-06
      %v4371 = vmul.f32 %v4307, 2.8656796e-06
      %v4372 = vmul.f32 %v4308, 2.8656796e-06
      %v4373 = vmul.f32 %v4309, 2.8656796e-06
      %v4374 = vmul.f32 %v4310, 2.8656796e-06
      %v4375 = vmul.f32 %v4311, 2.8656796e-06
      %v4376 = vmul.f32 %v4312, 2.8656796e-06
      %v4377 = vmul.f32 %v4313, 2.8656796e-06
      %v4378 = vmul.f32 %v4314, 2.8656796e-06
      %v4379 = vmul.f32 %v4315, 2.8656796e-06
      %v4380 = vmul.f32 %v4316, 2.8656796e-06
      %v4381 = vmul.f32 %v4317, 2.8656796e-06
      %v4382 = vmul.f32 %v4318, 2.8656796e-06
      %v4383 = vmul.f32 %v4319, 2.8656796e-06
      %v4384 = vmul.f32 %v4320, 2.8656796e-06
      %v4385 = vmul.f32 %v4321, 2.8656796e-06
      %v4386 = vmul.f32 %v4322, 2.8656796e-06
      %v4387 = vmul.f32 %v4323, 2.8656796e-06
      %v4388 = vmul.f32 %v4324, 2.8656796e-06
      %v4389 = vmul.f32 %v4325, 2.8656796e-06
      %v4390 = vmul.f32 %v4326, 2.8656796e-06
      %v4391 = vmul.f32 %v4327, 2.8656796e-06
      %v4392 = vmul.f32 %v4328, 2.8656796e-06
      %v4393 = vmul.f32 %v4329, 2.8656796e-06
      %v4394 = vmul.f32 %v4330, 2.8656796e-06
      %v4395 = vmul.f32 %v4331, 2.8656796e-06
      %v4396 = vmul.f32 %v4332, 2.8656796e-06
      %v4397 = vmul.f32 %v4333, 2.8656796e-06
      %v4398 = vmul.f32 %v4334, 2.8656796e-06
      %v4399 = vmul.f32 %v4335, 2.8656796e-06
      %v4400 = vmul.f32 %v4336, 2.8656796e-06
      %v4401 = vmul.f32 %v4337, 2.8656796e-06
      %v4402 = vmul.f32 %v4338, 2.8656796e-06
      %v4403 = vmul.f32 %v4339, 2.8656796e-06
      %v4404 = vmul.f32 %v4340, 2.8656796e-06
      %v4405 = vmul.f32 %v4341, 2.8656796e-06
      %v4406 = vmul.f32 %v4342, 2.8656796e-06
      %v4407 = vmul.f32 %v4343, 2.8656796e-06
      %v4408 = vmul.f32 %v4344, 2.8656796e-06
      %v4409 = vmul.f32 %v4345, 2.8656796e-06
      %v4410 = vmul.f32 %v4346, 2.8656796e-06
      %v4411 = vmul.f32 %v4347, 2.8656796e-06
      %v4412 = vmul.f32 %v4348, 2.8656796e-06
      %v4413 = vmul.f32 %v4349, 2.8656796e-06
      %v4414 = vmul.f32 %v4350, 2.8656796e-06
      %v4415 = vmul.f32 %v4351, 2.8656796e-06
      %v4416 = vadd.f32 %v4352, -0.00019855992
      %v4417 = vadd.f32 %v4353, -0.00019855992
      %v4418 = vadd.f32 %v4354, -0.00019855992
      %v4419 = vadd.f32 %v4355, -0.00019855992
      %v4420 = vadd.f32 %v4356, -0.00019855992
      %v4421 = vadd.f32 %v4357, -0.00019855992
      %v4422 = vadd.f32 %v4358, -0.00019855992
      %v4423 = vadd.f32 %v4359, -0.00019855992
      %v4424 = vadd.f32 %v4360, -0.00019855992
      %v4425 = vadd.f32 %v4361, -0.00019855992
      %v4426 = vadd.f32 %v4362, -0.00019855992
      %v4427 = vadd.f32 %v4363, -0.00019855992
      %v4428 = vadd.f32 %v4364, -0.00019855992
      %v4429 = vadd.f32 %v4365, -0.00019855992
      %v4430 = vadd.f32 %v4366, -0.00019855992
      %v4431 = vadd.f32 %v4367, -0.00019855992
      %v4432 = vadd.f32 %v4368, -0.00019855992
      %v4433 = vadd.f32 %v4369, -0.00019855992
      %v4434 = vadd.f32 %v4370, -0.00019855992
      %v4435 = vadd.f32 %v4371, -0.00019855992
      %v4436 = vadd.f32 %v4372, -0.00019855992
      %v4437 = vadd.f32 %v4373, -0.00019855992
      %v4438 = vadd.f32 %v4374, -0.00019855992
      %v4439 = vadd.f32 %v4375, -0.00019855992
      %v4440 = vadd.f32 %v4376, -0.00019855992
      %v4441 = vadd.f32 %v4377, -0.00019855992
      %v4442 = vadd.f32 %v4378, -0.00019855992
      %v4443 = vadd.f32 %v4379, -0.00019855992
      %v4444 = vadd.f32 %v4380, -0.00019855992
      %v4445 = vadd.f32 %v4381, -0.00019855992
      %v4446 = vadd.f32 %v4382, -0.00019855992
      %v4447 = vadd.f32 %v4383, -0.00019855992
      %v4448 = vadd.f32 %v4384, -0.00019855992
      %v4449 = vadd.f32 %v4385, -0.00019855992
      %v4450 = vadd.f32 %v4386, -0.00019855992
      %v4451 = vadd.f32 %v4387, -0.00019855992
      %v4452 = vadd.f32 %v4388, -0.00019855992
      %v4453 = vadd.f32 %v4389, -0.00019855992
      %v4454 = vadd.f32 %v4390, -0.00019855992
      %v4455 = vadd.f32 %v4391, -0.00019855992
      %v4456 = vadd.f32 %v4392, -0.00019855992
      %v4457 = vadd.f32 %v4393, -0.00019855992
      %v4458 = vadd.f32 %v4394, -0.00019855992
      %v4459 = vadd.f32 %v4395, -0.00019855992
      %v4460 = vadd.f32 %v4396, -0.00019855992
      %v4461 = vadd.f32 %v4397, -0.00019855992
      %v4462 = vadd.f32 %v4398, -0.00019855992
      %v4463 = vadd.f32 %v4399, -0.00019855992
      %v4464 = vadd.f32 %v4400, -0.00019855992
      %v4465 = vadd.f32 %v4401, -0.00019855992
      %v4466 = vadd.f32 %v4402, -0.00019855992
      %v4467 = vadd.f32 %v4403, -0.00019855992
      %v4468 = vadd.f32 %v4404, -0.00019855992
      %v4469 = vadd.f32 %v4405, -0.00019855992
      %v4470 = vadd.f32 %v4406, -0.00019855992
      %v4471 = vadd.f32 %v4407, -0.00019855992
      %v4472 = vadd.f32 %v4408, -0.00019855992
      %v4473 = vadd.f32 %v4409, -0.00019855992
      %v4474 = vadd.f32 %v4410, -0.00019855992
      %v4475 = vadd.f32 %v4411, -0.00019855992
      %v4476 = vadd.f32 %v4412, -0.00019855992
      %v4477 = vadd.f32 %v4413, -0.00019855992
      %v4478 = vadd.f32 %v4414, -0.00019855992
      %v4479 = vadd.f32 %v4415, -0.00019855992
      %v4480 = vmul.f32 %v4416, %v4288
      %v4481 = vmul.f32 %v4417, %v4289
      %v4482 = vmul.f32 %v4418, %v4290
      %v4483 = vmul.f32 %v4419, %v4291
      %v4484 = vmul.f32 %v4420, %v4292
      %v4485 = vmul.f32 %v4421, %v4293
      %v4486 = vmul.f32 %v4422, %v4294
      %v4487 = vmul.f32 %v4423, %v4295
      %v4488 = vmul.f32 %v4424, %v4296
      %v4489 = vmul.f32 %v4425, %v4297
      %v4490 = vmul.f32 %v4426, %v4298
      %v4491 = vmul.f32 %v4427, %v4299
      %v4492 = vmul.f32 %v4428, %v4300
      %v4493 = vmul.f32 %v4429, %v4301
      %v4494 = vmul.f32 %v4430, %v4302
      %v4495 = vmul.f32 %v4431, %v4303
      %v4496 = vmul.f32 %v4432, %v4304
      %v4497 = vmul.f32 %v4433, %v4305
      %v4498 = vmul.f32 %v4434, %v4306
      %v4499 = vmul.f32 %v4435, %v4307
      %v4500 = vmul.f32 %v4436, %v4308
      %v4501 = vmul.f32 %v4437, %v4309
      %v4502 = vmul.f32 %v4438, %v4310
      %v4503 = vmul.f32 %v4439, %v4311
      %v4504 = vmul.f32 %v4440, %v4312
      %v4505 = vmul.f32 %v4441, %v4313
      %v4506 = vmul.f32 %v4442, %v4314
      %v4507 = vmul.f32 %v4443, %v4315
      %v4508 = vmul.f32 %v4444, %v4316
      %v4509 = vmul.f32 %v4445, %v4317
      %v4510 = vmul.f32 %v4446, %v4318
      %v4511 = vmul.f32 %v4447, %v4319
      %v4512 = vmul.f32 %v4448, %v4320
      %v4513 = vmul.f32 %v4449, %v4321
      %v4514 = vmul.f32 %v4450, %v4322
      %v4515 = vmul.f32 %v4451, %v4323
      %v4516 = vmul.f32 %v4452, %v4324
      %v4517 = vmul.f32 %v4453, %v4325
      %v4518 = vmul.f32 %v4454, %v4326
      %v4519 = vmul.f32 %v4455, %v4327
      %v4520 = vmul.f32 %v4456, %v4328
      %v4521 = vmul.f32 %v4457, %v4329
      %v4522 = vmul.f32 %v4458, %v4330
      %v4523 = vmul.f32 %v4459, %v4331
      %v4524 = vmul.f32 %v4460, %v4332
      %v4525 = vmul.f32 %v4461, %v4333
      %v4526 = vmul.f32 %v4462, %v4334
      %v4527 = vmul.f32 %v4463, %v4335
      %v4528 = vmul.f32 %v4464, %v4336
      %v4529 = vmul.f32 %v4465, %v4337
      %v4530 = vmul.f32 %v4466, %v4338
      %v4531 = vmul.f32 %v4467, %v4339
      %v4532 = vmul.f32 %v4468, %v4340
      %v4533 = vmul.f32 %v4469, %v4341
      %v4534 = vmul.f32 %v4470, %v4342
      %v4535 = vmul.f32 %v4471, %v4343
      %v4536 = vmul.f32 %v4472, %v4344
      %v4537 = vmul.f32 %v4473, %v4345
      %v4538 = vmul.f32 %v4474, %v4346
      %v4539 = vmul.f32 %v4475, %v4347
      %v4540 = vmul.f32 %v4476, %v4348
      %v4541 = vmul.f32 %v4477, %v4349
      %v4542 = vmul.f32 %v4478, %v4350
      %v4543 = vmul.f32 %v4479, %v4351
      %v4544 = vadd.f32 %v4480, 0.008333386
      %v4545 = vadd.f32 %v4481, 0.008333386
      %v4546 = vadd.f32 %v4482, 0.008333386
      %v4547 = vadd.f32 %v4483, 0.008333386
      %v4548 = vadd.f32 %v4484, 0.008333386
      %v4549 = vadd.f32 %v4485, 0.008333386
      %v4550 = vadd.f32 %v4486, 0.008333386
      %v4551 = vadd.f32 %v4487, 0.008333386
      %v4552 = vadd.f32 %v4488, 0.008333386
      %v4553 = vadd.f32 %v4489, 0.008333386
      %v4554 = vadd.f32 %v4490, 0.008333386
      %v4555 = vadd.f32 %v4491, 0.008333386
      %v4556 = vadd.f32 %v4492, 0.008333386
      %v4557 = vadd.f32 %v4493, 0.008333386
      %v4558 = vadd.f32 %v4494, 0.008333386
      %v4559 = vadd.f32 %v4495, 0.008333386
      %v4560 = vadd.f32 %v4496, 0.008333386
      %v4561 = vadd.f32 %v4497, 0.008333386
      %v4562 = vadd.f32 %v4498, 0.008333386
      %v4563 = vadd.f32 %v4499, 0.008333386
      %v4564 = vadd.f32 %v4500, 0.008333386
      %v4565 = vadd.f32 %v4501, 0.008333386
      %v4566 = vadd.f32 %v4502, 0.008333386
      %v4567 = vadd.f32 %v4503, 0.008333386
      %v4568 = vadd.f32 %v4504, 0.008333386
      %v4569 = vadd.f32 %v4505, 0.008333386
      %v4570 = vadd.f32 %v4506, 0.008333386
      %v4571 = vadd.f32 %v4507, 0.008333386
      %v4572 = vadd.f32 %v4508, 0.008333386
      %v4573 = vadd.f32 %v4509, 0.008333386
      %v4574 = vadd.f32 %v4510, 0.008333386
      %v4575 = vadd.f32 %v4511, 0.008333386
      %v4576 = vadd.f32 %v4512, 0.008333386
      %v4577 = vadd.f32 %v4513, 0.008333386
      %v4578 = vadd.f32 %v4514, 0.008333386
      %v4579 = vadd.f32 %v4515, 0.008333386
      %v4580 = vadd.f32 %v4516, 0.008333386
      %v4581 = vadd.f32 %v4517, 0.008333386
      %v4582 = vadd.f32 %v4518, 0.008333386
      %v4583 = vadd.f32 %v4519, 0.008333386
      %v4584 = vadd.f32 %v4520, 0.008333386
      %v4585 = vadd.f32 %v4521, 0.008333386
      %v4586 = vadd.f32 %v4522, 0.008333386
      %v4587 = vadd.f32 %v4523, 0.008333386
      %v4588 = vadd.f32 %v4524, 0.008333386
      %v4589 = vadd.f32 %v4525, 0.008333386
      %v4590 = vadd.f32 %v4526, 0.008333386
      %v4591 = vadd.f32 %v4527, 0.008333386
      %v4592 = vadd.f32 %v4528, 0.008333386
      %v4593 = vadd.f32 %v4529, 0.008333386
      %v4594 = vadd.f32 %v4530, 0.008333386
      %v4595 = vadd.f32 %v4531, 0.008333386
      %v4596 = vadd.f32 %v4532, 0.008333386
      %v4597 = vadd.f32 %v4533, 0.008333386
      %v4598 = vadd.f32 %v4534, 0.008333386
      %v4599 = vadd.f32 %v4535, 0.008333386
      %v4600 = vadd.f32 %v4536, 0.008333386
      %v4601 = vadd.f32 %v4537, 0.008333386
      %v4602 = vadd.f32 %v4538, 0.008333386
      %v4603 = vadd.f32 %v4539, 0.008333386
      %v4604 = vadd.f32 %v4540, 0.008333386
      %v4605 = vadd.f32 %v4541, 0.008333386
      %v4606 = vadd.f32 %v4542, 0.008333386
      %v4607 = vadd.f32 %v4543, 0.008333386
      %v4608 = vmul.f32 %v4544, %v4288
      %v4609 = vmul.f32 %v4545, %v4289
      %v4610 = vmul.f32 %v4546, %v4290
      %v4611 = vmul.f32 %v4547, %v4291
      %v4612 = vmul.f32 %v4548, %v4292
      %v4613 = vmul.f32 %v4549, %v4293
      %v4614 = vmul.f32 %v4550, %v4294
      %v4615 = vmul.f32 %v4551, %v4295
      %v4616 = vmul.f32 %v4552, %v4296
      %v4617 = vmul.f32 %v4553, %v4297
      %v4618 = vmul.f32 %v4554, %v4298
      %v4619 = vmul.f32 %v4555, %v4299
      %v4620 = vmul.f32 %v4556, %v4300
      %v4621 = vmul.f32 %v4557, %v4301
      %v4622 = vmul.f32 %v4558, %v4302
      %v4623 = vmul.f32 %v4559, %v4303
      %v4624 = vmul.f32 %v4560, %v4304
      %v4625 = vmul.f32 %v4561, %v4305
      %v4626 = vmul.f32 %v4562, %v4306
      %v4627 = vmul.f32 %v4563, %v4307
      %v4628 = vmul.f32 %v4564, %v4308
      %v4629 = vmul.f32 %v4565, %v4309
      %v4630 = vmul.f32 %v4566, %v4310
      %v4631 = vmul.f32 %v4567, %v4311
      %v4632 = vmul.f32 %v4568, %v4312
      %v4633 = vmul.f32 %v4569, %v4313
      %v4634 = vmul.f32 %v4570, %v4314
      %v4635 = vmul.f32 %v4571, %v4315
      %v4636 = vmul.f32 %v4572, %v4316
      %v4637 = vmul.f32 %v4573, %v4317
      %v4638 = vmul.f32 %v4574, %v4318
      %v4639 = vmul.f32 %v4575, %v4319
      %v4640 = vmul.f32 %v4576, %v4320
      %v4641 = vmul.f32 %v4577, %v4321
      %v4642 = vmul.f32 %v4578, %v4322
      %v4643 = vmul.f32 %v4579, %v4323
      %v4644 = vmul.f32 %v4580, %v4324
      %v4645 = vmul.f32 %v4581, %v4325
      %v4646 = vmul.f32 %v4582, %v4326
      %v4647 = vmul.f32 %v4583, %v4327
      %v4648 = vmul.f32 %v4584, %v4328
      %v4649 = vmul.f32 %v4585, %v4329
      %v4650 = vmul.f32 %v4586, %v4330
      %v4651 = vmul.f32 %v4587, %v4331
      %v4652 = vmul.f32 %v4588, %v4332
      %v4653 = vmul.f32 %v4589, %v4333
      %v4654 = vmul.f32 %v4590, %v4334
      %v4655 = vmul.f32 %v4591, %v4335
      %v4656 = vmul.f32 %v4592, %v4336
      %v4657 = vmul.f32 %v4593, %v4337
      %v4658 = vmul.f32 %v4594, %v4338
      %v4659 = vmul.f32 %v4595, %v4339
      %v4660 = vmul.f32 %v4596, %v4340
      %v4661 = vmul.f32 %v4597, %v4341
      %v4662 = vmul.f32 %v4598, %v4342
      %v4663 = vmul.f32 %v4599, %v4343
      %v4664 = vmul.f32 %v4600, %v4344
      %v4665 = vmul.f32 %v4601, %v4345
      %v4666 = vmul.f32 %v4602, %v4346
      %v4667 = vmul.f32 %v4603, %v4347
      %v4668 = vmul.f32 %v4604, %v4348
      %v4669 = vmul.f32 %v4605, %v4349
      %v4670 = vmul.f32 %v4606, %v4350
      %v4671 = vmul.f32 %v4607, %v4351
      %v4672 = vadd.f32 %v4608, -0.16666667
      %v4673 = vadd.f32 %v4609, -0.16666667
      %v4674 = vadd.f32 %v4610, -0.16666667
      %v4675 = vadd.f32 %v4611, -0.16666667
      %v4676 = vadd.f32 %v4612, -0.16666667
      %v4677 = vadd.f32 %v4613, -0.16666667
      %v4678 = vadd.f32 %v4614, -0.16666667
      %v4679 = vadd.f32 %v4615, -0.16666667
      %v4680 = vadd.f32 %v4616, -0.16666667
      %v4681 = vadd.f32 %v4617, -0.16666667
      %v4682 = vadd.f32 %v4618, -0.16666667
      %v4683 = vadd.f32 %v4619, -0.16666667
      %v4684 = vadd.f32 %v4620, -0.16666667
      %v4685 = vadd.f32 %v4621, -0.16666667
      %v4686 = vadd.f32 %v4622, -0.16666667
      %v4687 = vadd.f32 %v4623, -0.16666667
      %v4688 = vadd.f32 %v4624, -0.16666667
      %v4689 = vadd.f32 %v4625, -0.16666667
      %v4690 = vadd.f32 %v4626, -0.16666667
      %v4691 = vadd.f32 %v4627, -0.16666667
      %v4692 = vadd.f32 %v4628, -0.16666667
      %v4693 = vadd.f32 %v4629, -0.16666667
      %v4694 = vadd.f32 %v4630, -0.16666667
      %v4695 = vadd.f32 %v4631, -0.16666667
      %v4696 = vadd.f32 %v4632, -0.16666667
      %v4697 = vadd.f32 %v4633, -0.16666667
      %v4698 = vadd.f32 %v4634, -0.16666667
      %v4699 = vadd.f32 %v4635, -0.16666667
      %v4700 = vadd.f32 %v4636, -0.16666667
      %v4701 = vadd.f32 %v4637, -0.16666667
      %v4702 = vadd.f32 %v4638, -0.16666667
      %v4703 = vadd.f32 %v4639, -0.16666667
      %v4704 = vadd.f32 %v4640, -0.16666667
      %v4705 = vadd.f32 %v4641, -0.16666667
      %v4706 = vadd.f32 %v4642, -0.16666667
      %v4707 = vadd.f32 %v4643, -0.16666667
      %v4708 = vadd.f32 %v4644, -0.16666667
      %v4709 = vadd.f32 %v4645, -0.16666667
      %v4710 = vadd.f32 %v4646, -0.16666667
      %v4711 = vadd.f32 %v4647, -0.16666667
      %v4712 = vadd.f32 %v4648, -0.16666667
      %v4713 = vadd.f32 %v4649, -0.16666667
      %v4714 = vadd.f32 %v4650, -0.16666667
      %v4715 = vadd.f32 %v4651, -0.16666667
      %v4716 = vadd.f32 %v4652, -0.16666667
      %v4717 = vadd.f32 %v4653, -0.16666667
      %v4718 = vadd.f32 %v4654, -0.16666667
      %v4719 = vadd.f32 %v4655, -0.16666667
      %v4720 = vadd.f32 %v4656, -0.16666667
      %v4721 = vadd.f32 %v4657, -0.16666667
      %v4722 = vadd.f32 %v4658, -0.16666667
      %v4723 = vadd.f32 %v4659, -0.16666667
      %v4724 = vadd.f32 %v4660, -0.16666667
      %v4725 = vadd.f32 %v4661, -0.16666667
      %v4726 = vadd.f32 %v4662, -0.16666667
      %v4727 = vadd.f32 %v4663, -0.16666667
      %v4728 = vadd.f32 %v4664, -0.16666667
      %v4729 = vadd.f32 %v4665, -0.16666667
      %v4730 = vadd.f32 %v4666, -0.16666667
      %v4731 = vadd.f32 %v4667, -0.16666667
      %v4732 = vadd.f32 %v4668, -0.16666667
      %v4733 = vadd.f32 %v4669, -0.16666667
      %v4734 = vadd.f32 %v4670, -0.16666667
      %v4735 = vadd.f32 %v4671, -0.16666667
      %v4736 = vmul.f32 %v4224, %v4288
      %v4737 = vmul.f32 %v4225, %v4289
      %v4738 = vmul.f32 %v4226, %v4290
      %v4739 = vmul.f32 %v4227, %v4291
      %v4740 = vmul.f32 %v4228, %v4292
      %v4741 = vmul.f32 %v4229, %v4293
      %v4742 = vmul.f32 %v4230, %v4294
      %v4743 = vmul.f32 %v4231, %v4295
      %v4744 = vmul.f32 %v4232, %v4296
      %v4745 = vmul.f32 %v4233, %v4297
      %v4746 = vmul.f32 %v4234, %v4298
      %v4747 = vmul.f32 %v4235, %v4299
      %v4748 = vmul.f32 %v4236, %v4300
      %v4749 = vmul.f32 %v4237, %v4301
      %v4750 = vmul.f32 %v4238, %v4302
      %v4751 = vmul.f32 %v4239, %v4303
      %v4752 = vmul.f32 %v4240, %v4304
      %v4753 = vmul.f32 %v4241, %v4305
      %v4754 = vmul.f32 %v4242, %v4306
      %v4755 = vmul.f32 %v4243, %v4307
      %v4756 = vmul.f32 %v4244, %v4308
      %v4757 = vmul.f32 %v4245, %v4309
      %v4758 = vmul.f32 %v4246, %v4310
      %v4759 = vmul.f32 %v4247, %v4311
      %v4760 = vmul.f32 %v4248, %v4312
      %v4761 = vmul.f32 %v4249, %v4313
      %v4762 = vmul.f32 %v4250, %v4314
      %v4763 = vmul.f32 %v4251, %v4315
      %v4764 = vmul.f32 %v4252, %v4316
      %v4765 = vmul.f32 %v4253, %v4317
      %v4766 = vmul.f32 %v4254, %v4318
      %v4767 = vmul.f32 %v4255, %v4319
      %v4768 = vmul.f32 %v4256, %v4320
      %v4769 = vmul.f32 %v4257, %v4321
      %v4770 = vmul.f32 %v4258, %v4322
      %v4771 = vmul.f32 %v4259, %v4323
      %v4772 = vmul.f32 %v4260, %v4324
      %v4773 = vmul.f32 %v4261, %v4325
      %v4774 = vmul.f32 %v4262, %v4326
      %v4775 = vmul.f32 %v4263, %v4327
      %v4776 = vmul.f32 %v4264, %v4328
      %v4777 = vmul.f32 %v4265, %v4329
      %v4778 = vmul.f32 %v4266, %v4330
      %v4779 = vmul.f32 %v4267, %v4331
      %v4780 = vmul.f32 %v4268, %v4332
      %v4781 = vmul.f32 %v4269, %v4333
      %v4782 = vmul.f32 %v4270, %v4334
      %v4783 = vmul.f32 %v4271, %v4335
      %v4784 = vmul.f32 %v4272, %v4336
      %v4785 = vmul.f32 %v4273, %v4337
      %v4786 = vmul.f32 %v4274, %v4338
      %v4787 = vmul.f32 %v4275, %v4339
      %v4788 = vmul.f32 %v4276, %v4340
      %v4789 = vmul.f32 %v4277, %v4341
      %v4790 = vmul.f32 %v4278, %v4342
      %v4791 = vmul.f32 %v4279, %v4343
      %v4792 = vmul.f32 %v4280, %v4344
      %v4793 = vmul.f32 %v4281, %v4345
      %v4794 = vmul.f32 %v4282, %v4346
      %v4795 = vmul.f32 %v4283, %v4347
      %v4796 = vmul.f32 %v4284, %v4348
      %v4797 = vmul.f32 %v4285, %v4349
      %v4798 = vmul.f32 %v4286, %v4350
      %v4799 = vmul.f32 %v4287, %v4351
      %v4800 = vmul.f32 %v4736, %v4672
      %v4801 = vmul.f32 %v4737, %v4673
      %v4802 = vmul.f32 %v4738, %v4674
      %v4803 = vmul.f32 %v4739, %v4675
      %v4804 = vmul.f32 %v4740, %v4676
      %v4805 = vmul.f32 %v4741, %v4677
      %v4806 = vmul.f32 %v4742, %v4678
      %v4807 = vmul.f32 %v4743, %v4679
      %v4808 = vmul.f32 %v4744, %v4680
      %v4809 = vmul.f32 %v4745, %v4681
      %v4810 = vmul.f32 %v4746, %v4682
      %v4811 = vmul.f32 %v4747, %v4683
      %v4812 = vmul.f32 %v4748, %v4684
      %v4813 = vmul.f32 %v4749, %v4685
      %v4814 = vmul.f32 %v4750, %v4686
      %v4815 = vmul.f32 %v4751, %v4687
      %v4816 = vmul.f32 %v4752, %v4688
      %v4817 = vmul.f32 %v4753, %v4689
      %v4818 = vmul.f32 %v4754, %v4690
      %v4819 = vmul.f32 %v4755, %v4691
      %v4820 = vmul.f32 %v4756, %v4692
      %v4821 = vmul.f32 %v4757, %v4693
      %v4822 = vmul.f32 %v4758, %v4694
      %v4823 = vmul.f32 %v4759, %v4695
      %v4824 = vmul.f32 %v4760, %v4696
      %v4825 = vmul.f32 %v4761, %v4697
      %v4826 = vmul.f32 %v4762, %v4698
      %v4827 = vmul.f32 %v4763, %v4699
      %v4828 = vmul.f32 %v4764, %v4700
      %v4829 = vmul.f32 %v4765, %v4701
      %v4830 = vmul.f32 %v4766, %v4702
      %v4831 = vmul.f32 %v4767, %v4703
      %v4832 = vmul.f32 %v4768, %v4704
      %v4833 = vmul.f32 %v4769, %v4705
      %v4834 = vmul.f32 %v4770, %v4706
      %v4835 = vmul.f32 %v4771, %v4707
      %v4836 = vmul.f32 %v4772, %v4708
      %v4837 = vmul.f32 %v4773, %v4709
      %v4838 = vmul.f32 %v4774, %v4710
      %v4839 = vmul.f32 %v4775, %v4711
      %v4840 = vmul.f32 %v4776, %v4712
      %v4841 = vmul.f32 %v4777, %v4713
      %v4842 = vmul.f32 %v4778, %v4714
      %v4843 = vmul.f32 %v4779, %v4715
      %v4844 = vmul.f32 %v4780, %v4716
      %v4845 = vmul.f32 %v4781, %v4717
      %v4846 = vmul.f32 %v4782, %v4718
      %v4847 = vmul.f32 %v4783, %v4719
      %v4848 = vmul.f32 %v4784, %v4720
      %v4849 = vmul.f32 %v4785, %v4721
      %v4850 = vmul.f32 %v4786, %v4722
      %v4851 = vmul.f32 %v4787, %v4723
      %v4852 = vmul.f32 %v4788, %v4724
      %v4853 = vmul.f32 %v4789, %v4725
      %v4854 = vmul.f32 %v4790, %v4726
      %v4855 = vmul.f32 %v4791, %v4727
      %v4856 = vmul.f32 %v4792, %v4728
      %v4857 = vmul.f32 %v4793, %v4729
      %v4858 = vmul.f32 %v4794, %v4730
      %v4859 = vmul.f32 %v4795, %v4731
      %v4860 = vmul.f32 %v4796, %v4732
      %v4861 = vmul.f32 %v4797, %v4733
      %v4862 = vmul.f32 %v4798, %v4734
      %v4863 = vmul.f32 %v4799, %v4735
      %v4864 = vadd.f32 %v4224, %v4800
      %v4865 = vadd.f32 %v4225, %v4801
      %v4866 = vadd.f32 %v4226, %v4802
      %v4867 = vadd.f32 %v4227, %v4803
      %v4868 = vadd.f32 %v4228, %v4804
      %v4869 = vadd.f32 %v4229, %v4805
      %v4870 = vadd.f32 %v4230, %v4806
      %v4871 = vadd.f32 %v4231, %v4807
      %v4872 = vadd.f32 %v4232, %v4808
      %v4873 = vadd.f32 %v4233, %v4809
      %v4874 = vadd.f32 %v4234, %v4810
      %v4875 = vadd.f32 %v4235, %v4811
      %v4876 = vadd.f32 %v4236, %v4812
      %v4877 = vadd.f32 %v4237, %v4813
      %v4878 = vadd.f32 %v4238, %v4814
      %v4879 = vadd.f32 %v4239, %v4815
      %v4880 = vadd.f32 %v4240, %v4816
      %v4881 = vadd.f32 %v4241, %v4817
      %v4882 = vadd.f32 %v4242, %v4818
      %v4883 = vadd.f32 %v4243, %v4819
      %v4884 = vadd.f32 %v4244, %v4820
      %v4885 = vadd.f32 %v4245, %v4821
      %v4886 = vadd.f32 %v4246, %v4822
      %v4887 = vadd.f32 %v4247, %v4823
      %v4888 = vadd.f32 %v4248, %v4824
      %v4889 = vadd.f32 %v4249, %v4825
      %v4890 = vadd.f32 %v4250, %v4826
      %v4891 = vadd.f32 %v4251, %v4827
      %v4892 = vadd.f32 %v4252, %v4828
      %v4893 = vadd.f32 %v4253, %v4829
      %v4894 = vadd.f32 %v4254, %v4830
      %v4895 = vadd.f32 %v4255, %v4831
      %v4896 = vadd.f32 %v4256, %v4832
      %v4897 = vadd.f32 %v4257, %v4833
      %v4898 = vadd.f32 %v4258, %v4834
      %v4899 = vadd.f32 %v4259, %v4835
      %v4900 = vadd.f32 %v4260, %v4836
      %v4901 = vadd.f32 %v4261, %v4837
      %v4902 = vadd.f32 %v4262, %v4838
      %v4903 = vadd.f32 %v4263, %v4839
      %v4904 = vadd.f32 %v4264, %v4840
      %v4905 = vadd.f32 %v4265, %v4841
      %v4906 = vadd.f32 %v4266, %v4842
      %v4907 = vadd.f32 %v4267, %v4843
      %v4908 = vadd.f32 %v4268, %v4844
      %v4909 = vadd.f32 %v4269, %v4845
      %v4910 = vadd.f32 %v4270, %v4846
      %v4911 = vadd.f32 %v4271, %v4847
      %v4912 = vadd.f32 %v4272, %v4848
      %v4913 = vadd.f32 %v4273, %v4849
      %v4914 = vadd.f32 %v4274, %v4850
      %v4915 = vadd.f32 %v4275, %v4851
      %v4916 = vadd.f32 %v4276, %v4852
      %v4917 = vadd.f32 %v4277, %v4853
      %v4918 = vadd.f32 %v4278, %v4854
      %v4919 = vadd.f32 %v4279, %v4855
      %v4920 = vadd.f32 %v4280, %v4856
      %v4921 = vadd.f32 %v4281, %v4857
      %v4922 = vadd.f32 %v4282, %v4858
      %v4923 = vadd.f32 %v4283, %v4859
      %v4924 = vadd.f32 %v4284, %v4860
      %v4925 = vadd.f32 %v4285, %v4861
      %v4926 = vadd.f32 %v4286, %v4862
      %v4927 = vadd.f32 %v4287, %v4863
      %v4928 = vpack.c.bf16 %v4866, %v4864
      %v4929 = vpack.c.bf16 %v4867, %v4865
      %v4930 = vpack.c.bf16 %v4870, %v4868
      %v4931 = vpack.c.bf16 %v4871, %v4869
      %v4932 = vpack.c.bf16 %v4874, %v4872
      %v4933 = vpack.c.bf16 %v4875, %v4873
      %v4934 = vpack.c.bf16 %v4878, %v4876
      %v4935 = vpack.c.bf16 %v4879, %v4877
      %v4936 = vpack.c.bf16 %v4882, %v4880
      %v4937 = vpack.c.bf16 %v4883, %v4881
      %v4938 = vpack.c.bf16 %v4886, %v4884
      %v4939 = vpack.c.bf16 %v4887, %v4885
      %v4940 = vpack.c.bf16 %v4890, %v4888
      %v4941 = vpack.c.bf16 %v4891, %v4889
      %v4942 = vpack.c.bf16 %v4894, %v4892
      %v4943 = vpack.c.bf16 %v4895, %v4893
      %v4944 = vpack.c.bf16 %v4898, %v4896
      %v4945 = vpack.c.bf16 %v4899, %v4897
      %v4946 = vpack.c.bf16 %v4902, %v4900
      %v4947 = vpack.c.bf16 %v4903, %v4901
      %v4948 = vpack.c.bf16 %v4906, %v4904
      %v4949 = vpack.c.bf16 %v4907, %v4905
      %v4950 = vpack.c.bf16 %v4910, %v4908
      %v4951 = vpack.c.bf16 %v4911, %v4909
      %v4952 = vpack.c.bf16 %v4914, %v4912
      %v4953 = vpack.c.bf16 %v4915, %v4913
      %v4954 = vpack.c.bf16 %v4918, %v4916
      %v4955 = vpack.c.bf16 %v4919, %v4917
      %v4956 = vpack.c.bf16 %v4922, %v4920
      %v4957 = vpack.c.bf16 %v4923, %v4921
      %v4958 = vpack.c.bf16 %v4926, %v4924
      %v4959 = vpack.c.bf16 %v4927, %v4925
      %v4960 = vld [vmem:[%s7] sm:$0xff]
      %v4961 = vld [vmem:[%s7 + $0x8] sm:$0xff]
      %v4962 = vld [vmem:[%s7 + $0x10] sm:$0xff]
      %v4963 = vld [vmem:[%s7 + $0x18] sm:$0xff]
      %v4964 = vld [vmem:[%s7 + $0x20] sm:$0xff]
      %v4965 = vld [vmem:[%s7 + $0x28] sm:$0xff]
      %v4966 = vld [vmem:[%s7 + $0x30] sm:$0xff]
      %v4967 = vld [vmem:[%s7 + $0x38] sm:$0xff]
      %v4968 = vld [vmem:[%s7 + $0x40] sm:$0xff]
      %v4969 = vld [vmem:[%s7 + $0x48] sm:$0xff]
      %v4970 = vld [vmem:[%s7 + $0x50] sm:$0xff]
      %v4971 = vld [vmem:[%s7 + $0x58] sm:$0xff]
      %v4972 = vld [vmem:[%s7 + $0x60] sm:$0xff]
      %v4973 = vld [vmem:[%s7 + $0x68] sm:$0xff]
      %v4974 = vld [vmem:[%s7 + $0x70] sm:$0xff]
      %v4975 = vld [vmem:[%s7 + $0x78] sm:$0xff]
      %v4976 = vld [vmem:[%s7 + $0x80] sm:$0xff]
      %v4977 = vld [vmem:[%s7 + $0x88] sm:$0xff]
      %v4978 = vld [vmem:[%s7 + $0x90] sm:$0xff]
      %v4979 = vld [vmem:[%s7 + $0x98] sm:$0xff]
      %v4980 = vld [vmem:[%s7 + $0xa0] sm:$0xff]
      %v4981 = vld [vmem:[%s7 + $0xa8] sm:$0xff]
      %v4982 = vld [vmem:[%s7 + $0xb0] sm:$0xff]
      %v4983 = vld [vmem:[%s7 + $0xb8] sm:$0xff]
      %v4984 = vld [vmem:[%s7 + $0xc0] sm:$0xff]
      %v4985 = vld [vmem:[%s7 + $0xc8] sm:$0xff]
      %v4986 = vld [vmem:[%s7 + $0xd0] sm:$0xff]
      %v4987 = vld [vmem:[%s7 + $0xd8] sm:$0xff]
      %v4988 = vld [vmem:[%s7 + $0xe0] sm:$0xff]
      %v4989 = vld [vmem:[%s7 + $0xe8] sm:$0xff]
      %v4990 = vld [vmem:[%s7 + $0xf0] sm:$0xff]
      %v4991 = vld [vmem:[%s7 + $0xf8] sm:$0xff]
      %v4992 = vld [vmem:[%s8] sm:$0x3]
      %v4994 = vlaneseq
      %v4995 = vshrl.u32 %v4994, 7
      %v4996 = vsub.s32 0, %v4995
      %v4997 = vrot.slane %v4992, %v4996
      %v4998 = vlaneseq
      %v4999 = vshrl.u32 %v4998, 7
      %v5000 = vsub.s32 1, %v4999
      %v5001 = vrot.slane %v4992, %v5000
      %v5036 = vunpack.c.l.b16 %v4960
      %v5037 = vunpack.c.h.b16 %v4960
      %v5038 = vunpack.c.l.b16 %v4961
      %v5039 = vunpack.c.h.b16 %v4961
      %v5040 = vunpack.c.l.b16 %v4962
      %v5041 = vunpack.c.h.b16 %v4962
      %v5042 = vunpack.c.l.b16 %v4963
      %v5043 = vunpack.c.h.b16 %v4963
      %v5044 = vunpack.c.l.b16 %v4964
      %v5045 = vunpack.c.h.b16 %v4964
      %v5046 = vunpack.c.l.b16 %v4965
      %v5047 = vunpack.c.h.b16 %v4965
      %v5048 = vunpack.c.l.b16 %v4966
      %v5049 = vunpack.c.h.b16 %v4966
      %v5050 = vunpack.c.l.b16 %v4967
      %v5051 = vunpack.c.h.b16 %v4967
      %v5052 = vunpack.c.l.b16 %v4968
      %v5053 = vunpack.c.h.b16 %v4968
      %v5054 = vunpack.c.l.b16 %v4969
      %v5055 = vunpack.c.h.b16 %v4969
      %v5056 = vunpack.c.l.b16 %v4970
      %v5057 = vunpack.c.h.b16 %v4970
      %v5058 = vunpack.c.l.b16 %v4971
      %v5059 = vunpack.c.h.b16 %v4971
      %v5060 = vunpack.c.l.b16 %v4972
      %v5061 = vunpack.c.h.b16 %v4972
      %v5062 = vunpack.c.l.b16 %v4973
      %v5063 = vunpack.c.h.b16 %v4973
      %v5064 = vunpack.c.l.b16 %v4974
      %v5065 = vunpack.c.h.b16 %v4974
      %v5066 = vunpack.c.l.b16 %v4975
      %v5067 = vunpack.c.h.b16 %v4975
      %v5068 = vunpack.c.l.b16 %v4976
      %v5069 = vunpack.c.h.b16 %v4976
      %v5070 = vunpack.c.l.b16 %v4977
      %v5071 = vunpack.c.h.b16 %v4977
      %v5072 = vunpack.c.l.b16 %v4978
      %v5073 = vunpack.c.h.b16 %v4978
      %v5074 = vunpack.c.l.b16 %v4979
      %v5075 = vunpack.c.h.b16 %v4979
      %v5076 = vunpack.c.l.b16 %v4980
      %v5077 = vunpack.c.h.b16 %v4980
      %v5078 = vunpack.c.l.b16 %v4981
      %v5079 = vunpack.c.h.b16 %v4981
      %v5080 = vunpack.c.l.b16 %v4982
      %v5081 = vunpack.c.h.b16 %v4982
      %v5082 = vunpack.c.l.b16 %v4983
      %v5083 = vunpack.c.h.b16 %v4983
      %v5084 = vunpack.c.l.b16 %v4984
      %v5085 = vunpack.c.h.b16 %v4984
      %v5086 = vunpack.c.l.b16 %v4985
      %v5087 = vunpack.c.h.b16 %v4985
      %v5088 = vunpack.c.l.b16 %v4986
      %v5089 = vunpack.c.h.b16 %v4986
      %v5090 = vunpack.c.l.b16 %v4987
      %v5091 = vunpack.c.h.b16 %v4987
      %v5092 = vunpack.c.l.b16 %v4988
      %v5093 = vunpack.c.h.b16 %v4988
      %v5094 = vunpack.c.l.b16 %v4989
      %v5095 = vunpack.c.h.b16 %v4989
      %v5096 = vunpack.c.l.b16 %v4990
      %v5097 = vunpack.c.h.b16 %v4990
      %v5098 = vunpack.c.l.b16 %v4991
      %v5099 = vunpack.c.h.b16 %v4991
      %v5100 = vpack.c.b16 %v5038, %v5036
      %v5101 = vpack.c.b16 %v5039, %v5037
      %v5102 = vpack.c.b16 %v5042, %v5040
      %v5103 = vpack.c.b16 %v5043, %v5041
      %v5104 = vpack.c.b16 %v5046, %v5044
      %v5105 = vpack.c.b16 %v5047, %v5045
      %v5106 = vpack.c.b16 %v5050, %v5048
      %v5107 = vpack.c.b16 %v5051, %v5049
      %v5108 = vpack.c.b16 %v5054, %v5052
      %v5109 = vpack.c.b16 %v5055, %v5053
      %v5110 = vpack.c.b16 %v5058, %v5056
      %v5111 = vpack.c.b16 %v5059, %v5057
      %v5112 = vpack.c.b16 %v5062, %v5060
      %v5113 = vpack.c.b16 %v5063, %v5061
      %v5114 = vpack.c.b16 %v5066, %v5064
      %v5115 = vpack.c.b16 %v5067, %v5065
      %v5116 = vpack.c.b16 %v5070, %v5068
      %v5117 = vpack.c.b16 %v5071, %v5069
      %v5118 = vpack.c.b16 %v5074, %v5072
      %v5119 = vpack.c.b16 %v5075, %v5073
      %v5120 = vpack.c.b16 %v5078, %v5076
      %v5121 = vpack.c.b16 %v5079, %v5077
      %v5122 = vpack.c.b16 %v5082, %v5080
      %v5123 = vpack.c.b16 %v5083, %v5081
      %v5124 = vpack.c.b16 %v5086, %v5084
      %v5125 = vpack.c.b16 %v5087, %v5085
      %v5126 = vpack.c.b16 %v5090, %v5088
      %v5127 = vpack.c.b16 %v5091, %v5089
      %v5128 = vpack.c.b16 %v5094, %v5092
      %v5129 = vpack.c.b16 %v5095, %v5093
      %v5130 = vpack.c.b16 %v5098, %v5096
      %v5131 = vpack.c.b16 %v5099, %v5097
      %5164 = vmatprep.subr.bf16.mxu0 %v5115
      %5165 = vmatpush1.bf16.msra.mxu0 %v5114
      %5166 = vmatprep.subr.bf16.mxu0 %v5113
      %5167 = vmatpush1.bf16.msra.mxu0 %v5112
      %5168 = vmatprep.subr.bf16.mxu0 %v5111
      %5169 = vmatpush1.bf16.msra.mxu0 %v5110
      %5170 = vmatprep.subr.bf16.mxu0 %v5109
      %5171 = vmatpush1.bf16.msra.mxu0 %v5108
      %5172 = vmatprep.subr.bf16.mxu0 %v5107
      %5173 = vmatpush1.bf16.msra.mxu0 %v5106
      %5174 = vmatprep.subr.bf16.mxu0 %v5105
      %5175 = vmatpush1.bf16.msra.mxu0 %v5104
      %5176 = vmatprep.subr.bf16.mxu0 %v5103
      %5177 = vmatpush1.bf16.msra.mxu0 %v5102
      %5178 = vmatprep.subr.bf16.mxu0 %v5101
      %5179 = vmatpush1.bf16.msra.mxu0 %v5100
      %5180 = vmatprep.subr.bf16.mxu0 %v5131
      %5181 = vmatpush2.bf16.msra.mxu0 %v5130
      %5182 = vmatprep.subr.bf16.mxu0 %v5129
      %5183 = vmatpush2.bf16.msra.mxu0 %v5128
      %5184 = vmatprep.subr.bf16.mxu0 %v5127
      %5185 = vmatpush2.bf16.msra.mxu0 %v5126
      %5186 = vmatprep.subr.bf16.mxu0 %v5125
      %5187 = vmatpush2.bf16.msra.mxu0 %v5124
      %5188 = vmatprep.subr.bf16.mxu0 %v5123
      %5189 = vmatpush2.bf16.msra.mxu0 %v5122
      %5190 = vmatprep.subr.bf16.mxu0 %v5121
      %5191 = vmatpush2.bf16.msra.mxu0 %v5120
      %5192 = vmatprep.subr.bf16.mxu0 %v5119
      %5193 = vmatpush2.bf16.msra.mxu0 %v5118
      %5194 = vmatprep.subr.bf16.mxu0 %v5117
      %5195 = vmatpush2.bf16.msra.mxu0 %v5116
      %5196 = vmatprep.mubr.bf16.mxu0 %v4929
      %5197 = vmatmul.mubr.bf16.gmra.mxu0 %v4928
      %v5198 = vpop.f32.mrf.mxu0
      %v5199 = vadd.f32 %v4997, %v5198
      %v5200 = vpop.f32.mrf.mxu0
      %v5201 = vadd.f32 %v5001, %v5200
      %v5202 = vpop.f32.mrf.mxu0
      %v5203 = vadd.f32 %v4997, %v5202
      %v5204 = vpop.f32.mrf.mxu0
      %v5205 = vadd.f32 %v5001, %v5204
      %5206 = vmatprep.mubr.bf16.mxu0 %v4931
      %5207 = vmatmul.mubr.bf16.gmra.mxu0 %v4930
      %v5208 = vpop.f32.mrf.mxu0
      %v5209 = vadd.f32 %v4997, %v5208
      %v5210 = vpop.f32.mrf.mxu0
      %v5211 = vadd.f32 %v5001, %v5210
      %v5212 = vpop.f32.mrf.mxu0
      %v5213 = vadd.f32 %v4997, %v5212
      %v5214 = vpop.f32.mrf.mxu0
      %v5215 = vadd.f32 %v5001, %v5214
      %5216 = vmatprep.mubr.bf16.mxu0 %v4933
      %5217 = vmatmul.mubr.bf16.gmra.mxu0 %v4932
      %v5218 = vpop.f32.mrf.mxu0
      %v5219 = vadd.f32 %v4997, %v5218
      %v5220 = vpop.f32.mrf.mxu0
      %v5221 = vadd.f32 %v5001, %v5220
      %v5222 = vpop.f32.mrf.mxu0
      %v5223 = vadd.f32 %v4997, %v5222
      %v5224 = vpop.f32.mrf.mxu0
      %v5225 = vadd.f32 %v5001, %v5224
      %5226 = vmatprep.mubr.bf16.mxu0 %v4935
      %5227 = vmatmul.mubr.bf16.gmra.mxu0 %v4934
      %v5228 = vpop.f32.mrf.mxu0
      %v5229 = vadd.f32 %v4997, %v5228
      %v5230 = vpop.f32.mrf.mxu0
      %v5231 = vadd.f32 %v5001, %v5230
      %v5232 = vpop.f32.mrf.mxu0
      %v5233 = vadd.f32 %v4997, %v5232
      %v5234 = vpop.f32.mrf.mxu0
      %v5235 = vadd.f32 %v5001, %v5234
      %5236 = vmatprep.mubr.bf16.mxu0 %v4937
      %5237 = vmatmul.mubr.bf16.gmra.mxu0 %v4936
      %v5238 = vpop.f32.mrf.mxu0
      %v5239 = vadd.f32 %v4997, %v5238
      %v5240 = vpop.f32.mrf.mxu0
      %v5241 = vadd.f32 %v5001, %v5240
      %v5242 = vpop.f32.mrf.mxu0
      %v5243 = vadd.f32 %v4997, %v5242
      %v5244 = vpop.f32.mrf.mxu0
      %v5245 = vadd.f32 %v5001, %v5244
      %5246 = vmatprep.mubr.bf16.mxu0 %v4939
      %5247 = vmatmul.mubr.bf16.gmra.mxu0 %v4938
      %v5248 = vpop.f32.mrf.mxu0
      %v5249 = vadd.f32 %v4997, %v5248
      %v5250 = vpop.f32.mrf.mxu0
      %v5251 = vadd.f32 %v5001, %v5250
      %v5252 = vpop.f32.mrf.mxu0
      %v5253 = vadd.f32 %v4997, %v5252
      %v5254 = vpop.f32.mrf.mxu0
      %v5255 = vadd.f32 %v5001, %v5254
      %5256 = vmatprep.mubr.bf16.mxu0 %v4941
      %5257 = vmatmul.mubr.bf16.gmra.mxu0 %v4940
      %v5258 = vpop.f32.mrf.mxu0
      %v5259 = vadd.f32 %v4997, %v5258
      %v5260 = vpop.f32.mrf.mxu0
      %v5261 = vadd.f32 %v5001, %v5260
      %v5262 = vpop.f32.mrf.mxu0
      %v5263 = vadd.f32 %v4997, %v5262
      %v5264 = vpop.f32.mrf.mxu0
      %v5265 = vadd.f32 %v5001, %v5264
      %5266 = vmatprep.mubr.bf16.mxu0 %v4943
      %5267 = vmatmul.mubr.bf16.gmra.mxu0 %v4942
      %v5268 = vpop.f32.mrf.mxu0
      %v5269 = vadd.f32 %v4997, %v5268
      %v5270 = vpop.f32.mrf.mxu0
      %v5271 = vadd.f32 %v5001, %v5270
      %v5272 = vpop.f32.mrf.mxu0
      %v5273 = vadd.f32 %v4997, %v5272
      %v5274 = vpop.f32.mrf.mxu0
      %v5275 = vadd.f32 %v5001, %v5274
      %5276 = vmatprep.mubr.bf16.mxu0 %v4945
      %5277 = vmatmul.mubr.bf16.gmra.mxu0 %v4944
      %v5278 = vpop.f32.mrf.mxu0
      %v5279 = vadd.f32 %v4997, %v5278
      %v5280 = vpop.f32.mrf.mxu0
      %v5281 = vadd.f32 %v5001, %v5280
      %v5282 = vpop.f32.mrf.mxu0
      %v5283 = vadd.f32 %v4997, %v5282
      %v5284 = vpop.f32.mrf.mxu0
      %v5285 = vadd.f32 %v5001, %v5284
      %5286 = vmatprep.mubr.bf16.mxu0 %v4947
      %5287 = vmatmul.mubr.bf16.gmra.mxu0 %v4946
      %v5288 = vpop.f32.mrf.mxu0
      %v5289 = vadd.f32 %v4997, %v5288
      %v5290 = vpop.f32.mrf.mxu0
      %v5291 = vadd.f32 %v5001, %v5290
      %v5292 = vpop.f32.mrf.mxu0
      %v5293 = vadd.f32 %v4997, %v5292
      %v5294 = vpop.f32.mrf.mxu0
      %v5295 = vadd.f32 %v5001, %v5294
      %5296 = vmatprep.mubr.bf16.mxu0 %v4949
      %5297 = vmatmul.mubr.bf16.gmra.mxu0 %v4948
      %v5298 = vpop.f32.mrf.mxu0
      %v5299 = vadd.f32 %v4997, %v5298
      %v5300 = vpop.f32.mrf.mxu0
      %v5301 = vadd.f32 %v5001, %v5300
      %v5302 = vpop.f32.mrf.mxu0
      %v5303 = vadd.f32 %v4997, %v5302
      %v5304 = vpop.f32.mrf.mxu0
      %v5305 = vadd.f32 %v5001, %v5304
      %5306 = vmatprep.mubr.bf16.mxu0 %v4951
      %5307 = vmatmul.mubr.bf16.gmra.mxu0 %v4950
      %v5308 = vpop.f32.mrf.mxu0
      %v5309 = vadd.f32 %v4997, %v5308
      %v5310 = vpop.f32.mrf.mxu0
      %v5311 = vadd.f32 %v5001, %v5310
      %v5312 = vpop.f32.mrf.mxu0
      %v5313 = vadd.f32 %v4997, %v5312
      %v5314 = vpop.f32.mrf.mxu0
      %v5315 = vadd.f32 %v5001, %v5314
      %5316 = vmatprep.mubr.bf16.mxu0 %v4953
      %5317 = vmatmul.mubr.bf16.gmra.mxu0 %v4952
      %v5318 = vpop.f32.mrf.mxu0
      %v5319 = vadd.f32 %v4997, %v5318
      %v5320 = vpop.f32.mrf.mxu0
      %v5321 = vadd.f32 %v5001, %v5320
      %v5322 = vpop.f32.mrf.mxu0
      %v5323 = vadd.f32 %v4997, %v5322
      %v5324 = vpop.f32.mrf.mxu0
      %v5325 = vadd.f32 %v5001, %v5324
      %5326 = vmatprep.mubr.bf16.mxu0 %v4955
      %5327 = vmatmul.mubr.bf16.gmra.mxu0 %v4954
      %v5328 = vpop.f32.mrf.mxu0
      %v5329 = vadd.f32 %v4997, %v5328
      %v5330 = vpop.f32.mrf.mxu0
      %v5331 = vadd.f32 %v5001, %v5330
      %v5332 = vpop.f32.mrf.mxu0
      %v5333 = vadd.f32 %v4997, %v5332
      %v5334 = vpop.f32.mrf.mxu0
      %v5335 = vadd.f32 %v5001, %v5334
      %5336 = vmatprep.mubr.bf16.mxu0 %v4957
      %5337 = vmatmul.mubr.bf16.gmra.mxu0 %v4956
      %v5338 = vpop.f32.mrf.mxu0
      %v5339 = vadd.f32 %v4997, %v5338
      %v5340 = vpop.f32.mrf.mxu0
      %v5341 = vadd.f32 %v5001, %v5340
      %v5342 = vpop.f32.mrf.mxu0
      %v5343 = vadd.f32 %v4997, %v5342
      %v5344 = vpop.f32.mrf.mxu0
      %v5345 = vadd.f32 %v5001, %v5344
      %5346 = vmatprep.mubr.bf16.mxu0 %v4959
      %5347 = vmatmul.mubr.bf16.gmra.mxu0 %v4958
      %v5348 = vpop.f32.mrf.mxu0
      %v5349 = vadd.f32 %v4997, %v5348
      %v5350 = vpop.f32.mrf.mxu0
      %v5351 = vadd.f32 %v5001, %v5350
      %v5352 = vpop.f32.mrf.mxu0
      %v5353 = vadd.f32 %v4997, %v5352
      %v5354 = vpop.f32.mrf.mxu0
      %v5355 = vadd.f32 %v5001, %v5354
      %5356 = vdwg.mxu0
      %v5357 = vmul.f32 %v5199, 0.15915494
      %v5358 = vmul.f32 %v5201, 0.15915494
      %v5359 = vmul.f32 %v5203, 0.15915494
      %v5360 = vmul.f32 %v5205, 0.15915494
      %v5361 = vmul.f32 %v5209, 0.15915494
      %v5362 = vmul.f32 %v5211, 0.15915494
      %v5363 = vmul.f32 %v5213, 0.15915494
      %v5364 = vmul.f32 %v5215, 0.15915494
      %v5365 = vmul.f32 %v5219, 0.15915494
      %v5366 = vmul.f32 %v5221, 0.15915494
      %v5367 = vmul.f32 %v5223, 0.15915494
      %v5368 = vmul.f32 %v5225, 0.15915494
      %v5369 = vmul.f32 %v5229, 0.15915494
      %v5370 = vmul.f32 %v5231, 0.15915494
      %v5371 = vmul.f32 %v5233, 0.15915494
      %v5372 = vmul.f32 %v5235, 0.15915494
      %v5373 = vmul.f32 %v5239, 0.15915494
      %v5374 = vmul.f32 %v5241, 0.15915494
      %v5375 = vmul.f32 %v5243, 0.15915494
      %v5376 = vmul.f32 %v5245, 0.15915494
      %v5377 = vmul.f32 %v5249, 0.15915494
      %v5378 = vmul.f32 %v5251, 0.15915494
      %v5379 = vmul.f32 %v5253, 0.15915494
      %v5380 = vmul.f32 %v5255, 0.15915494
      %v5381 = vmul.f32 %v5259, 0.15915494
      %v5382 = vmul.f32 %v5261, 0.15915494
      %v5383 = vmul.f32 %v5263, 0.15915494
      %v5384 = vmul.f32 %v5265, 0.15915494
      %v5385 = vmul.f32 %v5269, 0.15915494
      %v5386 = vmul.f32 %v5271, 0.15915494
      %v5387 = vmul.f32 %v5273, 0.15915494
      %v5388 = vmul.f32 %v5275, 0.15915494
      %v5389 = vmul.f32 %v5279, 0.15915494
      %v5390 = vmul.f32 %v5281, 0.15915494
      %v5391 = vmul.f32 %v5283, 0.15915494
      %v5392 = vmul.f32 %v5285, 0.15915494
      %v5393 = vmul.f32 %v5289, 0.15915494
      %v5394 = vmul.f32 %v5291, 0.15915494
      %v5395 = vmul.f32 %v5293, 0.15915494
      %v5396 = vmul.f32 %v5295, 0.15915494
      %v5397 = vmul.f32 %v5299, 0.15915494
      %v5398 = vmul.f32 %v5301, 0.15915494
      %v5399 = vmul.f32 %v5303, 0.15915494
      %v5400 = vmul.f32 %v5305, 0.15915494
      %v5401 = vmul.f32 %v5309, 0.15915494
      %v5402 = vmul.f32 %v5311, 0.15915494
      %v5403 = vmul.f32 %v5313, 0.15915494
      %v5404 = vmul.f32 %v5315, 0.15915494
      %v5405 = vmul.f32 %v5319, 0.15915494
      %v5406 = vmul.f32 %v5321, 0.15915494
      %v5407 = vmul.f32 %v5323, 0.15915494
      %v5408 = vmul.f32 %v5325, 0.15915494
      %v5409 = vmul.f32 %v5329, 0.15915494
      %v5410 = vmul.f32 %v5331, 0.15915494
      %v5411 = vmul.f32 %v5333, 0.15915494
      %v5412 = vmul.f32 %v5335, 0.15915494
      %v5413 = vmul.f32 %v5339, 0.15915494
      %v5414 = vmul.f32 %v5341, 0.15915494
      %v5415 = vmul.f32 %v5343, 0.15915494
      %v5416 = vmul.f32 %v5345, 0.15915494
      %v5417 = vmul.f32 %v5349, 0.15915494
      %v5418 = vmul.f32 %v5351, 0.15915494
      %v5419 = vmul.f32 %v5353, 0.15915494
      %v5420 = vmul.f32 %v5355, 0.15915494
      %v5421 = vadd.f32 %v5357, 0.5
      %v5422 = vadd.f32 %v5358, 0.5
      %v5423 = vadd.f32 %v5359, 0.5
      %v5424 = vadd.f32 %v5360, 0.5
      %v5425 = vadd.f32 %v5361, 0.5
      %v5426 = vadd.f32 %v5362, 0.5
      %v5427 = vadd.f32 %v5363, 0.5
      %v5428 = vadd.f32 %v5364, 0.5
      %v5429 = vadd.f32 %v5365, 0.5
      %v5430 = vadd.f32 %v5366, 0.5
      %v5431 = vadd.f32 %v5367, 0.5
      %v5432 = vadd.f32 %v5368, 0.5
      %v5433 = vadd.f32 %v5369, 0.5
      %v5434 = vadd.f32 %v5370, 0.5
      %v5435 = vadd.f32 %v5371, 0.5
      %v5436 = vadd.f32 %v5372, 0.5
      %v5437 = vadd.f32 %v5373, 0.5
      %v5438 = vadd.f32 %v5374, 0.5
      %v5439 = vadd.f32 %v5375, 0.5
      %v5440 = vadd.f32 %v5376, 0.5
      %v5441 = vadd.f32 %v5377, 0.5
      %v5442 = vadd.f32 %v5378, 0.5
      %v5443 = vadd.f32 %v5379, 0.5
      %v5444 = vadd.f32 %v5380, 0.5
      %v5445 = vadd.f32 %v5381, 0.5
      %v5446 = vadd.f32 %v5382, 0.5
      %v5447 = vadd.f32 %v5383, 0.5
      %v5448 = vadd.f32 %v5384, 0.5
      %v5449 = vadd.f32 %v5385, 0.5
      %v5450 = vadd.f32 %v5386, 0.5
      %v5451 = vadd.f32 %v5387, 0.5
      %v5452 = vadd.f32 %v5388, 0.5
      %v5453 = vadd.f32 %v5389, 0.5
      %v5454 = vadd.f32 %v5390, 0.5
      %v5455 = vadd.f32 %v5391, 0.5
      %v5456 = vadd.f32 %v5392, 0.5
      %v5457 = vadd.f32 %v5393, 0.5
      %v5458 = vadd.f32 %v5394, 0.5
      %v5459 = vadd.f32 %v5395, 0.5
      %v5460 = vadd.f32 %v5396, 0.5
      %v5461 = vadd.f32 %v5397, 0.5
      %v5462 = vadd.f32 %v5398, 0.5
      %v5463 = vadd.f32 %v5399, 0.5
      %v5464 = vadd.f32 %v5400, 0.5
      %v5465 = vadd.f32 %v5401, 0.5
      %v5466 = vadd.f32 %v5402, 0.5
      %v5467 = vadd.f32 %v5403, 0.5
      %v5468 = vadd.f32 %v5404, 0.5
      %v5469 = vadd.f32 %v5405, 0.5
      %v5470 = vadd.f32 %v5406, 0.5
      %v5471 = vadd.f32 %v5407, 0.5
      %v5472 = vadd.f32 %v5408, 0.5
      %v5473 = vadd.f32 %v5409, 0.5
      %v5474 = vadd.f32 %v5410, 0.5
      %v5475 = vadd.f32 %v5411, 0.5
      %v5476 = vadd.f32 %v5412, 0.5
      %v5477 = vadd.f32 %v5413, 0.5
      %v5478 = vadd.f32 %v5414, 0.5
      %v5479 = vadd.f32 %v5415, 0.5
      %v5480 = vadd.f32 %v5416, 0.5
      %v5481 = vadd.f32 %v5417, 0.5
      %v5482 = vadd.f32 %v5418, 0.5
      %v5483 = vadd.f32 %v5419, 0.5
      %v5484 = vadd.f32 %v5420, 0.5
      %v5485 = vfloor.f32 %v5421
      %v5486 = vfloor.f32 %v5422
      %v5487 = vfloor.f32 %v5423
      %v5488 = vfloor.f32 %v5424
      %v5489 = vfloor.f32 %v5425
      %v5490 = vfloor.f32 %v5426
      %v5491 = vfloor.f32 %v5427
      %v5492 = vfloor.f32 %v5428
      %v5493 = vfloor.f32 %v5429
      %v5494 = vfloor.f32 %v5430
      %v5495 = vfloor.f32 %v5431
      %v5496 = vfloor.f32 %v5432
      %v5497 = vfloor.f32 %v5433
      %v5498 = vfloor.f32 %v5434
      %v5499 = vfloor.f32 %v5435
      %v5500 = vfloor.f32 %v5436
      %v5501 = vfloor.f32 %v5437
      %v5502 = vfloor.f32 %v5438
      %v5503 = vfloor.f32 %v5439
      %v5504 = vfloor.f32 %v5440
      %v5505 = vfloor.f32 %v5441
      %v5506 = vfloor.f32 %v5442
      %v5507 = vfloor.f32 %v5443
      %v5508 = vfloor.f32 %v5444
      %v5509 = vfloor.f32 %v5445
      %v5510 = vfloor.f32 %v5446
      %v5511 = vfloor.f32 %v5447
      %v5512 = vfloor.f32 %v5448
      %v5513 = vfloor.f32 %v5449
      %v5514 = vfloor.f32 %v5450
      %v5515 = vfloor.f32 %v5451
      %v5516 = vfloor.f32 %v5452
      %v5517 = vfloor.f32 %v5453
      %v5518 = vfloor.f32 %v5454
      %v5519 = vfloor.f32 %v5455
      %v5520 = vfloor.f32 %v5456
      %v5521 = vfloor.f32 %v5457
      %v5522 = vfloor.f32 %v5458
      %v5523 = vfloor.f32 %v5459
      %v5524 = vfloor.f32 %v5460
      %v5525 = vfloor.f32 %v5461
      %v5526 = vfloor.f32 %v5462
      %v5527 = vfloor.f32 %v5463
      %v5528 = vfloor.f32 %v5464
      %v5529 = vfloor.f32 %v5465
      %v5530 = vfloor.f32 %v5466
      %v5531 = vfloor.f32 %v5467
      %v5532 = vfloor.f32 %v5468
      %v5533 = vfloor.f32 %v5469
      %v5534 = vfloor.f32 %v5470
      %v5535 = vfloor.f32 %v5471
      %v5536 = vfloor.f32 %v5472
      %v5537 = vfloor.f32 %v5473
      %v5538 = vfloor.f32 %v5474
      %v5539 = vfloor.f32 %v5475
      %v5540 = vfloor.f32 %v5476
      %v5541 = vfloor.f32 %v5477
      %v5542 = vfloor.f32 %v5478
      %v5543 = vfloor.f32 %v5479
      %v5544 = vfloor.f32 %v5480
      %v5545 = vfloor.f32 %v5481
      %v5546 = vfloor.f32 %v5482
      %v5547 = vfloor.f32 %v5483
      %v5548 = vfloor.f32 %v5484
      %v5549 = vmul.f32 %v5485, 6.28125
      %v5550 = vmul.f32 %v5486, 6.28125
      %v5551 = vmul.f32 %v5487, 6.28125
      %v5552 = vmul.f32 %v5488, 6.28125
      %v5553 = vmul.f32 %v5489, 6.28125
      %v5554 = vmul.f32 %v5490, 6.28125
      %v5555 = vmul.f32 %v5491, 6.28125
      %v5556 = vmul.f32 %v5492, 6.28125
      %v5557 = vmul.f32 %v5493, 6.28125
      %v5558 = vmul.f32 %v5494, 6.28125
      %v5559 = vmul.f32 %v5495, 6.28125
      %v5560 = vmul.f32 %v5496, 6.28125
      %v5561 = vmul.f32 %v5497, 6.28125
      %v5562 = vmul.f32 %v5498, 6.28125
      %v5563 = vmul.f32 %v5499, 6.28125
      %v5564 = vmul.f32 %v5500, 6.28125
      %v5565 = vmul.f32 %v5501, 6.28125
      %v5566 = vmul.f32 %v5502, 6.28125
      %v5567 = vmul.f32 %v5503, 6.28125
      %v5568 = vmul.f32 %v5504, 6.28125
      %v5569 = vmul.f32 %v5505, 6.28125
      %v5570 = vmul.f32 %v5506, 6.28125
      %v5571 = vmul.f32 %v5507, 6.28125
      %v5572 = vmul.f32 %v5508, 6.28125
      %v5573 = vmul.f32 %v5509, 6.28125
      %v5574 = vmul.f32 %v5510, 6.28125
      %v5575 = vmul.f32 %v5511, 6.28125
      %v5576 = vmul.f32 %v5512, 6.28125
      %v5577 = vmul.f32 %v5513, 6.28125
      %v5578 = vmul.f32 %v5514, 6.28125
      %v5579 = vmul.f32 %v5515, 6.28125
      %v5580 = vmul.f32 %v5516, 6.28125
      %v5581 = vmul.f32 %v5517, 6.28125
      %v5582 = vmul.f32 %v5518, 6.28125
      %v5583 = vmul.f32 %v5519, 6.28125
      %v5584 = vmul.f32 %v5520, 6.28125
      %v5585 = vmul.f32 %v5521, 6.28125
      %v5586 = vmul.f32 %v5522, 6.28125
      %v5587 = vmul.f32 %v5523, 6.28125
      %v5588 = vmul.f32 %v5524, 6.28125
      %v5589 = vmul.f32 %v5525, 6.28125
      %v5590 = vmul.f32 %v5526, 6.28125
      %v5591 = vmul.f32 %v5527, 6.28125
      %v5592 = vmul.f32 %v5528, 6.28125
      %v5593 = vmul.f32 %v5529, 6.28125
      %v5594 = vmul.f32 %v5530, 6.28125
      %v5595 = vmul.f32 %v5531, 6.28125
      %v5596 = vmul.f32 %v5532, 6.28125
      %v5597 = vmul.f32 %v5533, 6.28125
      %v5598 = vmul.f32 %v5534, 6.28125
      %v5599 = vmul.f32 %v5535, 6.28125
      %v5600 = vmul.f32 %v5536, 6.28125
      %v5601 = vmul.f32 %v5537, 6.28125
      %v5602 = vmul.f32 %v5538, 6.28125
      %v5603 = vmul.f32 %v5539, 6.28125
      %v5604 = vmul.f32 %v5540, 6.28125
      %v5605 = vmul.f32 %v5541, 6.28125
      %v5606 = vmul.f32 %v5542, 6.28125
      %v5607 = vmul.f32 %v5543, 6.28125
      %v5608 = vmul.f32 %v5544, 6.28125
      %v5609 = vmul.f32 %v5545, 6.28125
      %v5610 = vmul.f32 %v5546, 6.28125
      %v5611 = vmul.f32 %v5547, 6.28125
      %v5612 = vmul.f32 %v5548, 6.28125
      %v5613 = vsub.f32 %v5199, %v5549
      %v5614 = vsub.f32 %v5201, %v5550
      %v5615 = vsub.f32 %v5203, %v5551
      %v5616 = vsub.f32 %v5205, %v5552
      %v5617 = vsub.f32 %v5209, %v5553
      %v5618 = vsub.f32 %v5211, %v5554
      %v5619 = vsub.f32 %v5213, %v5555
      %v5620 = vsub.f32 %v5215, %v5556
      %v5621 = vsub.f32 %v5219, %v5557
      %v5622 = vsub.f32 %v5221, %v5558
      %v5623 = vsub.f32 %v5223, %v5559
      %v5624 = vsub.f32 %v5225, %v5560
      %v5625 = vsub.f32 %v5229, %v5561
      %v5626 = vsub.f32 %v5231, %v5562
      %v5627 = vsub.f32 %v5233, %v5563
      %v5628 = vsub.f32 %v5235, %v5564
      %v5629 = vsub.f32 %v5239, %v5565
      %v5630 = vsub.f32 %v5241, %v5566
      %v5631 = vsub.f32 %v5243, %v5567
      %v5632 = vsub.f32 %v5245, %v5568
      %v5633 = vsub.f32 %v5249, %v5569
      %v5634 = vsub.f32 %v5251, %v5570
      %v5635 = vsub.f32 %v5253, %v5571
      %v5636 = vsub.f32 %v5255, %v5572
      %v5637 = vsub.f32 %v5259, %v5573
      %v5638 = vsub.f32 %v5261, %v5574
      %v5639 = vsub.f32 %v5263, %v5575
      %v5640 = vsub.f32 %v5265, %v5576
      %v5641 = vsub.f32 %v5269, %v5577
      %v5642 = vsub.f32 %v5271, %v5578
      %v5643 = vsub.f32 %v5273, %v5579
      %v5644 = vsub.f32 %v5275, %v5580
      %v5645 = vsub.f32 %v5279, %v5581
      %v5646 = vsub.f32 %v5281, %v5582
      %v5647 = vsub.f32 %v5283, %v5583
      %v5648 = vsub.f32 %v5285, %v5584
      %v5649 = vsub.f32 %v5289, %v5585
      %v5650 = vsub.f32 %v5291, %v5586
      %v5651 = vsub.f32 %v5293, %v5587
      %v5652 = vsub.f32 %v5295, %v5588
      %v5653 = vsub.f32 %v5299, %v5589
      %v5654 = vsub.f32 %v5301, %v5590
      %v5655 = vsub.f32 %v5303, %v5591
      %v5656 = vsub.f32 %v5305, %v5592
      %v5657 = vsub.f32 %v5309, %v5593
      %v5658 = vsub.f32 %v5311, %v5594
      %v5659 = vsub.f32 %v5313, %v5595
      %v5660 = vsub.f32 %v5315, %v5596
      %v5661 = vsub.f32 %v5319, %v5597
      %v5662 = vsub.f32 %v5321, %v5598
      %v5663 = vsub.f32 %v5323, %v5599
      %v5664 = vsub.f32 %v5325, %v5600
      %v5665 = vsub.f32 %v5329, %v5601
      %v5666 = vsub.f32 %v5331, %v5602
      %v5667 = vsub.f32 %v5333, %v5603
      %v5668 = vsub.f32 %v5335, %v5604
      %v5669 = vsub.f32 %v5339, %v5605
      %v5670 = vsub.f32 %v5341, %v5606
      %v5671 = vsub.f32 %v5343, %v5607
      %v5672 = vsub.f32 %v5345, %v5608
      %v5673 = vsub.f32 %v5349, %v5609
      %v5674 = vsub.f32 %v5351, %v5610
      %v5675 = vsub.f32 %v5353, %v5611
      %v5676 = vsub.f32 %v5355, %v5612
      %v5677 = vmul.f32 %v5485, 0.0019353072
      %v5678 = vmul.f32 %v5486, 0.0019353072
      %v5679 = vmul.f32 %v5487, 0.0019353072
      %v5680 = vmul.f32 %v5488, 0.0019353072
      %v5681 = vmul.f32 %v5489, 0.0019353072
      %v5682 = vmul.f32 %v5490, 0.0019353072
      %v5683 = vmul.f32 %v5491, 0.0019353072
      %v5684 = vmul.f32 %v5492, 0.0019353072
      %v5685 = vmul.f32 %v5493, 0.0019353072
      %v5686 = vmul.f32 %v5494, 0.0019353072
      %v5687 = vmul.f32 %v5495, 0.0019353072
      %v5688 = vmul.f32 %v5496, 0.0019353072
      %v5689 = vmul.f32 %v5497, 0.0019353072
      %v5690 = vmul.f32 %v5498, 0.0019353072
      %v5691 = vmul.f32 %v5499, 0.0019353072
      %v5692 = vmul.f32 %v5500, 0.0019353072
      %v5693 = vmul.f32 %v5501, 0.0019353072
      %v5694 = vmul.f32 %v5502, 0.0019353072
      %v5695 = vmul.f32 %v5503, 0.0019353072
      %v5696 = vmul.f32 %v5504, 0.0019353072
      %v5697 = vmul.f32 %v5505, 0.0019353072
      %v5698 = vmul.f32 %v5506, 0.0019353072
      %v5699 = vmul.f32 %v5507, 0.0019353072
      %v5700 = vmul.f32 %v5508, 0.0019353072
      %v5701 = vmul.f32 %v5509, 0.0019353072
      %v5702 = vmul.f32 %v5510, 0.0019353072
      %v5703 = vmul.f32 %v5511, 0.0019353072
      %v5704 = vmul.f32 %v5512, 0.0019353072
      %v5705 = vmul.f32 %v5513, 0.0019353072
      %v5706 = vmul.f32 %v5514, 0.0019353072
      %v5707 = vmul.f32 %v5515, 0.0019353072
      %v5708 = vmul.f32 %v5516, 0.0019353072
      %v5709 = vmul.f32 %v5517, 0.0019353072
      %v5710 = vmul.f32 %v5518, 0.0019353072
      %v5711 = vmul.f32 %v5519, 0.0019353072
      %v5712 = vmul.f32 %v5520, 0.0019353072
      %v5713 = vmul.f32 %v5521, 0.0019353072
      %v5714 = vmul.f32 %v5522, 0.0019353072
      %v5715 = vmul.f32 %v5523, 0.0019353072
      %v5716 = vmul.f32 %v5524, 0.0019353072
      %v5717 = vmul.f32 %v5525, 0.0019353072
      %v5718 = vmul.f32 %v5526, 0.0019353072
      %v5719 = vmul.f32 %v5527, 0.0019353072
      %v5720 = vmul.f32 %v5528, 0.0019353072
      %v5721 = vmul.f32 %v5529, 0.0019353072
      %v5722 = vmul.f32 %v5530, 0.0019353072
      %v5723 = vmul.f32 %v5531, 0.0019353072
      %v5724 = vmul.f32 %v5532, 0.0019353072
      %v5725 = vmul.f32 %v5533, 0.0019353072
      %v5726 = vmul.f32 %v5534, 0.0019353072
      %v5727 = vmul.f32 %v5535, 0.0019353072
      %v5728 = vmul.f32 %v5536, 0.0019353072
      %v5729 = vmul.f32 %v5537, 0.0019353072
      %v5730 = vmul.f32 %v5538, 0.0019353072
      %v5731 = vmul.f32 %v5539, 0.0019353072
      %v5732 = vmul.f32 %v5540, 0.0019353072
      %v5733 = vmul.f32 %v5541, 0.0019353072
      %v5734 = vmul.f32 %v5542, 0.0019353072
      %v5735 = vmul.f32 %v5543, 0.0019353072
      %v5736 = vmul.f32 %v5544, 0.0019353072
      %v5737 = vmul.f32 %v5545, 0.0019353072
      %v5738 = vmul.f32 %v5546, 0.0019353072
      %v5739 = vmul.f32 %v5547, 0.0019353072
      %v5740 = vmul.f32 %v5548, 0.0019353072
      %v5741 = vsub.f32 %v5613, %v5677
      %v5742 = vsub.f32 %v5614, %v5678
      %v5743 = vsub.f32 %v5615, %v5679
      %v5744 = vsub.f32 %v5616, %v5680
      %v5745 = vsub.f32 %v5617, %v5681
      %v5746 = vsub.f32 %v5618, %v5682
      %v5747 = vsub.f32 %v5619, %v5683
      %v5748 = vsub.f32 %v5620, %v5684
      %v5749 = vsub.f32 %v5621, %v5685
      %v5750 = vsub.f32 %v5622, %v5686
      %v5751 = vsub.f32 %v5623, %v5687
      %v5752 = vsub.f32 %v5624, %v5688
      %v5753 = vsub.f32 %v5625, %v5689
      %v5754 = vsub.f32 %v5626, %v5690
      %v5755 = vsub.f32 %v5627, %v5691
      %v5756 = vsub.f32 %v5628, %v5692
      %v5757 = vsub.f32 %v5629, %v5693
      %v5758 = vsub.f32 %v5630, %v5694
      %v5759 = vsub.f32 %v5631, %v5695
      %v5760 = vsub.f32 %v5632, %v5696
      %v5761 = vsub.f32 %v5633, %v5697
      %v5762 = vsub.f32 %v5634, %v5698
      %v5763 = vsub.f32 %v5635, %v5699
      %v5764 = vsub.f32 %v5636, %v5700
      %v5765 = vsub.f32 %v5637, %v5701
      %v5766 = vsub.f32 %v5638, %v5702
      %v5767 = vsub.f32 %v5639, %v5703
      %v5768 = vsub.f32 %v5640, %v5704
      %v5769 = vsub.f32 %v5641, %v5705
      %v5770 = vsub.f32 %v5642, %v5706
      %v5771 = vsub.f32 %v5643, %v5707
      %v5772 = vsub.f32 %v5644, %v5708
      %v5773 = vsub.f32 %v5645, %v5709
      %v5774 = vsub.f32 %v5646, %v5710
      %v5775 = vsub.f32 %v5647, %v5711
      %v5776 = vsub.f32 %v5648, %v5712
      %v5777 = vsub.f32 %v5649, %v5713
      %v5778 = vsub.f32 %v5650, %v5714
      %v5779 = vsub.f32 %v5651, %v5715
      %v5780 = vsub.f32 %v5652, %v5716
      %v5781 = vsub.f32 %v5653, %v5717
      %v5782 = vsub.f32 %v5654, %v5718
      %v5783 = vsub.f32 %v5655, %v5719
      %v5784 = vsub.f32 %v5656, %v5720
      %v5785 = vsub.f32 %v5657, %v5721
      %v5786 = vsub.f32 %v5658, %v5722
      %v5787 = vsub.f32 %v5659, %v5723
      %v5788 = vsub.f32 %v5660, %v5724
      %v5789 = vsub.f32 %v5661, %v5725
      %v5790 = vsub.f32 %v5662, %v5726
      %v5791 = vsub.f32 %v5663, %v5727
      %v5792 = vsub.f32 %v5664, %v5728
      %v5793 = vsub.f32 %v5665, %v5729
      %v5794 = vsub.f32 %v5666, %v5730
      %v5795 = vsub.f32 %v5667, %v5731
      %v5796 = vsub.f32 %v5668, %v5732
      %v5797 = vsub.f32 %v5669, %v5733
      %v5798 = vsub.f32 %v5670, %v5734
      %v5799 = vsub.f32 %v5671, %v5735
      %v5800 = vsub.f32 %v5672, %v5736
      %v5801 = vsub.f32 %v5673, %v5737
      %v5802 = vsub.f32 %v5674, %v5738
      %v5803 = vsub.f32 %v5675, %v5739
      %v5804 = vsub.f32 %v5676, %v5740
      %v5805 = vmul.f32 %v5741, %v5741
      %v5806 = vmul.f32 %v5742, %v5742
      %v5807 = vmul.f32 %v5743, %v5743
      %v5808 = vmul.f32 %v5744, %v5744
      %v5809 = vmul.f32 %v5745, %v5745
      %v5810 = vmul.f32 %v5746, %v5746
      %v5811 = vmul.f32 %v5747, %v5747
      %v5812 = vmul.f32 %v5748, %v5748
      %v5813 = vmul.f32 %v5749, %v5749
      %v5814 = vmul.f32 %v5750, %v5750
      %v5815 = vmul.f32 %v5751, %v5751
      %v5816 = vmul.f32 %v5752, %v5752
      %v5817 = vmul.f32 %v5753, %v5753
      %v5818 = vmul.f32 %v5754, %v5754
      %v5819 = vmul.f32 %v5755, %v5755
      %v5820 = vmul.f32 %v5756, %v5756
      %v5821 = vmul.f32 %v5757, %v5757
      %v5822 = vmul.f32 %v5758, %v5758
      %v5823 = vmul.f32 %v5759, %v5759
      %v5824 = vmul.f32 %v5760, %v5760
      %v5825 = vmul.f32 %v5761, %v5761
      %v5826 = vmul.f32 %v5762, %v5762
      %v5827 = vmul.f32 %v5763, %v5763
      %v5828 = vmul.f32 %v5764, %v5764
      %v5829 = vmul.f32 %v5765, %v5765
      %v5830 = vmul.f32 %v5766, %v5766
      %v5831 = vmul.f32 %v5767, %v5767
      %v5832 = vmul.f32 %v5768, %v5768
      %v5833 = vmul.f32 %v5769, %v5769
      %v5834 = vmul.f32 %v5770, %v5770
      %v5835 = vmul.f32 %v5771, %v5771
      %v5836 = vmul.f32 %v5772, %v5772
      %v5837 = vmul.f32 %v5773, %v5773
      %v5838 = vmul.f32 %v5774, %v5774
      %v5839 = vmul.f32 %v5775, %v5775
      %v5840 = vmul.f32 %v5776, %v5776
      %v5841 = vmul.f32 %v5777, %v5777
      %v5842 = vmul.f32 %v5778, %v5778
      %v5843 = vmul.f32 %v5779, %v5779
      %v5844 = vmul.f32 %v5780, %v5780
      %v5845 = vmul.f32 %v5781, %v5781
      %v5846 = vmul.f32 %v5782, %v5782
      %v5847 = vmul.f32 %v5783, %v5783
      %v5848 = vmul.f32 %v5784, %v5784
      %v5849 = vmul.f32 %v5785, %v5785
      %v5850 = vmul.f32 %v5786, %v5786
      %v5851 = vmul.f32 %v5787, %v5787
      %v5852 = vmul.f32 %v5788, %v5788
      %v5853 = vmul.f32 %v5789, %v5789
      %v5854 = vmul.f32 %v5790, %v5790
      %v5855 = vmul.f32 %v5791, %v5791
      %v5856 = vmul.f32 %v5792, %v5792
      %v5857 = vmul.f32 %v5793, %v5793
      %v5858 = vmul.f32 %v5794, %v5794
      %v5859 = vmul.f32 %v5795, %v5795
      %v5860 = vmul.f32 %v5796, %v5796
      %v5861 = vmul.f32 %v5797, %v5797
      %v5862 = vmul.f32 %v5798, %v5798
      %v5863 = vmul.f32 %v5799, %v5799
      %v5864 = vmul.f32 %v5800, %v5800
      %v5865 = vmul.f32 %v5801, %v5801
      %v5866 = vmul.f32 %v5802, %v5802
      %v5867 = vmul.f32 %v5803, %v5803
      %v5868 = vmul.f32 %v5804, %v5804
      %v5869 = vmul.f32 %v5805, 2.8656796e-06
      %v5870 = vmul.f32 %v5806, 2.8656796e-06
      %v5871 = vmul.f32 %v5807, 2.8656796e-06
      %v5872 = vmul.f32 %v5808, 2.8656796e-06
      %v5873 = vmul.f32 %v5809, 2.8656796e-06
      %v5874 = vmul.f32 %v5810, 2.8656796e-06
      %v5875 = vmul.f32 %v5811, 2.8656796e-06
      %v5876 = vmul.f32 %v5812, 2.8656796e-06
      %v5877 = vmul.f32 %v5813, 2.8656796e-06
      %v5878 = vmul.f32 %v5814, 2.8656796e-06
      %v5879 = vmul.f32 %v5815, 2.8656796e-06
      %v5880 = vmul.f32 %v5816, 2.8656796e-06
      %v5881 = vmul.f32 %v5817, 2.8656796e-06
      %v5882 = vmul.f32 %v5818, 2.8656796e-06
      %v5883 = vmul.f32 %v5819, 2.8656796e-06
      %v5884 = vmul.f32 %v5820, 2.8656796e-06
      %v5885 = vmul.f32 %v5821, 2.8656796e-06
      %v5886 = vmul.f32 %v5822, 2.8656796e-06
      %v5887 = vmul.f32 %v5823, 2.8656796e-06
      %v5888 = vmul.f32 %v5824, 2.8656796e-06
      %v5889 = vmul.f32 %v5825, 2.8656796e-06
      %v5890 = vmul.f32 %v5826, 2.8656796e-06
      %v5891 = vmul.f32 %v5827, 2.8656796e-06
      %v5892 = vmul.f32 %v5828, 2.8656796e-06
      %v5893 = vmul.f32 %v5829, 2.8656796e-06
      %v5894 = vmul.f32 %v5830, 2.8656796e-06
      %v5895 = vmul.f32 %v5831, 2.8656796e-06
      %v5896 = vmul.f32 %v5832, 2.8656796e-06
      %v5897 = vmul.f32 %v5833, 2.8656796e-06
      %v5898 = vmul.f32 %v5834, 2.8656796e-06
      %v5899 = vmul.f32 %v5835, 2.8656796e-06
      %v5900 = vmul.f32 %v5836, 2.8656796e-06
      %v5901 = vmul.f32 %v5837, 2.8656796e-06
      %v5902 = vmul.f32 %v5838, 2.8656796e-06
      %v5903 = vmul.f32 %v5839, 2.8656796e-06
      %v5904 = vmul.f32 %v5840, 2.8656796e-06
      %v5905 = vmul.f32 %v5841, 2.8656796e-06
      %v5906 = vmul.f32 %v5842, 2.8656796e-06
      %v5907 = vmul.f32 %v5843, 2.8656796e-06
      %v5908 = vmul.f32 %v5844, 2.8656796e-06
      %v5909 = vmul.f32 %v5845, 2.8656796e-06
      %v5910 = vmul.f32 %v5846, 2.8656796e-06
      %v5911 = vmul.f32 %v5847, 2.8656796e-06
      %v5912 = vmul.f32 %v5848, 2.8656796e-06
      %v5913 = vmul.f32 %v5849, 2.8656796e-06
      %v5914 = vmul.f32 %v5850, 2.8656796e-06
      %v5915 = vmul.f32 %v5851, 2.8656796e-06
      %v5916 = vmul.f32 %v5852, 2.8656796e-06
      %v5917 = vmul.f32 %v5853, 2.8656796e-06
      %v5918 = vmul.f32 %v5854, 2.8656796e-06
      %v5919 = vmul.f32 %v5855, 2.8656796e-06
      %v5920 = vmul.f32 %v5856, 2.8656796e-06
      %v5921 = vmul.f32 %v5857, 2.8656796e-06
      %v5922 = vmul.f32 %v5858, 2.8656796e-06
      %v5923 = vmul.f32 %v5859, 2.8656796e-06
      %v5924 = vmul.f32 %v5860, 2.8656796e-06
      %v5925 = vmul.f32 %v5861, 2.8656796e-06
      %v5926 = vmul.f32 %v5862, 2.8656796e-06
      %v5927 = vmul.f32 %v5863, 2.8656796e-06
      %v5928 = vmul.f32 %v5864, 2.8656796e-06
      %v5929 = vmul.f32 %v5865, 2.8656796e-06
      %v5930 = vmul.f32 %v5866, 2.8656796e-06
      %v5931 = vmul.f32 %v5867, 2.8656796e-06
      %v5932 = vmul.f32 %v5868, 2.8656796e-06
      %v5933 = vadd.f32 %v5869, -0.00019855992
      %v5934 = vadd.f32 %v5870, -0.00019855992
      %v5935 = vadd.f32 %v5871, -0.00019855992
      %v5936 = vadd.f32 %v5872, -0.00019855992
      %v5937 = vadd.f32 %v5873, -0.00019855992
      %v5938 = vadd.f32 %v5874, -0.00019855992
      %v5939 = vadd.f32 %v5875, -0.00019855992
      %v5940 = vadd.f32 %v5876, -0.00019855992
      %v5941 = vadd.f32 %v5877, -0.00019855992
      %v5942 = vadd.f32 %v5878, -0.00019855992
      %v5943 = vadd.f32 %v5879, -0.00019855992
      %v5944 = vadd.f32 %v5880, -0.00019855992
      %v5945 = vadd.f32 %v5881, -0.00019855992
      %v5946 = vadd.f32 %v5882, -0.00019855992
      %v5947 = vadd.f32 %v5883, -0.00019855992
      %v5948 = vadd.f32 %v5884, -0.00019855992
      %v5949 = vadd.f32 %v5885, -0.00019855992
      %v5950 = vadd.f32 %v5886, -0.00019855992
      %v5951 = vadd.f32 %v5887, -0.00019855992
      %v5952 = vadd.f32 %v5888, -0.00019855992
      %v5953 = vadd.f32 %v5889, -0.00019855992
      %v5954 = vadd.f32 %v5890, -0.00019855992
      %v5955 = vadd.f32 %v5891, -0.00019855992
      %v5956 = vadd.f32 %v5892, -0.00019855992
      %v5957 = vadd.f32 %v5893, -0.00019855992
      %v5958 = vadd.f32 %v5894, -0.00019855992
      %v5959 = vadd.f32 %v5895, -0.00019855992
      %v5960 = vadd.f32 %v5896, -0.00019855992
      %v5961 = vadd.f32 %v5897, -0.00019855992
      %v5962 = vadd.f32 %v5898, -0.00019855992
      %v5963 = vadd.f32 %v5899, -0.00019855992
      %v5964 = vadd.f32 %v5900, -0.00019855992
      %v5965 = vadd.f32 %v5901, -0.00019855992
      %v5966 = vadd.f32 %v5902, -0.00019855992
      %v5967 = vadd.f32 %v5903, -0.00019855992
      %v5968 = vadd.f32 %v5904, -0.00019855992
      %v5969 = vadd.f32 %v5905, -0.00019855992
      %v5970 = vadd.f32 %v5906, -0.00019855992
      %v5971 = vadd.f32 %v5907, -0.00019855992
      %v5972 = vadd.f32 %v5908, -0.00019855992
      %v5973 = vadd.f32 %v5909, -0.00019855992
      %v5974 = vadd.f32 %v5910, -0.00019855992
      %v5975 = vadd.f32 %v5911, -0.00019855992
      %v5976 = vadd.f32 %v5912, -0.00019855992
      %v5977 = vadd.f32 %v5913, -0.00019855992
      %v5978 = vadd.f32 %v5914, -0.00019855992
      %v5979 = vadd.f32 %v5915, -0.00019855992
      %v5980 = vadd.f32 %v5916, -0.00019855992
      %v5981 = vadd.f32 %v5917, -0.00019855992
      %v5982 = vadd.f32 %v5918, -0.00019855992
      %v5983 = vadd.f32 %v5919, -0.00019855992
      %v5984 = vadd.f32 %v5920, -0.00019855992
      %v5985 = vadd.f32 %v5921, -0.00019855992
      %v5986 = vadd.f32 %v5922, -0.00019855992
      %v5987 = vadd.f32 %v5923, -0.00019855992
      %v5988 = vadd.f32 %v5924, -0.00019855992
      %v5989 = vadd.f32 %v5925, -0.00019855992
      %v5990 = vadd.f32 %v5926, -0.00019855992
      %v5991 = vadd.f32 %v5927, -0.00019855992
      %v5992 = vadd.f32 %v5928, -0.00019855992
      %v5993 = vadd.f32 %v5929, -0.00019855992
      %v5994 = vadd.f32 %v5930, -0.00019855992
      %v5995 = vadd.f32 %v5931, -0.00019855992
      %v5996 = vadd.f32 %v5932, -0.00019855992
      %v5997 = vmul.f32 %v5933, %v5805
      %v5998 = vmul.f32 %v5934, %v5806
      %v5999 = vmul.f32 %v5935, %v5807
      %v6000 = vmul.f32 %v5936, %v5808
      %v6001 = vmul.f32 %v5937, %v5809
      %v6002 = vmul.f32 %v5938, %v5810
      %v6003 = vmul.f32 %v5939, %v5811
      %v6004 = vmul.f32 %v5940, %v5812
      %v6005 = vmul.f32 %v5941, %v5813
      %v6006 = vmul.f32 %v5942, %v5814
      %v6007 = vmul.f32 %v5943, %v5815
      %v6008 = vmul.f32 %v5944, %v5816
      %v6009 = vmul.f32 %v5945, %v5817
      %v6010 = vmul.f32 %v5946, %v5818
      %v6011 = vmul.f32 %v5947, %v5819
      %v6012 = vmul.f32 %v5948, %v5820
      %v6013 = vmul.f32 %v5949, %v5821
      %v6014 = vmul.f32 %v5950, %v5822
      %v6015 = vmul.f32 %v5951, %v5823
      %v6016 = vmul.f32 %v5952, %v5824
      %v6017 = vmul.f32 %v5953, %v5825
      %v6018 = vmul.f32 %v5954, %v5826
      %v6019 = vmul.f32 %v5955, %v5827
      %v6020 = vmul.f32 %v5956, %v5828
      %v6021 = vmul.f32 %v5957, %v5829
      %v6022 = vmul.f32 %v5958, %v5830
      %v6023 = vmul.f32 %v5959, %v5831
      %v6024 = vmul.f32 %v5960, %v5832
      %v6025 = vmul.f32 %v5961, %v5833
      %v6026 = vmul.f32 %v5962, %v5834
      %v6027 = vmul.f32 %v5963, %v5835
      %v6028 = vmul.f32 %v5964, %v5836
      %v6029 = vmul.f32 %v5965, %v5837
      %v6030 = vmul.f32 %v5966, %v5838
      %v6031 = vmul.f32 %v5967, %v5839
      %v6032 = vmul.f32 %v5968, %v5840
      %v6033 = vmul.f32 %v5969, %v5841
      %v6034 = vmul.f32 %v5970, %v5842
      %v6035 = vmul.f32 %v5971, %v5843
      %v6036 = vmul.f32 %v5972, %v5844
      %v6037 = vmul.f32 %v5973, %v5845
      %v6038 = vmul.f32 %v5974, %v5846
      %v6039 = vmul.f32 %v5975, %v5847
      %v6040 = vmul.f32 %v5976, %v5848
      %v6041 = vmul.f32 %v5977, %v5849
      %v6042 = vmul.f32 %v5978, %v5850
      %v6043 = vmul.f32 %v5979, %v5851
      %v6044 = vmul.f32 %v5980, %v5852
      %v6045 = vmul.f32 %v5981, %v5853
      %v6046 = vmul.f32 %v5982, %v5854
      %v6047 = vmul.f32 %v5983, %v5855
      %v6048 = vmul.f32 %v5984, %v5856
      %v6049 = vmul.f32 %v5985, %v5857
      %v6050 = vmul.f32 %v5986, %v5858
      %v6051 = vmul.f32 %v5987, %v5859
      %v6052 = vmul.f32 %v5988, %v5860
      %v6053 = vmul.f32 %v5989, %v5861
      %v6054 = vmul.f32 %v5990, %v5862
      %v6055 = vmul.f32 %v5991, %v5863
      %v6056 = vmul.f32 %v5992, %v5864
      %v6057 = vmul.f32 %v5993, %v5865
      %v6058 = vmul.f32 %v5994, %v5866
      %v6059 = vmul.f32 %v5995, %v5867
      %v6060 = vmul.f32 %v5996, %v5868
      %v6061 = vadd.f32 %v5997, 0.008333386
      %v6062 = vadd.f32 %v5998, 0.008333386
      %v6063 = vadd.f32 %v5999, 0.008333386
      %v6064 = vadd.f32 %v6000, 0.008333386
      %v6065 = vadd.f32 %v6001, 0.008333386
      %v6066 = vadd.f32 %v6002, 0.008333386
      %v6067 = vadd.f32 %v6003, 0.008333386
      %v6068 = vadd.f32 %v6004, 0.008333386
      %v6069 = vadd.f32 %v6005, 0.008333386
      %v6070 = vadd.f32 %v6006, 0.008333386
      %v6071 = vadd.f32 %v6007, 0.008333386
      %v6072 = vadd.f32 %v6008, 0.008333386
      %v6073 = vadd.f32 %v6009, 0.008333386
      %v6074 = vadd.f32 %v6010, 0.008333386
      %v6075 = vadd.f32 %v6011, 0.008333386
      %v6076 = vadd.f32 %v6012, 0.008333386
      %v6077 = vadd.f32 %v6013, 0.008333386
      %v6078 = vadd.f32 %v6014, 0.008333386
      %v6079 = vadd.f32 %v6015, 0.008333386
      %v6080 = vadd.f32 %v6016, 0.008333386
      %v6081 = vadd.f32 %v6017, 0.008333386
      %v6082 = vadd.f32 %v6018, 0.008333386
      %v6083 = vadd.f32 %v6019, 0.008333386
      %v6084 = vadd.f32 %v6020, 0.008333386
      %v6085 = vadd.f32 %v6021, 0.008333386
      %v6086 = vadd.f32 %v6022, 0.008333386
      %v6087 = vadd.f32 %v6023, 0.008333386
      %v6088 = vadd.f32 %v6024, 0.008333386
      %v6089 = vadd.f32 %v6025, 0.008333386
      %v6090 = vadd.f32 %v6026, 0.008333386
      %v6091 = vadd.f32 %v6027, 0.008333386
      %v6092 = vadd.f32 %v6028, 0.008333386
      %v6093 = vadd.f32 %v6029, 0.008333386
      %v6094 = vadd.f32 %v6030, 0.008333386
      %v6095 = vadd.f32 %v6031, 0.008333386
      %v6096 = vadd.f32 %v6032, 0.008333386
      %v6097 = vadd.f32 %v6033, 0.008333386
      %v6098 = vadd.f32 %v6034, 0.008333386
      %v6099 = vadd.f32 %v6035, 0.008333386
      %v6100 = vadd.f32 %v6036, 0.008333386
      %v6101 = vadd.f32 %v6037, 0.008333386
      %v6102 = vadd.f32 %v6038, 0.008333386
      %v6103 = vadd.f32 %v6039, 0.008333386
      %v6104 = vadd.f32 %v6040, 0.008333386
      %v6105 = vadd.f32 %v6041, 0.008333386
      %v6106 = vadd.f32 %v6042, 0.008333386
      %v6107 = vadd.f32 %v6043, 0.008333386
      %v6108 = vadd.f32 %v6044, 0.008333386
      %v6109 = vadd.f32 %v6045, 0.008333386
      %v6110 = vadd.f32 %v6046, 0.008333386
      %v6111 = vadd.f32 %v6047, 0.008333386
      %v6112 = vadd.f32 %v6048, 0.008333386
      %v6113 = vadd.f32 %v6049, 0.008333386
      %v6114 = vadd.f32 %v6050, 0.008333386
      %v6115 = vadd.f32 %v6051, 0.008333386
      %v6116 = vadd.f32 %v6052, 0.008333386
      %v6117 = vadd.f32 %v6053, 0.008333386
      %v6118 = vadd.f32 %v6054, 0.008333386
      %v6119 = vadd.f32 %v6055, 0.008333386
      %v6120 = vadd.f32 %v6056, 0.008333386
      %v6121 = vadd.f32 %v6057, 0.008333386
      %v6122 = vadd.f32 %v6058, 0.008333386
      %v6123 = vadd.f32 %v6059, 0.008333386
      %v6124 = vadd.f32 %v6060, 0.008333386
      %v6125 = vmul.f32 %v6061, %v5805
      %v6126 = vmul.f32 %v6062, %v5806
      %v6127 = vmul.f32 %v6063, %v5807
      %v6128 = vmul.f32 %v6064, %v5808
      %v6129 = vmul.f32 %v6065, %v5809
      %v6130 = vmul.f32 %v6066, %v5810
      %v6131 = vmul.f32 %v6067, %v5811
      %v6132 = vmul.f32 %v6068, %v5812
      %v6133 = vmul.f32 %v6069, %v5813
      %v6134 = vmul.f32 %v6070, %v5814
      %v6135 = vmul.f32 %v6071, %v5815
      %v6136 = vmul.f32 %v6072, %v5816
      %v6137 = vmul.f32 %v6073, %v5817
      %v6138 = vmul.f32 %v6074, %v5818
      %v6139 = vmul.f32 %v6075, %v5819
      %v6140 = vmul.f32 %v6076, %v5820
      %v6141 = vmul.f32 %v6077, %v5821
      %v6142 = vmul.f32 %v6078, %v5822
      %v6143 = vmul.f32 %v6079, %v5823
      %v6144 = vmul.f32 %v6080, %v5824
      %v6145 = vmul.f32 %v6081, %v5825
      %v6146 = vmul.f32 %v6082, %v5826
      %v6147 = vmul.f32 %v6083, %v5827
      %v6148 = vmul.f32 %v6084, %v5828
      %v6149 = vmul.f32 %v6085, %v5829
      %v6150 = vmul.f32 %v6086, %v5830
      %v6151 = vmul.f32 %v6087, %v5831
      %v6152 = vmul.f32 %v6088, %v5832
      %v6153 = vmul.f32 %v6089, %v5833
      %v6154 = vmul.f32 %v6090, %v5834
      %v6155 = vmul.f32 %v6091, %v5835
      %v6156 = vmul.f32 %v6092, %v5836
      %v6157 = vmul.f32 %v6093, %v5837
      %v6158 = vmul.f32 %v6094, %v5838
      %v6159 = vmul.f32 %v6095, %v5839
      %v6160 = vmul.f32 %v6096, %v5840
      %v6161 = vmul.f32 %v6097, %v5841
      %v6162 = vmul.f32 %v6098, %v5842
      %v6163 = vmul.f32 %v6099, %v5843
      %v6164 = vmul.f32 %v6100, %v5844
      %v6165 = vmul.f32 %v6101, %v5845
      %v6166 = vmul.f32 %v6102, %v5846
      %v6167 = vmul.f32 %v6103, %v5847
      %v6168 = vmul.f32 %v6104, %v5848
      %v6169 = vmul.f32 %v6105, %v5849
      %v6170 = vmul.f32 %v6106, %v5850
      %v6171 = vmul.f32 %v6107, %v5851
      %v6172 = vmul.f32 %v6108, %v5852
      %v6173 = vmul.f32 %v6109, %v5853
      %v6174 = vmul.f32 %v6110, %v5854
      %v6175 = vmul.f32 %v6111, %v5855
      %v6176 = vmul.f32 %v6112, %v5856
      %v6177 = vmul.f32 %v6113, %v5857
      %v6178 = vmul.f32 %v6114, %v5858
      %v6179 = vmul.f32 %v6115, %v5859
      %v6180 = vmul.f32 %v6116, %v5860
      %v6181 = vmul.f32 %v6117, %v5861
      %v6182 = vmul.f32 %v6118, %v5862
      %v6183 = vmul.f32 %v6119, %v5863
      %v6184 = vmul.f32 %v6120, %v5864
      %v6185 = vmul.f32 %v6121, %v5865
      %v6186 = vmul.f32 %v6122, %v5866
      %v6187 = vmul.f32 %v6123, %v5867
      %v6188 = vmul.f32 %v6124, %v5868
      %v6189 = vadd.f32 %v6125, -0.16666667
      %v6190 = vadd.f32 %v6126, -0.16666667
      %v6191 = vadd.f32 %v6127, -0.16666667
      %v6192 = vadd.f32 %v6128, -0.16666667
      %v6193 = vadd.f32 %v6129, -0.16666667
      %v6194 = vadd.f32 %v6130, -0.16666667
      %v6195 = vadd.f32 %v6131, -0.16666667
      %v6196 = vadd.f32 %v6132, -0.16666667
      %v6197 = vadd.f32 %v6133, -0.16666667
      %v6198 = vadd.f32 %v6134, -0.16666667
      %v6199 = vadd.f32 %v6135, -0.16666667
      %v6200 = vadd.f32 %v6136, -0.16666667
      %v6201 = vadd.f32 %v6137, -0.16666667
      %v6202 = vadd.f32 %v6138, -0.16666667
      %v6203 = vadd.f32 %v6139, -0.16666667
      %v6204 = vadd.f32 %v6140, -0.16666667
      %v6205 = vadd.f32 %v6141, -0.16666667
      %v6206 = vadd.f32 %v6142, -0.16666667
      %v6207 = vadd.f32 %v6143, -0.16666667
      %v6208 = vadd.f32 %v6144, -0.16666667
      %v6209 = vadd.f32 %v6145, -0.16666667
      %v6210 = vadd.f32 %v6146, -0.16666667
      %v6211 = vadd.f32 %v6147, -0.16666667
      %v6212 = vadd.f32 %v6148, -0.16666667
      %v6213 = vadd.f32 %v6149, -0.16666667
      %v6214 = vadd.f32 %v6150, -0.16666667
      %v6215 = vadd.f32 %v6151, -0.16666667
      %v6216 = vadd.f32 %v6152, -0.16666667
      %v6217 = vadd.f32 %v6153, -0.16666667
      %v6218 = vadd.f32 %v6154, -0.16666667
      %v6219 = vadd.f32 %v6155, -0.16666667
      %v6220 = vadd.f32 %v6156, -0.16666667
      %v6221 = vadd.f32 %v6157, -0.16666667
      %v6222 = vadd.f32 %v6158, -0.16666667
      %v6223 = vadd.f32 %v6159, -0.16666667
      %v6224 = vadd.f32 %v6160, -0.16666667
      %v6225 = vadd.f32 %v6161, -0.16666667
      %v6226 = vadd.f32 %v6162, -0.16666667
      %v6227 = vadd.f32 %v6163, -0.16666667
      %v6228 = vadd.f32 %v6164, -0.16666667
      %v6229 = vadd.f32 %v6165, -0.16666667
      %v6230 = vadd.f32 %v6166, -0.16666667
      %v6231 = vadd.f32 %v6167, -0.16666667
      %v6232 = vadd.f32 %v6168, -0.16666667
      %v6233 = vadd.f32 %v6169, -0.16666667
      %v6234 = vadd.f32 %v6170, -0.16666667
      %v6235 = vadd.f32 %v6171, -0.16666667
      %v6236 = vadd.f32 %v6172, -0.16666667
      %v6237 = vadd.f32 %v6173, -0.16666667
      %v6238 = vadd.f32 %v6174, -0.16666667
      %v6239 = vadd.f32 %v6175, -0.16666667
      %v6240 = vadd.f32 %v6176, -0.16666667
      %v6241 = vadd.f32 %v6177, -0.16666667
      %v6242 = vadd.f32 %v6178, -0.16666667
      %v6243 = vadd.f32 %v6179, -0.16666667
      %v6244 = vadd.f32 %v6180, -0.16666667
      %v6245 = vadd.f32 %v6181, -0.16666667
      %v6246 = vadd.f32 %v6182, -0.16666667
      %v6247 = vadd.f32 %v6183, -0.16666667
      %v6248 = vadd.f32 %v6184, -0.16666667
      %v6249 = vadd.f32 %v6185, -0.16666667
      %v6250 = vadd.f32 %v6186, -0.16666667
      %v6251 = vadd.f32 %v6187, -0.16666667
      %v6252 = vadd.f32 %v6188, -0.16666667
      %v6253 = vmul.f32 %v5741, %v5805
      %v6254 = vmul.f32 %v5742, %v5806
      %v6255 = vmul.f32 %v5743, %v5807
      %v6256 = vmul.f32 %v5744, %v5808
      %v6257 = vmul.f32 %v5745, %v5809
      %v6258 = vmul.f32 %v5746, %v5810
      %v6259 = vmul.f32 %v5747, %v5811
      %v6260 = vmul.f32 %v5748, %v5812
      %v6261 = vmul.f32 %v5749, %v5813
      %v6262 = vmul.f32 %v5750, %v5814
      %v6263 = vmul.f32 %v5751, %v5815
      %v6264 = vmul.f32 %v5752, %v5816
      %v6265 = vmul.f32 %v5753, %v5817
      %v6266 = vmul.f32 %v5754, %v5818
      %v6267 = vmul.f32 %v5755, %v5819
      %v6268 = vmul.f32 %v5756, %v5820
      %v6269 = vmul.f32 %v5757, %v5821
      %v6270 = vmul.f32 %v5758, %v5822
      %v6271 = vmul.f32 %v5759, %v5823
      %v6272 = vmul.f32 %v5760, %v5824
      %v6273 = vmul.f32 %v5761, %v5825
      %v6274 = vmul.f32 %v5762, %v5826
      %v6275 = vmul.f32 %v5763, %v5827
      %v6276 = vmul.f32 %v5764, %v5828
      %v6277 = vmul.f32 %v5765, %v5829
      %v6278 = vmul.f32 %v5766, %v5830
      %v6279 = vmul.f32 %v5767, %v5831
      %v6280 = vmul.f32 %v5768, %v5832
      %v6281 = vmul.f32 %v5769, %v5833
      %v6282 = vmul.f32 %v5770, %v5834
      %v6283 = vmul.f32 %v5771, %v5835
      %v6284 = vmul.f32 %v5772, %v5836
      %v6285 = vmul.f32 %v5773, %v5837
      %v6286 = vmul.f32 %v5774, %v5838
      %v6287 = vmul.f32 %v5775, %v5839
      %v6288 = vmul.f32 %v5776, %v5840
      %v6289 = vmul.f32 %v5777, %v5841
      %v6290 = vmul.f32 %v5778, %v5842
      %v6291 = vmul.f32 %v5779, %v5843
      %v6292 = vmul.f32 %v5780, %v5844
      %v6293 = vmul.f32 %v5781, %v5845
      %v6294 = vmul.f32 %v5782, %v5846
      %v6295 = vmul.f32 %v5783, %v5847
      %v6296 = vmul.f32 %v5784, %v5848
      %v6297 = vmul.f32 %v5785, %v5849
      %v6298 = vmul.f32 %v5786, %v5850
      %v6299 = vmul.f32 %v5787, %v5851
      %v6300 = vmul.f32 %v5788, %v5852
      %v6301 = vmul.f32 %v5789, %v5853
      %v6302 = vmul.f32 %v5790, %v5854
      %v6303 = vmul.f32 %v5791, %v5855
      %v6304 = vmul.f32 %v5792, %v5856
      %v6305 = vmul.f32 %v5793, %v5857
      %v6306 = vmul.f32 %v5794, %v5858
      %v6307 = vmul.f32 %v5795, %v5859
      %v6308 = vmul.f32 %v5796, %v5860
      %v6309 = vmul.f32 %v5797, %v5861
      %v6310 = vmul.f32 %v5798, %v5862
      %v6311 = vmul.f32 %v5799, %v5863
      %v6312 = vmul.f32 %v5800, %v5864
      %v6313 = vmul.f32 %v5801, %v5865
      %v6314 = vmul.f32 %v5802, %v5866
      %v6315 = vmul.f32 %v5803, %v5867
      %v6316 = vmul.f32 %v5804, %v5868
      %v6317 = vmul.f32 %v6253, %v6189
      %v6318 = vmul.f32 %v6254, %v6190
      %v6319 = vmul.f32 %v6255, %v6191
      %v6320 = vmul.f32 %v6256, %v6192
      %v6321 = vmul.f32 %v6257, %v6193
      %v6322 = vmul.f32 %v6258, %v6194
      %v6323 = vmul.f32 %v6259, %v6195
      %v6324 = vmul.f32 %v6260, %v6196
      %v6325 = vmul.f32 %v6261, %v6197
      %v6326 = vmul.f32 %v6262, %v6198
      %v6327 = vmul.f32 %v6263, %v6199
      %v6328 = vmul.f32 %v6264, %v6200
      %v6329 = vmul.f32 %v6265, %v6201
      %v6330 = vmul.f32 %v6266, %v6202
      %v6331 = vmul.f32 %v6267, %v6203
      %v6332 = vmul.f32 %v6268, %v6204
      %v6333 = vmul.f32 %v6269, %v6205
      %v6334 = vmul.f32 %v6270, %v6206
      %v6335 = vmul.f32 %v6271, %v6207
      %v6336 = vmul.f32 %v6272, %v6208
      %v6337 = vmul.f32 %v6273, %v6209
      %v6338 = vmul.f32 %v6274, %v6210
      %v6339 = vmul.f32 %v6275, %v6211
      %v6340 = vmul.f32 %v6276, %v6212
      %v6341 = vmul.f32 %v6277, %v6213
      %v6342 = vmul.f32 %v6278, %v6214
      %v6343 = vmul.f32 %v6279, %v6215
      %v6344 = vmul.f32 %v6280, %v6216
      %v6345 = vmul.f32 %v6281, %v6217
      %v6346 = vmul.f32 %v6282, %v6218
      %v6347 = vmul.f32 %v6283, %v6219
      %v6348 = vmul.f32 %v6284, %v6220
      %v6349 = vmul.f32 %v6285, %v6221
      %v6350 = vmul.f32 %v6286, %v6222
      %v6351 = vmul.f32 %v6287, %v6223
      %v6352 = vmul.f32 %v6288, %v6224
      %v6353 = vmul.f32 %v6289, %v6225
      %v6354 = vmul.f32 %v6290, %v6226
      %v6355 = vmul.f32 %v6291, %v6227
      %v6356 = vmul.f32 %v6292, %v6228
      %v6357 = vmul.f32 %v6293, %v6229
      %v6358 = vmul.f32 %v6294, %v6230
      %v6359 = vmul.f32 %v6295, %v6231
      %v6360 = vmul.f32 %v6296, %v6232
      %v6361 = vmul.f32 %v6297, %v6233
      %v6362 = vmul.f32 %v6298, %v6234
      %v6363 = vmul.f32 %v6299, %v6235
      %v6364 = vmul.f32 %v6300, %v6236
      %v6365 = vmul.f32 %v6301, %v6237
      %v6366 = vmul.f32 %v6302, %v6238
      %v6367 = vmul.f32 %v6303, %v6239
      %v6368 = vmul.f32 %v6304, %v6240
      %v6369 = vmul.f32 %v6305, %v6241
      %v6370 = vmul.f32 %v6306, %v6242
      %v6371 = vmul.f32 %v6307, %v6243
      %v6372 = vmul.f32 %v6308, %v6244
      %v6373 = vmul.f32 %v6309, %v6245
      %v6374 = vmul.f32 %v6310, %v6246
      %v6375 = vmul.f32 %v6311, %v6247
      %v6376 = vmul.f32 %v6312, %v6248
      %v6377 = vmul.f32 %v6313, %v6249
      %v6378 = vmul.f32 %v6314, %v6250
      %v6379 = vmul.f32 %v6315, %v6251
      %v6380 = vmul.f32 %v6316, %v6252
      %v6381 = vadd.f32 %v5741, %v6317
      %v6382 = vadd.f32 %v5742, %v6318
      %v6383 = vadd.f32 %v5743, %v6319
      %v6384 = vadd.f32 %v5744, %v6320
      %v6385 = vadd.f32 %v5745, %v6321
      %v6386 = vadd.f32 %v5746, %v6322
      %v6387 = vadd.f32 %v5747, %v6323
      %v6388 = vadd.f32 %v5748, %v6324
      %v6389 = vadd.f32 %v5749, %v6325
      %v6390 = vadd.f32 %v5750, %v6326
      %v6391 = vadd.f32 %v5751, %v6327
      %v6392 = vadd.f32 %v5752, %v6328
      %v6393 = vadd.f32 %v5753, %v6329
      %v6394 = vadd.f32 %v5754, %v6330
      %v6395 = vadd.f32 %v5755, %v6331
      %v6396 = vadd.f32 %v5756, %v6332
      %v6397 = vadd.f32 %v5757, %v6333
      %v6398 = vadd.f32 %v5758, %v6334
      %v6399 = vadd.f32 %v5759, %v6335
      %v6400 = vadd.f32 %v5760, %v6336
      %v6401 = vadd.f32 %v5761, %v6337
      %v6402 = vadd.f32 %v5762, %v6338
      %v6403 = vadd.f32 %v5763, %v6339
      %v6404 = vadd.f32 %v5764, %v6340
      %v6405 = vadd.f32 %v5765, %v6341
      %v6406 = vadd.f32 %v5766, %v6342
      %v6407 = vadd.f32 %v5767, %v6343
      %v6408 = vadd.f32 %v5768, %v6344
      %v6409 = vadd.f32 %v5769, %v6345
      %v6410 = vadd.f32 %v5770, %v6346
      %v6411 = vadd.f32 %v5771, %v6347
      %v6412 = vadd.f32 %v5772, %v6348
      %v6413 = vadd.f32 %v5773, %v6349
      %v6414 = vadd.f32 %v5774, %v6350
      %v6415 = vadd.f32 %v5775, %v6351
      %v6416 = vadd.f32 %v5776, %v6352
      %v6417 = vadd.f32 %v5777, %v6353
      %v6418 = vadd.f32 %v5778, %v6354
      %v6419 = vadd.f32 %v5779, %v6355
      %v6420 = vadd.f32 %v5780, %v6356
      %v6421 = vadd.f32 %v5781, %v6357
      %v6422 = vadd.f32 %v5782, %v6358
      %v6423 = vadd.f32 %v5783, %v6359
      %v6424 = vadd.f32 %v5784, %v6360
      %v6425 = vadd.f32 %v5785, %v6361
      %v6426 = vadd.f32 %v5786, %v6362
      %v6427 = vadd.f32 %v5787, %v6363
      %v6428 = vadd.f32 %v5788, %v6364
      %v6429 = vadd.f32 %v5789, %v6365
      %v6430 = vadd.f32 %v5790, %v6366
      %v6431 = vadd.f32 %v5791, %v6367
      %v6432 = vadd.f32 %v5792, %v6368
      %v6433 = vadd.f32 %v5793, %v6369
      %v6434 = vadd.f32 %v5794, %v6370
      %v6435 = vadd.f32 %v5795, %v6371
      %v6436 = vadd.f32 %v5796, %v6372
      %v6437 = vadd.f32 %v5797, %v6373
      %v6438 = vadd.f32 %v5798, %v6374
      %v6439 = vadd.f32 %v5799, %v6375
      %v6440 = vadd.f32 %v5800, %v6376
      %v6441 = vadd.f32 %v5801, %v6377
      %v6442 = vadd.f32 %v5802, %v6378
      %v6443 = vadd.f32 %v5803, %v6379
      %v6444 = vadd.f32 %v5804, %v6380
      %v6445 = vpack.c.bf16 %v6383, %v6381
      %v6446 = vpack.c.bf16 %v6384, %v6382
      %v6447 = vpack.c.bf16 %v6387, %v6385
      %v6448 = vpack.c.bf16 %v6388, %v6386
      %v6449 = vpack.c.bf16 %v6391, %v6389
      %v6450 = vpack.c.bf16 %v6392, %v6390
      %v6451 = vpack.c.bf16 %v6395, %v6393
      %v6452 = vpack.c.bf16 %v6396, %v6394
      %v6453 = vpack.c.bf16 %v6399, %v6397
      %v6454 = vpack.c.bf16 %v6400, %v6398
      %v6455 = vpack.c.bf16 %v6403, %v6401
      %v6456 = vpack.c.bf16 %v6404, %v6402
      %v6457 = vpack.c.bf16 %v6407, %v6405
      %v6458 = vpack.c.bf16 %v6408, %v6406
      %v6459 = vpack.c.bf16 %v6411, %v6409
      %v6460 = vpack.c.bf16 %v6412, %v6410
      %v6461 = vpack.c.bf16 %v6415, %v6413
      %v6462 = vpack.c.bf16 %v6416, %v6414
      %v6463 = vpack.c.bf16 %v6419, %v6417
      %v6464 = vpack.c.bf16 %v6420, %v6418
      %v6465 = vpack.c.bf16 %v6423, %v6421
      %v6466 = vpack.c.bf16 %v6424, %v6422
      %v6467 = vpack.c.bf16 %v6427, %v6425
      %v6468 = vpack.c.bf16 %v6428, %v6426
      %v6469 = vpack.c.bf16 %v6431, %v6429
      %v6470 = vpack.c.bf16 %v6432, %v6430
      %v6471 = vpack.c.bf16 %v6435, %v6433
      %v6472 = vpack.c.bf16 %v6436, %v6434
      %v6473 = vpack.c.bf16 %v6439, %v6437
      %v6474 = vpack.c.bf16 %v6440, %v6438
      %v6475 = vpack.c.bf16 %v6443, %v6441
      %v6476 = vpack.c.bf16 %v6444, %v6442
      %v6477 = vld [vmem:[%s9] sm:$0xf]
      %v6478 = vld [vmem:[%s9 + $0x4] sm:$0xf]
      %v6479 = vld [vmem:[%s9 + $0x8] sm:$0xf]
      %v6480 = vld [vmem:[%s9 + $0xc] sm:$0xf]
      %v6481 = vld [vmem:[%s9 + $0x10] sm:$0xf]
      %v6482 = vld [vmem:[%s9 + $0x14] sm:$0xf]
      %v6483 = vld [vmem:[%s9 + $0x18] sm:$0xf]
      %v6484 = vld [vmem:[%s9 + $0x1c] sm:$0xf]
      %v6485 = vld [vmem:[%s9 + $0x20] sm:$0xf]
      %v6486 = vld [vmem:[%s9 + $0x24] sm:$0xf]
      %v6487 = vld [vmem:[%s9 + $0x28] sm:$0xf]
      %v6488 = vld [vmem:[%s9 + $0x2c] sm:$0xf]
      %v6489 = vld [vmem:[%s9 + $0x30] sm:$0xf]
      %v6490 = vld [vmem:[%s9 + $0x34] sm:$0xf]
      %v6491 = vld [vmem:[%s9 + $0x38] sm:$0xf]
      %v6492 = vld [vmem:[%s9 + $0x3c] sm:$0xf]
      %v6493 = vld [vmem:[%s9 + $0x40] sm:$0xf]
      %v6494 = vld [vmem:[%s9 + $0x44] sm:$0xf]
      %v6495 = vld [vmem:[%s9 + $0x48] sm:$0xf]
      %v6496 = vld [vmem:[%s9 + $0x4c] sm:$0xf]
      %v6497 = vld [vmem:[%s9 + $0x50] sm:$0xf]
      %v6498 = vld [vmem:[%s9 + $0x54] sm:$0xf]
      %v6499 = vld [vmem:[%s9 + $0x58] sm:$0xf]
      %v6500 = vld [vmem:[%s9 + $0x5c] sm:$0xf]
      %v6501 = vld [vmem:[%s9 + $0x60] sm:$0xf]
      %v6502 = vld [vmem:[%s9 + $0x64] sm:$0xf]
      %v6503 = vld [vmem:[%s9 + $0x68] sm:$0xf]
      %v6504 = vld [vmem:[%s9 + $0x6c] sm:$0xf]
      %v6505 = vld [vmem:[%s9 + $0x70] sm:$0xf]
      %v6506 = vld [vmem:[%s9 + $0x74] sm:$0xf]
      %v6507 = vld [vmem:[%s9 + $0x78] sm:$0xf]
      %v6508 = vld [vmem:[%s9 + $0x7c] sm:$0xf]
      %v6509 = vld [vmem:[#allocation2] sm:$0x1]
      %v6511 = vlaneseq
      %v6512 = vshrl.u32 %v6511, 7
      %v6513 = vsub.s32 0, %v6512
      %v6514 = vrot.slane %v6509, %v6513
      %v6548 = vunpack.c.l.b16 %v6477
      %v6549 = vunpack.c.l.b16 %v6478
      %v6550 = vunpack.c.l.b16 %v6479
      %v6551 = vunpack.c.l.b16 %v6480
      %v6552 = vunpack.c.l.b16 %v6481
      %v6553 = vunpack.c.l.b16 %v6482
      %v6554 = vunpack.c.l.b16 %v6483
      %v6555 = vunpack.c.l.b16 %v6484
      %v6556 = vunpack.c.l.b16 %v6485
      %v6557 = vunpack.c.l.b16 %v6486
      %v6558 = vunpack.c.l.b16 %v6487
      %v6559 = vunpack.c.l.b16 %v6488
      %v6560 = vunpack.c.l.b16 %v6489
      %v6561 = vunpack.c.l.b16 %v6490
      %v6562 = vunpack.c.l.b16 %v6491
      %v6563 = vunpack.c.l.b16 %v6492
      %v6564 = vunpack.c.l.b16 %v6493
      %v6565 = vunpack.c.l.b16 %v6494
      %v6566 = vunpack.c.l.b16 %v6495
      %v6567 = vunpack.c.l.b16 %v6496
      %v6568 = vunpack.c.l.b16 %v6497
      %v6569 = vunpack.c.l.b16 %v6498
      %v6570 = vunpack.c.l.b16 %v6499
      %v6571 = vunpack.c.l.b16 %v6500
      %v6572 = vunpack.c.l.b16 %v6501
      %v6573 = vunpack.c.l.b16 %v6502
      %v6574 = vunpack.c.l.b16 %v6503
      %v6575 = vunpack.c.l.b16 %v6504
      %v6576 = vunpack.c.l.b16 %v6505
      %v6577 = vunpack.c.l.b16 %v6506
      %v6578 = vunpack.c.l.b16 %v6507
      %v6579 = vunpack.c.l.b16 %v6508
      %v6580 = vpack.c.b16 %v6549, %v6548
      %v6581 = vpack.c.b16 %v6551, %v6550
      %v6582 = vpack.c.b16 %v6553, %v6552
      %v6583 = vpack.c.b16 %v6555, %v6554
      %v6584 = vpack.c.b16 %v6557, %v6556
      %v6585 = vpack.c.b16 %v6559, %v6558
      %v6586 = vpack.c.b16 %v6561, %v6560
      %v6587 = vpack.c.b16 %v6563, %v6562
      %v6588 = vpack.c.b16 %v6565, %v6564
      %v6589 = vpack.c.b16 %v6567, %v6566
      %v6590 = vpack.c.b16 %v6569, %v6568
      %v6591 = vpack.c.b16 %v6571, %v6570
      %v6592 = vpack.c.b16 %v6573, %v6572
      %v6593 = vpack.c.b16 %v6575, %v6574
      %v6594 = vpack.c.b16 %v6577, %v6576
      %v6595 = vpack.c.b16 %v6579, %v6578
      %6612 = vmatprep.subr.bf16.mxu0 0
      %6613 = vmatpush1.bf16.msra.mxu0 %v6587
      %6614 = vmatprep.subr.bf16.mxu0 0
      %6615 = vmatpush1.bf16.msra.mxu0 %v6586
      %6616 = vmatprep.subr.bf16.mxu0 0
      %6617 = vmatpush1.bf16.msra.mxu0 %v6585
      %6618 = vmatprep.subr.bf16.mxu0 0
      %6619 = vmatpush1.bf16.msra.mxu0 %v6584
      %6620 = vmatprep.subr.bf16.mxu0 0
      %6621 = vmatpush1.bf16.msra.mxu0 %v6583
      %6622 = vmatprep.subr.bf16.mxu0 0
      %6623 = vmatpush1.bf16.msra.mxu0 %v6582
      %6624 = vmatprep.subr.bf16.mxu0 0
      %6625 = vmatpush1.bf16.msra.mxu0 %v6581
      %6626 = vmatprep.subr.bf16.mxu0 0
      %6627 = vmatpush1.bf16.msra.mxu0 %v6580
      %6628 = vmatprep.subr.bf16.mxu0 0
      %6629 = vmatpush2.bf16.msra.mxu0 %v6595
      %6630 = vmatprep.subr.bf16.mxu0 0
      %6631 = vmatpush2.bf16.msra.mxu0 %v6594
      %6632 = vmatprep.subr.bf16.mxu0 0
      %6633 = vmatpush2.bf16.msra.mxu0 %v6593
      %6634 = vmatprep.subr.bf16.mxu0 0
      %6635 = vmatpush2.bf16.msra.mxu0 %v6592
      %6636 = vmatprep.subr.bf16.mxu0 0
      %6637 = vmatpush2.bf16.msra.mxu0 %v6591
      %6638 = vmatprep.subr.bf16.mxu0 0
      %6639 = vmatpush2.bf16.msra.mxu0 %v6590
      %6640 = vmatprep.subr.bf16.mxu0 0
      %6641 = vmatpush2.bf16.msra.mxu0 %v6589
      %6642 = vmatprep.subr.bf16.mxu0 0
      %6643 = vmatpush2.bf16.msra.mxu0 %v6588
      %6644 = vmatprep.mubr.bf16.mxu0 %v6446
      %6645 = vmatmul.mubr.bf16.gmra.mxu0 %v6445
      %v6646 = vpop.f32.mrf.mxu0
      %v6647 = vadd.f32 %v6514, %v6646
      %v6648 = vpop.f32.mrf.mxu0
      %v6649 = vpop.f32.mrf.mxu0
      %v6650 = vadd.f32 %v6514, %v6649
      %v6651 = vpop.f32.mrf.mxu0
      %6652 = vmatprep.mubr.bf16.mxu0 %v6448
      %6653 = vmatmul.mubr.bf16.gmra.mxu0 %v6447
      %v6654 = vpop.f32.mrf.mxu0
      %v6655 = vadd.f32 %v6514, %v6654
      %v6656 = vpop.f32.mrf.mxu0
      %v6657 = vpop.f32.mrf.mxu0
      %v6658 = vadd.f32 %v6514, %v6657
      %v6659 = vpop.f32.mrf.mxu0
      %6660 = vmatprep.mubr.bf16.mxu0 %v6450
      %6661 = vmatmul.mubr.bf16.gmra.mxu0 %v6449
      %v6662 = vpop.f32.mrf.mxu0
      %v6663 = vadd.f32 %v6514, %v6662
      %v6664 = vpop.f32.mrf.mxu0
      %v6665 = vpop.f32.mrf.mxu0
      %v6666 = vadd.f32 %v6514, %v6665
      %v6667 = vpop.f32.mrf.mxu0
      %6668 = vmatprep.mubr.bf16.mxu0 %v6452
      %6669 = vmatmul.mubr.bf16.gmra.mxu0 %v6451
      %v6670 = vpop.f32.mrf.mxu0
      %v6671 = vadd.f32 %v6514, %v6670
      %v6672 = vpop.f32.mrf.mxu0
      %v6673 = vpop.f32.mrf.mxu0
      %v6674 = vadd.f32 %v6514, %v6673
      %v6675 = vpop.f32.mrf.mxu0
      %6676 = vmatprep.mubr.bf16.mxu0 %v6454
      %6677 = vmatmul.mubr.bf16.gmra.mxu0 %v6453
      %v6678 = vpop.f32.mrf.mxu0
      %v6679 = vadd.f32 %v6514, %v6678
      %v6680 = vpop.f32.mrf.mxu0
      %v6681 = vpop.f32.mrf.mxu0
      %v6682 = vadd.f32 %v6514, %v6681
      %v6683 = vpop.f32.mrf.mxu0
      %6684 = vmatprep.mubr.bf16.mxu0 %v6456
      %6685 = vmatmul.mubr.bf16.gmra.mxu0 %v6455
      %v6686 = vpop.f32.mrf.mxu0
      %v6687 = vadd.f32 %v6514, %v6686
      %v6688 = vpop.f32.mrf.mxu0
      %v6689 = vpop.f32.mrf.mxu0
      %v6690 = vadd.f32 %v6514, %v6689
      %v6691 = vpop.f32.mrf.mxu0
      %6692 = vmatprep.mubr.bf16.mxu0 %v6458
      %6693 = vmatmul.mubr.bf16.gmra.mxu0 %v6457
      %v6694 = vpop.f32.mrf.mxu0
      %v6695 = vadd.f32 %v6514, %v6694
      %v6696 = vpop.f32.mrf.mxu0
      %v6697 = vpop.f32.mrf.mxu0
      %v6698 = vadd.f32 %v6514, %v6697
      %v6699 = vpop.f32.mrf.mxu0
      %6700 = vmatprep.mubr.bf16.mxu0 %v6460
      %6701 = vmatmul.mubr.bf16.gmra.mxu0 %v6459
      %v6702 = vpop.f32.mrf.mxu0
      %v6703 = vadd.f32 %v6514, %v6702
      %v6704 = vpop.f32.mrf.mxu0
      %v6705 = vpop.f32.mrf.mxu0
      %v6706 = vadd.f32 %v6514, %v6705
      %v6707 = vpop.f32.mrf.mxu0
      %6708 = vmatprep.mubr.bf16.mxu0 %v6462
      %6709 = vmatmul.mubr.bf16.gmra.mxu0 %v6461
      %v6710 = vpop.f32.mrf.mxu0
      %v6711 = vadd.f32 %v6514, %v6710
      %v6712 = vpop.f32.mrf.mxu0
      %v6713 = vpop.f32.mrf.mxu0
      %v6714 = vadd.f32 %v6514, %v6713
      %v6715 = vpop.f32.mrf.mxu0
      %6716 = vmatprep.mubr.bf16.mxu0 %v6464
      %6717 = vmatmul.mubr.bf16.gmra.mxu0 %v6463
      %v6718 = vpop.f32.mrf.mxu0
      %v6719 = vadd.f32 %v6514, %v6718
      %v6720 = vpop.f32.mrf.mxu0
      %v6721 = vpop.f32.mrf.mxu0
      %v6722 = vadd.f32 %v6514, %v6721
      %v6723 = vpop.f32.mrf.mxu0
      %6724 = vmatprep.mubr.bf16.mxu0 %v6466
      %6725 = vmatmul.mubr.bf16.gmra.mxu0 %v6465
      %v6726 = vpop.f32.mrf.mxu0
      %v6727 = vadd.f32 %v6514, %v6726
      %v6728 = vpop.f32.mrf.mxu0
      %v6729 = vpop.f32.mrf.mxu0
      %v6730 = vadd.f32 %v6514, %v6729
      %v6731 = vpop.f32.mrf.mxu0
      %6732 = vmatprep.mubr.bf16.mxu0 %v6468
      %6733 = vmatmul.mubr.bf16.gmra.mxu0 %v6467
      %v6734 = vpop.f32.mrf.mxu0
      %v6735 = vadd.f32 %v6514, %v6734
      %v6736 = vpop.f32.mrf.mxu0
      %v6737 = vpop.f32.mrf.mxu0
      %v6738 = vadd.f32 %v6514, %v6737
      %v6739 = vpop.f32.mrf.mxu0
      %6740 = vmatprep.mubr.bf16.mxu0 %v6470
      %6741 = vmatmul.mubr.bf16.gmra.mxu0 %v6469
      %v6742 = vpop.f32.mrf.mxu0
      %v6743 = vadd.f32 %v6514, %v6742
      %v6744 = vpop.f32.mrf.mxu0
      %v6745 = vpop.f32.mrf.mxu0
      %v6746 = vadd.f32 %v6514, %v6745
      %v6747 = vpop.f32.mrf.mxu0
      %6748 = vmatprep.mubr.bf16.mxu0 %v6472
      %6749 = vmatmul.mubr.bf16.gmra.mxu0 %v6471
      %v6750 = vpop.f32.mrf.mxu0
      %v6751 = vadd.f32 %v6514, %v6750
      %v6752 = vpop.f32.mrf.mxu0
      %v6753 = vpop.f32.mrf.mxu0
      %v6754 = vadd.f32 %v6514, %v6753
      %v6755 = vpop.f32.mrf.mxu0
      %6756 = vmatprep.mubr.bf16.mxu0 %v6474
      %6757 = vmatmul.mubr.bf16.gmra.mxu0 %v6473
      %v6758 = vpop.f32.mrf.mxu0
      %v6759 = vadd.f32 %v6514, %v6758
      %v6760 = vpop.f32.mrf.mxu0
      %v6761 = vpop.f32.mrf.mxu0
      %v6762 = vadd.f32 %v6514, %v6761
      %v6763 = vpop.f32.mrf.mxu0
      %6764 = vmatprep.mubr.bf16.mxu0 %v6476
      %6765 = vmatmul.mubr.bf16.gmra.mxu0 %v6475
      %v6766 = vpop.f32.mrf.mxu0
      %v6767 = vadd.f32 %v6514, %v6766
      %v6768 = vpop.f32.mrf.mxu0
      %v6769 = vpop.f32.mrf.mxu0
      %v6770 = vadd.f32 %v6514, %v6769
      %v6771 = vpop.f32.mrf.mxu0
      %6772 = vdwg.mxu0
      %vm6773 = vcmask 7168
      %6774 = vst.msk [vmem:[%s390] sm:$0xff] %vm6773, %v6647
      %6775 = vst.msk [vmem:[%s390 + $0x8] sm:$0xff] %vm6773, %v6650
      %6776 = vst.msk [vmem:[%s390 + $0x10] sm:$0xff] %vm6773, %v6655
      %6777 = vst.msk [vmem:[%s390 + $0x18] sm:$0xff] %vm6773, %v6658
      %6778 = vst.msk [vmem:[%s390 + $0x20] sm:$0xff] %vm6773, %v6663
      %6779 = vst.msk [vmem:[%s390 + $0x28] sm:$0xff] %vm6773, %v6666
      %6780 = vst.msk [vmem:[%s390 + $0x30] sm:$0xff] %vm6773, %v6671
      %6781 = vst.msk [vmem:[%s390 + $0x38] sm:$0xff] %vm6773, %v6674
      %6782 = vst.msk [vmem:[%s390 + $0x40] sm:$0xff] %vm6773, %v6679
      %6783 = vst.msk [vmem:[%s390 + $0x48] sm:$0xff] %vm6773, %v6682
      %6784 = vst.msk [vmem:[%s390 + $0x50] sm:$0xff] %vm6773, %v6687
      %6785 = vst.msk [vmem:[%s390 + $0x58] sm:$0xff] %vm6773, %v6690
      %6786 = vst.msk [vmem:[%s390 + $0x60] sm:$0xff] %vm6773, %v6695
      %6787 = vst.msk [vmem:[%s390 + $0x68] sm:$0xff] %vm6773, %v6698
      %6788 = vst.msk [vmem:[%s390 + $0x70] sm:$0xff] %vm6773, %v6703
      %6789 = vst.msk [vmem:[%s390 + $0x78] sm:$0xff] %vm6773, %v6706
      %6790 = vst.msk [vmem:[%s390 + $0x80] sm:$0xff] %vm6773, %v6711
      %6791 = vst.msk [vmem:[%s390 + $0x88] sm:$0xff] %vm6773, %v6714
      %6792 = vst.msk [vmem:[%s390 + $0x90] sm:$0xff] %vm6773, %v6719
      %6793 = vst.msk [vmem:[%s390 + $0x98] sm:$0xff] %vm6773, %v6722
      %6794 = vst.msk [vmem:[%s390 + $0xa0] sm:$0xff] %vm6773, %v6727
      %6795 = vst.msk [vmem:[%s390 + $0xa8] sm:$0xff] %vm6773, %v6730
      %6796 = vst.msk [vmem:[%s390 + $0xb0] sm:$0xff] %vm6773, %v6735
      %6797 = vst.msk [vmem:[%s390 + $0xb8] sm:$0xff] %vm6773, %v6738
      %6798 = vst.msk [vmem:[%s390 + $0xc0] sm:$0xff] %vm6773, %v6743
      %6799 = vst.msk [vmem:[%s390 + $0xc8] sm:$0xff] %vm6773, %v6746
      %6800 = vst.msk [vmem:[%s390 + $0xd0] sm:$0xff] %vm6773, %v6751
      %6801 = vst.msk [vmem:[%s390 + $0xd8] sm:$0xff] %vm6773, %v6754
      %6802 = vst.msk [vmem:[%s390 + $0xe0] sm:$0xff] %vm6773, %v6759
      %6803 = vst.msk [vmem:[%s390 + $0xe8] sm:$0xff] %vm6773, %v6762
      %6804 = vst.msk [vmem:[%s390 + $0xf0] sm:$0xff] %vm6773, %v6767
      %6805 = vst.msk [vmem:[%s390 + $0xf8] sm:$0xff] %vm6773, %v6770
      %s6806 = smul.u32 32, %s24
      %p6807 = scmp.lt.s32.totalorder %s6806, 63
      %s6808 = scalar_select %p6807, %s6806, 63
      %s6809 = smul.addr %s6808, 8
      %s6810 = scalar_lea.vmem %s11, %s6809
      // Predicated region
      $region65: #{inr_forward.1} parent=63 // pred_check
        %p6811 = pneg %p278
      $region66: #{inr_forward.1} parent=63 // pred_check_branch
        %6813 = sbr.rel (%p6811) target = $region68
      $region67: #{inr_forward.1} parent=63 // pred_region
        %s6814 = smul.u32 32, %s24
      $region68: #{inr_forward.1} parent=63 // pred_fallthru
        _
    $region64: #{inr_forward.1} parent=5 // pred_fallthru
      _
    %p6815 = scmp.le.s32.totalorder 2, %s19
    // Predicated region
    $region69: #{inr_forward.1} parent=5 // pred_check
      %p6816 = pneg %p6815
    $region70: #{inr_forward.1} parent=5 // pred_check_branch
      %6818 = sbr.rel (%p6816) target = $region72
    $region71: #{inr_forward.1} parent=5 // pred_region
      %s6819 = ssub.s32 %s19, 2
      // Predicated region
      $region73: #{inr_forward.1} parent=71 // pred_check
        %p6820 = pneg %p284
      $region74: #{inr_forward.1} parent=71 // pred_check_branch
        %6822 = sbr.rel (%p6820) target = $region76
      $region75: #{inr_forward.1} parent=71 // pred_region
        %s6823 = smul.u32 32, %s25
        %p6824 = scmp.lt.s32.totalorder %s6823, 63
        %s6825 = scalar_select %p6824, %s6823, 63
        %s6826 = smul.addr %s6825, 8
        %s6827 = scalar_lea.vmem %s11, %s6826
      $region76: #{inr_forward.1} parent=71 // pred_fallthru
        _
    $region72: #{inr_forward.1} parent=5 // pred_fallthru
      _
  $region6: #{inr_forward.1} parent=0 // loop_footer
    %s23 = sadd.s32 1, %s19
  $region7: #{inr_forward.1} parent=0 // loop_footer_branch
    %18 = sbr.rel target = $region3
  $region8: #{inr_forward.1} parent=0 // loop_exit
    _

</llo_original>
